<compile_context>
chip_gen: v7x
topology: tpu7x:2x2x1
jax: 0.10.0
libtpu: 0.0.40
codegen_flags: <defaults>
</compile_context>

<pallas_src>
import math

import jax
import jax.numpy as jnp
from jax.experimental import pallas as pl
from jax.experimental.pallas import tpu as pltpu


def _round_up(x, m):
    return ((x + m - 1) // m) * m


def _const_map2(i):
    return (0, 0)


# Group-tile granularity.  16 keeps the bf16 output blocks sublane-native.
_TG_ALIGN = 16


def _vmem_budget():
    """(data-tile budget, vmem_limit_bytes) derived from the chip generation."""
    cap = 128 << 20
    try:
        info = pltpu.get_tpu_info()
        cap = int(getattr(info, "vmem_capacity_bytes", cap)) or cap
    except Exception:  # defensive: interpret mode / older jax
        pass
    if cap <= (64 << 20):            # v7x: 64 MiB physical per TensorCore
        return 12 << 20, 48 << 20
    return 16 << 20, 96 << 20        # v5e / v6e: 128 MiB physical


def _pick_tg(G, K, Cf, Hmax, Dout, data_budget):
    """Biggest group tile that fits the data budget, >=2 grid steps if we can."""
    per_g = (2 * K * (Cf * 2 + 3 * 4)        # double-buffered feat(bf16)+rel(f32)
             + 3 * K * Hmax * 4              # live f32 intermediates
             + 2 * Dout * 2)                 # bf16 output (double-buffered)
    tg = (data_budget // max(per_g, 1)) // _TG_ALIGN * _TG_ALIGN
    tg = max(_TG_ALIGN, tg)
    Gal = _round_up(G, _TG_ALIGN)
    if Gal >= 2 * _TG_ALIGN:                 # leave >=2 parallel steps (megacore)
        tg = min(tg, max(_TG_ALIGN, (Gal // 2) // _TG_ALIGN * _TG_ALIGN))
    return min(tg, Gal)


# ----------------------------------------------------------------------------
# Kernel 1: per-(group, neighbor) 3-layer MLP (Lin-ReLU, Lin-ReLU, Lin) + max
# over the neighbor axis.  Used by both SAModules (PointNetConv message + max
# aggregation) and the GlobalSAModule (K = #points).  BatchNorm folds to
# identity at eval with fresh running stats; dropout = 0 -> identity.
#
# modes:
#   "fma"     : feat = raw x_j (Cin small)  -> layer-1 x-part via VPU FMA
#   "preproj" : feat = x_j @ W1_x hoisted   -> layer-1 x-part is just an add
#   "mxu"     : feat = raw x_j (C large)    -> layer-1 x-part via MXU matmul
# The 3-wide relative-position contraction is always VPU FMA.
# ----------------------------------------------------------------------------
def _make_edge_kernel(mode):
    preproj = (mode == "preproj")
    fma = (mode == "fma")

    def kernel(*refs):
        if preproj:
            (feat_ref, rel_ref, w1r_ref, b1_ref,
             w2_ref, b2_ref, w3_ref, b3_ref, o_ref) = refs
            w1x_ref = None
        else:
            (feat_ref, rel_ref, w1x_ref, w1r_ref, b1_ref,
             w2_ref, b2_ref, w3_ref, b3_ref, o_ref) = refs
        tg, k, cf = feat_ref.shape
        h1 = b1_ref.shape[-1]
        gk = tg * k
        b1 = b1_ref[...]                                       # (1, H1) f32

        # ---- layer 1 ----
        if preproj:
            # feat already holds x_j @ W1_x (hoisted per-point in the wrapper).
            h = feat_ref[...].reshape(gk, h1).astype(jnp.float32) + b1
        elif fma:
            # Tiny contraction depth (Cin): unrolled broadcast-FMA on the VPU
            # instead of a full MXU pass.
            feat2 = feat_ref[...].reshape(gk, cf).astype(jnp.float32)
            w1x = w1x_ref[...]                                 # (Cin, H1) f32
            h = jnp.broadcast_to(b1, (gk, h1))
            for c in range(cf):
                h = h + feat2[:, c:c + 1] * w1x[c:c + 1, :]
        else:  # "mxu": deep contraction -> MXU
            h = jnp.dot(feat_ref[...].reshape(gk, cf), w1x_ref[...],
                        preferred_element_type=jnp.float32) + b1
        # relative-position part: contraction depth 3 -> VPU FMA (never MXU).
        rel2 = rel_ref[...].reshape(gk, rel_ref.shape[-1])     # f32
        w1r = w1r_ref[...]                                     # (3, H1) f32
        for c in range(rel2.shape[-1]):
            h = h + rel2[:, c:c + 1] * w1r[c:c + 1, :]
        h = jnp.maximum(h, 0.0)

        # ---- layers 2 & 3: one big (TG*K, H) matmul each, bf16 in / f32 acc.
        h = jnp.dot(h.astype(jnp.bfloat16), w2_ref[...],
                    preferred_element_type=jnp.float32) + b2_ref[...]
        h = jnp.maximum(h, 0.0)
        h = jnp.dot(h.astype(jnp.bfloat16), w3_ref[...],
                    preferred_element_type=jnp.float32) + b3_ref[...]

        # ---- max over the neighbor axis; emit bf16.
        dout = h.shape[-1]
        o_ref[...] = jnp.max(h.reshape(tg, k, dout), axis=1).astype(o_ref.dtype)

    return kernel


def edge_mlp3_maxpool(feat, rel, params, *, mode, tg=None):
    """feat: (G,K,Cf) bf16, rel: (G,K,3) f32 -> (G, Dout) bf16."""
    (w1x, w1r, b1), (w2, b2), (w3, b3) = params
    G, K, Cf = feat.shape
    H1, H2, Dout = b1.shape[-1], w2.shape[1], w3.shape[1]
    assert K % 8 == 0  # callers pad the neighbor axis to a multiple of 8

    data_budget, vmem_limit = _vmem_budget()
    if tg is None:
        tg = _pick_tg(G, K, Cf, max(H1, H2, Dout), Dout, data_budget)
    Gp = _round_up(G, tg)
    if Gp != G:
        feat = jnp.pad(feat, ((0, Gp - G), (0, 0), (0, 0)))
        rel = jnp.pad(rel, ((0, Gp - G), (0, 0), (0, 0)))

    args = [feat, rel]
    in_specs = [pl.BlockSpec((tg, K, Cf), lambda i: (i, 0, 0)),
                pl.BlockSpec((tg, K, 3), lambda i: (i, 0, 0))]
    if mode != "preproj":
        args.append(w1x)
        in_specs.append(pl.BlockSpec(w1x.shape, _const_map2))
    wb = [w1r, b1, w2, b2, w3, b3]
    args += wb
    # TODO(synk): these constant-index weight blocks could be single-buffered
    # (pipeline_mode=pl.Buffered(1)) to reclaim ~1-2 MB VMEM once that option
    # is reliably supported by the grid pipeliner.
    in_specs += [pl.BlockSpec(a.shape, _const_map2) for a in wb]

    out = pl.pallas_call(
        _make_edge_kernel(mode),
        grid=(Gp // tg,),
        in_specs=in_specs,
        out_specs=pl.BlockSpec((tg, Dout), lambda i: (i, 0)),
        out_shape=jax.ShapeDtypeStruct((Gp, Dout), jnp.bfloat16),
        compiler_params=pltpu.CompilerParams(
            dimension_semantics=("parallel",),
            vmem_limit_bytes=vmem_limit),
    )(*args)
    return out[:G]


# ----------------------------------------------------------------------------
# Kernel 2: plain 2-D 3-layer MLP for the classification head(s).
# All heads are fused (block-diagonal) into one call; output padded to 128.
# ----------------------------------------------------------------------------
def _mlp3_kernel(x_ref, w1_ref, b1_ref, w2_ref, b2_ref, w3_ref, b3_ref, o_ref):
    h = jnp.dot(x_ref[...], w1_ref[...], preferred_element_type=jnp.float32)
    h = jnp.maximum(h + b1_ref[...], 0.0)
    h = jnp.dot(h.astype(jnp.bfloat16), w2_ref[...],
                preferred_element_type=jnp.float32)
    h = jnp.maximum(h + b2_ref[...], 0.0)
    o_ref[...] = jnp.dot(h.astype(jnp.bfloat16), w3_ref[...],
                         preferred_element_type=jnp.float32) + b3_ref[...]


def head_mlp(x, params, out_dim):
    (w1, b1), (w2, b2), (w3, b3) = params
    B = x.shape[0]
    Doutp = w3.shape[1]
    args = (x.astype(jnp.bfloat16), w1, b1, w2, b2, w3, b3)
    in_specs = [pl.BlockSpec(a.shape, _const_map2) for a in args]
    out = pl.pallas_call(
        _mlp3_kernel,
        grid=(1,),
        in_specs=in_specs,
        out_specs=pl.BlockSpec((B, Doutp), _const_map2),
        out_shape=jax.ShapeDtypeStruct((B, Doutp), jnp.float32),
    )(*args)
    return out[:, :out_dim]


# ----------------------------------------------------------------------------
# Plain-JAX glue: farthest point sampling, radius neighbor search, gathers.
# ----------------------------------------------------------------------------
def fps_dense(pos, n_samples):
    # TODO(synk): PyG fps(random_start=True) starts from a random point per
    # batch; we use a deterministic start (index 0) for reproducibility.
    B, N, _ = pos.shape

    def one(p):
        idx0 = jnp.zeros((n_samples,), jnp.int32)
        d0 = jnp.full((N,), jnp.inf, jnp.float32)

        def body(i, state):
            idx, d = state
            last = p[idx[i - 1]]
            d = jnp.minimum(d, jnp.sum((p - last) ** 2, axis=-1))
            idx = idx.at[i].set(jnp.argmax(d).astype(jnp.int32))
            return idx, d

        idx, _ = jax.lax.fori_loop(1, n_samples, body, (idx0, d0))
        return idx

    return jax.vmap(one)(pos)


def radius_neighbors(pos, center_idx, r, max_k):
    """Per sampled center: up-to-K neighbor indices within radius r.
    Invalid slots (and the padding up to a multiple of 8) point at the center
    itself (distance 0, always within radius); duplicates cannot change the
    downstream max, so no mask is needed.
    TODO(synk): PyG `radius` caps neighbors differently (implementation order);
    results can differ when more than max_k points fall within radius."""
    B, N, _ = pos.shape
    M = center_idx.shape[1]
    b_idx = jnp.arange(B)[:, None]
    cpos = pos[b_idx, center_idx]                                    # (B,M,3)
    d2 = jnp.sum((cpos[:, :, None, :] - pos[:, None, :, :]) ** 2, axis=-1)
    within = d2 <= r * r                                             # (B,M,N)
    K = min(N, max_k)
    ar = jnp.arange(N)
    keys = jnp.where(within, ar, N + ar)          # valid neighbors sort first
    order = jnp.argsort(keys, axis=-1)
    nbr_idx = order[..., :K].astype(jnp.int32)
    nbr_valid = jnp.take_along_axis(within, order, axis=-1)[..., :K]
    center32 = center_idx[:, :, None].astype(jnp.int32)
    nbr_idx = jnp.where(nbr_valid, nbr_idx, center32)
    Kp = _round_up(K, 8)
    if Kp != K:
        pad = jnp.broadcast_to(center32, (B, M, Kp - K))
        nbr_idx = jnp.concatenate([nbr_idx, pad], axis=-1)
    return cpos, nbr_idx


def sa_module(x, pos, ratio, r, params, *, mode, max_k=64):
    B, N, _ = x.shape
    M = int(math.ceil(ratio * N))
    idx = fps_dense(pos, M)                                          # (B,M)
    cpos, nbr_idx = radius_neighbors(pos, idx, r, max_k)             # (B,M,Kp)
    b_idx = jnp.arange(B)[:, None, None]
    (w1x, _, _), _, _ = params
    if mode == "preproj":
        # Hoist the W1_x projection to per-point: each point appears as a
        # neighbor of many groups, so projecting per-edge repeats the matmul.
        feat_src = jnp.einsum("bnc,ch->bnh", x.astype(jnp.bfloat16), w1x,
                              preferred_element_type=jnp.float32)
        feat_src = feat_src.astype(jnp.bfloat16)
    else:
        feat_src = x.astype(jnp.bfloat16)
    feat_j = feat_src[b_idx, nbr_idx]                        # (B,M,Kp,Cf) bf16
    pos_j = pos[b_idx, nbr_idx]                              # (B,M,Kp,3) f32
    rel = pos_j - cpos[:, :, None, :]                        # f32 (tiny)
    G = B * M
    Kp = nbr_idx.shape[-1]
    out = edge_mlp3_maxpool(feat_j.reshape(G, Kp, -1),
                            rel.reshape(G, Kp, 3), params, mode=mode)
    return out.reshape(B, M, -1), cpos


def global_sa_module(x, pos, params):
    """GlobalSAModule: nn(concat[x, pos]) then max over every point of a cloud."""
    B, M, C = x.shape
    Mp = _round_up(M, 8)
    if Mp != M:
        # Duplicate a real point instead of masking; duplicates can't change max.
        x = jnp.concatenate(
            [x, jnp.broadcast_to(x[:, :1], (B, Mp - M, C))], axis=1)
        pos = jnp.concatenate(
            [pos, jnp.broadcast_to(pos[:, :1], (B, Mp - M, 3))], axis=1)
    return edge_mlp3_maxpool(x.astype(jnp.bfloat16), pos.astype(jnp.float32),
                             params, mode="mxu")                   # (B, 1024)


# ----------------------------------------------------------------------------
# Deterministic parameter init + layout prep (pad / split / fuse / cast).
# ----------------------------------------------------------------------------
def init_mlp(key, dims):
    params = []
    for i in range(len(dims) - 1):
        key, kw, kb = jax.random.split(key, 3)
        w = (jax.random.normal(kw, (dims[i], dims[i + 1]), jnp.float32)
             / jnp.sqrt(float(dims[i])))
        b = jax.random.normal(kb, (dims[i + 1],), jnp.float32) * 0.01
        params.append((w, b))
    return params


def _pad_axis(a, axis, new):
    pad = [(0, 0)] * a.ndim
    pad[axis] = (0, new - a.shape[axis])
    return jnp.pad(a, pad)


def pad_hidden_lanes(params, mult=128):
    """Zero-pad the two hidden widths to a multiple of `mult` (lane-dense).
    Padded channels are exactly zero after ReLU and the corresponding W2/W3
    rows are zero, so the output is unchanged."""
    (w1, b1), (w2, b2), (w3, b3) = params
    h1 = _round_up(w1.shape[1], mult)
    h2 = _round_up(w2.shape[1], mult)
    w1, b1 = _pad_axis(w1, 1, h1), _pad_axis(b1, 0, h1)
    w2, b2 = _pad_axis(_pad_axis(w2, 0, h1), 1, h2), _pad_axis(b2, 0, h2)
    w3 = _pad_axis(w3, 0, h2)
    return [(w1, b1), (w2, b2), (w3, b3)]


def prep_edge_params(params, cx, mode):
    """Split W1 into x-part / relative-position-part.  MXU-consumed weights ->
    bf16; FMA-consumed weights and biases stay f32 (biases reshaped (1,H))."""
    (w1, b1), (w2, b2), (w3, b3) = params
    bf = lambda m: m.astype(jnp.bfloat16)
    fb = lambda v: v.reshape(1, -1).astype(jnp.float32)
    w1x, w1r = w1[:cx], w1[cx:]
    w1x = w1x.astype(jnp.float32) if mode == "fma" else bf(w1x)
    return ((w1x, w1r.astype(jnp.float32), fb(b1)),
            (bf(w2), fb(b2)), (bf(w3), fb(b3)))


def prep_dense_params(params):
    (w1, b1), (w2, b2), (w3, b3) = params
    bf = lambda m: m.astype(jnp.bfloat16)
    fb = lambda v: v.reshape(1, -1).astype(jnp.float32)
    return ((bf(w1), fb(b1)), (bf(w2), fb(b2)), (bf(w3), fb(b3)))


def fuse_heads(head_params):
    """Fuse per-head [1024,512,256,out] MLPs into one block-diagonal MLP so a
    single pallas_call produces the concatenated outputs (== torch.cat)."""
    from jax.scipy.linalg import block_diag
    w1 = jnp.concatenate([p[0][0] for p in head_params], axis=1)
    b1 = jnp.concatenate([p[0][1] for p in head_params], axis=0)
    w2 = block_diag(*[p[1][0] for p in head_params])
    b2 = jnp.concatenate([p[1][1] for p in head_params], axis=0)
    w3 = block_diag(*[p[2][0] for p in head_params])
    b3 = jnp.concatenate([p[2][1] for p in head_params], axis=0)
    return [(w1, b1), (w2, b2), (w3, b3)]


def pad_head_out(params, mult=128):
    """Pad the fused head's output columns so stores are lane-dense."""
    (w1, b1), (w2, b2), (w3, b3) = params
    dp = _round_up(w3.shape[1], mult)
    return [(w1, b1), (w2, b2), (_pad_axis(w3, 1, dp), _pad_axis(b3, 0, dp))]


class PointNet2ClassificationPallas:
    """Defaults of the reference module: dropout=0, pos_in_feature=False,
    normalize_pos=False, mode=None.
    TODO(synk): BatchNorm is folded to identity (valid for fresh running stats:
    mean 0, var 1, gamma 1, beta 0); trained BN params must be folded into W/b."""

    def __init__(self, in_channels, out_channels, key):
        out_channels = (out_channels if isinstance(out_channels, list)
                        else [out_channels])
        k1, k2, k3, k4 = jax.random.split(key, 4)
        sa1 = pad_hidden_lanes(init_mlp(k1, [in_channels + 3, 64, 64, 128]))
        sa2 = init_mlp(k2, [128 + 3, 128, 128, 256])
        sa3 = init_mlp(k3, [256 + 3, 256, 512, 1024])
        self.sa1_mode = "fma" if in_channels <= 16 else "mxu"
        self.sa1 = prep_edge_params(sa1, in_channels, self.sa1_mode)
        self.sa2 = prep_edge_params(sa2, 128, "preproj")
        self.sa3 = prep_edge_params(sa3, 256, "mxu")
        hkeys = jax.random.split(k4, len(out_channels))
        heads = [init_mlp(kk, [1024, 512, 256, od])
                 for kk, od in zip(hkeys, out_channels)]
        self.out_dim = sum(out_channels)
        self.head = prep_dense_params(pad_head_out(fuse_heads(heads)))

    def __call__(self, x, pos):
        x1, pos1 = sa_module(x, pos, ratio=0.5, r=0.2,
                             params=self.sa1, mode=self.sa1_mode)
        x2, pos2 = sa_module(x1, pos1, ratio=0.25, r=0.4,
                             params=self.sa2, mode="preproj")
        x3 = global_sa_module(x2, pos2, self.sa3)
        return head_mlp(x3, self.head, self.out_dim)   # == torch.cat(out_list, 1)


if __name__ == "__main__":
    key = jax.random.PRNGKey(0)
    kx, kp, km = jax.random.split(key, 3)
    B, N, Cin, n_cls = 2, 16, 4, 10
    x = jax.random.normal(kx, (B, N, Cin), jnp.float32)
    pos = jax.random.uniform(kp, (B, N, 3), jnp.float32)  # unit-cube points
    model = PointNet2ClassificationPallas(Cin, n_cls, km)
    out = jax.jit(model.__call__)(x, pos)
    jax.block_until_ready(out)
    assert out.shape == (B, n_cls), out.shape
    assert bool(jnp.all(jnp.isfinite(out)))
    print("KERNEL_OK")
</pallas_src>

<mosaic_0001>
module attributes {stable_mosaic.version = 11 : i64} {
  func.func @kernel(%arg0: i32, %arg1: memref<16x16x4xbf16, #tpu.memory_space<vmem>>, %arg2: memref<16x16x3xf32, #tpu.memory_space<vmem>>, %arg3: memref<4x128xf32, #tpu.memory_space<vmem>>, %arg4: memref<3x128xf32, #tpu.memory_space<vmem>>, %arg5: memref<1x128xf32, #tpu.memory_space<vmem>>, %arg6: memref<128x128xbf16, #tpu.memory_space<vmem>>, %arg7: memref<1x128xf32, #tpu.memory_space<vmem>>, %arg8: memref<128x128xbf16, #tpu.memory_space<vmem>>, %arg9: memref<1x128xf32, #tpu.memory_space<vmem>>, %arg10: memref<16x128xbf16, #tpu.memory_space<vmem>>) attributes {dimension_semantics = [#tpu.dimension_semantics<parallel>], iteration_bounds = array<i64: 1>, scalar_prefetch = 0 : i64, scratch_operands = 0 : i64, tpu.core_type = #tpu.core_type<tc>, window_params = [{transform_indices = @transform_0, window_bounds = array<i64: 16, 16, 4>}, {transform_indices = @transform_1, window_bounds = array<i64: 16, 16, 3>}, {pipeline_mode = #tpu.pipeline_mode<synchronous>, transform_indices = @transform_2, window_bounds = array<i64: 4, 128>}, {pipeline_mode = #tpu.pipeline_mode<synchronous>, transform_indices = @transform_3, window_bounds = array<i64: 3, 128>}, {pipeline_mode = #tpu.pipeline_mode<synchronous>, transform_indices = @transform_4, window_bounds = array<i64: 1, 128>}, {pipeline_mode = #tpu.pipeline_mode<synchronous>, transform_indices = @transform_5, window_bounds = array<i64: 128, 128>}, {pipeline_mode = #tpu.pipeline_mode<synchronous>, transform_indices = @transform_6, window_bounds = array<i64: 1, 128>}, {pipeline_mode = #tpu.pipeline_mode<synchronous>, transform_indices = @transform_7, window_bounds = array<i64: 128, 128>}, {pipeline_mode = #tpu.pipeline_mode<synchronous>, transform_indices = @transform_8, window_bounds = array<i64: 1, 128>}, {transform_indices = @transform_9, window_bounds = array<i64: 16, 128>}]} {
    %c0 = arith.constant 0 : index
    %c0_0 = arith.constant 0 : index
    %0 = vector.load %arg5[%c0, %c0_0] : memref<1x128xf32, #tpu.memory_space<vmem>>, vector<1x128xf32>
    %c0_1 = arith.constant 0 : index
    %c0_2 = arith.constant 0 : index
    %c0_3 = arith.constant 0 : index
    %1 = vector.load %arg1[%c0_1, %c0_2, %c0_3] : memref<16x16x4xbf16, #tpu.memory_space<vmem>>, vector<16x16x4xbf16>
    %2 = vector.shape_cast %1 : vector<16x16x4xbf16> to vector<256x4xbf16>
    %3 = arith.extf %2 : vector<256x4xbf16> to vector<256x4xf32>
    %c0_4 = arith.constant 0 : index
    %c0_5 = arith.constant 0 : index
    %4 = vector.load %arg3[%c0_4, %c0_5] : memref<4x128xf32, #tpu.memory_space<vmem>>, vector<4x128xf32>
    %5 = vector.shape_cast %0 : vector<1x128xf32> to vector<1x128xf32>
    %6 = vector.broadcast %5 : vector<1x128xf32> to vector<256x128xf32>
    %7 = vector.extract_strided_slice %3 {offsets = [0, 0], sizes = [256, 1], strides = [1, 1]} : vector<256x4xf32> to vector<256x1xf32>
    %8 = vector.extract_strided_slice %4 {offsets = [0, 0], sizes = [1, 128], strides = [1, 1]} : vector<4x128xf32> to vector<1x128xf32>
    %9 = vector.broadcast %7 : vector<256x1xf32> to vector<256x128xf32>
    %10 = vector.broadcast %8 : vector<1x128xf32> to vector<256x128xf32>
    %11 = arith.mulf %9, %10 : vector<256x128xf32>
    %12 = arith.addf %6, %11 : vector<256x128xf32>
    %13 = vector.extract_strided_slice %3 {offsets = [0, 1], sizes = [256, 1], strides = [1, 1]} : vector<256x4xf32> to vector<256x1xf32>
    %14 = vector.extract_strided_slice %4 {offsets = [1, 0], sizes = [1, 128], strides = [1, 1]} : vector<4x128xf32> to vector<1x128xf32>
    %15 = vector.broadcast %13 : vector<256x1xf32> to vector<256x128xf32>
    %16 = vector.broadcast %14 : vector<1x128xf32> to vector<256x128xf32>
    %17 = arith.mulf %15, %16 : vector<256x128xf32>
    %18 = arith.addf %12, %17 : vector<256x128xf32>
    %19 = vector.extract_strided_slice %3 {offsets = [0, 2], sizes = [256, 1], strides = [1, 1]} : vector<256x4xf32> to vector<256x1xf32>
    %20 = vector.extract_strided_slice %4 {offsets = [2, 0], sizes = [1, 128], strides = [1, 1]} : vector<4x128xf32> to vector<1x128xf32>
    %21 = vector.broadcast %19 : vector<256x1xf32> to vector<256x128xf32>
    %22 = vector.broadcast %20 : vector<1x128xf32> to vector<256x128xf32>
    %23 = arith.mulf %21, %22 : vector<256x128xf32>
    %24 = arith.addf %18, %23 : vector<256x128xf32>
    %25 = vector.extract_strided_slice %3 {offsets = [0, 3], sizes = [256, 1], strides = [1, 1]} : vector<256x4xf32> to vector<256x1xf32>
    %26 = vector.extract_strided_slice %4 {offsets = [3, 0], sizes = [1, 128], strides = [1, 1]} : vector<4x128xf32> to vector<1x128xf32>
    %27 = vector.broadcast %25 : vector<256x1xf32> to vector<256x128xf32>
    %28 = vector.broadcast %26 : vector<1x128xf32> to vector<256x128xf32>
    %29 = arith.mulf %27, %28 : vector<256x128xf32>
    %30 = arith.addf %24, %29 : vector<256x128xf32>
    %c0_6 = arith.constant 0 : index
    %c0_7 = arith.constant 0 : index
    %c0_8 = arith.constant 0 : index
    %31 = vector.load %arg2[%c0_6, %c0_7, %c0_8] : memref<16x16x3xf32, #tpu.memory_space<vmem>>, vector<16x16x3xf32>
    %32 = vector.shape_cast %31 : vector<16x16x3xf32> to vector<256x3xf32>
    %c0_9 = arith.constant 0 : index
    %c0_10 = arith.constant 0 : index
    %33 = vector.load %arg4[%c0_9, %c0_10] : memref<3x128xf32, #tpu.memory_space<vmem>>, vector<3x128xf32>
    %34 = vector.extract_strided_slice %32 {offsets = [0, 0], sizes = [256, 1], strides = [1, 1]} : vector<256x3xf32> to vector<256x1xf32>
    %35 = vector.extract_strided_slice %33 {offsets = [0, 0], sizes = [1, 128], strides = [1, 1]} : vector<3x128xf32> to vector<1x128xf32>
    %36 = vector.broadcast %34 : vector<256x1xf32> to vector<256x128xf32>
    %37 = vector.broadcast %35 : vector<1x128xf32> to vector<256x128xf32>
    %38 = arith.mulf %36, %37 : vector<256x128xf32>
    %39 = arith.addf %30, %38 : vector<256x128xf32>
    %40 = vector.extract_strided_slice %32 {offsets = [0, 1], sizes = [256, 1], strides = [1, 1]} : vector<256x3xf32> to vector<256x1xf32>
    %41 = vector.extract_strided_slice %33 {offsets = [1, 0], sizes = [1, 128], strides = [1, 1]} : vector<3x128xf32> to vector<1x128xf32>
    %42 = vector.broadcast %40 : vector<256x1xf32> to vector<256x128xf32>
    %43 = vector.broadcast %41 : vector<1x128xf32> to vector<256x128xf32>
    %44 = arith.mulf %42, %43 : vector<256x128xf32>
    %45 = arith.addf %39, %44 : vector<256x128xf32>
    %46 = vector.extract_strided_slice %32 {offsets = [0, 2], sizes = [256, 1], strides = [1, 1]} : vector<256x3xf32> to vector<256x1xf32>
    %47 = vector.extract_strided_slice %33 {offsets = [2, 0], sizes = [1, 128], strides = [1, 1]} : vector<3x128xf32> to vector<1x128xf32>
    %48 = vector.broadcast %46 : vector<256x1xf32> to vector<256x128xf32>
    %49 = vector.broadcast %47 : vector<1x128xf32> to vector<256x128xf32>
    %50 = arith.mulf %48, %49 : vector<256x128xf32>
    %51 = arith.addf %45, %50 : vector<256x128xf32>
    %cst = arith.constant 0.000000e+00 : f32
    %52 = vector.broadcast %cst : f32 to vector<256x128xf32>
    %53 = arith.maximumf %51, %52 : vector<256x128xf32>
    %54 = arith.truncf %53 : vector<256x128xf32> to vector<256x128xbf16>
    %c0_11 = arith.constant 0 : index
    %c0_12 = arith.constant 0 : index
    %55 = vector.load %arg6[%c0_11, %c0_12] : memref<128x128xbf16, #tpu.memory_space<vmem>>, vector<128x128xbf16>
    %cst_13 = arith.constant dense<0.000000e+00> : vector<256x128xf32>
    %56 = tpu.matmul %54, %55, %cst_13 {dimension_numbers = #tpu.dot_dimension_numbers<[1], [0], [0], [1], [0, 0, 1, 1], [], []>} : vector<256x128xbf16>, vector<128x128xbf16>, vector<256x128xf32> -> vector<256x128xf32>
    %c0_14 = arith.constant 0 : index
    %c0_15 = arith.constant 0 : index
    %57 = vector.load %arg7[%c0_14, %c0_15] : memref<1x128xf32, #tpu.memory_space<vmem>>, vector<1x128xf32>
    %58 = vector.broadcast %57 : vector<1x128xf32> to vector<256x128xf32>
    %59 = arith.addf %56, %58 : vector<256x128xf32>
    %cst_16 = arith.constant 0.000000e+00 : f32
    %60 = vector.broadcast %cst_16 : f32 to vector<256x128xf32>
    %61 = arith.maximumf %59, %60 : vector<256x128xf32>
    %62 = arith.truncf %61 : vector<256x128xf32> to vector<256x128xbf16>
    %c0_17 = arith.constant 0 : index
    %c0_18 = arith.constant 0 : index
    %63 = vector.load %arg8[%c0_17, %c0_18] : memref<128x128xbf16, #tpu.memory_space<vmem>>, vector<128x128xbf16>
    %cst_19 = arith.constant dense<0.000000e+00> : vector<256x128xf32>
    %64 = tpu.matmul %62, %63, %cst_19 {dimension_numbers = #tpu.dot_dimension_numbers<[1], [0], [0], [1], [0, 0, 1, 1], [], []>} : vector<256x128xbf16>, vector<128x128xbf16>, vector<256x128xf32> -> vector<256x128xf32>
    %c0_20 = arith.constant 0 : index
    %c0_21 = arith.constant 0 : index
    %65 = vector.load %arg9[%c0_20, %c0_21] : memref<1x128xf32, #tpu.memory_space<vmem>>, vector<1x128xf32>
    %66 = vector.broadcast %65 : vector<1x128xf32> to vector<256x128xf32>
    %67 = arith.addf %64, %66 : vector<256x128xf32>
    %68 = vector.shape_cast %67 : vector<256x128xf32> to vector<16x16x128xf32>
    %cst_22 = arith.constant dense<0xFF800000> : vector<16x128xf32>
    %69 = vector.multi_reduction <maximumf>, %68, %cst_22 [1] : vector<16x16x128xf32> to vector<16x128xf32>
    %70 = arith.truncf %69 : vector<16x128xf32> to vector<16x128xbf16>
    %c0_23 = arith.constant 0 : index
    %c0_24 = arith.constant 0 : index
    %71 = vector.load %arg10[%c0_23, %c0_24] : memref<16x128xbf16, #tpu.memory_space<vmem>>, vector<16x128xbf16>
    tpu.vector_store %arg10[%c0_23, %c0_24], %70 {strides = array<i32>} : memref<16x128xbf16, #tpu.memory_space<vmem>>, vector<16x128xbf16>,
    return
  }
  func.func @transform_0(%arg0: i32) -> (i32, i32, i32) {
    %c0_i32 = arith.constant 0 : i32
    %c0_i32_0 = arith.constant 0 : i32
    %c0_i32_1 = arith.constant 0 : i32
    return %arg0, %c0_i32, %c0_i32_0 : i32, i32, i32
  }
  func.func @transform_1(%arg0: i32) -> (i32, i32, i32) {
    %c0_i32 = arith.constant 0 : i32
    %c0_i32_0 = arith.constant 0 : i32
    %c0_i32_1 = arith.constant 0 : i32
    return %arg0, %c0_i32, %c0_i32_0 : i32, i32, i32
  }
  func.func @transform_2(%arg0: i32) -> (i32, i32) {
    %c0_i32 = arith.constant 0 : i32
    %c0_i32_0 = arith.constant 0 : i32
    %c0_i32_1 = arith.constant 0 : i32
    return %c0_i32, %c0_i32_0 : i32, i32
  }
  func.func @transform_3(%arg0: i32) -> (i32, i32) {
    %c0_i32 = arith.constant 0 : i32
    %c0_i32_0 = arith.constant 0 : i32
    %c0_i32_1 = arith.constant 0 : i32
    return %c0_i32, %c0_i32_0 : i32, i32
  }
  func.func @transform_4(%arg0: i32) -> (i32, i32) {
    %c0_i32 = arith.constant 0 : i32
    %c0_i32_0 = arith.constant 0 : i32
    %c0_i32_1 = arith.constant 0 : i32
    return %c0_i32, %c0_i32_0 : i32, i32
  }
  func.func @transform_5(%arg0: i32) -> (i32, i32) {
    %c0_i32 = arith.constant 0 : i32
    %c0_i32_0 = arith.constant 0 : i32
    %c0_i32_1 = arith.constant 0 : i32
    return %c0_i32, %c0_i32_0 : i32, i32
  }
  func.func @transform_6(%arg0: i32) -> (i32, i32) {
    %c0_i32 = arith.constant 0 : i32
    %c0_i32_0 = arith.constant 0 : i32
    %c0_i32_1 = arith.constant 0 : i32
    return %c0_i32, %c0_i32_0 : i32, i32
  }
  func.func @transform_7(%arg0: i32) -> (i32, i32) {
    %c0_i32 = arith.constant 0 : i32
    %c0_i32_0 = arith.constant 0 : i32
    %c0_i32_1 = arith.constant 0 : i32
    return %c0_i32, %c0_i32_0 : i32, i32
  }
  func.func @transform_8(%arg0: i32) -> (i32, i32) {
    %c0_i32 = arith.constant 0 : i32
    %c0_i32_0 = arith.constant 0 : i32
    %c0_i32_1 = arith.constant 0 : i32
    return %c0_i32, %c0_i32_0 : i32, i32
  }
  func.func @transform_9(%arg0: i32) -> (i32, i32) {
    %c0_i32 = arith.constant 0 : i32
    %c0_i32_0 = arith.constant 0 : i32
    return %arg0, %c0_i32 : i32, i32
  }
}

module attributes {stable_mosaic.version = 11 : i64} {
  func.func @kernel(%arg0: i32, %arg1: memref<16x8x128xbf16, #tpu.memory_space<vmem>>, %arg2: memref<16x8x3xf32, #tpu.memory_space<vmem>>, %arg3: memref<3x128xf32, #tpu.memory_space<vmem>>, %arg4: memref<1x128xf32, #tpu.memory_space<vmem>>, %arg5: memref<128x128xbf16, #tpu.memory_space<vmem>>, %arg6: memref<1x128xf32, #tpu.memory_space<vmem>>, %arg7: memref<128x256xbf16, #tpu.memory_space<vmem>>, %arg8: memref<1x256xf32, #tpu.memory_space<vmem>>, %arg9: memref<16x256xbf16, #tpu.memory_space<vmem>>) attributes {dimension_semantics = [#tpu.dimension_semantics<parallel>], iteration_bounds = array<i64: 1>, scalar_prefetch = 0 : i64, scratch_operands = 0 : i64, tpu.core_type = #tpu.core_type<tc>, window_params = [{transform_indices = @transform_0, window_bounds = array<i64: 16, 8, 128>}, {transform_indices = @transform_1, window_bounds = array<i64: 16, 8, 3>}, {pipeline_mode = #tpu.pipeline_mode<synchronous>, transform_indices = @transform_2, window_bounds = array<i64: 3, 128>}, {pipeline_mode = #tpu.pipeline_mode<synchronous>, transform_indices = @transform_3, window_bounds = array<i64: 1, 128>}, {pipeline_mode = #tpu.pipeline_mode<synchronous>, transform_indices = @transform_4, window_bounds = array<i64: 128, 128>}, {pipeline_mode = #tpu.pipeline_mode<synchronous>, transform_indices = @transform_5, window_bounds = array<i64: 1, 128>}, {pipeline_mode = #tpu.pipeline_mode<synchronous>, transform_indices = @transform_6, window_bounds = array<i64: 128, 256>}, {pipeline_mode = #tpu.pipeline_mode<synchronous>, transform_indices = @transform_7, window_bounds = array<i64: 1, 256>}, {transform_indices = @transform_8, window_bounds = array<i64: 16, 256>}]} {
    %c0 = arith.constant 0 : index
    %c0_0 = arith.constant 0 : index
    %0 = vector.load %arg4[%c0, %c0_0] : memref<1x128xf32, #tpu.memory_space<vmem>>, vector<1x128xf32>
    %c0_1 = arith.constant 0 : index
    %c0_2 = arith.constant 0 : index
    %c0_3 = arith.constant 0 : index
    %1 = vector.load %arg1[%c0_1, %c0_2, %c0_3] : memref<16x8x128xbf16, #tpu.memory_space<vmem>>, vector<16x8x128xbf16>
    %2 = vector.shape_cast %1 : vector<16x8x128xbf16> to vector<128x128xbf16>
    %3 = arith.extf %2 : vector<128x128xbf16> to vector<128x128xf32>
    %4 = vector.broadcast %0 : vector<1x128xf32> to vector<128x128xf32>
    %5 = arith.addf %3, %4 : vector<128x128xf32>
    %c0_4 = arith.constant 0 : index
    %c0_5 = arith.constant 0 : index
    %c0_6 = arith.constant 0 : index
    %6 = vector.load %arg2[%c0_4, %c0_5, %c0_6] : memref<16x8x3xf32, #tpu.memory_space<vmem>>, vector<16x8x3xf32>
    %7 = vector.shape_cast %6 : vector<16x8x3xf32> to vector<128x3xf32>
    %c0_7 = arith.constant 0 : index
    %c0_8 = arith.constant 0 : index
    %8 = vector.load %arg3[%c0_7, %c0_8] : memref<3x128xf32, #tpu.memory_space<vmem>>, vector<3x128xf32>
    %9 = vector.extract_strided_slice %7 {offsets = [0, 0], sizes = [128, 1], strides = [1, 1]} : vector<128x3xf32> to vector<128x1xf32>
    %10 = vector.extract_strided_slice %8 {offsets = [0, 0], sizes = [1, 128], strides = [1, 1]} : vector<3x128xf32> to vector<1x128xf32>
    %11 = vector.broadcast %9 : vector<128x1xf32> to vector<128x128xf32>
    %12 = vector.broadcast %10 : vector<1x128xf32> to vector<128x128xf32>
    %13 = arith.mulf %11, %12 : vector<128x128xf32>
    %14 = arith.addf %5, %13 : vector<128x128xf32>
    %15 = vector.extract_strided_slice %7 {offsets = [0, 1], sizes = [128, 1], strides = [1, 1]} : vector<128x3xf32> to vector<128x1xf32>
    %16 = vector.extract_strided_slice %8 {offsets = [1, 0], sizes = [1, 128], strides = [1, 1]} : vector<3x128xf32> to vector<1x128xf32>
    %17 = vector.broadcast %15 : vector<128x1xf32> to vector<128x128xf32>
    %18 = vector.broadcast %16 : vector<1x128xf32> to vector<128x128xf32>
    %19 = arith.mulf %17, %18 : vector<128x128xf32>
    %20 = arith.addf %14, %19 : vector<128x128xf32>
    %21 = vector.extract_strided_slice %7 {offsets = [0, 2], sizes = [128, 1], strides = [1, 1]} : vector<128x3xf32> to vector<128x1xf32>
    %22 = vector.extract_strided_slice %8 {offsets = [2, 0], sizes = [1, 128], strides = [1, 1]} : vector<3x128xf32> to vector<1x128xf32>
    %23 = vector.broadcast %21 : vector<128x1xf32> to vector<128x128xf32>
    %24 = vector.broadcast %22 : vector<1x128xf32> to vector<128x128xf32>
    %25 = arith.mulf %23, %24 : vector<128x128xf32>
    %26 = arith.addf %20, %25 : vector<128x128xf32>
    %cst = arith.constant 0.000000e+00 : f32
    %27 = vector.broadcast %cst : f32 to vector<128x128xf32>
    %28 = arith.maximumf %26, %27 : vector<128x128xf32>
    %29 = arith.truncf %28 : vector<128x128xf32> to vector<128x128xbf16>
    %c0_9 = arith.constant 0 : index
    %c0_10 = arith.constant 0 : index
    %30 = vector.load %arg5[%c0_9, %c0_10] : memref<128x128xbf16, #tpu.memory_space<vmem>>, vector<128x128xbf16>
    %cst_11 = arith.constant dense<0.000000e+00> : vector<128x128xf32>
    %31 = tpu.matmul %29, %30, %cst_11 {dimension_numbers = #tpu.dot_dimension_numbers<[1], [0], [0], [1], [0, 0, 1, 1], [], []>} : vector<128x128xbf16>, vector<128x128xbf16>, vector<128x128xf32> -> vector<128x128xf32>
    %c0_12 = arith.constant 0 : index
    %c0_13 = arith.constant 0 : index
    %32 = vector.load %arg6[%c0_12, %c0_13] : memref<1x128xf32, #tpu.memory_space<vmem>>, vector<1x128xf32>
    %33 = vector.broadcast %32 : vector<1x128xf32> to vector<128x128xf32>
    %34 = arith.addf %31, %33 : vector<128x128xf32>
    %cst_14 = arith.constant 0.000000e+00 : f32
    %35 = vector.broadcast %cst_14 : f32 to vector<128x128xf32>
    %36 = arith.maximumf %34, %35 : vector<128x128xf32>
    %37 = arith.truncf %36 : vector<128x128xf32> to vector<128x128xbf16>
    %c0_15 = arith.constant 0 : index
    %c0_16 = arith.constant 0 : index
    %38 = vector.load %arg7[%c0_15, %c0_16] : memref<128x256xbf16, #tpu.memory_space<vmem>>, vector<128x256xbf16>
    %cst_17 = arith.constant dense<0.000000e+00> : vector<128x256xf32>
    %39 = tpu.matmul %37, %38, %cst_17 {dimension_numbers = #tpu.dot_dimension_numbers<[1], [0], [0], [1], [0, 0, 1, 1], [], []>} : vector<128x128xbf16>, vector<128x256xbf16>, vector<128x256xf32> -> vector<128x256xf32>
    %c0_18 = arith.constant 0 : index
    %c0_19 = arith.constant 0 : index
    %40 = vector.load %arg8[%c0_18, %c0_19] : memref<1x256xf32, #tpu.memory_space<vmem>>, vector<1x256xf32>
    %41 = vector.broadcast %40 : vector<1x256xf32> to vector<128x256xf32>
    %42 = arith.addf %39, %41 : vector<128x256xf32>
    %43 = vector.shape_cast %42 : vector<128x256xf32> to vector<16x8x256xf32>
    %cst_20 = arith.constant dense<0xFF800000> : vector<16x256xf32>
    %44 = vector.multi_reduction <maximumf>, %43, %cst_20 [1] : vector<16x8x256xf32> to vector<16x256xf32>
    %45 = arith.truncf %44 : vector<16x256xf32> to vector<16x256xbf16>
    %c0_21 = arith.constant 0 : index
    %c0_22 = arith.constant 0 : index
    %46 = vector.load %arg9[%c0_21, %c0_22] : memref<16x256xbf16, #tpu.memory_space<vmem>>, vector<16x256xbf16>
    tpu.vector_store %arg9[%c0_21, %c0_22], %45 {strides = array<i32>} : memref<16x256xbf16, #tpu.memory_space<vmem>>, vector<16x256xbf16>,
    return
  }
  func.func @transform_0(%arg0: i32) -> (i32, i32, i32) {
    %c0_i32 = arith.constant 0 : i32
    %c0_i32_0 = arith.constant 0 : i32
    %c0_i32_1 = arith.constant 0 : i32
    return %arg0, %c0_i32, %c0_i32_0 : i32, i32, i32
  }
  func.func @transform_1(%arg0: i32) -> (i32, i32, i32) {
    %c0_i32 = arith.constant 0 : i32
    %c0_i32_0 = arith.constant 0 : i32
    %c0_i32_1 = arith.constant 0 : i32
    return %arg0, %c0_i32, %c0_i32_0 : i32, i32, i32
  }
  func.func @transform_2(%arg0: i32) -> (i32, i32) {
    %c0_i32 = arith.constant 0 : i32
    %c0_i32_0 = arith.constant 0 : i32
    %c0_i32_1 = arith.constant 0 : i32
    return %c0_i32, %c0_i32_0 : i32, i32
  }
  func.func @transform_3(%arg0: i32) -> (i32, i32) {
    %c0_i32 = arith.constant 0 : i32
    %c0_i32_0 = arith.constant 0 : i32
    %c0_i32_1 = arith.constant 0 : i32
    return %c0_i32, %c0_i32_0 : i32, i32
  }
  func.func @transform_4(%arg0: i32) -> (i32, i32) {
    %c0_i32 = arith.constant 0 : i32
    %c0_i32_0 = arith.constant 0 : i32
    %c0_i32_1 = arith.constant 0 : i32
    return %c0_i32, %c0_i32_0 : i32, i32
  }
  func.func @transform_5(%arg0: i32) -> (i32, i32) {
    %c0_i32 = arith.constant 0 : i32
    %c0_i32_0 = arith.constant 0 : i32
    %c0_i32_1 = arith.constant 0 : i32
    return %c0_i32, %c0_i32_0 : i32, i32
  }
  func.func @transform_6(%arg0: i32) -> (i32, i32) {
    %c0_i32 = arith.constant 0 : i32
    %c0_i32_0 = arith.constant 0 : i32
    %c0_i32_1 = arith.constant 0 : i32
    return %c0_i32, %c0_i32_0 : i32, i32
  }
  func.func @transform_7(%arg0: i32) -> (i32, i32) {
    %c0_i32 = arith.constant 0 : i32
    %c0_i32_0 = arith.constant 0 : i32
    %c0_i32_1 = arith.constant 0 : i32
    return %c0_i32, %c0_i32_0 : i32, i32
  }
  func.func @transform_8(%arg0: i32) -> (i32, i32) {
    %c0_i32 = arith.constant 0 : i32
    %c0_i32_0 = arith.constant 0 : i32
    return %arg0, %c0_i32 : i32, i32
  }
}

module attributes {stable_mosaic.version = 11 : i64} {
  func.func @kernel(%arg0: i32, %arg1: memref<16x8x256xbf16, #tpu.memory_space<vmem>>, %arg2: memref<16x8x3xf32, #tpu.memory_space<vmem>>, %arg3: memref<256x256xbf16, #tpu.memory_space<vmem>>, %arg4: memref<3x256xf32, #tpu.memory_space<vmem>>, %arg5: memref<1x256xf32, #tpu.memory_space<vmem>>, %arg6: memref<256x512xbf16, #tpu.memory_space<vmem>>, %arg7: memref<1x512xf32, #tpu.memory_space<vmem>>, %arg8: memref<512x1024xbf16, #tpu.memory_space<vmem>>, %arg9: memref<1x1024xf32, #tpu.memory_space<vmem>>, %arg10: memref<16x1024xbf16, #tpu.memory_space<vmem>>) attributes {dimension_semantics = [#tpu.dimension_semantics<parallel>], iteration_bounds = array<i64: 1>, scalar_prefetch = 0 : i64, scratch_operands = 0 : i64, tpu.core_type = #tpu.core_type<tc>, window_params = [{transform_indices = @transform_0, window_bounds = array<i64: 16, 8, 256>}, {transform_indices = @transform_1, window_bounds = array<i64: 16, 8, 3>}, {pipeline_mode = #tpu.pipeline_mode<synchronous>, transform_indices = @transform_2, window_bounds = array<i64: 256, 256>}, {pipeline_mode = #tpu.pipeline_mode<synchronous>, transform_indices = @transform_3, window_bounds = array<i64: 3, 256>}, {pipeline_mode = #tpu.pipeline_mode<synchronous>, transform_indices = @transform_4, window_bounds = array<i64: 1, 256>}, {pipeline_mode = #tpu.pipeline_mode<synchronous>, transform_indices = @transform_5, window_bounds = array<i64: 256, 512>}, {pipeline_mode = #tpu.pipeline_mode<synchronous>, transform_indices = @transform_6, window_bounds = array<i64: 1, 512>}, {pipeline_mode = #tpu.pipeline_mode<synchronous>, transform_indices = @transform_7, window_bounds = array<i64: 512, 1024>}, {pipeline_mode = #tpu.pipeline_mode<synchronous>, transform_indices = @transform_8, window_bounds = array<i64: 1, 1024>}, {transform_indices = @transform_9, window_bounds = array<i64: 16, 1024>}]} {
    %c0 = arith.constant 0 : index
    %c0_0 = arith.constant 0 : index
    %0 = vector.load %arg5[%c0, %c0_0] : memref<1x256xf32, #tpu.memory_space<vmem>>, vector<1x256xf32>
    %c0_1 = arith.constant 0 : index
    %c0_2 = arith.constant 0 : index
    %c0_3 = arith.constant 0 : index
    %1 = vector.load %arg1[%c0_1, %c0_2, %c0_3] : memref<16x8x256xbf16, #tpu.memory_space<vmem>>, vector<16x8x256xbf16>
    %2 = vector.shape_cast %1 : vector<16x8x256xbf16> to vector<128x256xbf16>
    %c0_4 = arith.constant 0 : index
    %c0_5 = arith.constant 0 : index
    %3 = vector.load %arg3[%c0_4, %c0_5] : memref<256x256xbf16, #tpu.memory_space<vmem>>, vector<256x256xbf16>
    %cst = arith.constant dense<0.000000e+00> : vector<128x256xf32>
    %4 = tpu.matmul %2, %3, %cst {dimension_numbers = #tpu.dot_dimension_numbers<[1], [0], [0], [1], [0, 0, 1, 1], [], []>} : vector<128x256xbf16>, vector<256x256xbf16>, vector<128x256xf32> -> vector<128x256xf32>
    %5 = vector.broadcast %0 : vector<1x256xf32> to vector<128x256xf32>
    %6 = arith.addf %4, %5 : vector<128x256xf32>
    %c0_6 = arith.constant 0 : index
    %c0_7 = arith.constant 0 : index
    %c0_8 = arith.constant 0 : index
    %7 = vector.load %arg2[%c0_6, %c0_7, %c0_8] : memref<16x8x3xf32, #tpu.memory_space<vmem>>, vector<16x8x3xf32>
    %8 = vector.shape_cast %7 : vector<16x8x3xf32> to vector<128x3xf32>
    %c0_9 = arith.constant 0 : index
    %c0_10 = arith.constant 0 : index
    %9 = vector.load %arg4[%c0_9, %c0_10] : memref<3x256xf32, #tpu.memory_space<vmem>>, vector<3x256xf32>
    %10 = vector.extract_strided_slice %8 {offsets = [0, 0], sizes = [128, 1], strides = [1, 1]} : vector<128x3xf32> to vector<128x1xf32>
    %11 = vector.extract_strided_slice %9 {offsets = [0, 0], sizes = [1, 256], strides = [1, 1]} : vector<3x256xf32> to vector<1x256xf32>
    %12 = vector.broadcast %10 : vector<128x1xf32> to vector<128x256xf32>
    %13 = vector.broadcast %11 : vector<1x256xf32> to vector<128x256xf32>
    %14 = arith.mulf %12, %13 : vector<128x256xf32>
    %15 = arith.addf %6, %14 : vector<128x256xf32>
    %16 = vector.extract_strided_slice %8 {offsets = [0, 1], sizes = [128, 1], strides = [1, 1]} : vector<128x3xf32> to vector<128x1xf32>
    %17 = vector.extract_strided_slice %9 {offsets = [1, 0], sizes = [1, 256], strides = [1, 1]} : vector<3x256xf32> to vector<1x256xf32>
    %18 = vector.broadcast %16 : vector<128x1xf32> to vector<128x256xf32>
    %19 = vector.broadcast %17 : vector<1x256xf32> to vector<128x256xf32>
    %20 = arith.mulf %18, %19 : vector<128x256xf32>
    %21 = arith.addf %15, %20 : vector<128x256xf32>
    %22 = vector.extract_strided_slice %8 {offsets = [0, 2], sizes = [128, 1], strides = [1, 1]} : vector<128x3xf32> to vector<128x1xf32>
    %23 = vector.extract_strided_slice %9 {offsets = [2, 0], sizes = [1, 256], strides = [1, 1]} : vector<3x256xf32> to vector<1x256xf32>
    %24 = vector.broadcast %22 : vector<128x1xf32> to vector<128x256xf32>
    %25 = vector.broadcast %23 : vector<1x256xf32> to vector<128x256xf32>
    %26 = arith.mulf %24, %25 : vector<128x256xf32>
    %27 = arith.addf %21, %26 : vector<128x256xf32>
    %cst_11 = arith.constant 0.000000e+00 : f32
    %28 = vector.broadcast %cst_11 : f32 to vector<128x256xf32>
    %29 = arith.maximumf %27, %28 : vector<128x256xf32>
    %30 = arith.truncf %29 : vector<128x256xf32> to vector<128x256xbf16>
    %c0_12 = arith.constant 0 : index
    %c0_13 = arith.constant 0 : index
    %31 = vector.load %arg6[%c0_12, %c0_13] : memref<256x512xbf16, #tpu.memory_space<vmem>>, vector<256x512xbf16>
    %cst_14 = arith.constant dense<0.000000e+00> : vector<128x512xf32>
    %32 = tpu.matmul %30, %31, %cst_14 {dimension_numbers = #tpu.dot_dimension_numbers<[1], [0], [0], [1], [0, 0, 1, 1], [], []>} : vector<128x256xbf16>, vector<256x512xbf16>, vector<128x512xf32> -> vector<128x512xf32>
    %c0_15 = arith.constant 0 : index
    %c0_16 = arith.constant 0 : index
    %33 = vector.load %arg7[%c0_15, %c0_16] : memref<1x512xf32, #tpu.memory_space<vmem>>, vector<1x512xf32>
    %34 = vector.broadcast %33 : vector<1x512xf32> to vector<128x512xf32>
    %35 = arith.addf %32, %34 : vector<128x512xf32>
    %cst_17 = arith.constant 0.000000e+00 : f32
    %36 = vector.broadcast %cst_17 : f32 to vector<128x512xf32>
    %37 = arith.maximumf %35, %36 : vector<128x512xf32>
    %38 = arith.truncf %37 : vector<128x512xf32> to vector<128x512xbf16>
    %c0_18 = arith.constant 0 : index
    %c0_19 = arith.constant 0 : index
    %39 = vector.load %arg8[%c0_18, %c0_19] : memref<512x1024xbf16, #tpu.memory_space<vmem>>, vector<512x1024xbf16>
    %cst_20 = arith.constant dense<0.000000e+00> : vector<128x1024xf32>
    %40 = tpu.matmul %38, %39, %cst_20 {dimension_numbers = #tpu.dot_dimension_numbers<[1], [0], [0], [1], [0, 0, 1, 1], [], []>} : vector<128x512xbf16>, vector<512x1024xbf16>, vector<128x1024xf32> -> vector<128x1024xf32>
    %c0_21 = arith.constant 0 : index
    %c0_22 = arith.constant 0 : index
    %41 = vector.load %arg9[%c0_21, %c0_22] : memref<1x1024xf32, #tpu.memory_space<vmem>>, vector<1x1024xf32>
    %42 = vector.broadcast %41 : vector<1x1024xf32> to vector<128x1024xf32>
    %43 = arith.addf %40, %42 : vector<128x1024xf32>
    %44 = vector.shape_cast %43 : vector<128x1024xf32> to vector<16x8x1024xf32>
    %cst_23 = arith.constant dense<0xFF800000> : vector<16x1024xf32>
    %45 = vector.multi_reduction <maximumf>, %44, %cst_23 [1] : vector<16x8x1024xf32> to vector<16x1024xf32>
    %46 = arith.truncf %45 : vector<16x1024xf32> to vector<16x1024xbf16>
    %c0_24 = arith.constant 0 : index
    %c0_25 = arith.constant 0 : index
    %47 = vector.load %arg10[%c0_24, %c0_25] : memref<16x1024xbf16, #tpu.memory_space<vmem>>, vector<16x1024xbf16>
    tpu.vector_store %arg10[%c0_24, %c0_25], %46 {strides = array<i32>} : memref<16x1024xbf16, #tpu.memory_space<vmem>>, vector<16x1024xbf16>,
    return
  }
  func.func @transform_0(%arg0: i32) -> (i32, i32, i32) {
    %c0_i32 = arith.constant 0 : i32
    %c0_i32_0 = arith.constant 0 : i32
    %c0_i32_1 = arith.constant 0 : i32
    return %arg0, %c0_i32, %c0_i32_0 : i32, i32, i32
  }
  func.func @transform_1(%arg0: i32) -> (i32, i32, i32) {
    %c0_i32 = arith.constant 0 : i32
    %c0_i32_0 = arith.constant 0 : i32
    %c0_i32_1 = arith.constant 0 : i32
    return %arg0, %c0_i32, %c0_i32_0 : i32, i32, i32
  }
  func.func @transform_2(%arg0: i32) -> (i32, i32) {
    %c0_i32 = arith.constant 0 : i32
    %c0_i32_0 = arith.constant 0 : i32
    %c0_i32_1 = arith.constant 0 : i32
    return %c0_i32, %c0_i32_0 : i32, i32
  }
  func.func @transform_3(%arg0: i32) -> (i32, i32) {
    %c0_i32 = arith.constant 0 : i32
    %c0_i32_0 = arith.constant 0 : i32
    %c0_i32_1 = arith.constant 0 : i32
    return %c0_i32, %c0_i32_0 : i32, i32
  }
  func.func @transform_4(%arg0: i32) -> (i32, i32) {
    %c0_i32 = arith.constant 0 : i32
    %c0_i32_0 = arith.constant 0 : i32
    %c0_i32_1 = arith.constant 0 : i32
    return %c0_i32, %c0_i32_0 : i32, i32
  }
  func.func @transform_5(%arg0: i32) -> (i32, i32) {
    %c0_i32 = arith.constant 0 : i32
    %c0_i32_0 = arith.constant 0 : i32
    %c0_i32_1 = arith.constant 0 : i32
    return %c0_i32, %c0_i32_0 : i32, i32
  }
  func.func @transform_6(%arg0: i32) -> (i32, i32) {
    %c0_i32 = arith.constant 0 : i32
    %c0_i32_0 = arith.constant 0 : i32
    %c0_i32_1 = arith.constant 0 : i32
    return %c0_i32, %c0_i32_0 : i32, i32
  }
  func.func @transform_7(%arg0: i32) -> (i32, i32) {
    %c0_i32 = arith.constant 0 : i32
    %c0_i32_0 = arith.constant 0 : i32
    %c0_i32_1 = arith.constant 0 : i32
    return %c0_i32, %c0_i32_0 : i32, i32
  }
  func.func @transform_8(%arg0: i32) -> (i32, i32) {
    %c0_i32 = arith.constant 0 : i32
    %c0_i32_0 = arith.constant 0 : i32
    %c0_i32_1 = arith.constant 0 : i32
    return %c0_i32, %c0_i32_0 : i32, i32
  }
  func.func @transform_9(%arg0: i32) -> (i32, i32) {
    %c0_i32 = arith.constant 0 : i32
    %c0_i32_0 = arith.constant 0 : i32
    return %arg0, %c0_i32 : i32, i32
  }
}

module attributes {stable_mosaic.version = 11 : i64} {
  func.func @_mlp3_kernel(%arg0: i32, %arg1: memref<2x1024xbf16, #tpu.memory_space<vmem>>, %arg2: memref<1024x512xbf16, #tpu.memory_space<vmem>>, %arg3: memref<1x512xf32, #tpu.memory_space<vmem>>, %arg4: memref<512x256xbf16, #tpu.memory_space<vmem>>, %arg5: memref<1x256xf32, #tpu.memory_space<vmem>>, %arg6: memref<256x128xbf16, #tpu.memory_space<vmem>>, %arg7: memref<1x128xf32, #tpu.memory_space<vmem>>, %arg8: memref<2x128xf32, #tpu.memory_space<vmem>>) attributes {dimension_semantics = [#tpu.dimension_semantics<arbitrary>], iteration_bounds = array<i64: 1>, scalar_prefetch = 0 : i64, scratch_operands = 0 : i64, tpu.core_type = #tpu.core_type<tc>, window_params = [{pipeline_mode = #tpu.pipeline_mode<synchronous>, transform_indices = @transform_0, window_bounds = array<i64: 2, 1024>}, {pipeline_mode = #tpu.pipeline_mode<synchronous>, transform_indices = @transform_1, window_bounds = array<i64: 1024, 512>}, {pipeline_mode = #tpu.pipeline_mode<synchronous>, transform_indices = @transform_2, window_bounds = array<i64: 1, 512>}, {pipeline_mode = #tpu.pipeline_mode<synchronous>, transform_indices = @transform_3, window_bounds = array<i64: 512, 256>}, {pipeline_mode = #tpu.pipeline_mode<synchronous>, transform_indices = @transform_4, window_bounds = array<i64: 1, 256>}, {pipeline_mode = #tpu.pipeline_mode<synchronous>, transform_indices = @transform_5, window_bounds = array<i64: 256, 128>}, {pipeline_mode = #tpu.pipeline_mode<synchronous>, transform_indices = @transform_6, window_bounds = array<i64: 1, 128>}, {pipeline_mode = #tpu.pipeline_mode<synchronous>, transform_indices = @transform_7, window_bounds = array<i64: 2, 128>}]} {
    %c0 = arith.constant 0 : index
    %c0_0 = arith.constant 0 : index
    %0 = vector.load %arg1[%c0, %c0_0] : memref<2x1024xbf16, #tpu.memory_space<vmem>>, vector<2x1024xbf16>
    %c0_1 = arith.constant 0 : index
    %c0_2 = arith.constant 0 : index
    %1 = vector.load %arg2[%c0_1, %c0_2] : memref<1024x512xbf16, #tpu.memory_space<vmem>>, vector<1024x512xbf16>
    %cst = arith.constant dense<0.000000e+00> : vector<2x512xf32>
    %2 = tpu.matmul %0, %1, %cst {dimension_numbers = #tpu.dot_dimension_numbers<[1], [0], [0], [1], [0, 0, 1, 1], [], []>} : vector<2x1024xbf16>, vector<1024x512xbf16>, vector<2x512xf32> -> vector<2x512xf32>
    %c0_3 = arith.constant 0 : index
    %c0_4 = arith.constant 0 : index
    %3 = vector.load %arg3[%c0_3, %c0_4] : memref<1x512xf32, #tpu.memory_space<vmem>>, vector<1x512xf32>
    %4 = vector.broadcast %3 : vector<1x512xf32> to vector<2x512xf32>
    %5 = arith.addf %2, %4 : vector<2x512xf32>
    %cst_5 = arith.constant 0.000000e+00 : f32
    %6 = vector.broadcast %cst_5 : f32 to vector<2x512xf32>
    %7 = arith.maximumf %5, %6 : vector<2x512xf32>
    %8 = arith.truncf %7 : vector<2x512xf32> to vector<2x512xbf16>
    %c0_6 = arith.constant 0 : index
    %c0_7 = arith.constant 0 : index
    %9 = vector.load %arg4[%c0_6, %c0_7] : memref<512x256xbf16, #tpu.memory_space<vmem>>, vector<512x256xbf16>
    %cst_8 = arith.constant dense<0.000000e+00> : vector<2x256xf32>
    %10 = tpu.matmul %8, %9, %cst_8 {dimension_numbers = #tpu.dot_dimension_numbers<[1], [0], [0], [1], [0, 0, 1, 1], [], []>} : vector<2x512xbf16>, vector<512x256xbf16>, vector<2x256xf32> -> vector<2x256xf32>
    %c0_9 = arith.constant 0 : index
    %c0_10 = arith.constant 0 : index
    %11 = vector.load %arg5[%c0_9, %c0_10] : memref<1x256xf32, #tpu.memory_space<vmem>>, vector<1x256xf32>
    %12 = vector.broadcast %11 : vector<1x256xf32> to vector<2x256xf32>
    %13 = arith.addf %10, %12 : vector<2x256xf32>
    %cst_11 = arith.constant 0.000000e+00 : f32
    %14 = vector.broadcast %cst_11 : f32 to vector<2x256xf32>
    %15 = arith.maximumf %13, %14 : vector<2x256xf32>
    %16 = arith.truncf %15 : vector<2x256xf32> to vector<2x256xbf16>
    %c0_12 = arith.constant 0 : index
    %c0_13 = arith.constant 0 : index
    %17 = vector.load %arg6[%c0_12, %c0_13] : memref<256x128xbf16, #tpu.memory_space<vmem>>, vector<256x128xbf16>
    %cst_14 = arith.constant dense<0.000000e+00> : vector<2x128xf32>
    %18 = tpu.matmul %16, %17, %cst_14 {dimension_numbers = #tpu.dot_dimension_numbers<[1], [0], [0], [1], [0, 0, 1, 1], [], []>} : vector<2x256xbf16>, vector<256x128xbf16>, vector<2x128xf32> -> vector<2x128xf32>
    %c0_15 = arith.constant 0 : index
    %c0_16 = arith.constant 0 : index
    %19 = vector.load %arg7[%c0_15, %c0_16] : memref<1x128xf32, #tpu.memory_space<vmem>>, vector<1x128xf32>
    %20 = vector.broadcast %19 : vector<1x128xf32> to vector<2x128xf32>
    %21 = arith.addf %18, %20 : vector<2x128xf32>
    %c0_17 = arith.constant 0 : index
    %c0_18 = arith.constant 0 : index
    %22 = vector.load %arg8[%c0_17, %c0_18] : memref<2x128xf32, #tpu.memory_space<vmem>>, vector<2x128xf32>
    tpu.vector_store %arg8[%c0_17, %c0_18], %21 {strides = array<i32>} : memref<2x128xf32, #tpu.memory_space<vmem>>, vector<2x128xf32>,
    return
  }
  func.func @transform_0(%arg0: i32) -> (i32, i32) {
    %c0_i32 = arith.constant 0 : i32
    %c0_i32_0 = arith.constant 0 : i32
    %c0_i32_1 = arith.constant 0 : i32
    return %c0_i32, %c0_i32_0 : i32, i32
  }
  func.func @transform_1(%arg0: i32) -> (i32, i32) {
    %c0_i32 = arith.constant 0 : i32
    %c0_i32_0 = arith.constant 0 : i32
    %c0_i32_1 = arith.constant 0 : i32
    return %c0_i32, %c0_i32_0 : i32, i32
  }
  func.func @transform_2(%arg0: i32) -> (i32, i32) {
    %c0_i32 = arith.constant 0 : i32
    %c0_i32_0 = arith.constant 0 : i32
    %c0_i32_1 = arith.constant 0 : i32
    return %c0_i32, %c0_i32_0 : i32, i32
  }
  func.func @transform_3(%arg0: i32) -> (i32, i32) {
    %c0_i32 = arith.constant 0 : i32
    %c0_i32_0 = arith.constant 0 : i32
    %c0_i32_1 = arith.constant 0 : i32
    return %c0_i32, %c0_i32_0 : i32, i32
  }
  func.func @transform_4(%arg0: i32) -> (i32, i32) {
    %c0_i32 = arith.constant 0 : i32
    %c0_i32_0 = arith.constant 0 : i32
    %c0_i32_1 = arith.constant 0 : i32
    return %c0_i32, %c0_i32_0 : i32, i32
  }
  func.func @transform_5(%arg0: i32) -> (i32, i32) {
    %c0_i32 = arith.constant 0 : i32
    %c0_i32_0 = arith.constant 0 : i32
    %c0_i32_1 = arith.constant 0 : i32
    return %c0_i32, %c0_i32_0 : i32, i32
  }
  func.func @transform_6(%arg0: i32) -> (i32, i32) {
    %c0_i32 = arith.constant 0 : i32
    %c0_i32_0 = arith.constant 0 : i32
    %c0_i32_1 = arith.constant 0 : i32
    return %c0_i32, %c0_i32_0 : i32, i32
  }
  func.func @transform_7(%arg0: i32) -> (i32, i32) {
    %c0_i32 = arith.constant 0 : i32
    %c0_i32_0 = arith.constant 0 : i32
    %c0_i32_1 = arith.constant 0 : i32
    return %c0_i32, %c0_i32_0 : i32, i32
  }
}

</mosaic_0001>

<llo_original>
// kernel: custom-call.20
$region0: #{custom-call.20}
  %s0 = inlined_call_operand.vmem [shape: f32[2,16], index: 0, kind: output, shape index: {}]

// kernel: a_call__.4
$region0: #{a_call__.4}
  #allocation0 [shape = 'u32[]', space=smem, size = 0x4, offset = 0x4, fixed_abs, tag = 'smem constant byte address 0x4 - core index']
  #allocation1 [shape = 'u32[144,128]{1,0:T(1,128)}', space=vmem, size = 0x12000, scoped, tag = 'internal scratch']
  %s0 = inlined_call_operand.hbm [shape: bf16[16,16,4], index: 0, kind: input, shape index: {}]
  %s1 = inlined_call_operand.hbm [shape: f32[16,16,3], index: 1, kind: input, shape index: {}]
  %s2 = inlined_call_operand.hbm [shape: f32[4,128], index: 2, kind: input, shape index: {}]
  %s3 = inlined_call_operand.hbm [shape: f32[3,128], index: 3, kind: input, shape index: {}]
  %s4 = inlined_call_operand.hbm [shape: f32[1,128], index: 4, kind: input, shape index: {}]
  %s5 = inlined_call_operand.hbm [shape: bf16[128,128], index: 5, kind: input, shape index: {}]
  %s6 = inlined_call_operand.hbm [shape: f32[1,128], index: 6, kind: input, shape index: {}]
  %s7 = inlined_call_operand.hbm [shape: bf16[128,128], index: 7, kind: input, shape index: {}]
  %s8 = inlined_call_operand.hbm [shape: f32[1,128], index: 8, kind: input, shape index: {}]
  %s9 = inlined_call_operand.hbm [shape: bf16[16,128], index: 9, kind: output, shape index: {}]
  %s10 = sld [smem:[#allocation0]]
  $region82: #{a_call__.4} parent=0
    _
  %s12 = ssub.s32 1, %s10
  %s13 = scalar_select 0, %s12, %s10
  $region1: #{a_call__.4} parent=0
    #allocation2 [shape = 'u8[65536]{0}', space=vmem, size = 0x10000, scoped, tag = 'input window, operand 0, single buffered']
    #allocation3 [shape = 's32[1]{0}', space=sflag, size = 0x4, scoped, tag = 'scoped memory for a_call__.4']
    #allocation4 [shape = 's32[1]{0}', space=sflag, size = 0x4, scoped, tag = 'scoped memory for a_call__.4']
    #allocation5 [shape = 'u8[131072]{0}', space=vmem, size = 0x20000, scoped, tag = 'input window, operand 1, single buffered']
    #allocation6 [shape = 's32[1]{0}', space=sflag, size = 0x4, scoped, tag = 'scoped memory for a_call__.4']
    #allocation7 [shape = 'u8[2048]{0}', space=vmem, size = 0x800, scoped, tag = 'input window, operand 2, single buffered']
    #allocation8 [shape = 'u8[2048]{0}', space=vmem, size = 0x800, scoped, tag = 'input window, operand 3, single buffered']
    #allocation9 [shape = 's32[1]{0}', space=sflag, size = 0x4, scoped, tag = 'scoped memory for a_call__.4']
    #allocation10 [shape = 'u8[512]{0}', space=vmem, size = 0x400, scoped, tag = 'input window, operand 4, single buffered']
    #allocation11 [shape = 'u8[32768]{0}', space=vmem, size = 0x8000, scoped, tag = 'input window, operand 5, single buffered']
    #allocation12 [shape = 's32[1]{0}', space=sflag, size = 0x4, scoped, tag = 'scoped memory for a_call__.4']
    #allocation13 [shape = 'u8[512]{0}', space=vmem, size = 0x400, scoped, tag = 'input window, operand 6, single buffered']
    #allocation14 [shape = 'u8[32768]{0}', space=vmem, size = 0x8000, scoped, tag = 'input window, operand 7, single buffered']
    #allocation15 [shape = 's32[1]{0}', space=sflag, size = 0x4, scoped, tag = 'scoped memory for a_call__.4']
    #allocation16 [shape = 'u8[512]{0}', space=vmem, size = 0x400, scoped, tag = 'input window, operand 8, single buffered']
    #allocation17 [shape = 'u8[4096]{0}', space=vmem, size = 0x1000, scoped, tag = 'output window, operand 0, single buffered']
    %14 = vsyncpa [#allocation3], 0
    %15 = vsyncpa [#allocation6], 0
    %16 = vsyncpa [#allocation9], 0
    %17 = vsyncpa [#allocation12], 0
    %18 = vsyncpa [#allocation15], 0
    %19 = vsyncpa [#allocation4], 0
    // Predicated region
    $region2: #{a_call__.4} parent=1 // pred_check
      _
    $region3: #{a_call__.4} parent=1 // pred_check_branch
      %21 = sbr.rel (0) target = $region5
    $region4: #{a_call__.4} parent=1 // pred_region
      %s23 = ssub.s32 2048, 2048
      %24 = vsyncadd [#allocation3], %s23
      %s25 = sshll.u32 [#allocation2], 4
      %s26 = int_to_ptr.vmem [resolvable:$true] %s25
      %31 = dma.hbm_to_vmem [thread:$0]  %s0, 2048, %s26, [#allocation3], 64, 64, 4
    $region5: #{a_call__.4} parent=1 // pred_fallthru
      _
    // Predicated region
    $region6: #{a_call__.4} parent=1 // pred_check
      _
    $region7: #{a_call__.4} parent=1 // pred_check_branch
      %33 = sbr.rel (0) target = $region9
    $region8: #{a_call__.4} parent=1 // pred_region
      %s35 = ssub.s32 4096, 4096
      %36 = vsyncadd [#allocation6], %s35
      %s37 = sshll.u32 [#allocation5], 4
      %s38 = int_to_ptr.vmem [resolvable:$true] %s37
      %43 = dma.hbm_to_vmem [thread:$0]  %s1, 4096, %s38, [#allocation6], 128, 128, 8
    $region9: #{a_call__.4} parent=1 // pred_fallthru
      _
    // Predicated region
    $region10: #{a_call__.4} parent=1 // pred_check
      _
    $region11: #{a_call__.4} parent=1 // pred_check_branch
      %45 = sbr.rel (0) target = $region13
    $region12: #{a_call__.4} parent=1 // pred_region
      %s47 = ssub.s32 64, 64
      %48 = vsyncadd [#allocation6], %s47
      %s50 = sshll.u32 [#allocation7], 4
      %s51 = int_to_ptr.vmem [resolvable:$true] %s50
      %53 = dma.hbm_to_vmem [thread:$0]  %s2, 64, %s51, [#allocation6]
    $region13: #{a_call__.4} parent=1 // pred_fallthru
      _
    // Predicated region
    $region14: #{a_call__.4} parent=1 // pred_check
      _
    $region15: #{a_call__.4} parent=1 // pred_check_branch
      %55 = sbr.rel (0) target = $region17
    $region16: #{a_call__.4} parent=1 // pred_region
      %s57 = ssub.s32 64, 64
      %58 = vsyncadd [#allocation9], %s57
      %s60 = sshll.u32 [#allocation8], 4
      %s61 = int_to_ptr.vmem [resolvable:$true] %s60
      %63 = dma.hbm_to_vmem [thread:$0]  %s3, 64, %s61, [#allocation9]
    $region17: #{a_call__.4} parent=1 // pred_fallthru
      _
    // Predicated region
    $region18: #{a_call__.4} parent=1 // pred_check
      _
    $region19: #{a_call__.4} parent=1 // pred_check_branch
      %65 = sbr.rel (0) target = $region21
    $region20: #{a_call__.4} parent=1 // pred_region
      %s67 = ssub.s32 16, 16
      %68 = vsyncadd [#allocation9], %s67
      %s70 = sshll.u32 [#allocation10], 4
      %s71 = int_to_ptr.vmem [resolvable:$true] %s70
      %73 = dma.hbm_to_vmem [thread:$0]  %s4, 16, %s71, [#allocation9]
    $region21: #{a_call__.4} parent=1 // pred_fallthru
      _
    // Predicated region
    $region22: #{a_call__.4} parent=1 // pred_check
      _
    $region23: #{a_call__.4} parent=1 // pred_check_branch
      %75 = sbr.rel (0) target = $region25
    $region24: #{a_call__.4} parent=1 // pred_region
      %s77 = ssub.s32 1024, 1024
      %78 = vsyncadd [#allocation12], %s77
      %s79 = sshll.u32 [#allocation11], 4
      %s80 = int_to_ptr.vmem [resolvable:$true] %s79
      %85 = dma.hbm_to_vmem [thread:$0]  %s5, 1024, %s80, [#allocation12], 64, 64, 4
    $region25: #{a_call__.4} parent=1 // pred_fallthru
      _
    // Predicated region
    $region26: #{a_call__.4} parent=1 // pred_check
      _
    $region27: #{a_call__.4} parent=1 // pred_check_branch
      %87 = sbr.rel (0) target = $region29
    $region28: #{a_call__.4} parent=1 // pred_region
      %s89 = ssub.s32 16, 16
      %90 = vsyncadd [#allocation12], %s89
      %s92 = sshll.u32 [#allocation13], 4
      %s93 = int_to_ptr.vmem [resolvable:$true] %s92
      %95 = dma.hbm_to_vmem [thread:$0]  %s6, 16, %s93, [#allocation12]
    $region29: #{a_call__.4} parent=1 // pred_fallthru
      _
    // Predicated region
    $region30: #{a_call__.4} parent=1 // pred_check
      _
    $region31: #{a_call__.4} parent=1 // pred_check_branch
      %97 = sbr.rel (0) target = $region33
    $region32: #{a_call__.4} parent=1 // pred_region
      %s99 = ssub.s32 1024, 1024
      %100 = vsyncadd [#allocation15], %s99
      %s101 = sshll.u32 [#allocation14], 4
      %s102 = int_to_ptr.vmem [resolvable:$true] %s101
      %107 = dma.hbm_to_vmem [thread:$0]  %s7, 1024, %s102, [#allocation15], 64, 64, 4
    $region33: #{a_call__.4} parent=1 // pred_fallthru
      _
    // Predicated region
    $region34: #{a_call__.4} parent=1 // pred_check
      _
    $region35: #{a_call__.4} parent=1 // pred_check_branch
      %109 = sbr.rel (0) target = $region37
    $region36: #{a_call__.4} parent=1 // pred_region
      %s111 = ssub.s32 16, 16
      %112 = vsyncadd [#allocation15], %s111
      %s114 = sshll.u32 [#allocation16], 4
      %s115 = int_to_ptr.vmem [resolvable:$true] %s114
      %117 = dma.hbm_to_vmem [thread:$0]  %s8, 16, %s115, [#allocation15]
    $region37: #{a_call__.4} parent=1 // pred_fallthru
      _
    // Predicated region
    $region38: #{a_call__.4} parent=1 // pred_check
      _
    $region39: #{a_call__.4} parent=1 // pred_check_branch
      %119 = sbr.rel (0) target = $region41
    $region40: #{a_call__.4} parent=1 // pred_region
      %120 = dma.done [#allocation3], 2048
    $region41: #{a_call__.4} parent=1 // pred_fallthru
      _
    // Predicated region
    $region42: #{a_call__.4} parent=1 // pred_check
      _
    $region43: #{a_call__.4} parent=1 // pred_check_branch
      %122 = sbr.rel (0) target = $region45
    $region44: #{a_call__.4} parent=1 // pred_region
      %123 = dma.done [#allocation6], 4096
    $region45: #{a_call__.4} parent=1 // pred_fallthru
      _
    // Predicated region
    $region46: #{a_call__.4} parent=1 // pred_check
      _
    $region47: #{a_call__.4} parent=1 // pred_check_branch
      %125 = sbr.rel (0) target = $region49
    $region48: #{a_call__.4} parent=1 // pred_region
      %126 = dma.done [#allocation6], 64
    $region49: #{a_call__.4} parent=1 // pred_fallthru
      _
    // Predicated region
    $region50: #{a_call__.4} parent=1 // pred_check
      _
    $region51: #{a_call__.4} parent=1 // pred_check_branch
      %128 = sbr.rel (0) target = $region53
    $region52: #{a_call__.4} parent=1 // pred_region
      %129 = dma.done [#allocation9], 64
    $region53: #{a_call__.4} parent=1 // pred_fallthru
      _
    // Predicated region
    $region54: #{a_call__.4} parent=1 // pred_check
      _
    $region55: #{a_call__.4} parent=1 // pred_check_branch
      %131 = sbr.rel (0) target = $region57
    $region56: #{a_call__.4} parent=1 // pred_region
      %132 = dma.done [#allocation9], 16
    $region57: #{a_call__.4} parent=1 // pred_fallthru
      _
    // Predicated region
    $region58: #{a_call__.4} parent=1 // pred_check
      _
    $region59: #{a_call__.4} parent=1 // pred_check_branch
      %134 = sbr.rel (0) target = $region61
    $region60: #{a_call__.4} parent=1 // pred_region
      %135 = dma.done [#allocation12], 1024
    $region61: #{a_call__.4} parent=1 // pred_fallthru
      _
    // Predicated region
    $region62: #{a_call__.4} parent=1 // pred_check
      _
    $region63: #{a_call__.4} parent=1 // pred_check_branch
      %137 = sbr.rel (0) target = $region65
    $region64: #{a_call__.4} parent=1 // pred_region
      %138 = dma.done [#allocation12], 16
    $region65: #{a_call__.4} parent=1 // pred_fallthru
      _
    // Predicated region
    $region66: #{a_call__.4} parent=1 // pred_check
      _
    $region67: #{a_call__.4} parent=1 // pred_check_branch
      %140 = sbr.rel (0) target = $region69
    $region68: #{a_call__.4} parent=1 // pred_region
      %141 = dma.done [#allocation15], 1024
    $region69: #{a_call__.4} parent=1 // pred_fallthru
      _
    // Predicated region
    $region70: #{a_call__.4} parent=1 // pred_check
      _
    $region71: #{a_call__.4} parent=1 // pred_check_branch
      %143 = sbr.rel (0) target = $region73
    $region72: #{a_call__.4} parent=1 // pred_region
      %144 = dma.done [#allocation15], 16
    $region73: #{a_call__.4} parent=1 // pred_fallthru
      _
    %v146 = vld [vmem:[#allocation10] sm:$0x1]
    %v147 = vld [vmem:[#allocation2] sm:$0xf]
    %v148 = vld [vmem:[#allocation2 + $0x4] sm:$0xf]
    %v149 = vld [vmem:[#allocation2 + $0x8] sm:$0xf]
    %v150 = vld [vmem:[#allocation2 + $0xc] sm:$0xf]
    %v151 = vld [vmem:[#allocation2 + $0x10] sm:$0xf]
    %v152 = vld [vmem:[#allocation2 + $0x14] sm:$0xf]
    %v153 = vld [vmem:[#allocation2 + $0x18] sm:$0xf]
    %v154 = vld [vmem:[#allocation2 + $0x1c] sm:$0xf]
    %v155 = vld [vmem:[#allocation2 + $0x20] sm:$0xf]
    %v156 = vld [vmem:[#allocation2 + $0x24] sm:$0xf]
    %v157 = vld [vmem:[#allocation2 + $0x28] sm:$0xf]
    %v158 = vld [vmem:[#allocation2 + $0x2c] sm:$0xf]
    %v159 = vld [vmem:[#allocation2 + $0x30] sm:$0xf]
    %v160 = vld [vmem:[#allocation2 + $0x34] sm:$0xf]
    %v161 = vld [vmem:[#allocation2 + $0x38] sm:$0xf]
    %v162 = vld [vmem:[#allocation2 + $0x3c] sm:$0xf]
    %v163 = vld [vmem:[#allocation2 + $0x40] sm:$0xf]
    %v164 = vld [vmem:[#allocation2 + $0x44] sm:$0xf]
    %v165 = vld [vmem:[#allocation2 + $0x48] sm:$0xf]
    %v166 = vld [vmem:[#allocation2 + $0x4c] sm:$0xf]
    %v167 = vld [vmem:[#allocation2 + $0x50] sm:$0xf]
    %v168 = vld [vmem:[#allocation2 + $0x54] sm:$0xf]
    %v169 = vld [vmem:[#allocation2 + $0x58] sm:$0xf]
    %v170 = vld [vmem:[#allocation2 + $0x5c] sm:$0xf]
    %v171 = vld [vmem:[#allocation2 + $0x60] sm:$0xf]
    %v172 = vld [vmem:[#allocation2 + $0x64] sm:$0xf]
    %v173 = vld [vmem:[#allocation2 + $0x68] sm:$0xf]
    %v174 = vld [vmem:[#allocation2 + $0x6c] sm:$0xf]
    %v175 = vld [vmem:[#allocation2 + $0x70] sm:$0xf]
    %v176 = vld [vmem:[#allocation2 + $0x74] sm:$0xf]
    %v177 = vld [vmem:[#allocation2 + $0x78] sm:$0xf]
    %v178 = vld [vmem:[#allocation2 + $0x7c] sm:$0xf]
    %v179 = vunpack.c.l.bf16 %v147
    %v180 = vunpack.c.l.bf16 %v148
    %v181 = vunpack.c.l.bf16 %v149
    %v182 = vunpack.c.l.bf16 %v150
    %v183 = vunpack.c.l.bf16 %v151
    %v184 = vunpack.c.l.bf16 %v152
    %v185 = vunpack.c.l.bf16 %v153
    %v186 = vunpack.c.l.bf16 %v154
    %v187 = vunpack.c.l.bf16 %v155
    %v188 = vunpack.c.l.bf16 %v156
    %v189 = vunpack.c.l.bf16 %v157
    %v190 = vunpack.c.l.bf16 %v158
    %v191 = vunpack.c.l.bf16 %v159
    %v192 = vunpack.c.l.bf16 %v160
    %v193 = vunpack.c.l.bf16 %v161
    %v194 = vunpack.c.l.bf16 %v162
    %v195 = vunpack.c.l.bf16 %v163
    %v196 = vunpack.c.l.bf16 %v164
    %v197 = vunpack.c.l.bf16 %v165
    %v198 = vunpack.c.l.bf16 %v166
    %v199 = vunpack.c.l.bf16 %v167
    %v200 = vunpack.c.l.bf16 %v168
    %v201 = vunpack.c.l.bf16 %v169
    %v202 = vunpack.c.l.bf16 %v170
    %v203 = vunpack.c.l.bf16 %v171
    %v204 = vunpack.c.l.bf16 %v172
    %v205 = vunpack.c.l.bf16 %v173
    %v206 = vunpack.c.l.bf16 %v174
    %v207 = vunpack.c.l.bf16 %v175
    %v208 = vunpack.c.l.bf16 %v176
    %v209 = vunpack.c.l.bf16 %v177
    %v210 = vunpack.c.l.bf16 %v178
    %v211 = vld [vmem:[#allocation7] sm:$0xf]
    %v213 = vlaneseq
    %v214 = vshrl.u32 %v213, 7
    %v215 = vsub.s32 0, %v214
    %v216 = vrot.slane %v146, %v215
    %219 = vset.pattern.permute.xlu0 0
    %220 = vperm.xlu0 %219, %v179
    %v221 = vpop.permute.xlu0 %220
    %224 = vset.pattern.permute.xlu0 0
    %225 = vperm.xlu0 %224, %v180
    %v226 = vpop.permute.xlu0 %225
    %229 = vset.pattern.permute.xlu0 0
    %230 = vperm.xlu0 %229, %v181
    %v231 = vpop.permute.xlu0 %230
    %234 = vset.pattern.permute.xlu0 0
    %235 = vperm.xlu0 %234, %v182
    %v236 = vpop.permute.xlu0 %235
    %239 = vset.pattern.permute.xlu0 0
    %240 = vperm.xlu0 %239, %v183
    %v241 = vpop.permute.xlu0 %240
    %244 = vset.pattern.permute.xlu0 0
    %245 = vperm.xlu0 %244, %v184
    %v246 = vpop.permute.xlu0 %245
    %249 = vset.pattern.permute.xlu0 0
    %250 = vperm.xlu0 %249, %v185
    %v251 = vpop.permute.xlu0 %250
    %254 = vset.pattern.permute.xlu0 0
    %255 = vperm.xlu0 %254, %v186
    %v256 = vpop.permute.xlu0 %255
    %259 = vset.pattern.permute.xlu0 0
    %260 = vperm.xlu0 %259, %v187
    %v261 = vpop.permute.xlu0 %260
    %264 = vset.pattern.permute.xlu0 0
    %265 = vperm.xlu0 %264, %v188
    %v266 = vpop.permute.xlu0 %265
    %269 = vset.pattern.permute.xlu0 0
    %270 = vperm.xlu0 %269, %v189
    %v271 = vpop.permute.xlu0 %270
    %274 = vset.pattern.permute.xlu0 0
    %275 = vperm.xlu0 %274, %v190
    %v276 = vpop.permute.xlu0 %275
    %279 = vset.pattern.permute.xlu0 0
    %280 = vperm.xlu0 %279, %v191
    %v281 = vpop.permute.xlu0 %280
    %284 = vset.pattern.permute.xlu0 0
    %285 = vperm.xlu0 %284, %v192
    %v286 = vpop.permute.xlu0 %285
    %289 = vset.pattern.permute.xlu0 0
    %290 = vperm.xlu0 %289, %v193
    %v291 = vpop.permute.xlu0 %290
    %294 = vset.pattern.permute.xlu0 0
    %295 = vperm.xlu0 %294, %v194
    %v296 = vpop.permute.xlu0 %295
    %299 = vset.pattern.permute.xlu0 0
    %300 = vperm.xlu0 %299, %v195
    %v301 = vpop.permute.xlu0 %300
    %304 = vset.pattern.permute.xlu0 0
    %305 = vperm.xlu0 %304, %v196
    %v306 = vpop.permute.xlu0 %305
    %309 = vset.pattern.permute.xlu0 0
    %310 = vperm.xlu0 %309, %v197
    %v311 = vpop.permute.xlu0 %310
    %314 = vset.pattern.permute.xlu0 0
    %315 = vperm.xlu0 %314, %v198
    %v316 = vpop.permute.xlu0 %315
    %319 = vset.pattern.permute.xlu0 0
    %320 = vperm.xlu0 %319, %v199
    %v321 = vpop.permute.xlu0 %320
    %324 = vset.pattern.permute.xlu0 0
    %325 = vperm.xlu0 %324, %v200
    %v326 = vpop.permute.xlu0 %325
    %329 = vset.pattern.permute.xlu0 0
    %330 = vperm.xlu0 %329, %v201
    %v331 = vpop.permute.xlu0 %330
    %334 = vset.pattern.permute.xlu0 0
    %335 = vperm.xlu0 %334, %v202
    %v336 = vpop.permute.xlu0 %335
    %339 = vset.pattern.permute.xlu0 0
    %340 = vperm.xlu0 %339, %v203
    %v341 = vpop.permute.xlu0 %340
    %344 = vset.pattern.permute.xlu0 0
    %345 = vperm.xlu0 %344, %v204
    %v346 = vpop.permute.xlu0 %345
    %349 = vset.pattern.permute.xlu0 0
    %350 = vperm.xlu0 %349, %v205
    %v351 = vpop.permute.xlu0 %350
    %354 = vset.pattern.permute.xlu0 0
    %355 = vperm.xlu0 %354, %v206
    %v356 = vpop.permute.xlu0 %355
    %359 = vset.pattern.permute.xlu0 0
    %360 = vperm.xlu0 %359, %v207
    %v361 = vpop.permute.xlu0 %360
    %364 = vset.pattern.permute.xlu0 0
    %365 = vperm.xlu0 %364, %v208
    %v366 = vpop.permute.xlu0 %365
    %369 = vset.pattern.permute.xlu0 0
    %370 = vperm.xlu0 %369, %v209
    %v371 = vpop.permute.xlu0 %370
    %374 = vset.pattern.permute.xlu0 0
    %375 = vperm.xlu0 %374, %v210
    %v376 = vpop.permute.xlu0 %375
    %v378 = vlaneseq
    %v379 = vshrl.u32 %v378, 7
    %v380 = vsub.s32 0, %v379
    %v381 = vrot.slane %v211, %v380
    %v382 = vmul.f32 %v221, %v381
    %v383 = vmul.f32 %v226, %v381
    %v384 = vmul.f32 %v231, %v381
    %v385 = vmul.f32 %v236, %v381
    %v386 = vmul.f32 %v241, %v381
    %v387 = vmul.f32 %v246, %v381
    %v388 = vmul.f32 %v251, %v381
    %v389 = vmul.f32 %v256, %v381
    %v390 = vmul.f32 %v261, %v381
    %v391 = vmul.f32 %v266, %v381
    %v392 = vmul.f32 %v271, %v381
    %v393 = vmul.f32 %v276, %v381
    %v394 = vmul.f32 %v281, %v381
    %v395 = vmul.f32 %v286, %v381
    %v396 = vmul.f32 %v291, %v381
    %v397 = vmul.f32 %v296, %v381
    %v398 = vmul.f32 %v301, %v381
    %v399 = vmul.f32 %v306, %v381
    %v400 = vmul.f32 %v311, %v381
    %v401 = vmul.f32 %v316, %v381
    %v402 = vmul.f32 %v321, %v381
    %v403 = vmul.f32 %v326, %v381
    %v404 = vmul.f32 %v331, %v381
    %v405 = vmul.f32 %v336, %v381
    %v406 = vmul.f32 %v341, %v381
    %v407 = vmul.f32 %v346, %v381
    %v408 = vmul.f32 %v351, %v381
    %v409 = vmul.f32 %v356, %v381
    %v410 = vmul.f32 %v361, %v381
    %v411 = vmul.f32 %v366, %v381
    %v412 = vmul.f32 %v371, %v381
    %v413 = vmul.f32 %v376, %v381
    %v414 = vadd.f32 %v216, %v382
    %v415 = vadd.f32 %v216, %v383
    %v416 = vadd.f32 %v216, %v384
    %v417 = vadd.f32 %v216, %v385
    %v418 = vadd.f32 %v216, %v386
    %v419 = vadd.f32 %v216, %v387
    %v420 = vadd.f32 %v216, %v388
    %v421 = vadd.f32 %v216, %v389
    %v422 = vadd.f32 %v216, %v390
    %v423 = vadd.f32 %v216, %v391
    %v424 = vadd.f32 %v216, %v392
    %v425 = vadd.f32 %v216, %v393
    %v426 = vadd.f32 %v216, %v394
    %v427 = vadd.f32 %v216, %v395
    %v428 = vadd.f32 %v216, %v396
    %v429 = vadd.f32 %v216, %v397
    %v430 = vadd.f32 %v216, %v398
    %v431 = vadd.f32 %v216, %v399
    %v432 = vadd.f32 %v216, %v400
    %v433 = vadd.f32 %v216, %v401
    %v434 = vadd.f32 %v216, %v402
    %v435 = vadd.f32 %v216, %v403
    %v436 = vadd.f32 %v216, %v404
    %v437 = vadd.f32 %v216, %v405
    %v438 = vadd.f32 %v216, %v406
    %v439 = vadd.f32 %v216, %v407
    %v440 = vadd.f32 %v216, %v408
    %v441 = vadd.f32 %v216, %v409
    %v442 = vadd.f32 %v216, %v410
    %v443 = vadd.f32 %v216, %v411
    %v444 = vadd.f32 %v216, %v412
    %v445 = vadd.f32 %v216, %v413
    %446 = vset.pattern.permute.xlu0 1
    %447 = vperm.xlu0 %446, %v179
    %v448 = vpop.permute.xlu0 %447
    %450 = vset.pattern.permute.xlu0 1
    %451 = vperm.xlu0 %450, %v180
    %v452 = vpop.permute.xlu0 %451
    %454 = vset.pattern.permute.xlu0 1
    %455 = vperm.xlu0 %454, %v181
    %v456 = vpop.permute.xlu0 %455
    %458 = vset.pattern.permute.xlu0 1
    %459 = vperm.xlu0 %458, %v182
    %v460 = vpop.permute.xlu0 %459
    %462 = vset.pattern.permute.xlu0 1
    %463 = vperm.xlu0 %462, %v183
    %v464 = vpop.permute.xlu0 %463
    %466 = vset.pattern.permute.xlu0 1
    %467 = vperm.xlu0 %466, %v184
    %v468 = vpop.permute.xlu0 %467
    %470 = vset.pattern.permute.xlu0 1
    %471 = vperm.xlu0 %470, %v185
    %v472 = vpop.permute.xlu0 %471
    %474 = vset.pattern.permute.xlu0 1
    %475 = vperm.xlu0 %474, %v186
    %v476 = vpop.permute.xlu0 %475
    %478 = vset.pattern.permute.xlu0 1
    %479 = vperm.xlu0 %478, %v187
    %v480 = vpop.permute.xlu0 %479
    %482 = vset.pattern.permute.xlu0 1
    %483 = vperm.xlu0 %482, %v188
    %v484 = vpop.permute.xlu0 %483
    %486 = vset.pattern.permute.xlu0 1
    %487 = vperm.xlu0 %486, %v189
    %v488 = vpop.permute.xlu0 %487
    %490 = vset.pattern.permute.xlu0 1
    %491 = vperm.xlu0 %490, %v190
    %v492 = vpop.permute.xlu0 %491
    %494 = vset.pattern.permute.xlu0 1
    %495 = vperm.xlu0 %494, %v191
    %v496 = vpop.permute.xlu0 %495
    %498 = vset.pattern.permute.xlu0 1
    %499 = vperm.xlu0 %498, %v192
    %v500 = vpop.permute.xlu0 %499
    %502 = vset.pattern.permute.xlu0 1
    %503 = vperm.xlu0 %502, %v193
    %v504 = vpop.permute.xlu0 %503
    %506 = vset.pattern.permute.xlu0 1
    %507 = vperm.xlu0 %506, %v194
    %v508 = vpop.permute.xlu0 %507
    %510 = vset.pattern.permute.xlu0 1
    %511 = vperm.xlu0 %510, %v195
    %v512 = vpop.permute.xlu0 %511
    %514 = vset.pattern.permute.xlu0 1
    %515 = vperm.xlu0 %514, %v196
    %v516 = vpop.permute.xlu0 %515
    %518 = vset.pattern.permute.xlu0 1
    %519 = vperm.xlu0 %518, %v197
    %v520 = vpop.permute.xlu0 %519
    %522 = vset.pattern.permute.xlu0 1
    %523 = vperm.xlu0 %522, %v198
    %v524 = vpop.permute.xlu0 %523
    %526 = vset.pattern.permute.xlu0 1
    %527 = vperm.xlu0 %526, %v199
    %v528 = vpop.permute.xlu0 %527
    %530 = vset.pattern.permute.xlu0 1
    %531 = vperm.xlu0 %530, %v200
    %v532 = vpop.permute.xlu0 %531
    %534 = vset.pattern.permute.xlu0 1
    %535 = vperm.xlu0 %534, %v201
    %v536 = vpop.permute.xlu0 %535
    %538 = vset.pattern.permute.xlu0 1
    %539 = vperm.xlu0 %538, %v202
    %v540 = vpop.permute.xlu0 %539
    %542 = vset.pattern.permute.xlu0 1
    %543 = vperm.xlu0 %542, %v203
    %v544 = vpop.permute.xlu0 %543
    %546 = vset.pattern.permute.xlu0 1
    %547 = vperm.xlu0 %546, %v204
    %v548 = vpop.permute.xlu0 %547
    %550 = vset.pattern.permute.xlu0 1
    %551 = vperm.xlu0 %550, %v205
    %v552 = vpop.permute.xlu0 %551
    %554 = vset.pattern.permute.xlu0 1
    %555 = vperm.xlu0 %554, %v206
    %v556 = vpop.permute.xlu0 %555
    %558 = vset.pattern.permute.xlu0 1
    %559 = vperm.xlu0 %558, %v207
    %v560 = vpop.permute.xlu0 %559
    %562 = vset.pattern.permute.xlu0 1
    %563 = vperm.xlu0 %562, %v208
    %v564 = vpop.permute.xlu0 %563
    %566 = vset.pattern.permute.xlu0 1
    %567 = vperm.xlu0 %566, %v209
    %v568 = vpop.permute.xlu0 %567
    %570 = vset.pattern.permute.xlu0 1
    %571 = vperm.xlu0 %570, %v210
    %v572 = vpop.permute.xlu0 %571
    %v574 = vlaneseq
    %v575 = vshrl.u32 %v574, 7
    %v576 = vsub.s32 1, %v575
    %v577 = vrot.slane %v211, %v576
    %v578 = vmul.f32 %v448, %v577
    %v579 = vmul.f32 %v452, %v577
    %v580 = vmul.f32 %v456, %v577
    %v581 = vmul.f32 %v460, %v577
    %v582 = vmul.f32 %v464, %v577
    %v583 = vmul.f32 %v468, %v577
    %v584 = vmul.f32 %v472, %v577
    %v585 = vmul.f32 %v476, %v577
    %v586 = vmul.f32 %v480, %v577
    %v587 = vmul.f32 %v484, %v577
    %v588 = vmul.f32 %v488, %v577
    %v589 = vmul.f32 %v492, %v577
    %v590 = vmul.f32 %v496, %v577
    %v591 = vmul.f32 %v500, %v577
    %v592 = vmul.f32 %v504, %v577
    %v593 = vmul.f32 %v508, %v577
    %v594 = vmul.f32 %v512, %v577
    %v595 = vmul.f32 %v516, %v577
    %v596 = vmul.f32 %v520, %v577
    %v597 = vmul.f32 %v524, %v577
    %v598 = vmul.f32 %v528, %v577
    %v599 = vmul.f32 %v532, %v577
    %v600 = vmul.f32 %v536, %v577
    %v601 = vmul.f32 %v540, %v577
    %v602 = vmul.f32 %v544, %v577
    %v603 = vmul.f32 %v548, %v577
    %v604 = vmul.f32 %v552, %v577
    %v605 = vmul.f32 %v556, %v577
    %v606 = vmul.f32 %v560, %v577
    %v607 = vmul.f32 %v564, %v577
    %v608 = vmul.f32 %v568, %v577
    %v609 = vmul.f32 %v572, %v577
    %v610 = vadd.f32 %v414, %v578
    %v611 = vadd.f32 %v415, %v579
    %v612 = vadd.f32 %v416, %v580
    %v613 = vadd.f32 %v417, %v581
    %v614 = vadd.f32 %v418, %v582
    %v615 = vadd.f32 %v419, %v583
    %v616 = vadd.f32 %v420, %v584
    %v617 = vadd.f32 %v421, %v585
    %v618 = vadd.f32 %v422, %v586
    %v619 = vadd.f32 %v423, %v587
    %v620 = vadd.f32 %v424, %v588
    %v621 = vadd.f32 %v425, %v589
    %v622 = vadd.f32 %v426, %v590
    %v623 = vadd.f32 %v427, %v591
    %v624 = vadd.f32 %v428, %v592
    %v625 = vadd.f32 %v429, %v593
    %v626 = vadd.f32 %v430, %v594
    %v627 = vadd.f32 %v431, %v595
    %v628 = vadd.f32 %v432, %v596
    %v629 = vadd.f32 %v433, %v597
    %v630 = vadd.f32 %v434, %v598
    %v631 = vadd.f32 %v435, %v599
    %v632 = vadd.f32 %v436, %v600
    %v633 = vadd.f32 %v437, %v601
    %v634 = vadd.f32 %v438, %v602
    %v635 = vadd.f32 %v439, %v603
    %v636 = vadd.f32 %v440, %v604
    %v637 = vadd.f32 %v441, %v605
    %v638 = vadd.f32 %v442, %v606
    %v639 = vadd.f32 %v443, %v607
    %v640 = vadd.f32 %v444, %v608
    %v641 = vadd.f32 %v445, %v609
    %642 = vset.pattern.permute.xlu0 2
    %643 = vperm.xlu0 %642, %v179
    %v644 = vpop.permute.xlu0 %643
    %646 = vset.pattern.permute.xlu0 2
    %647 = vperm.xlu0 %646, %v180
    %v648 = vpop.permute.xlu0 %647
    %650 = vset.pattern.permute.xlu0 2
    %651 = vperm.xlu0 %650, %v181
    %v652 = vpop.permute.xlu0 %651
    %654 = vset.pattern.permute.xlu0 2
    %655 = vperm.xlu0 %654, %v182
    %v656 = vpop.permute.xlu0 %655
    %658 = vset.pattern.permute.xlu0 2
    %659 = vperm.xlu0 %658, %v183
    %v660 = vpop.permute.xlu0 %659
    %662 = vset.pattern.permute.xlu0 2
    %663 = vperm.xlu0 %662, %v184
    %v664 = vpop.permute.xlu0 %663
    %666 = vset.pattern.permute.xlu0 2
    %667 = vperm.xlu0 %666, %v185
    %v668 = vpop.permute.xlu0 %667
    %670 = vset.pattern.permute.xlu0 2
    %671 = vperm.xlu0 %670, %v186
    %v672 = vpop.permute.xlu0 %671
    %674 = vset.pattern.permute.xlu0 2
    %675 = vperm.xlu0 %674, %v187
    %v676 = vpop.permute.xlu0 %675
    %678 = vset.pattern.permute.xlu0 2
    %679 = vperm.xlu0 %678, %v188
    %v680 = vpop.permute.xlu0 %679
    %682 = vset.pattern.permute.xlu0 2
    %683 = vperm.xlu0 %682, %v189
    %v684 = vpop.permute.xlu0 %683
    %686 = vset.pattern.permute.xlu0 2
    %687 = vperm.xlu0 %686, %v190
    %v688 = vpop.permute.xlu0 %687
    %690 = vset.pattern.permute.xlu0 2
    %691 = vperm.xlu0 %690, %v191
    %v692 = vpop.permute.xlu0 %691
    %694 = vset.pattern.permute.xlu0 2
    %695 = vperm.xlu0 %694, %v192
    %v696 = vpop.permute.xlu0 %695
    %698 = vset.pattern.permute.xlu0 2
    %699 = vperm.xlu0 %698, %v193
    %v700 = vpop.permute.xlu0 %699
    %702 = vset.pattern.permute.xlu0 2
    %703 = vperm.xlu0 %702, %v194
    %v704 = vpop.permute.xlu0 %703
    %706 = vset.pattern.permute.xlu0 2
    %707 = vperm.xlu0 %706, %v195
    %v708 = vpop.permute.xlu0 %707
    %710 = vset.pattern.permute.xlu0 2
    %711 = vperm.xlu0 %710, %v196
    %v712 = vpop.permute.xlu0 %711
    %714 = vset.pattern.permute.xlu0 2
    %715 = vperm.xlu0 %714, %v197
    %v716 = vpop.permute.xlu0 %715
    %718 = vset.pattern.permute.xlu0 2
    %719 = vperm.xlu0 %718, %v198
    %v720 = vpop.permute.xlu0 %719
    %722 = vset.pattern.permute.xlu0 2
    %723 = vperm.xlu0 %722, %v199
    %v724 = vpop.permute.xlu0 %723
    %726 = vset.pattern.permute.xlu0 2
    %727 = vperm.xlu0 %726, %v200
    %v728 = vpop.permute.xlu0 %727
    %730 = vset.pattern.permute.xlu0 2
    %731 = vperm.xlu0 %730, %v201
    %v732 = vpop.permute.xlu0 %731
    %734 = vset.pattern.permute.xlu0 2
    %735 = vperm.xlu0 %734, %v202
    %v736 = vpop.permute.xlu0 %735
    %738 = vset.pattern.permute.xlu0 2
    %739 = vperm.xlu0 %738, %v203
    %v740 = vpop.permute.xlu0 %739
    %742 = vset.pattern.permute.xlu0 2
    %743 = vperm.xlu0 %742, %v204
    %v744 = vpop.permute.xlu0 %743
    %746 = vset.pattern.permute.xlu0 2
    %747 = vperm.xlu0 %746, %v205
    %v748 = vpop.permute.xlu0 %747
    %750 = vset.pattern.permute.xlu0 2
    %751 = vperm.xlu0 %750, %v206
    %v752 = vpop.permute.xlu0 %751
    %754 = vset.pattern.permute.xlu0 2
    %755 = vperm.xlu0 %754, %v207
    %v756 = vpop.permute.xlu0 %755
    %758 = vset.pattern.permute.xlu0 2
    %759 = vperm.xlu0 %758, %v208
    %v760 = vpop.permute.xlu0 %759
    %762 = vset.pattern.permute.xlu0 2
    %763 = vperm.xlu0 %762, %v209
    %v764 = vpop.permute.xlu0 %763
    %766 = vset.pattern.permute.xlu0 2
    %767 = vperm.xlu0 %766, %v210
    %v768 = vpop.permute.xlu0 %767
    %v770 = vlaneseq
    %v771 = vshrl.u32 %v770, 7
    %v772 = vsub.s32 2, %v771
    %v773 = vrot.slane %v211, %v772
    %v774 = vmul.f32 %v644, %v773
    %v775 = vmul.f32 %v648, %v773
    %v776 = vmul.f32 %v652, %v773
    %v777 = vmul.f32 %v656, %v773
    %v778 = vmul.f32 %v660, %v773
    %v779 = vmul.f32 %v664, %v773
    %v780 = vmul.f32 %v668, %v773
    %v781 = vmul.f32 %v672, %v773
    %v782 = vmul.f32 %v676, %v773
    %v783 = vmul.f32 %v680, %v773
    %v784 = vmul.f32 %v684, %v773
    %v785 = vmul.f32 %v688, %v773
    %v786 = vmul.f32 %v692, %v773
    %v787 = vmul.f32 %v696, %v773
    %v788 = vmul.f32 %v700, %v773
    %v789 = vmul.f32 %v704, %v773
    %v790 = vmul.f32 %v708, %v773
    %v791 = vmul.f32 %v712, %v773
    %v792 = vmul.f32 %v716, %v773
    %v793 = vmul.f32 %v720, %v773
    %v794 = vmul.f32 %v724, %v773
    %v795 = vmul.f32 %v728, %v773
    %v796 = vmul.f32 %v732, %v773
    %v797 = vmul.f32 %v736, %v773
    %v798 = vmul.f32 %v740, %v773
    %v799 = vmul.f32 %v744, %v773
    %v800 = vmul.f32 %v748, %v773
    %v801 = vmul.f32 %v752, %v773
    %v802 = vmul.f32 %v756, %v773
    %v803 = vmul.f32 %v760, %v773
    %v804 = vmul.f32 %v764, %v773
    %v805 = vmul.f32 %v768, %v773
    %v806 = vadd.f32 %v610, %v774
    %v807 = vadd.f32 %v611, %v775
    %v808 = vadd.f32 %v612, %v776
    %v809 = vadd.f32 %v613, %v777
    %v810 = vadd.f32 %v614, %v778
    %v811 = vadd.f32 %v615, %v779
    %v812 = vadd.f32 %v616, %v780
    %v813 = vadd.f32 %v617, %v781
    %v814 = vadd.f32 %v618, %v782
    %v815 = vadd.f32 %v619, %v783
    %v816 = vadd.f32 %v620, %v784
    %v817 = vadd.f32 %v621, %v785
    %v818 = vadd.f32 %v622, %v786
    %v819 = vadd.f32 %v623, %v787
    %v820 = vadd.f32 %v624, %v788
    %v821 = vadd.f32 %v625, %v789
    %v822 = vadd.f32 %v626, %v790
    %v823 = vadd.f32 %v627, %v791
    %v824 = vadd.f32 %v628, %v792
    %v825 = vadd.f32 %v629, %v793
    %v826 = vadd.f32 %v630, %v794
    %v827 = vadd.f32 %v631, %v795
    %v828 = vadd.f32 %v632, %v796
    %v829 = vadd.f32 %v633, %v797
    %v830 = vadd.f32 %v634, %v798
    %v831 = vadd.f32 %v635, %v799
    %v832 = vadd.f32 %v636, %v800
    %v833 = vadd.f32 %v637, %v801
    %v834 = vadd.f32 %v638, %v802
    %v835 = vadd.f32 %v639, %v803
    %v836 = vadd.f32 %v640, %v804
    %v837 = vadd.f32 %v641, %v805
    %838 = vset.pattern.permute.xlu0 3
    %839 = vperm.xlu0 %838, %v179
    %v840 = vpop.permute.xlu0 %839
    %842 = vset.pattern.permute.xlu0 3
    %843 = vperm.xlu0 %842, %v180
    %v844 = vpop.permute.xlu0 %843
    %846 = vset.pattern.permute.xlu0 3
    %847 = vperm.xlu0 %846, %v181
    %v848 = vpop.permute.xlu0 %847
    %850 = vset.pattern.permute.xlu0 3
    %851 = vperm.xlu0 %850, %v182
    %v852 = vpop.permute.xlu0 %851
    %854 = vset.pattern.permute.xlu0 3
    %855 = vperm.xlu0 %854, %v183
    %v856 = vpop.permute.xlu0 %855
    %858 = vset.pattern.permute.xlu0 3
    %859 = vperm.xlu0 %858, %v184
    %v860 = vpop.permute.xlu0 %859
    %862 = vset.pattern.permute.xlu0 3
    %863 = vperm.xlu0 %862, %v185
    %v864 = vpop.permute.xlu0 %863
    %866 = vset.pattern.permute.xlu0 3
    %867 = vperm.xlu0 %866, %v186
    %v868 = vpop.permute.xlu0 %867
    %870 = vset.pattern.permute.xlu0 3
    %871 = vperm.xlu0 %870, %v187
    %v872 = vpop.permute.xlu0 %871
    %874 = vset.pattern.permute.xlu0 3
    %875 = vperm.xlu0 %874, %v188
    %v876 = vpop.permute.xlu0 %875
    %878 = vset.pattern.permute.xlu0 3
    %879 = vperm.xlu0 %878, %v189
    %v880 = vpop.permute.xlu0 %879
    %882 = vset.pattern.permute.xlu0 3
    %883 = vperm.xlu0 %882, %v190
    %v884 = vpop.permute.xlu0 %883
    %886 = vset.pattern.permute.xlu0 3
    %887 = vperm.xlu0 %886, %v191
    %v888 = vpop.permute.xlu0 %887
    %890 = vset.pattern.permute.xlu0 3
    %891 = vperm.xlu0 %890, %v192
    %v892 = vpop.permute.xlu0 %891
    %894 = vset.pattern.permute.xlu0 3
    %895 = vperm.xlu0 %894, %v193
    %v896 = vpop.permute.xlu0 %895
    %898 = vset.pattern.permute.xlu0 3
    %899 = vperm.xlu0 %898, %v194
    %v900 = vpop.permute.xlu0 %899
    %902 = vset.pattern.permute.xlu0 3
    %903 = vperm.xlu0 %902, %v195
    %v904 = vpop.permute.xlu0 %903
    %906 = vset.pattern.permute.xlu0 3
    %907 = vperm.xlu0 %906, %v196
    %v908 = vpop.permute.xlu0 %907
    %910 = vset.pattern.permute.xlu0 3
    %911 = vperm.xlu0 %910, %v197
    %v912 = vpop.permute.xlu0 %911
    %914 = vset.pattern.permute.xlu0 3
    %915 = vperm.xlu0 %914, %v198
    %v916 = vpop.permute.xlu0 %915
    %918 = vset.pattern.permute.xlu0 3
    %919 = vperm.xlu0 %918, %v199
    %v920 = vpop.permute.xlu0 %919
    %922 = vset.pattern.permute.xlu0 3
    %923 = vperm.xlu0 %922, %v200
    %v924 = vpop.permute.xlu0 %923
    %926 = vset.pattern.permute.xlu0 3
    %927 = vperm.xlu0 %926, %v201
    %v928 = vpop.permute.xlu0 %927
    %930 = vset.pattern.permute.xlu0 3
    %931 = vperm.xlu0 %930, %v202
    %v932 = vpop.permute.xlu0 %931
    %934 = vset.pattern.permute.xlu0 3
    %935 = vperm.xlu0 %934, %v203
    %v936 = vpop.permute.xlu0 %935
    %938 = vset.pattern.permute.xlu0 3
    %939 = vperm.xlu0 %938, %v204
    %v940 = vpop.permute.xlu0 %939
    %942 = vset.pattern.permute.xlu0 3
    %943 = vperm.xlu0 %942, %v205
    %v944 = vpop.permute.xlu0 %943
    %946 = vset.pattern.permute.xlu0 3
    %947 = vperm.xlu0 %946, %v206
    %v948 = vpop.permute.xlu0 %947
    %950 = vset.pattern.permute.xlu0 3
    %951 = vperm.xlu0 %950, %v207
    %v952 = vpop.permute.xlu0 %951
    %954 = vset.pattern.permute.xlu0 3
    %955 = vperm.xlu0 %954, %v208
    %v956 = vpop.permute.xlu0 %955
    %958 = vset.pattern.permute.xlu0 3
    %959 = vperm.xlu0 %958, %v209
    %v960 = vpop.permute.xlu0 %959
    %962 = vset.pattern.permute.xlu0 3
    %963 = vperm.xlu0 %962, %v210
    %v964 = vpop.permute.xlu0 %963
    %v966 = vlaneseq
    %v967 = vshrl.u32 %v966, 7
    %v968 = vsub.s32 3, %v967
    %v969 = vrot.slane %v211, %v968
    %v970 = vmul.f32 %v840, %v969
    %v971 = vmul.f32 %v844, %v969
    %v972 = vmul.f32 %v848, %v969
    %v973 = vmul.f32 %v852, %v969
    %v974 = vmul.f32 %v856, %v969
    %v975 = vmul.f32 %v860, %v969
    %v976 = vmul.f32 %v864, %v969
    %v977 = vmul.f32 %v868, %v969
    %v978 = vmul.f32 %v872, %v969
    %v979 = vmul.f32 %v876, %v969
    %v980 = vmul.f32 %v880, %v969
    %v981 = vmul.f32 %v884, %v969
    %v982 = vmul.f32 %v888, %v969
    %v983 = vmul.f32 %v892, %v969
    %v984 = vmul.f32 %v896, %v969
    %v985 = vmul.f32 %v900, %v969
    %v986 = vmul.f32 %v904, %v969
    %v987 = vmul.f32 %v908, %v969
    %v988 = vmul.f32 %v912, %v969
    %v989 = vmul.f32 %v916, %v969
    %v990 = vmul.f32 %v920, %v969
    %v991 = vmul.f32 %v924, %v969
    %v992 = vmul.f32 %v928, %v969
    %v993 = vmul.f32 %v932, %v969
    %v994 = vmul.f32 %v936, %v969
    %v995 = vmul.f32 %v940, %v969
    %v996 = vmul.f32 %v944, %v969
    %v997 = vmul.f32 %v948, %v969
    %v998 = vmul.f32 %v952, %v969
    %v999 = vmul.f32 %v956, %v969
    %v1000 = vmul.f32 %v960, %v969
    %v1001 = vmul.f32 %v964, %v969
    %v1002 = vadd.f32 %v806, %v970
    %v1003 = vadd.f32 %v807, %v971
    %v1004 = vadd.f32 %v808, %v972
    %v1005 = vadd.f32 %v809, %v973
    %v1006 = vadd.f32 %v810, %v974
    %v1007 = vadd.f32 %v811, %v975
    %v1008 = vadd.f32 %v812, %v976
    %v1009 = vadd.f32 %v813, %v977
    %v1010 = vadd.f32 %v814, %v978
    %v1011 = vadd.f32 %v815, %v979
    %v1012 = vadd.f32 %v816, %v980
    %v1013 = vadd.f32 %v817, %v981
    %v1014 = vadd.f32 %v818, %v982
    %v1015 = vadd.f32 %v819, %v983
    %v1016 = vadd.f32 %v820, %v984
    %v1017 = vadd.f32 %v821, %v985
    %v1018 = vadd.f32 %v822, %v986
    %v1019 = vadd.f32 %v823, %v987
    %v1020 = vadd.f32 %v824, %v988
    %v1021 = vadd.f32 %v825, %v989
    %v1022 = vadd.f32 %v826, %v990
    %v1023 = vadd.f32 %v827, %v991
    %v1024 = vadd.f32 %v828, %v992
    %v1025 = vadd.f32 %v829, %v993
    %v1026 = vadd.f32 %v830, %v994
    %v1027 = vadd.f32 %v831, %v995
    %v1028 = vadd.f32 %v832, %v996
    %v1029 = vadd.f32 %v833, %v997
    %v1030 = vadd.f32 %v834, %v998
    %v1031 = vadd.f32 %v835, %v999
    %v1032 = vadd.f32 %v836, %v1000
    %v1033 = vadd.f32 %v837, %v1001
    %v1034 = vld [vmem:[#allocation5] sm:$0xff]
    %v1035 = vld [vmem:[#allocation5 + $0x8] sm:$0xff]
    %v1036 = vld [vmem:[#allocation5 + $0x10] sm:$0xff]
    %v1037 = vld [vmem:[#allocation5 + $0x18] sm:$0xff]
    %v1038 = vld [vmem:[#allocation5 + $0x20] sm:$0xff]
    %v1039 = vld [vmem:[#allocation5 + $0x28] sm:$0xff]
    %v1040 = vld [vmem:[#allocation5 + $0x30] sm:$0xff]
    %v1041 = vld [vmem:[#allocation5 + $0x38] sm:$0xff]
    %v1042 = vld [vmem:[#allocation5 + $0x40] sm:$0xff]
    %v1043 = vld [vmem:[#allocation5 + $0x48] sm:$0xff]
    %v1044 = vld [vmem:[#allocation5 + $0x50] sm:$0xff]
    %v1045 = vld [vmem:[#allocation5 + $0x58] sm:$0xff]
    %v1046 = vld [vmem:[#allocation5 + $0x60] sm:$0xff]
    %v1047 = vld [vmem:[#allocation5 + $0x68] sm:$0xff]
    %v1048 = vld [vmem:[#allocation5 + $0x70] sm:$0xff]
    %v1049 = vld [vmem:[#allocation5 + $0x78] sm:$0xff]
    %v1050 = vld [vmem:[#allocation5 + $0x80] sm:$0xff]
    %v1051 = vld [vmem:[#allocation5 + $0x88] sm:$0xff]
    %v1052 = vld [vmem:[#allocation5 + $0x90] sm:$0xff]
    %v1053 = vld [vmem:[#allocation5 + $0x98] sm:$0xff]
    %v1054 = vld [vmem:[#allocation5 + $0xa0] sm:$0xff]
    %v1055 = vld [vmem:[#allocation5 + $0xa8] sm:$0xff]
    %v1056 = vld [vmem:[#allocation5 + $0xb0] sm:$0xff]
    %v1057 = vld [vmem:[#allocation5 + $0xb8] sm:$0xff]
    %v1058 = vld [vmem:[#allocation5 + $0xc0] sm:$0xff]
    %v1059 = vld [vmem:[#allocation5 + $0xc8] sm:$0xff]
    %v1060 = vld [vmem:[#allocation5 + $0xd0] sm:$0xff]
    %v1061 = vld [vmem:[#allocation5 + $0xd8] sm:$0xff]
    %v1062 = vld [vmem:[#allocation5 + $0xe0] sm:$0xff]
    %v1063 = vld [vmem:[#allocation5 + $0xe8] sm:$0xff]
    %v1064 = vld [vmem:[#allocation5 + $0xf0] sm:$0xff]
    %v1065 = vld [vmem:[#allocation5 + $0xf8] sm:$0xff]
    %v1066 = vld [vmem:[#allocation8] sm:$0x7]
    %1068 = vset.pattern.permute.xlu0 0
    %1069 = vperm.xlu0 %1068, %v1034
    %v1070 = vpop.permute.xlu0 %1069
    %1073 = vset.pattern.permute.xlu0 0
    %1074 = vperm.xlu0 %1073, %v1035
    %v1075 = vpop.permute.xlu0 %1074
    %1078 = vset.pattern.permute.xlu0 0
    %1079 = vperm.xlu0 %1078, %v1036
    %v1080 = vpop.permute.xlu0 %1079
    %1083 = vset.pattern.permute.xlu0 0
    %1084 = vperm.xlu0 %1083, %v1037
    %v1085 = vpop.permute.xlu0 %1084
    %1088 = vset.pattern.permute.xlu0 0
    %1089 = vperm.xlu0 %1088, %v1038
    %v1090 = vpop.permute.xlu0 %1089
    %1093 = vset.pattern.permute.xlu0 0
    %1094 = vperm.xlu0 %1093, %v1039
    %v1095 = vpop.permute.xlu0 %1094
    %1098 = vset.pattern.permute.xlu0 0
    %1099 = vperm.xlu0 %1098, %v1040
    %v1100 = vpop.permute.xlu0 %1099
    %1103 = vset.pattern.permute.xlu0 0
    %1104 = vperm.xlu0 %1103, %v1041
    %v1105 = vpop.permute.xlu0 %1104
    %1108 = vset.pattern.permute.xlu0 0
    %1109 = vperm.xlu0 %1108, %v1042
    %v1110 = vpop.permute.xlu0 %1109
    %1113 = vset.pattern.permute.xlu0 0
    %1114 = vperm.xlu0 %1113, %v1043
    %v1115 = vpop.permute.xlu0 %1114
    %1118 = vset.pattern.permute.xlu0 0
    %1119 = vperm.xlu0 %1118, %v1044
    %v1120 = vpop.permute.xlu0 %1119
    %1123 = vset.pattern.permute.xlu0 0
    %1124 = vperm.xlu0 %1123, %v1045
    %v1125 = vpop.permute.xlu0 %1124
    %1128 = vset.pattern.permute.xlu0 0
    %1129 = vperm.xlu0 %1128, %v1046
    %v1130 = vpop.permute.xlu0 %1129
    %1133 = vset.pattern.permute.xlu0 0
    %1134 = vperm.xlu0 %1133, %v1047
    %v1135 = vpop.permute.xlu0 %1134
    %1138 = vset.pattern.permute.xlu0 0
    %1139 = vperm.xlu0 %1138, %v1048
    %v1140 = vpop.permute.xlu0 %1139
    %1143 = vset.pattern.permute.xlu0 0
    %1144 = vperm.xlu0 %1143, %v1049
    %v1145 = vpop.permute.xlu0 %1144
    %1148 = vset.pattern.permute.xlu0 0
    %1149 = vperm.xlu0 %1148, %v1050
    %v1150 = vpop.permute.xlu0 %1149
    %1153 = vset.pattern.permute.xlu0 0
    %1154 = vperm.xlu0 %1153, %v1051
    %v1155 = vpop.permute.xlu0 %1154
    %1158 = vset.pattern.permute.xlu0 0
    %1159 = vperm.xlu0 %1158, %v1052
    %v1160 = vpop.permute.xlu0 %1159
    %1163 = vset.pattern.permute.xlu0 0
    %1164 = vperm.xlu0 %1163, %v1053
    %v1165 = vpop.permute.xlu0 %1164
    %1168 = vset.pattern.permute.xlu0 0
    %1169 = vperm.xlu0 %1168, %v1054
    %v1170 = vpop.permute.xlu0 %1169
    %1173 = vset.pattern.permute.xlu0 0
    %1174 = vperm.xlu0 %1173, %v1055
    %v1175 = vpop.permute.xlu0 %1174
    %1178 = vset.pattern.permute.xlu0 0
    %1179 = vperm.xlu0 %1178, %v1056
    %v1180 = vpop.permute.xlu0 %1179
    %1183 = vset.pattern.permute.xlu0 0
    %1184 = vperm.xlu0 %1183, %v1057
    %v1185 = vpop.permute.xlu0 %1184
    %1188 = vset.pattern.permute.xlu0 0
    %1189 = vperm.xlu0 %1188, %v1058
    %v1190 = vpop.permute.xlu0 %1189
    %1193 = vset.pattern.permute.xlu0 0
    %1194 = vperm.xlu0 %1193, %v1059
    %v1195 = vpop.permute.xlu0 %1194
    %1198 = vset.pattern.permute.xlu0 0
    %1199 = vperm.xlu0 %1198, %v1060
    %v1200 = vpop.permute.xlu0 %1199
    %1203 = vset.pattern.permute.xlu0 0
    %1204 = vperm.xlu0 %1203, %v1061
    %v1205 = vpop.permute.xlu0 %1204
    %1208 = vset.pattern.permute.xlu0 0
    %1209 = vperm.xlu0 %1208, %v1062
    %v1210 = vpop.permute.xlu0 %1209
    %1213 = vset.pattern.permute.xlu0 0
    %1214 = vperm.xlu0 %1213, %v1063
    %v1215 = vpop.permute.xlu0 %1214
    %1218 = vset.pattern.permute.xlu0 0
    %1219 = vperm.xlu0 %1218, %v1064
    %v1220 = vpop.permute.xlu0 %1219
    %1223 = vset.pattern.permute.xlu0 0
    %1224 = vperm.xlu0 %1223, %v1065
    %v1225 = vpop.permute.xlu0 %1224
    %v1227 = vlaneseq
    %v1228 = vshrl.u32 %v1227, 7
    %v1229 = vsub.s32 0, %v1228
    %v1230 = vrot.slane %v1066, %v1229
    %v1231 = vmul.f32 %v1070, %v1230
    %v1232 = vmul.f32 %v1075, %v1230
    %v1233 = vmul.f32 %v1080, %v1230
    %v1234 = vmul.f32 %v1085, %v1230
    %v1235 = vmul.f32 %v1090, %v1230
    %v1236 = vmul.f32 %v1095, %v1230
    %v1237 = vmul.f32 %v1100, %v1230
    %v1238 = vmul.f32 %v1105, %v1230
    %v1239 = vmul.f32 %v1110, %v1230
    %v1240 = vmul.f32 %v1115, %v1230
    %v1241 = vmul.f32 %v1120, %v1230
    %v1242 = vmul.f32 %v1125, %v1230
    %v1243 = vmul.f32 %v1130, %v1230
    %v1244 = vmul.f32 %v1135, %v1230
    %v1245 = vmul.f32 %v1140, %v1230
    %v1246 = vmul.f32 %v1145, %v1230
    %v1247 = vmul.f32 %v1150, %v1230
    %v1248 = vmul.f32 %v1155, %v1230
    %v1249 = vmul.f32 %v1160, %v1230
    %v1250 = vmul.f32 %v1165, %v1230
    %v1251 = vmul.f32 %v1170, %v1230
    %v1252 = vmul.f32 %v1175, %v1230
    %v1253 = vmul.f32 %v1180, %v1230
    %v1254 = vmul.f32 %v1185, %v1230
    %v1255 = vmul.f32 %v1190, %v1230
    %v1256 = vmul.f32 %v1195, %v1230
    %v1257 = vmul.f32 %v1200, %v1230
    %v1258 = vmul.f32 %v1205, %v1230
    %v1259 = vmul.f32 %v1210, %v1230
    %v1260 = vmul.f32 %v1215, %v1230
    %v1261 = vmul.f32 %v1220, %v1230
    %v1262 = vmul.f32 %v1225, %v1230
    %v1263 = vadd.f32 %v1002, %v1231
    %v1264 = vadd.f32 %v1003, %v1232
    %v1265 = vadd.f32 %v1004, %v1233
    %v1266 = vadd.f32 %v1005, %v1234
    %v1267 = vadd.f32 %v1006, %v1235
    %v1268 = vadd.f32 %v1007, %v1236
    %v1269 = vadd.f32 %v1008, %v1237
    %v1270 = vadd.f32 %v1009, %v1238
    %v1271 = vadd.f32 %v1010, %v1239
    %v1272 = vadd.f32 %v1011, %v1240
    %v1273 = vadd.f32 %v1012, %v1241
    %v1274 = vadd.f32 %v1013, %v1242
    %v1275 = vadd.f32 %v1014, %v1243
    %v1276 = vadd.f32 %v1015, %v1244
    %v1277 = vadd.f32 %v1016, %v1245
    %v1278 = vadd.f32 %v1017, %v1246
    %v1279 = vadd.f32 %v1018, %v1247
    %v1280 = vadd.f32 %v1019, %v1248
    %v1281 = vadd.f32 %v1020, %v1249
    %v1282 = vadd.f32 %v1021, %v1250
    %v1283 = vadd.f32 %v1022, %v1251
    %v1284 = vadd.f32 %v1023, %v1252
    %v1285 = vadd.f32 %v1024, %v1253
    %v1286 = vadd.f32 %v1025, %v1254
    %v1287 = vadd.f32 %v1026, %v1255
    %v1288 = vadd.f32 %v1027, %v1256
    %v1289 = vadd.f32 %v1028, %v1257
    %v1290 = vadd.f32 %v1029, %v1258
    %v1291 = vadd.f32 %v1030, %v1259
    %v1292 = vadd.f32 %v1031, %v1260
    %v1293 = vadd.f32 %v1032, %v1261
    %v1294 = vadd.f32 %v1033, %v1262
    %1295 = vset.pattern.permute.xlu0 1
    %1296 = vperm.xlu0 %1295, %v1034
    %v1297 = vpop.permute.xlu0 %1296
    %1299 = vset.pattern.permute.xlu0 1
    %1300 = vperm.xlu0 %1299, %v1035
    %v1301 = vpop.permute.xlu0 %1300
    %1303 = vset.pattern.permute.xlu0 1
    %1304 = vperm.xlu0 %1303, %v1036
    %v1305 = vpop.permute.xlu0 %1304
    %1307 = vset.pattern.permute.xlu0 1
    %1308 = vperm.xlu0 %1307, %v1037
    %v1309 = vpop.permute.xlu0 %1308
    %1311 = vset.pattern.permute.xlu0 1
    %1312 = vperm.xlu0 %1311, %v1038
    %v1313 = vpop.permute.xlu0 %1312
    %1315 = vset.pattern.permute.xlu0 1
    %1316 = vperm.xlu0 %1315, %v1039
    %v1317 = vpop.permute.xlu0 %1316
    %1319 = vset.pattern.permute.xlu0 1
    %1320 = vperm.xlu0 %1319, %v1040
    %v1321 = vpop.permute.xlu0 %1320
    %1323 = vset.pattern.permute.xlu0 1
    %1324 = vperm.xlu0 %1323, %v1041
    %v1325 = vpop.permute.xlu0 %1324
    %1327 = vset.pattern.permute.xlu0 1
    %1328 = vperm.xlu0 %1327, %v1042
    %v1329 = vpop.permute.xlu0 %1328
    %1331 = vset.pattern.permute.xlu0 1
    %1332 = vperm.xlu0 %1331, %v1043
    %v1333 = vpop.permute.xlu0 %1332
    %1335 = vset.pattern.permute.xlu0 1
    %1336 = vperm.xlu0 %1335, %v1044
    %v1337 = vpop.permute.xlu0 %1336
    %1339 = vset.pattern.permute.xlu0 1
    %1340 = vperm.xlu0 %1339, %v1045
    %v1341 = vpop.permute.xlu0 %1340
    %1343 = vset.pattern.permute.xlu0 1
    %1344 = vperm.xlu0 %1343, %v1046
    %v1345 = vpop.permute.xlu0 %1344
    %1347 = vset.pattern.permute.xlu0 1
    %1348 = vperm.xlu0 %1347, %v1047
    %v1349 = vpop.permute.xlu0 %1348
    %1351 = vset.pattern.permute.xlu0 1
    %1352 = vperm.xlu0 %1351, %v1048
    %v1353 = vpop.permute.xlu0 %1352
    %1355 = vset.pattern.permute.xlu0 1
    %1356 = vperm.xlu0 %1355, %v1049
    %v1357 = vpop.permute.xlu0 %1356
    %1359 = vset.pattern.permute.xlu0 1
    %1360 = vperm.xlu0 %1359, %v1050
    %v1361 = vpop.permute.xlu0 %1360
    %1363 = vset.pattern.permute.xlu0 1
    %1364 = vperm.xlu0 %1363, %v1051
    %v1365 = vpop.permute.xlu0 %1364
    %1367 = vset.pattern.permute.xlu0 1
    %1368 = vperm.xlu0 %1367, %v1052
    %v1369 = vpop.permute.xlu0 %1368
    %1371 = vset.pattern.permute.xlu0 1
    %1372 = vperm.xlu0 %1371, %v1053
    %v1373 = vpop.permute.xlu0 %1372
    %1375 = vset.pattern.permute.xlu0 1
    %1376 = vperm.xlu0 %1375, %v1054
    %v1377 = vpop.permute.xlu0 %1376
    %1379 = vset.pattern.permute.xlu0 1
    %1380 = vperm.xlu0 %1379, %v1055
    %v1381 = vpop.permute.xlu0 %1380
    %1383 = vset.pattern.permute.xlu0 1
    %1384 = vperm.xlu0 %1383, %v1056
    %v1385 = vpop.permute.xlu0 %1384
    %1387 = vset.pattern.permute.xlu0 1
    %1388 = vperm.xlu0 %1387, %v1057
    %v1389 = vpop.permute.xlu0 %1388
    %1391 = vset.pattern.permute.xlu0 1
    %1392 = vperm.xlu0 %1391, %v1058
    %v1393 = vpop.permute.xlu0 %1392
    %1395 = vset.pattern.permute.xlu0 1
    %1396 = vperm.xlu0 %1395, %v1059
    %v1397 = vpop.permute.xlu0 %1396
    %1399 = vset.pattern.permute.xlu0 1
    %1400 = vperm.xlu0 %1399, %v1060
    %v1401 = vpop.permute.xlu0 %1400
    %1403 = vset.pattern.permute.xlu0 1
    %1404 = vperm.xlu0 %1403, %v1061
    %v1405 = vpop.permute.xlu0 %1404
    %1407 = vset.pattern.permute.xlu0 1
    %1408 = vperm.xlu0 %1407, %v1062
    %v1409 = vpop.permute.xlu0 %1408
    %1411 = vset.pattern.permute.xlu0 1
    %1412 = vperm.xlu0 %1411, %v1063
    %v1413 = vpop.permute.xlu0 %1412
    %1415 = vset.pattern.permute.xlu0 1
    %1416 = vperm.xlu0 %1415, %v1064
    %v1417 = vpop.permute.xlu0 %1416
    %1419 = vset.pattern.permute.xlu0 1
    %1420 = vperm.xlu0 %1419, %v1065
    %v1421 = vpop.permute.xlu0 %1420
    %v1423 = vlaneseq
    %v1424 = vshrl.u32 %v1423, 7
    %v1425 = vsub.s32 1, %v1424
    %v1426 = vrot.slane %v1066, %v1425
    %v1427 = vmul.f32 %v1297, %v1426
    %v1428 = vmul.f32 %v1301, %v1426
    %v1429 = vmul.f32 %v1305, %v1426
    %v1430 = vmul.f32 %v1309, %v1426
    %v1431 = vmul.f32 %v1313, %v1426
    %v1432 = vmul.f32 %v1317, %v1426
    %v1433 = vmul.f32 %v1321, %v1426
    %v1434 = vmul.f32 %v1325, %v1426
    %v1435 = vmul.f32 %v1329, %v1426
    %v1436 = vmul.f32 %v1333, %v1426
    %v1437 = vmul.f32 %v1337, %v1426
    %v1438 = vmul.f32 %v1341, %v1426
    %v1439 = vmul.f32 %v1345, %v1426
    %v1440 = vmul.f32 %v1349, %v1426
    %v1441 = vmul.f32 %v1353, %v1426
    %v1442 = vmul.f32 %v1357, %v1426
    %v1443 = vmul.f32 %v1361, %v1426
    %v1444 = vmul.f32 %v1365, %v1426
    %v1445 = vmul.f32 %v1369, %v1426
    %v1446 = vmul.f32 %v1373, %v1426
    %v1447 = vmul.f32 %v1377, %v1426
    %v1448 = vmul.f32 %v1381, %v1426
    %v1449 = vmul.f32 %v1385, %v1426
    %v1450 = vmul.f32 %v1389, %v1426
    %v1451 = vmul.f32 %v1393, %v1426
    %v1452 = vmul.f32 %v1397, %v1426
    %v1453 = vmul.f32 %v1401, %v1426
    %v1454 = vmul.f32 %v1405, %v1426
    %v1455 = vmul.f32 %v1409, %v1426
    %v1456 = vmul.f32 %v1413, %v1426
    %v1457 = vmul.f32 %v1417, %v1426
    %v1458 = vmul.f32 %v1421, %v1426
    %v1459 = vadd.f32 %v1263, %v1427
    %v1460 = vadd.f32 %v1264, %v1428
    %v1461 = vadd.f32 %v1265, %v1429
    %v1462 = vadd.f32 %v1266, %v1430
    %v1463 = vadd.f32 %v1267, %v1431
    %v1464 = vadd.f32 %v1268, %v1432
    %v1465 = vadd.f32 %v1269, %v1433
    %v1466 = vadd.f32 %v1270, %v1434
    %v1467 = vadd.f32 %v1271, %v1435
    %v1468 = vadd.f32 %v1272, %v1436
    %v1469 = vadd.f32 %v1273, %v1437
    %v1470 = vadd.f32 %v1274, %v1438
    %v1471 = vadd.f32 %v1275, %v1439
    %v1472 = vadd.f32 %v1276, %v1440
    %v1473 = vadd.f32 %v1277, %v1441
    %v1474 = vadd.f32 %v1278, %v1442
    %v1475 = vadd.f32 %v1279, %v1443
    %v1476 = vadd.f32 %v1280, %v1444
    %v1477 = vadd.f32 %v1281, %v1445
    %v1478 = vadd.f32 %v1282, %v1446
    %v1479 = vadd.f32 %v1283, %v1447
    %v1480 = vadd.f32 %v1284, %v1448
    %v1481 = vadd.f32 %v1285, %v1449
    %v1482 = vadd.f32 %v1286, %v1450
    %v1483 = vadd.f32 %v1287, %v1451
    %v1484 = vadd.f32 %v1288, %v1452
    %v1485 = vadd.f32 %v1289, %v1453
    %v1486 = vadd.f32 %v1290, %v1454
    %v1487 = vadd.f32 %v1291, %v1455
    %v1488 = vadd.f32 %v1292, %v1456
    %v1489 = vadd.f32 %v1293, %v1457
    %v1490 = vadd.f32 %v1294, %v1458
    %1491 = vset.pattern.permute.xlu0 2
    %1492 = vperm.xlu0 %1491, %v1034
    %v1493 = vpop.permute.xlu0 %1492
    %1495 = vset.pattern.permute.xlu0 2
    %1496 = vperm.xlu0 %1495, %v1035
    %v1497 = vpop.permute.xlu0 %1496
    %1499 = vset.pattern.permute.xlu0 2
    %1500 = vperm.xlu0 %1499, %v1036
    %v1501 = vpop.permute.xlu0 %1500
    %1503 = vset.pattern.permute.xlu0 2
    %1504 = vperm.xlu0 %1503, %v1037
    %v1505 = vpop.permute.xlu0 %1504
    %1507 = vset.pattern.permute.xlu0 2
    %1508 = vperm.xlu0 %1507, %v1038
    %v1509 = vpop.permute.xlu0 %1508
    %1511 = vset.pattern.permute.xlu0 2
    %1512 = vperm.xlu0 %1511, %v1039
    %v1513 = vpop.permute.xlu0 %1512
    %1515 = vset.pattern.permute.xlu0 2
    %1516 = vperm.xlu0 %1515, %v1040
    %v1517 = vpop.permute.xlu0 %1516
    %1519 = vset.pattern.permute.xlu0 2
    %1520 = vperm.xlu0 %1519, %v1041
    %v1521 = vpop.permute.xlu0 %1520
    %1523 = vset.pattern.permute.xlu0 2
    %1524 = vperm.xlu0 %1523, %v1042
    %v1525 = vpop.permute.xlu0 %1524
    %1527 = vset.pattern.permute.xlu0 2
    %1528 = vperm.xlu0 %1527, %v1043
    %v1529 = vpop.permute.xlu0 %1528
    %1531 = vset.pattern.permute.xlu0 2
    %1532 = vperm.xlu0 %1531, %v1044
    %v1533 = vpop.permute.xlu0 %1532
    %1535 = vset.pattern.permute.xlu0 2
    %1536 = vperm.xlu0 %1535, %v1045
    %v1537 = vpop.permute.xlu0 %1536
    %1539 = vset.pattern.permute.xlu0 2
    %1540 = vperm.xlu0 %1539, %v1046
    %v1541 = vpop.permute.xlu0 %1540
    %1543 = vset.pattern.permute.xlu0 2
    %1544 = vperm.xlu0 %1543, %v1047
    %v1545 = vpop.permute.xlu0 %1544
    %1547 = vset.pattern.permute.xlu0 2
    %1548 = vperm.xlu0 %1547, %v1048
    %v1549 = vpop.permute.xlu0 %1548
    %1551 = vset.pattern.permute.xlu0 2
    %1552 = vperm.xlu0 %1551, %v1049
    %v1553 = vpop.permute.xlu0 %1552
    %1555 = vset.pattern.permute.xlu0 2
    %1556 = vperm.xlu0 %1555, %v1050
    %v1557 = vpop.permute.xlu0 %1556
    %1559 = vset.pattern.permute.xlu0 2
    %1560 = vperm.xlu0 %1559, %v1051
    %v1561 = vpop.permute.xlu0 %1560
    %1563 = vset.pattern.permute.xlu0 2
    %1564 = vperm.xlu0 %1563, %v1052
    %v1565 = vpop.permute.xlu0 %1564
    %1567 = vset.pattern.permute.xlu0 2
    %1568 = vperm.xlu0 %1567, %v1053
    %v1569 = vpop.permute.xlu0 %1568
    %1571 = vset.pattern.permute.xlu0 2
    %1572 = vperm.xlu0 %1571, %v1054
    %v1573 = vpop.permute.xlu0 %1572
    %1575 = vset.pattern.permute.xlu0 2
    %1576 = vperm.xlu0 %1575, %v1055
    %v1577 = vpop.permute.xlu0 %1576
    %1579 = vset.pattern.permute.xlu0 2
    %1580 = vperm.xlu0 %1579, %v1056
    %v1581 = vpop.permute.xlu0 %1580
    %1583 = vset.pattern.permute.xlu0 2
    %1584 = vperm.xlu0 %1583, %v1057
    %v1585 = vpop.permute.xlu0 %1584
    %1587 = vset.pattern.permute.xlu0 2
    %1588 = vperm.xlu0 %1587, %v1058
    %v1589 = vpop.permute.xlu0 %1588
    %1591 = vset.pattern.permute.xlu0 2
    %1592 = vperm.xlu0 %1591, %v1059
    %v1593 = vpop.permute.xlu0 %1592
    %1595 = vset.pattern.permute.xlu0 2
    %1596 = vperm.xlu0 %1595, %v1060
    %v1597 = vpop.permute.xlu0 %1596
    %1599 = vset.pattern.permute.xlu0 2
    %1600 = vperm.xlu0 %1599, %v1061
    %v1601 = vpop.permute.xlu0 %1600
    %1603 = vset.pattern.permute.xlu0 2
    %1604 = vperm.xlu0 %1603, %v1062
    %v1605 = vpop.permute.xlu0 %1604
    %1607 = vset.pattern.permute.xlu0 2
    %1608 = vperm.xlu0 %1607, %v1063
    %v1609 = vpop.permute.xlu0 %1608
    %1611 = vset.pattern.permute.xlu0 2
    %1612 = vperm.xlu0 %1611, %v1064
    %v1613 = vpop.permute.xlu0 %1612
    %1615 = vset.pattern.permute.xlu0 2
    %1616 = vperm.xlu0 %1615, %v1065
    %v1617 = vpop.permute.xlu0 %1616
    %v1619 = vlaneseq
    %v1620 = vshrl.u32 %v1619, 7
    %v1621 = vsub.s32 2, %v1620
    %v1622 = vrot.slane %v1066, %v1621
    %v1623 = vmul.f32 %v1493, %v1622
    %v1624 = vmul.f32 %v1497, %v1622
    %v1625 = vmul.f32 %v1501, %v1622
    %v1626 = vmul.f32 %v1505, %v1622
    %v1627 = vmul.f32 %v1509, %v1622
    %v1628 = vmul.f32 %v1513, %v1622
    %v1629 = vmul.f32 %v1517, %v1622
    %v1630 = vmul.f32 %v1521, %v1622
    %v1631 = vmul.f32 %v1525, %v1622
    %v1632 = vmul.f32 %v1529, %v1622
    %v1633 = vmul.f32 %v1533, %v1622
    %v1634 = vmul.f32 %v1537, %v1622
    %v1635 = vmul.f32 %v1541, %v1622
    %v1636 = vmul.f32 %v1545, %v1622
    %v1637 = vmul.f32 %v1549, %v1622
    %v1638 = vmul.f32 %v1553, %v1622
    %v1639 = vmul.f32 %v1557, %v1622
    %v1640 = vmul.f32 %v1561, %v1622
    %v1641 = vmul.f32 %v1565, %v1622
    %v1642 = vmul.f32 %v1569, %v1622
    %v1643 = vmul.f32 %v1573, %v1622
    %v1644 = vmul.f32 %v1577, %v1622
    %v1645 = vmul.f32 %v1581, %v1622
    %v1646 = vmul.f32 %v1585, %v1622
    %v1647 = vmul.f32 %v1589, %v1622
    %v1648 = vmul.f32 %v1593, %v1622
    %v1649 = vmul.f32 %v1597, %v1622
    %v1650 = vmul.f32 %v1601, %v1622
    %v1651 = vmul.f32 %v1605, %v1622
    %v1652 = vmul.f32 %v1609, %v1622
    %v1653 = vmul.f32 %v1613, %v1622
    %v1654 = vmul.f32 %v1617, %v1622
    %v1655 = vadd.f32 %v1459, %v1623
    %v1656 = vadd.f32 %v1460, %v1624
    %v1657 = vadd.f32 %v1461, %v1625
    %v1658 = vadd.f32 %v1462, %v1626
    %v1659 = vadd.f32 %v1463, %v1627
    %v1660 = vadd.f32 %v1464, %v1628
    %v1661 = vadd.f32 %v1465, %v1629
    %v1662 = vadd.f32 %v1466, %v1630
    %v1663 = vadd.f32 %v1467, %v1631
    %v1664 = vadd.f32 %v1468, %v1632
    %v1665 = vadd.f32 %v1469, %v1633
    %v1666 = vadd.f32 %v1470, %v1634
    %v1667 = vadd.f32 %v1471, %v1635
    %v1668 = vadd.f32 %v1472, %v1636
    %v1669 = vadd.f32 %v1473, %v1637
    %v1670 = vadd.f32 %v1474, %v1638
    %v1671 = vadd.f32 %v1475, %v1639
    %v1672 = vadd.f32 %v1476, %v1640
    %v1673 = vadd.f32 %v1477, %v1641
    %v1674 = vadd.f32 %v1478, %v1642
    %v1675 = vadd.f32 %v1479, %v1643
    %v1676 = vadd.f32 %v1480, %v1644
    %v1677 = vadd.f32 %v1481, %v1645
    %v1678 = vadd.f32 %v1482, %v1646
    %v1679 = vadd.f32 %v1483, %v1647
    %v1680 = vadd.f32 %v1484, %v1648
    %v1681 = vadd.f32 %v1485, %v1649
    %v1682 = vadd.f32 %v1486, %v1650
    %v1683 = vadd.f32 %v1487, %v1651
    %v1684 = vadd.f32 %v1488, %v1652
    %v1685 = vadd.f32 %v1489, %v1653
    %v1686 = vadd.f32 %v1490, %v1654
    %v1687 = vmax.f32 %v1655, 0.0
    %v1688 = vmax.f32 %v1656, 0.0
    %v1689 = vmax.f32 %v1657, 0.0
    %v1690 = vmax.f32 %v1658, 0.0
    %v1691 = vmax.f32 %v1659, 0.0
    %v1692 = vmax.f32 %v1660, 0.0
    %v1693 = vmax.f32 %v1661, 0.0
    %v1694 = vmax.f32 %v1662, 0.0
    %v1695 = vmax.f32 %v1663, 0.0
    %v1696 = vmax.f32 %v1664, 0.0
    %v1697 = vmax.f32 %v1665, 0.0
    %v1698 = vmax.f32 %v1666, 0.0
    %v1699 = vmax.f32 %v1667, 0.0
    %v1700 = vmax.f32 %v1668, 0.0
    %v1701 = vmax.f32 %v1669, 0.0
    %v1702 = vmax.f32 %v1670, 0.0
    %v1703 = vmax.f32 %v1671, 0.0
    %v1704 = vmax.f32 %v1672, 0.0
    %v1705 = vmax.f32 %v1673, 0.0
    %v1706 = vmax.f32 %v1674, 0.0
    %v1707 = vmax.f32 %v1675, 0.0
    %v1708 = vmax.f32 %v1676, 0.0
    %v1709 = vmax.f32 %v1677, 0.0
    %v1710 = vmax.f32 %v1678, 0.0
    %v1711 = vmax.f32 %v1679, 0.0
    %v1712 = vmax.f32 %v1680, 0.0
    %v1713 = vmax.f32 %v1681, 0.0
    %v1714 = vmax.f32 %v1682, 0.0
    %v1715 = vmax.f32 %v1683, 0.0
    %v1716 = vmax.f32 %v1684, 0.0
    %v1717 = vmax.f32 %v1685, 0.0
    %v1718 = vmax.f32 %v1686, 0.0
    %v1719 = vpack.c.bf16 %v1688, %v1687
    %v1720 = vpack.c.bf16 %v1690, %v1689
    %v1721 = vpack.c.bf16 %v1692, %v1691
    %v1722 = vpack.c.bf16 %v1694, %v1693
    %v1723 = vpack.c.bf16 %v1696, %v1695
    %v1724 = vpack.c.bf16 %v1698, %v1697
    %v1725 = vpack.c.bf16 %v1700, %v1699
    %v1726 = vpack.c.bf16 %v1702, %v1701
    %v1727 = vpack.c.bf16 %v1704, %v1703
    %v1728 = vpack.c.bf16 %v1706, %v1705
    %v1729 = vpack.c.bf16 %v1708, %v1707
    %v1730 = vpack.c.bf16 %v1710, %v1709
    %v1731 = vpack.c.bf16 %v1712, %v1711
    %v1732 = vpack.c.bf16 %v1714, %v1713
    %v1733 = vpack.c.bf16 %v1716, %v1715
    %v1734 = vpack.c.bf16 %v1718, %v1717
    %v1735 = vld [vmem:[#allocation11] sm:$0xf]
    %v1736 = vld [vmem:[#allocation11 + $0x4] sm:$0xf]
    %v1737 = vld [vmem:[#allocation11 + $0x8] sm:$0xf]
    %v1738 = vld [vmem:[#allocation11 + $0xc] sm:$0xf]
    %v1739 = vld [vmem:[#allocation11 + $0x10] sm:$0xf]
    %v1740 = vld [vmem:[#allocation11 + $0x14] sm:$0xf]
    %v1741 = vld [vmem:[#allocation11 + $0x18] sm:$0xf]
    %v1742 = vld [vmem:[#allocation11 + $0x1c] sm:$0xf]
    %v1743 = vld [vmem:[#allocation11 + $0x20] sm:$0xf]
    %v1744 = vld [vmem:[#allocation11 + $0x24] sm:$0xf]
    %v1745 = vld [vmem:[#allocation11 + $0x28] sm:$0xf]
    %v1746 = vld [vmem:[#allocation11 + $0x2c] sm:$0xf]
    %v1747 = vld [vmem:[#allocation11 + $0x30] sm:$0xf]
    %v1748 = vld [vmem:[#allocation11 + $0x34] sm:$0xf]
    %v1749 = vld [vmem:[#allocation11 + $0x38] sm:$0xf]
    %v1750 = vld [vmem:[#allocation11 + $0x3c] sm:$0xf]
    %v1751 = vld [vmem:[#allocation13] sm:$0x1]
    %v1753 = vlaneseq
    %v1754 = vshrl.u32 %v1753, 7
    %v1755 = vsub.s32 0, %v1754
    %v1756 = vrot.slane %v1751, %v1755
    %v1774 = vunpack.c.l.b16 %v1735
    %v1775 = vunpack.c.l.b16 %v1736
    %v1776 = vunpack.c.l.b16 %v1737
    %v1777 = vunpack.c.l.b16 %v1738
    %v1778 = vunpack.c.l.b16 %v1739
    %v1779 = vunpack.c.l.b16 %v1740
    %v1780 = vunpack.c.l.b16 %v1741
    %v1781 = vunpack.c.l.b16 %v1742
    %v1782 = vunpack.c.l.b16 %v1743
    %v1783 = vunpack.c.l.b16 %v1744
    %v1784 = vunpack.c.l.b16 %v1745
    %v1785 = vunpack.c.l.b16 %v1746
    %v1786 = vunpack.c.l.b16 %v1747
    %v1787 = vunpack.c.l.b16 %v1748
    %v1788 = vunpack.c.l.b16 %v1749
    %v1789 = vunpack.c.l.b16 %v1750
    %v1790 = vpack.c.b16 %v1775, %v1774
    %v1791 = vpack.c.b16 %v1777, %v1776
    %v1792 = vpack.c.b16 %v1779, %v1778
    %v1793 = vpack.c.b16 %v1781, %v1780
    %v1794 = vpack.c.b16 %v1783, %v1782
    %v1795 = vpack.c.b16 %v1785, %v1784
    %v1796 = vpack.c.b16 %v1787, %v1786
    %v1797 = vpack.c.b16 %v1789, %v1788
    %1806 = vmatprep.subr.bf16.mxu0 0
    %1807 = vmatpush1.bf16.msra.mxu0 %v1790
    %1808 = vmatprep.subr.bf16.mxu0 0
    %1809 = vmatpush1.bf16.msra.mxu0 %v1791
    %1810 = vmatprep.subr.bf16.mxu0 0
    %1811 = vmatpush1.bf16.msra.mxu0 %v1792
    %1812 = vmatprep.subr.bf16.mxu0 0
    %1813 = vmatpush1.bf16.msra.mxu0 %v1793
    %1814 = vmatprep.subr.bf16.mxu0 0
    %1815 = vmatpush1.bf16.msra.mxu0 %v1794
    %1816 = vmatprep.subr.bf16.mxu0 0
    %1817 = vmatpush1.bf16.msra.mxu0 %v1795
    %1818 = vmatprep.subr.bf16.mxu0 0
    %1819 = vmatpush1.bf16.msra.mxu0 %v1796
    %1820 = vmatprep.subr.bf16.mxu0 0
    %1821 = vmatpush1.bf16.msra.mxu0 %v1797
    %1822 = vmatprep.subr.bf16.mxu0 0
    %1823 = vmatpush1.bf16.msra.mxu0 0
    %1824 = vmatprep.subr.bf16.mxu0 0
    %1825 = vmatpush1.bf16.msra.mxu0 0
    %1826 = vmatprep.subr.bf16.mxu0 0
    %1827 = vmatpush1.bf16.msra.mxu0 0
    %1828 = vmatprep.subr.bf16.mxu0 0
    %1829 = vmatpush1.bf16.msra.mxu0 0
    %1830 = vmatprep.subr.bf16.mxu0 0
    %1831 = vmatpush1.bf16.msra.mxu0 0
    %1832 = vmatprep.subr.bf16.mxu0 0
    %1833 = vmatpush1.bf16.msra.mxu0 0
    %1834 = vmatprep.subr.bf16.mxu0 0
    %1835 = vmatpush1.bf16.msra.mxu0 0
    %1836 = vmatprep.subr.bf16.mxu0 0
    %1837 = vmatpush1.bf16.msra.mxu0 0
    %1838 = vmatprep.mubr.bf16.mxu0 0
    %1839 = vmatmul.mubr.bf16.gmra.mrb[0].mxu0 %v1719
    %v1840 = vpop.f32.mrb[0].mxu0
    %v1841 = vadd.f32 %v1756, %v1840
    %v1842 = vpop.f32.mrb[0].mxu0
    %v1843 = vpop.f32.mrb[0].mxu0
    %v1844 = vadd.f32 %v1756, %v1843
    %v1845 = vpop.f32.mrb[0].mxu0
    %1846 = vmatprep.mubr.bf16.mxu0 0
    %1847 = vmatmul.mubr.bf16.gmra.mrb[0].mxu0 %v1720
    %v1848 = vpop.f32.mrb[0].mxu0
    %v1849 = vadd.f32 %v1756, %v1848
    %v1850 = vpop.f32.mrb[0].mxu0
    %v1851 = vpop.f32.mrb[0].mxu0
    %v1852 = vadd.f32 %v1756, %v1851
    %v1853 = vpop.f32.mrb[0].mxu0
    %1854 = vmatprep.mubr.bf16.mxu0 0
    %1855 = vmatmul.mubr.bf16.gmra.mrb[0].mxu0 %v1721
    %v1856 = vpop.f32.mrb[0].mxu0
    %v1857 = vadd.f32 %v1756, %v1856
    %v1858 = vpop.f32.mrb[0].mxu0
    %v1859 = vpop.f32.mrb[0].mxu0
    %v1860 = vadd.f32 %v1756, %v1859
    %v1861 = vpop.f32.mrb[0].mxu0
    %1862 = vmatprep.mubr.bf16.mxu0 0
    %1863 = vmatmul.mubr.bf16.gmra.mrb[0].mxu0 %v1722
    %v1864 = vpop.f32.mrb[0].mxu0
    %v1865 = vadd.f32 %v1756, %v1864
    %v1866 = vpop.f32.mrb[0].mxu0
    %v1867 = vpop.f32.mrb[0].mxu0
    %v1868 = vadd.f32 %v1756, %v1867
    %v1869 = vpop.f32.mrb[0].mxu0
    %1870 = vmatprep.mubr.bf16.mxu0 0
    %1871 = vmatmul.mubr.bf16.gmra.mrb[0].mxu0 %v1723
    %v1872 = vpop.f32.mrb[0].mxu0
    %v1873 = vadd.f32 %v1756, %v1872
    %v1874 = vpop.f32.mrb[0].mxu0
    %v1875 = vpop.f32.mrb[0].mxu0
    %v1876 = vadd.f32 %v1756, %v1875
    %v1877 = vpop.f32.mrb[0].mxu0
    %1878 = vmatprep.mubr.bf16.mxu0 0
    %1879 = vmatmul.mubr.bf16.gmra.mrb[0].mxu0 %v1724
    %v1880 = vpop.f32.mrb[0].mxu0
    %v1881 = vadd.f32 %v1756, %v1880
    %v1882 = vpop.f32.mrb[0].mxu0
    %v1883 = vpop.f32.mrb[0].mxu0
    %v1884 = vadd.f32 %v1756, %v1883
    %v1885 = vpop.f32.mrb[0].mxu0
    %1886 = vmatprep.mubr.bf16.mxu0 0
    %1887 = vmatmul.mubr.bf16.gmra.mrb[0].mxu0 %v1725
    %v1888 = vpop.f32.mrb[0].mxu0
    %v1889 = vadd.f32 %v1756, %v1888
    %v1890 = vpop.f32.mrb[0].mxu0
    %v1891 = vpop.f32.mrb[0].mxu0
    %v1892 = vadd.f32 %v1756, %v1891
    %v1893 = vpop.f32.mrb[0].mxu0
    %1894 = vmatprep.mubr.bf16.mxu0 0
    %1895 = vmatmul.mubr.bf16.gmra.mrb[0].mxu0 %v1726
    %v1896 = vpop.f32.mrb[0].mxu0
    %v1897 = vadd.f32 %v1756, %v1896
    %v1898 = vpop.f32.mrb[0].mxu0
    %v1899 = vpop.f32.mrb[0].mxu0
    %v1900 = vadd.f32 %v1756, %v1899
    %v1901 = vpop.f32.mrb[0].mxu0
    %1902 = vmatprep.mubr.bf16.mxu0 0
    %1903 = vmatmul.mubr.bf16.gmra.mrb[0].mxu0 %v1727
    %v1904 = vpop.f32.mrb[0].mxu0
    %v1905 = vadd.f32 %v1756, %v1904
    %v1906 = vpop.f32.mrb[0].mxu0
    %v1907 = vpop.f32.mrb[0].mxu0
    %v1908 = vadd.f32 %v1756, %v1907
    %v1909 = vpop.f32.mrb[0].mxu0
    %1910 = vmatprep.mubr.bf16.mxu0 0
    %1911 = vmatmul.mubr.bf16.gmra.mrb[0].mxu0 %v1728
    %v1912 = vpop.f32.mrb[0].mxu0
    %v1913 = vadd.f32 %v1756, %v1912
    %v1914 = vpop.f32.mrb[0].mxu0
    %v1915 = vpop.f32.mrb[0].mxu0
    %v1916 = vadd.f32 %v1756, %v1915
    %v1917 = vpop.f32.mrb[0].mxu0
    %1918 = vmatprep.mubr.bf16.mxu0 0
    %1919 = vmatmul.mubr.bf16.gmra.mrb[0].mxu0 %v1729
    %v1920 = vpop.f32.mrb[0].mxu0
    %v1921 = vadd.f32 %v1756, %v1920
    %v1922 = vpop.f32.mrb[0].mxu0
    %v1923 = vpop.f32.mrb[0].mxu0
    %v1924 = vadd.f32 %v1756, %v1923
    %v1925 = vpop.f32.mrb[0].mxu0
    %1926 = vmatprep.mubr.bf16.mxu0 0
    %1927 = vmatmul.mubr.bf16.gmra.mrb[0].mxu0 %v1730
    %v1928 = vpop.f32.mrb[0].mxu0
    %v1929 = vadd.f32 %v1756, %v1928
    %v1930 = vpop.f32.mrb[0].mxu0
    %v1931 = vpop.f32.mrb[0].mxu0
    %v1932 = vadd.f32 %v1756, %v1931
    %v1933 = vpop.f32.mrb[0].mxu0
    %1934 = vmatprep.mubr.bf16.mxu0 0
    %1935 = vmatmul.mubr.bf16.gmra.mrb[0].mxu0 %v1731
    %v1936 = vpop.f32.mrb[0].mxu0
    %v1937 = vadd.f32 %v1756, %v1936
    %v1938 = vpop.f32.mrb[0].mxu0
    %v1939 = vpop.f32.mrb[0].mxu0
    %v1940 = vadd.f32 %v1756, %v1939
    %v1941 = vpop.f32.mrb[0].mxu0
    %1942 = vmatprep.mubr.bf16.mxu0 0
    %1943 = vmatmul.mubr.bf16.gmra.mrb[0].mxu0 %v1732
    %v1944 = vpop.f32.mrb[0].mxu0
    %v1945 = vadd.f32 %v1756, %v1944
    %v1946 = vpop.f32.mrb[0].mxu0
    %v1947 = vpop.f32.mrb[0].mxu0
    %v1948 = vadd.f32 %v1756, %v1947
    %v1949 = vpop.f32.mrb[0].mxu0
    %1950 = vmatprep.mubr.bf16.mxu0 0
    %1951 = vmatmul.mubr.bf16.gmra.mrb[0].mxu0 %v1733
    %v1952 = vpop.f32.mrb[0].mxu0
    %v1953 = vadd.f32 %v1756, %v1952
    %v1954 = vpop.f32.mrb[0].mxu0
    %v1955 = vpop.f32.mrb[0].mxu0
    %v1956 = vadd.f32 %v1756, %v1955
    %v1957 = vpop.f32.mrb[0].mxu0
    %1958 = vmatprep.mubr.bf16.mxu0 0
    %1959 = vmatmul.mubr.bf16.gmra.mrb[0].mxu0 %v1734
    %v1960 = vpop.f32.mrb[0].mxu0
    %v1961 = vadd.f32 %v1756, %v1960
    %v1962 = vpop.f32.mrb[0].mxu0
    %v1963 = vpop.f32.mrb[0].mxu0
    %v1964 = vadd.f32 %v1756, %v1963
    %v1965 = vpop.f32.mrb[0].mxu0
    %1966 = vdwg.mxu0
    %v1967 = vmax.f32 %v1841, 0.0
    %v1968 = vmax.f32 %v1844, 0.0
    %v1969 = vmax.f32 %v1849, 0.0
    %v1970 = vmax.f32 %v1852, 0.0
    %v1971 = vmax.f32 %v1857, 0.0
    %v1972 = vmax.f32 %v1860, 0.0
    %v1973 = vmax.f32 %v1865, 0.0
    %v1974 = vmax.f32 %v1868, 0.0
    %v1975 = vmax.f32 %v1873, 0.0
    %v1976 = vmax.f32 %v1876, 0.0
    %v1977 = vmax.f32 %v1881, 0.0
    %v1978 = vmax.f32 %v1884, 0.0
    %v1979 = vmax.f32 %v1889, 0.0
    %v1980 = vmax.f32 %v1892, 0.0
    %v1981 = vmax.f32 %v1897, 0.0
    %v1982 = vmax.f32 %v1900, 0.0
    %v1983 = vmax.f32 %v1905, 0.0
    %v1984 = vmax.f32 %v1908, 0.0
    %v1985 = vmax.f32 %v1913, 0.0
    %v1986 = vmax.f32 %v1916, 0.0
    %v1987 = vmax.f32 %v1921, 0.0
    %v1988 = vmax.f32 %v1924, 0.0
    %v1989 = vmax.f32 %v1929, 0.0
    %v1990 = vmax.f32 %v1932, 0.0
    %v1991 = vmax.f32 %v1937, 0.0
    %v1992 = vmax.f32 %v1940, 0.0
    %v1993 = vmax.f32 %v1945, 0.0
    %v1994 = vmax.f32 %v1948, 0.0
    %v1995 = vmax.f32 %v1953, 0.0
    %v1996 = vmax.f32 %v1956, 0.0
    %v1997 = vmax.f32 %v1961, 0.0
    %v1998 = vmax.f32 %v1964, 0.0
    %v1999 = vpack.c.bf16 %v1968, %v1967
    %v2000 = vpack.c.bf16 %v1970, %v1969
    %v2001 = vpack.c.bf16 %v1972, %v1971
    %v2002 = vpack.c.bf16 %v1974, %v1973
    %v2003 = vpack.c.bf16 %v1976, %v1975
    %v2004 = vpack.c.bf16 %v1978, %v1977
    %v2005 = vpack.c.bf16 %v1980, %v1979
    %v2006 = vpack.c.bf16 %v1982, %v1981
    %v2007 = vpack.c.bf16 %v1984, %v1983
    %v2008 = vpack.c.bf16 %v1986, %v1985
    %v2009 = vpack.c.bf16 %v1988, %v1987
    %v2010 = vpack.c.bf16 %v1990, %v1989
    %v2011 = vpack.c.bf16 %v1992, %v1991
    %v2012 = vpack.c.bf16 %v1994, %v1993
    %v2013 = vpack.c.bf16 %v1996, %v1995
    %v2014 = vpack.c.bf16 %v1998, %v1997
    %v2015 = vld [vmem:[#allocation14] sm:$0xf]
    %v2016 = vld [vmem:[#allocation14 + $0x4] sm:$0xf]
    %v2017 = vld [vmem:[#allocation14 + $0x8] sm:$0xf]
    %v2018 = vld [vmem:[#allocation14 + $0xc] sm:$0xf]
    %v2019 = vld [vmem:[#allocation14 + $0x10] sm:$0xf]
    %v2020 = vld [vmem:[#allocation14 + $0x14] sm:$0xf]
    %v2021 = vld [vmem:[#allocation14 + $0x18] sm:$0xf]
    %v2022 = vld [vmem:[#allocation14 + $0x1c] sm:$0xf]
    %v2023 = vld [vmem:[#allocation14 + $0x20] sm:$0xf]
    %v2024 = vld [vmem:[#allocation14 + $0x24] sm:$0xf]
    %v2025 = vld [vmem:[#allocation14 + $0x28] sm:$0xf]
    %v2026 = vld [vmem:[#allocation14 + $0x2c] sm:$0xf]
    %v2027 = vld [vmem:[#allocation14 + $0x30] sm:$0xf]
    %v2028 = vld [vmem:[#allocation14 + $0x34] sm:$0xf]
    %v2029 = vld [vmem:[#allocation14 + $0x38] sm:$0xf]
    %v2030 = vld [vmem:[#allocation14 + $0x3c] sm:$0xf]
    %v2031 = vld [vmem:[#allocation16] sm:$0x1]
    %v2033 = vlaneseq
    %v2034 = vshrl.u32 %v2033, 7
    %v2035 = vsub.s32 0, %v2034
    %v2036 = vrot.slane %v2031, %v2035
    %v2054 = vunpack.c.l.b16 %v2015
    %v2055 = vunpack.c.l.b16 %v2016
    %v2056 = vunpack.c.l.b16 %v2017
    %v2057 = vunpack.c.l.b16 %v2018
    %v2058 = vunpack.c.l.b16 %v2019
    %v2059 = vunpack.c.l.b16 %v2020
    %v2060 = vunpack.c.l.b16 %v2021
    %v2061 = vunpack.c.l.b16 %v2022
    %v2062 = vunpack.c.l.b16 %v2023
    %v2063 = vunpack.c.l.b16 %v2024
    %v2064 = vunpack.c.l.b16 %v2025
    %v2065 = vunpack.c.l.b16 %v2026
    %v2066 = vunpack.c.l.b16 %v2027
    %v2067 = vunpack.c.l.b16 %v2028
    %v2068 = vunpack.c.l.b16 %v2029
    %v2069 = vunpack.c.l.b16 %v2030
    %v2070 = vpack.c.b16 %v2055, %v2054
    %v2071 = vpack.c.b16 %v2057, %v2056
    %v2072 = vpack.c.b16 %v2059, %v2058
    %v2073 = vpack.c.b16 %v2061, %v2060
    %v2074 = vpack.c.b16 %v2063, %v2062
    %v2075 = vpack.c.b16 %v2065, %v2064
    %v2076 = vpack.c.b16 %v2067, %v2066
    %v2077 = vpack.c.b16 %v2069, %v2068
    %2086 = vmatprep.subr.bf16.mxu0 0
    %2087 = vmatpush1.bf16.msra.mxu0 %v2070
    %2088 = vmatprep.subr.bf16.mxu0 0
    %2089 = vmatpush1.bf16.msra.mxu0 %v2071
    %2090 = vmatprep.subr.bf16.mxu0 0
    %2091 = vmatpush1.bf16.msra.mxu0 %v2072
    %2092 = vmatprep.subr.bf16.mxu0 0
    %2093 = vmatpush1.bf16.msra.mxu0 %v2073
    %2094 = vmatprep.subr.bf16.mxu0 0
    %2095 = vmatpush1.bf16.msra.mxu0 %v2074
    %2096 = vmatprep.subr.bf16.mxu0 0
    %2097 = vmatpush1.bf16.msra.mxu0 %v2075
    %2098 = vmatprep.subr.bf16.mxu0 0
    %2099 = vmatpush1.bf16.msra.mxu0 %v2076
    %2100 = vmatprep.subr.bf16.mxu0 0
    %2101 = vmatpush1.bf16.msra.mxu0 %v2077
    %2102 = vmatprep.subr.bf16.mxu0 0
    %2103 = vmatpush1.bf16.msra.mxu0 0
    %2104 = vmatprep.subr.bf16.mxu0 0
    %2105 = vmatpush1.bf16.msra.mxu0 0
    %2106 = vmatprep.subr.bf16.mxu0 0
    %2107 = vmatpush1.bf16.msra.mxu0 0
    %2108 = vmatprep.subr.bf16.mxu0 0
    %2109 = vmatpush1.bf16.msra.mxu0 0
    %2110 = vmatprep.subr.bf16.mxu0 0
    %2111 = vmatpush1.bf16.msra.mxu0 0
    %2112 = vmatprep.subr.bf16.mxu0 0
    %2113 = vmatpush1.bf16.msra.mxu0 0
    %2114 = vmatprep.subr.bf16.mxu0 0
    %2115 = vmatpush1.bf16.msra.mxu0 0
    %2116 = vmatprep.subr.bf16.mxu0 0
    %2117 = vmatpush1.bf16.msra.mxu0 0
    %2118 = vmatprep.mubr.bf16.mxu0 0
    %2119 = vmatmul.mubr.bf16.gmra.mrb[0].mxu0 %v1999
    %v2120 = vpop.f32.mrb[0].mxu0
    %v2121 = vadd.f32 %v2036, %v2120
    %v2122 = vpop.f32.mrb[0].mxu0
    %v2123 = vpop.f32.mrb[0].mxu0
    %v2124 = vadd.f32 %v2036, %v2123
    %v2125 = vpop.f32.mrb[0].mxu0
    %2126 = vmatprep.mubr.bf16.mxu0 0
    %2127 = vmatmul.mubr.bf16.gmra.mrb[0].mxu0 %v2000
    %v2128 = vpop.f32.mrb[0].mxu0
    %v2129 = vadd.f32 %v2036, %v2128
    %v2130 = vpop.f32.mrb[0].mxu0
    %v2131 = vpop.f32.mrb[0].mxu0
    %v2132 = vadd.f32 %v2036, %v2131
    %v2133 = vpop.f32.mrb[0].mxu0
    %2134 = vmatprep.mubr.bf16.mxu0 0
    %2135 = vmatmul.mubr.bf16.gmra.mrb[0].mxu0 %v2001
    %v2136 = vpop.f32.mrb[0].mxu0
    %v2137 = vadd.f32 %v2036, %v2136
    %v2138 = vpop.f32.mrb[0].mxu0
    %v2139 = vpop.f32.mrb[0].mxu0
    %v2140 = vadd.f32 %v2036, %v2139
    %v2141 = vpop.f32.mrb[0].mxu0
    %2142 = vmatprep.mubr.bf16.mxu0 0
    %2143 = vmatmul.mubr.bf16.gmra.mrb[0].mxu0 %v2002
    %v2144 = vpop.f32.mrb[0].mxu0
    %v2145 = vadd.f32 %v2036, %v2144
    %v2146 = vpop.f32.mrb[0].mxu0
    %v2147 = vpop.f32.mrb[0].mxu0
    %v2148 = vadd.f32 %v2036, %v2147
    %v2149 = vpop.f32.mrb[0].mxu0
    %2150 = vmatprep.mubr.bf16.mxu0 0
    %2151 = vmatmul.mubr.bf16.gmra.mrb[0].mxu0 %v2003
    %v2152 = vpop.f32.mrb[0].mxu0
    %v2153 = vadd.f32 %v2036, %v2152
    %v2154 = vpop.f32.mrb[0].mxu0
    %v2155 = vpop.f32.mrb[0].mxu0
    %v2156 = vadd.f32 %v2036, %v2155
    %v2157 = vpop.f32.mrb[0].mxu0
    %2158 = vmatprep.mubr.bf16.mxu0 0
    %2159 = vmatmul.mubr.bf16.gmra.mrb[0].mxu0 %v2004
    %v2160 = vpop.f32.mrb[0].mxu0
    %v2161 = vadd.f32 %v2036, %v2160
    %v2162 = vpop.f32.mrb[0].mxu0
    %v2163 = vpop.f32.mrb[0].mxu0
    %v2164 = vadd.f32 %v2036, %v2163
    %v2165 = vpop.f32.mrb[0].mxu0
    %2166 = vmatprep.mubr.bf16.mxu0 0
    %2167 = vmatmul.mubr.bf16.gmra.mrb[0].mxu0 %v2005
    %v2168 = vpop.f32.mrb[0].mxu0
    %v2169 = vadd.f32 %v2036, %v2168
    %v2170 = vpop.f32.mrb[0].mxu0
    %v2171 = vpop.f32.mrb[0].mxu0
    %v2172 = vadd.f32 %v2036, %v2171
    %v2173 = vpop.f32.mrb[0].mxu0
    %2174 = vmatprep.mubr.bf16.mxu0 0
    %2175 = vmatmul.mubr.bf16.gmra.mrb[0].mxu0 %v2006
    %v2176 = vpop.f32.mrb[0].mxu0
    %v2177 = vadd.f32 %v2036, %v2176
    %v2178 = vpop.f32.mrb[0].mxu0
    %v2179 = vpop.f32.mrb[0].mxu0
    %v2180 = vadd.f32 %v2036, %v2179
    %v2181 = vpop.f32.mrb[0].mxu0
    %2182 = vmatprep.mubr.bf16.mxu0 0
    %2183 = vmatmul.mubr.bf16.gmra.mrb[0].mxu0 %v2007
    %v2184 = vpop.f32.mrb[0].mxu0
    %v2185 = vadd.f32 %v2036, %v2184
    %v2186 = vpop.f32.mrb[0].mxu0
    %v2187 = vpop.f32.mrb[0].mxu0
    %v2188 = vadd.f32 %v2036, %v2187
    %v2189 = vpop.f32.mrb[0].mxu0
    %2190 = vmatprep.mubr.bf16.mxu0 0
    %2191 = vmatmul.mubr.bf16.gmra.mrb[0].mxu0 %v2008
    %v2192 = vpop.f32.mrb[0].mxu0
    %v2193 = vadd.f32 %v2036, %v2192
    %v2194 = vpop.f32.mrb[0].mxu0
    %v2195 = vpop.f32.mrb[0].mxu0
    %v2196 = vadd.f32 %v2036, %v2195
    %v2197 = vpop.f32.mrb[0].mxu0
    %2198 = vmatprep.mubr.bf16.mxu0 0
    %2199 = vmatmul.mubr.bf16.gmra.mrb[0].mxu0 %v2009
    %v2200 = vpop.f32.mrb[0].mxu0
    %v2201 = vadd.f32 %v2036, %v2200
    %v2202 = vpop.f32.mrb[0].mxu0
    %v2203 = vpop.f32.mrb[0].mxu0
    %v2204 = vadd.f32 %v2036, %v2203
    %v2205 = vpop.f32.mrb[0].mxu0
    %2206 = vmatprep.mubr.bf16.mxu0 0
    %2207 = vmatmul.mubr.bf16.gmra.mrb[0].mxu0 %v2010
    %v2208 = vpop.f32.mrb[0].mxu0
    %v2209 = vadd.f32 %v2036, %v2208
    %v2210 = vpop.f32.mrb[0].mxu0
    %v2211 = vpop.f32.mrb[0].mxu0
    %v2212 = vadd.f32 %v2036, %v2211
    %v2213 = vpop.f32.mrb[0].mxu0
    %2214 = vmatprep.mubr.bf16.mxu0 0
    %2215 = vmatmul.mubr.bf16.gmra.mrb[0].mxu0 %v2011
    %v2216 = vpop.f32.mrb[0].mxu0
    %v2217 = vadd.f32 %v2036, %v2216
    %v2218 = vpop.f32.mrb[0].mxu0
    %v2219 = vpop.f32.mrb[0].mxu0
    %v2220 = vadd.f32 %v2036, %v2219
    %v2221 = vpop.f32.mrb[0].mxu0
    %2222 = vmatprep.mubr.bf16.mxu0 0
    %2223 = vmatmul.mubr.bf16.gmra.mrb[0].mxu0 %v2012
    %v2224 = vpop.f32.mrb[0].mxu0
    %v2225 = vadd.f32 %v2036, %v2224
    %v2226 = vpop.f32.mrb[0].mxu0
    %v2227 = vpop.f32.mrb[0].mxu0
    %v2228 = vadd.f32 %v2036, %v2227
    %v2229 = vpop.f32.mrb[0].mxu0
    %2230 = vmatprep.mubr.bf16.mxu0 0
    %2231 = vmatmul.mubr.bf16.gmra.mrb[0].mxu0 %v2013
    %v2232 = vpop.f32.mrb[0].mxu0
    %v2233 = vadd.f32 %v2036, %v2232
    %v2234 = vpop.f32.mrb[0].mxu0
    %v2235 = vpop.f32.mrb[0].mxu0
    %v2236 = vadd.f32 %v2036, %v2235
    %v2237 = vpop.f32.mrb[0].mxu0
    %2238 = vmatprep.mubr.bf16.mxu0 0
    %2239 = vmatmul.mubr.bf16.gmra.mrb[0].mxu0 %v2014
    %v2240 = vpop.f32.mrb[0].mxu0
    %v2241 = vadd.f32 %v2036, %v2240
    %v2242 = vpop.f32.mrb[0].mxu0
    %v2243 = vpop.f32.mrb[0].mxu0
    %v2244 = vadd.f32 %v2036, %v2243
    %v2245 = vpop.f32.mrb[0].mxu0
    %2246 = vdwg.mxu0
    %v2247 = vmax.f32 %v2121, %v2124
    %v2248 = vrot.slane %v2247, 4
    %v2249 = vmax.f32 %v2247, %v2248
    %v2250 = vrot.slane %v2249, 2
    %v2251 = vmax.f32 %v2249, %v2250
    %v2252 = vrot.slane %v2251, 1
    %v2253 = vmax.f32 %v2251, %v2252
    %v2254 = vmax.f32 %v2129, %v2132
    %v2255 = vrot.slane %v2254, 4
    %v2256 = vmax.f32 %v2254, %v2255
    %v2257 = vrot.slane %v2256, 2
    %v2258 = vmax.f32 %v2256, %v2257
    %v2259 = vrot.slane %v2258, 1
    %v2260 = vmax.f32 %v2258, %v2259
    %v2261 = vmax.f32 %v2137, %v2140
    %v2262 = vrot.slane %v2261, 4
    %v2263 = vmax.f32 %v2261, %v2262
    %v2264 = vrot.slane %v2263, 2
    %v2265 = vmax.f32 %v2263, %v2264
    %v2266 = vrot.slane %v2265, 1
    %v2267 = vmax.f32 %v2265, %v2266
    %v2268 = vmax.f32 %v2145, %v2148
    %v2269 = vrot.slane %v2268, 4
    %v2270 = vmax.f32 %v2268, %v2269
    %v2271 = vrot.slane %v2270, 2
    %v2272 = vmax.f32 %v2270, %v2271
    %v2273 = vrot.slane %v2272, 1
    %v2274 = vmax.f32 %v2272, %v2273
    %v2275 = vmax.f32 %v2153, %v2156
    %v2276 = vrot.slane %v2275, 4
    %v2277 = vmax.f32 %v2275, %v2276
    %v2278 = vrot.slane %v2277, 2
    %v2279 = vmax.f32 %v2277, %v2278
    %v2280 = vrot.slane %v2279, 1
    %v2281 = vmax.f32 %v2279, %v2280
    %v2282 = vmax.f32 %v2161, %v2164
    %v2283 = vrot.slane %v2282, 4
    %v2284 = vmax.f32 %v2282, %v2283
    %v2285 = vrot.slane %v2284, 2
    %v2286 = vmax.f32 %v2284, %v2285
    %v2287 = vrot.slane %v2286, 1
    %v2288 = vmax.f32 %v2286, %v2287
    %v2289 = vmax.f32 %v2169, %v2172
    %v2290 = vrot.slane %v2289, 4
    %v2291 = vmax.f32 %v2289, %v2290
    %v2292 = vrot.slane %v2291, 2
    %v2293 = vmax.f32 %v2291, %v2292
    %v2294 = vrot.slane %v2293, 1
    %v2295 = vmax.f32 %v2293, %v2294
    %v2296 = vmax.f32 %v2177, %v2180
    %v2297 = vrot.slane %v2296, 4
    %v2298 = vmax.f32 %v2296, %v2297
    %v2299 = vrot.slane %v2298, 2
    %v2300 = vmax.f32 %v2298, %v2299
    %v2301 = vrot.slane %v2300, 1
    %v2302 = vmax.f32 %v2300, %v2301
    %v2303 = vmax.f32 %v2185, %v2188
    %v2304 = vrot.slane %v2303, 4
    %v2305 = vmax.f32 %v2303, %v2304
    %v2306 = vrot.slane %v2305, 2
    %v2307 = vmax.f32 %v2305, %v2306
    %v2308 = vrot.slane %v2307, 1
    %v2309 = vmax.f32 %v2307, %v2308
    %v2310 = vmax.f32 %v2193, %v2196
    %v2311 = vrot.slane %v2310, 4
    %v2312 = vmax.f32 %v2310, %v2311
    %v2313 = vrot.slane %v2312, 2
    %v2314 = vmax.f32 %v2312, %v2313
    %v2315 = vrot.slane %v2314, 1
    %v2316 = vmax.f32 %v2314, %v2315
    %v2317 = vmax.f32 %v2201, %v2204
    %v2318 = vrot.slane %v2317, 4
    %v2319 = vmax.f32 %v2317, %v2318
    %v2320 = vrot.slane %v2319, 2
    %v2321 = vmax.f32 %v2319, %v2320
    %v2322 = vrot.slane %v2321, 1
    %v2323 = vmax.f32 %v2321, %v2322
    %v2324 = vmax.f32 %v2209, %v2212
    %v2325 = vrot.slane %v2324, 4
    %v2326 = vmax.f32 %v2324, %v2325
    %v2327 = vrot.slane %v2326, 2
    %v2328 = vmax.f32 %v2326, %v2327
    %v2329 = vrot.slane %v2328, 1
    %v2330 = vmax.f32 %v2328, %v2329
    %v2331 = vmax.f32 %v2217, %v2220
    %v2332 = vrot.slane %v2331, 4
    %v2333 = vmax.f32 %v2331, %v2332
    %v2334 = vrot.slane %v2333, 2
    %v2335 = vmax.f32 %v2333, %v2334
    %v2336 = vrot.slane %v2335, 1
    %v2337 = vmax.f32 %v2335, %v2336
    %v2338 = vmax.f32 %v2225, %v2228
    %v2339 = vrot.slane %v2338, 4
    %v2340 = vmax.f32 %v2338, %v2339
    %v2341 = vrot.slane %v2340, 2
    %v2342 = vmax.f32 %v2340, %v2341
    %v2343 = vrot.slane %v2342, 1
    %v2344 = vmax.f32 %v2342, %v2343
    %v2345 = vmax.f32 %v2233, %v2236
    %v2346 = vrot.slane %v2345, 4
    %v2347 = vmax.f32 %v2345, %v2346
    %v2348 = vrot.slane %v2347, 2
    %v2349 = vmax.f32 %v2347, %v2348
    %v2350 = vrot.slane %v2349, 1
    %v2351 = vmax.f32 %v2349, %v2350
    %v2352 = vmax.f32 %v2241, %v2244
    %v2353 = vrot.slane %v2352, 4
    %v2354 = vmax.f32 %v2352, %v2353
    %v2355 = vrot.slane %v2354, 2
    %v2356 = vmax.f32 %v2354, %v2355
    %v2357 = vrot.slane %v2356, 1
    %v2358 = vmax.f32 %v2356, %v2357
    %v2359 = vpack.c.bf16 %v2253, %v2253
    %v2360 = vpack.c.bf16 %v2260, %v2260
    %v2361 = vpack.c.bf16 %v2267, %v2267
    %v2362 = vpack.c.bf16 %v2274, %v2274
    %v2363 = vpack.c.bf16 %v2281, %v2281
    %v2364 = vpack.c.bf16 %v2288, %v2288
    %v2365 = vpack.c.bf16 %v2295, %v2295
    %v2366 = vpack.c.bf16 %v2302, %v2302
    %v2367 = vpack.c.bf16 %v2309, %v2309
    %v2368 = vpack.c.bf16 %v2316, %v2316
    %v2369 = vpack.c.bf16 %v2323, %v2323
    %v2370 = vpack.c.bf16 %v2330, %v2330
    %v2371 = vpack.c.bf16 %v2337, %v2337
    %v2372 = vpack.c.bf16 %v2344, %v2344
    %v2373 = vpack.c.bf16 %v2351, %v2351
    %v2374 = vpack.c.bf16 %v2358, %v2358
    %v2391 = vunpack.c.l.b16 %v2359
    %v2392 = vunpack.c.l.b16 %v2360
    %v2393 = vunpack.c.l.b16 %v2361
    %v2394 = vunpack.c.l.b16 %v2362
    %v2395 = vunpack.c.l.b16 %v2363
    %v2396 = vunpack.c.l.b16 %v2364
    %v2397 = vunpack.c.l.b16 %v2365
    %v2398 = vunpack.c.l.b16 %v2366
    %v2399 = vunpack.c.l.b16 %v2367
    %v2400 = vunpack.c.l.b16 %v2368
    %v2401 = vunpack.c.l.b16 %v2369
    %v2402 = vunpack.c.l.b16 %v2370
    %v2403 = vunpack.c.l.b16 %v2371
    %v2404 = vunpack.c.l.b16 %v2372
    %v2405 = vunpack.c.l.b16 %v2373
    %v2406 = vunpack.c.l.b16 %v2374
    %v2407 = vpack.c.b16 %v2391, %v2391
    %v2408 = vpack.c.b16 %v2392, %v2392
    %v2409 = vpack.c.b16 %v2393, %v2393
    %v2410 = vpack.c.b16 %v2394, %v2394
    %v2411 = vpack.c.b16 %v2395, %v2395
    %v2412 = vpack.c.b16 %v2396, %v2396
    %v2413 = vpack.c.b16 %v2397, %v2397
    %v2414 = vpack.c.b16 %v2398, %v2398
    %v2415 = vpack.c.b16 %v2399, %v2399
    %v2416 = vpack.c.b16 %v2400, %v2400
    %v2417 = vpack.c.b16 %v2401, %v2401
    %v2418 = vpack.c.b16 %v2402, %v2402
    %v2419 = vpack.c.b16 %v2403, %v2403
    %v2420 = vpack.c.b16 %v2404, %v2404
    %v2421 = vpack.c.b16 %v2405, %v2405
    %v2422 = vpack.c.b16 %v2406, %v2406
    %v2423 = vunpack.c.l.b16 %v2407
    %v2424 = vunpack.c.l.b16 %v2408
    %v2425 = vunpack.c.l.b16 %v2409
    %v2426 = vunpack.c.l.b16 %v2410
    %v2427 = vunpack.c.l.b16 %v2411
    %v2428 = vunpack.c.l.b16 %v2412
    %v2429 = vunpack.c.l.b16 %v2413
    %v2430 = vunpack.c.l.b16 %v2414
    %v2431 = vunpack.c.l.b16 %v2415
    %v2432 = vunpack.c.l.b16 %v2416
    %v2433 = vunpack.c.l.b16 %v2417
    %v2434 = vunpack.c.l.b16 %v2418
    %v2435 = vunpack.c.l.b16 %v2419
    %v2436 = vunpack.c.l.b16 %v2420
    %v2437 = vunpack.c.l.b16 %v2421
    %v2438 = vunpack.c.l.b16 %v2422
    %vm2439 = vcmask 1041409
    %v2440 = vsel %vm2439, %v2424, %v2423
    %vm2441 = vcmask 1042434
    %v2442 = vsel %vm2441, %v2425, %v2440
    %vm2443 = vcmask 1043459
    %v2444 = vsel %vm2443, %v2426, %v2442
    %vm2445 = vcmask 1044484
    %v2446 = vsel %vm2445, %v2427, %v2444
    %vm2447 = vcmask 1045509
    %v2448 = vsel %vm2447, %v2428, %v2446
    %vm2449 = vcmask 1046534
    %v2450 = vsel %vm2449, %v2429, %v2448
    %vm2451 = vcmask 1047559
    %v2452 = vsel %vm2451, %v2430, %v2450
    %v2453 = vsel %vm2439, %v2432, %v2431
    %v2454 = vsel %vm2441, %v2433, %v2453
    %v2455 = vsel %vm2443, %v2434, %v2454
    %v2456 = vsel %vm2445, %v2435, %v2455
    %v2457 = vsel %vm2447, %v2436, %v2456
    %v2458 = vsel %vm2449, %v2437, %v2457
    %v2459 = vsel %vm2451, %v2438, %v2458
    %v2460 = vpack.c.b16 %v2452, %v2452
    %v2461 = vpack.c.b16 %v2459, %v2459
    %2464 = vst [vmem:[#allocation17] sm:$0xf] %v2460
    %2465 = vst [vmem:[#allocation17 + $0x4] sm:$0xf] %v2461
    // Predicated region
    $region74: #{a_call__.4} parent=1 // pred_check
      _
    $region75: #{a_call__.4} parent=1 // pred_check_branch
      %2467 = sbr.rel (0) target = $region77
    $region76: #{a_call__.4} parent=1 // pred_region
      %s2469 = ssub.s32 128, 128
      %2470 = vsyncadd [#allocation4], %s2469
      %s2471 = sshll.u32 [#allocation17], 4
      %s2472 = int_to_ptr.vmem [resolvable:$true] %s2471
      %2477 = dma.vmem_to_hbm [thread:$0]  %s2472, 128, %s9, [#allocation4], 64, 64, 4
    $region77: #{a_call__.4} parent=1 // pred_fallthru
      _
    // Predicated region
    $region78: #{a_call__.4} parent=1 // pred_check
      _
    $region79: #{a_call__.4} parent=1 // pred_check_branch
      %2479 = sbr.rel (0) target = $region81
    $region80: #{a_call__.4} parent=1 // pred_region
      %2480 = dma.done [#allocation4], 128
    $region81: #{a_call__.4} parent=1 // pred_fallthru
      _
    %2481 = vsyncpa [#allocation3], 1
    %2482 = vsyncpa [#allocation6], 1
    %2483 = vsyncpa [#allocation9], 1
    %2484 = vsyncpa [#allocation12], 1
    %2485 = vsyncpa [#allocation15], 1
    %2486 = vsyncpa [#allocation4], 1

// kernel: a_call__.5
$region0: #{a_call__.5}
  #allocation0 [shape = 'u32[]', space=smem, size = 0x4, offset = 0x4, fixed_abs, tag = 'smem constant byte address 0x4 - core index']
  #allocation1 [shape = 'u32[144,128]{1,0:T(1,128)}', space=vmem, size = 0x12000, scoped, tag = 'internal scratch']
  %s0 = inlined_call_operand.hbm [shape: bf16[16,8,128], index: 0, kind: input, shape index: {}]
  %s1 = inlined_call_operand.hbm [shape: f32[16,8,3], index: 1, kind: input, shape index: {}]
  %s2 = inlined_call_operand.hbm [shape: f32[3,128], index: 2, kind: input, shape index: {}]
  %s3 = inlined_call_operand.hbm [shape: f32[1,128], index: 3, kind: input, shape index: {}]
  %s4 = inlined_call_operand.hbm [shape: bf16[128,128], index: 4, kind: input, shape index: {}]
  %s5 = inlined_call_operand.hbm [shape: f32[1,128], index: 5, kind: input, shape index: {}]
  %s6 = inlined_call_operand.hbm [shape: bf16[128,256], index: 6, kind: input, shape index: {}]
  %s7 = inlined_call_operand.hbm [shape: f32[1,256], index: 7, kind: input, shape index: {}]
  %s8 = inlined_call_operand.hbm [shape: bf16[16,256], index: 8, kind: output, shape index: {}]
  %s9 = sld [smem:[#allocation0]]
  $region74: #{a_call__.5} parent=0
    _
  %s11 = ssub.s32 1, %s9
  %s12 = scalar_select 0, %s11, %s9
  $region1: #{a_call__.5} parent=0
    #allocation2 [shape = 'u8[32768]{0}', space=vmem, size = 0x8000, scoped, tag = 'input window, operand 0, single buffered']
    #allocation3 [shape = 's32[1]{0}', space=sflag, size = 0x4, scoped, tag = 'scoped memory for a_call__.5']
    #allocation4 [shape = 's32[1]{0}', space=sflag, size = 0x4, scoped, tag = 'scoped memory for a_call__.5']
    #allocation5 [shape = 'u8[65536]{0}', space=vmem, size = 0x10000, scoped, tag = 'input window, operand 1, single buffered']
    #allocation6 [shape = 's32[1]{0}', space=sflag, size = 0x4, scoped, tag = 'scoped memory for a_call__.5']
    #allocation7 [shape = 'u8[2048]{0}', space=vmem, size = 0x800, scoped, tag = 'input window, operand 2, single buffered']
    #allocation8 [shape = 'u8[512]{0}', space=vmem, size = 0x400, scoped, tag = 'input window, operand 3, single buffered']
    #allocation9 [shape = 's32[1]{0}', space=sflag, size = 0x4, scoped, tag = 'scoped memory for a_call__.5']
    #allocation10 [shape = 'u8[32768]{0}', space=vmem, size = 0x8000, scoped, tag = 'input window, operand 4, single buffered']
    #allocation11 [shape = 'u8[512]{0}', space=vmem, size = 0x400, scoped, tag = 'input window, operand 5, single buffered']
    #allocation12 [shape = 's32[1]{0}', space=sflag, size = 0x4, scoped, tag = 'scoped memory for a_call__.5']
    #allocation13 [shape = 'u8[65536]{0}', space=vmem, size = 0x10000, scoped, tag = 'input window, operand 6, single buffered']
    #allocation14 [shape = 'u8[1024]{0}', space=vmem, size = 0x400, scoped, tag = 'input window, operand 7, single buffered']
    #allocation15 [shape = 's32[1]{0}', space=sflag, size = 0x4, scoped, tag = 'scoped memory for a_call__.5']
    #allocation16 [shape = 'u8[8192]{0}', space=vmem, size = 0x2000, scoped, tag = 'output window, operand 0, single buffered']
    %13 = vsyncpa [#allocation3], 0
    %14 = vsyncpa [#allocation6], 0
    %15 = vsyncpa [#allocation9], 0
    %16 = vsyncpa [#allocation12], 0
    %17 = vsyncpa [#allocation15], 0
    %18 = vsyncpa [#allocation4], 0
    // Predicated region
    $region2: #{a_call__.5} parent=1 // pred_check
      _
    $region3: #{a_call__.5} parent=1 // pred_check_branch
      %20 = sbr.rel (0) target = $region5
    $region4: #{a_call__.5} parent=1 // pred_region
      %s22 = ssub.s32 1024, 1024
      %23 = vsyncadd [#allocation3], %s22
      %s24 = sshll.u32 [#allocation2], 4
      %s25 = int_to_ptr.vmem [resolvable:$true] %s24
      %30 = dma.hbm_to_vmem [thread:$0]  %s0, 1024, %s25, [#allocation3], 64, 64, 4
    $region5: #{a_call__.5} parent=1 // pred_fallthru
      _
    // Predicated region
    $region6: #{a_call__.5} parent=1 // pred_check
      _
    $region7: #{a_call__.5} parent=1 // pred_check_branch
      %32 = sbr.rel (0) target = $region9
    $region8: #{a_call__.5} parent=1 // pred_region
      %s34 = ssub.s32 2048, 2048
      %35 = vsyncadd [#allocation6], %s34
      %s36 = sshll.u32 [#allocation5], 4
      %s37 = int_to_ptr.vmem [resolvable:$true] %s36
      %42 = dma.hbm_to_vmem [thread:$0]  %s1, 2048, %s37, [#allocation6], 128, 128, 8
    $region9: #{a_call__.5} parent=1 // pred_fallthru
      _
    // Predicated region
    $region10: #{a_call__.5} parent=1 // pred_check
      _
    $region11: #{a_call__.5} parent=1 // pred_check_branch
      %44 = sbr.rel (0) target = $region13
    $region12: #{a_call__.5} parent=1 // pred_region
      %s46 = ssub.s32 64, 64
      %47 = vsyncadd [#allocation6], %s46
      %s49 = sshll.u32 [#allocation7], 4
      %s50 = int_to_ptr.vmem [resolvable:$true] %s49
      %52 = dma.hbm_to_vmem [thread:$0]  %s2, 64, %s50, [#allocation6]
    $region13: #{a_call__.5} parent=1 // pred_fallthru
      _
    // Predicated region
    $region14: #{a_call__.5} parent=1 // pred_check
      _
    $region15: #{a_call__.5} parent=1 // pred_check_branch
      %54 = sbr.rel (0) target = $region17
    $region16: #{a_call__.5} parent=1 // pred_region
      %s56 = ssub.s32 16, 16
      %57 = vsyncadd [#allocation9], %s56
      %s59 = sshll.u32 [#allocation8], 4
      %s60 = int_to_ptr.vmem [resolvable:$true] %s59
      %62 = dma.hbm_to_vmem [thread:$0]  %s3, 16, %s60, [#allocation9]
    $region17: #{a_call__.5} parent=1 // pred_fallthru
      _
    // Predicated region
    $region18: #{a_call__.5} parent=1 // pred_check
      _
    $region19: #{a_call__.5} parent=1 // pred_check_branch
      %64 = sbr.rel (0) target = $region21
    $region20: #{a_call__.5} parent=1 // pred_region
      %s66 = ssub.s32 1024, 1024
      %67 = vsyncadd [#allocation9], %s66
      %s68 = sshll.u32 [#allocation10], 4
      %s69 = int_to_ptr.vmem [resolvable:$true] %s68
      %74 = dma.hbm_to_vmem [thread:$0]  %s4, 1024, %s69, [#allocation9], 64, 64, 4
    $region21: #{a_call__.5} parent=1 // pred_fallthru
      _
    // Predicated region
    $region22: #{a_call__.5} parent=1 // pred_check
      _
    $region23: #{a_call__.5} parent=1 // pred_check_branch
      %76 = sbr.rel (0) target = $region25
    $region24: #{a_call__.5} parent=1 // pred_region
      %s78 = ssub.s32 16, 16
      %79 = vsyncadd [#allocation12], %s78
      %s81 = sshll.u32 [#allocation11], 4
      %s82 = int_to_ptr.vmem [resolvable:$true] %s81
      %84 = dma.hbm_to_vmem [thread:$0]  %s5, 16, %s82, [#allocation12]
    $region25: #{a_call__.5} parent=1 // pred_fallthru
      _
    // Predicated region
    $region26: #{a_call__.5} parent=1 // pred_check
      _
    $region27: #{a_call__.5} parent=1 // pred_check_branch
      %86 = sbr.rel (0) target = $region29
    $region28: #{a_call__.5} parent=1 // pred_region
      %s88 = ssub.s32 2048, 2048
      %89 = vsyncadd [#allocation12], %s88
      %s90 = sshll.u32 [#allocation13], 4
      %s91 = int_to_ptr.vmem [resolvable:$true] %s90
      %96 = dma.hbm_to_vmem [thread:$0]  %s6, 2048, %s91, [#allocation12], 128, 128, 8
    $region29: #{a_call__.5} parent=1 // pred_fallthru
      _
    // Predicated region
    $region30: #{a_call__.5} parent=1 // pred_check
      _
    $region31: #{a_call__.5} parent=1 // pred_check_branch
      %98 = sbr.rel (0) target = $region33
    $region32: #{a_call__.5} parent=1 // pred_region
      %s100 = ssub.s32 32, 32
      %101 = vsyncadd [#allocation15], %s100
      %s103 = sshll.u32 [#allocation14], 4
      %s104 = int_to_ptr.vmem [resolvable:$true] %s103
      %106 = dma.hbm_to_vmem [thread:$0]  %s7, 32, %s104, [#allocation15]
    $region33: #{a_call__.5} parent=1 // pred_fallthru
      _
    // Predicated region
    $region34: #{a_call__.5} parent=1 // pred_check
      _
    $region35: #{a_call__.5} parent=1 // pred_check_branch
      %108 = sbr.rel (0) target = $region37
    $region36: #{a_call__.5} parent=1 // pred_region
      %109 = dma.done [#allocation3], 1024
    $region37: #{a_call__.5} parent=1 // pred_fallthru
      _
    // Predicated region
    $region38: #{a_call__.5} parent=1 // pred_check
      _
    $region39: #{a_call__.5} parent=1 // pred_check_branch
      %111 = sbr.rel (0) target = $region41
    $region40: #{a_call__.5} parent=1 // pred_region
      %112 = dma.done [#allocation6], 2048
    $region41: #{a_call__.5} parent=1 // pred_fallthru
      _
    // Predicated region
    $region42: #{a_call__.5} parent=1 // pred_check
      _
    $region43: #{a_call__.5} parent=1 // pred_check_branch
      %114 = sbr.rel (0) target = $region45
    $region44: #{a_call__.5} parent=1 // pred_region
      %115 = dma.done [#allocation6], 64
    $region45: #{a_call__.5} parent=1 // pred_fallthru
      _
    // Predicated region
    $region46: #{a_call__.5} parent=1 // pred_check
      _
    $region47: #{a_call__.5} parent=1 // pred_check_branch
      %117 = sbr.rel (0) target = $region49
    $region48: #{a_call__.5} parent=1 // pred_region
      %118 = dma.done [#allocation9], 16
    $region49: #{a_call__.5} parent=1 // pred_fallthru
      _
    // Predicated region
    $region50: #{a_call__.5} parent=1 // pred_check
      _
    $region51: #{a_call__.5} parent=1 // pred_check_branch
      %120 = sbr.rel (0) target = $region53
    $region52: #{a_call__.5} parent=1 // pred_region
      %121 = dma.done [#allocation9], 1024
    $region53: #{a_call__.5} parent=1 // pred_fallthru
      _
    // Predicated region
    $region54: #{a_call__.5} parent=1 // pred_check
      _
    $region55: #{a_call__.5} parent=1 // pred_check_branch
      %123 = sbr.rel (0) target = $region57
    $region56: #{a_call__.5} parent=1 // pred_region
      %124 = dma.done [#allocation12], 16
    $region57: #{a_call__.5} parent=1 // pred_fallthru
      _
    // Predicated region
    $region58: #{a_call__.5} parent=1 // pred_check
      _
    $region59: #{a_call__.5} parent=1 // pred_check_branch
      %126 = sbr.rel (0) target = $region61
    $region60: #{a_call__.5} parent=1 // pred_region
      %127 = dma.done [#allocation12], 2048
    $region61: #{a_call__.5} parent=1 // pred_fallthru
      _
    // Predicated region
    $region62: #{a_call__.5} parent=1 // pred_check
      _
    $region63: #{a_call__.5} parent=1 // pred_check_branch
      %129 = sbr.rel (0) target = $region65
    $region64: #{a_call__.5} parent=1 // pred_region
      %130 = dma.done [#allocation15], 32
    $region65: #{a_call__.5} parent=1 // pred_fallthru
      _
    %v132 = vld [vmem:[#allocation8] sm:$0x1]
    %v133 = vld [vmem:[#allocation2] sm:$0xf]
    %v134 = vld [vmem:[#allocation2 + $0x4] sm:$0xf]
    %v135 = vld [vmem:[#allocation2 + $0x8] sm:$0xf]
    %v136 = vld [vmem:[#allocation2 + $0xc] sm:$0xf]
    %v137 = vld [vmem:[#allocation2 + $0x10] sm:$0xf]
    %v138 = vld [vmem:[#allocation2 + $0x14] sm:$0xf]
    %v139 = vld [vmem:[#allocation2 + $0x18] sm:$0xf]
    %v140 = vld [vmem:[#allocation2 + $0x1c] sm:$0xf]
    %v141 = vld [vmem:[#allocation2 + $0x20] sm:$0xf]
    %v142 = vld [vmem:[#allocation2 + $0x24] sm:$0xf]
    %v143 = vld [vmem:[#allocation2 + $0x28] sm:$0xf]
    %v144 = vld [vmem:[#allocation2 + $0x2c] sm:$0xf]
    %v145 = vld [vmem:[#allocation2 + $0x30] sm:$0xf]
    %v146 = vld [vmem:[#allocation2 + $0x34] sm:$0xf]
    %v147 = vld [vmem:[#allocation2 + $0x38] sm:$0xf]
    %v148 = vld [vmem:[#allocation2 + $0x3c] sm:$0xf]
    %v149 = vunpack.c.l.bf16 %v133
    %v150 = vunpack.c.l.bf16 %v134
    %v151 = vunpack.c.l.bf16 %v135
    %v152 = vunpack.c.l.bf16 %v136
    %v153 = vunpack.c.l.bf16 %v137
    %v154 = vunpack.c.l.bf16 %v138
    %v155 = vunpack.c.l.bf16 %v139
    %v156 = vunpack.c.l.bf16 %v140
    %v157 = vunpack.c.l.bf16 %v141
    %v158 = vunpack.c.l.bf16 %v142
    %v159 = vunpack.c.l.bf16 %v143
    %v160 = vunpack.c.l.bf16 %v144
    %v161 = vunpack.c.l.bf16 %v145
    %v162 = vunpack.c.l.bf16 %v146
    %v163 = vunpack.c.l.bf16 %v147
    %v164 = vunpack.c.l.bf16 %v148
    %v166 = vlaneseq
    %v167 = vshrl.u32 %v166, 7
    %v168 = vsub.s32 0, %v167
    %v169 = vrot.slane %v132, %v168
    %v171 = vadd.f32 %v149, %v169
    %v172 = vadd.f32 %v150, %v169
    %v173 = vadd.f32 %v151, %v169
    %v174 = vadd.f32 %v152, %v169
    %v175 = vadd.f32 %v153, %v169
    %v176 = vadd.f32 %v154, %v169
    %v177 = vadd.f32 %v155, %v169
    %v178 = vadd.f32 %v156, %v169
    %v179 = vadd.f32 %v157, %v169
    %v180 = vadd.f32 %v158, %v169
    %v181 = vadd.f32 %v159, %v169
    %v182 = vadd.f32 %v160, %v169
    %v183 = vadd.f32 %v161, %v169
    %v184 = vadd.f32 %v162, %v169
    %v185 = vadd.f32 %v163, %v169
    %v186 = vadd.f32 %v164, %v169
    %v187 = vld [vmem:[#allocation5] sm:$0xff]
    %v188 = vld [vmem:[#allocation5 + $0x8] sm:$0xff]
    %v189 = vld [vmem:[#allocation5 + $0x10] sm:$0xff]
    %v190 = vld [vmem:[#allocation5 + $0x18] sm:$0xff]
    %v191 = vld [vmem:[#allocation5 + $0x20] sm:$0xff]
    %v192 = vld [vmem:[#allocation5 + $0x28] sm:$0xff]
    %v193 = vld [vmem:[#allocation5 + $0x30] sm:$0xff]
    %v194 = vld [vmem:[#allocation5 + $0x38] sm:$0xff]
    %v195 = vld [vmem:[#allocation5 + $0x40] sm:$0xff]
    %v196 = vld [vmem:[#allocation5 + $0x48] sm:$0xff]
    %v197 = vld [vmem:[#allocation5 + $0x50] sm:$0xff]
    %v198 = vld [vmem:[#allocation5 + $0x58] sm:$0xff]
    %v199 = vld [vmem:[#allocation5 + $0x60] sm:$0xff]
    %v200 = vld [vmem:[#allocation5 + $0x68] sm:$0xff]
    %v201 = vld [vmem:[#allocation5 + $0x70] sm:$0xff]
    %v202 = vld [vmem:[#allocation5 + $0x78] sm:$0xff]
    %v203 = vld [vmem:[#allocation7] sm:$0x7]
    %205 = vset.pattern.permute.xlu0 0
    %206 = vperm.xlu0 %205, %v187
    %v207 = vpop.permute.xlu0 %206
    %210 = vset.pattern.permute.xlu0 0
    %211 = vperm.xlu0 %210, %v188
    %v212 = vpop.permute.xlu0 %211
    %215 = vset.pattern.permute.xlu0 0
    %216 = vperm.xlu0 %215, %v189
    %v217 = vpop.permute.xlu0 %216
    %220 = vset.pattern.permute.xlu0 0
    %221 = vperm.xlu0 %220, %v190
    %v222 = vpop.permute.xlu0 %221
    %225 = vset.pattern.permute.xlu0 0
    %226 = vperm.xlu0 %225, %v191
    %v227 = vpop.permute.xlu0 %226
    %230 = vset.pattern.permute.xlu0 0
    %231 = vperm.xlu0 %230, %v192
    %v232 = vpop.permute.xlu0 %231
    %235 = vset.pattern.permute.xlu0 0
    %236 = vperm.xlu0 %235, %v193
    %v237 = vpop.permute.xlu0 %236
    %240 = vset.pattern.permute.xlu0 0
    %241 = vperm.xlu0 %240, %v194
    %v242 = vpop.permute.xlu0 %241
    %245 = vset.pattern.permute.xlu0 0
    %246 = vperm.xlu0 %245, %v195
    %v247 = vpop.permute.xlu0 %246
    %250 = vset.pattern.permute.xlu0 0
    %251 = vperm.xlu0 %250, %v196
    %v252 = vpop.permute.xlu0 %251
    %255 = vset.pattern.permute.xlu0 0
    %256 = vperm.xlu0 %255, %v197
    %v257 = vpop.permute.xlu0 %256
    %260 = vset.pattern.permute.xlu0 0
    %261 = vperm.xlu0 %260, %v198
    %v262 = vpop.permute.xlu0 %261
    %265 = vset.pattern.permute.xlu0 0
    %266 = vperm.xlu0 %265, %v199
    %v267 = vpop.permute.xlu0 %266
    %270 = vset.pattern.permute.xlu0 0
    %271 = vperm.xlu0 %270, %v200
    %v272 = vpop.permute.xlu0 %271
    %275 = vset.pattern.permute.xlu0 0
    %276 = vperm.xlu0 %275, %v201
    %v277 = vpop.permute.xlu0 %276
    %280 = vset.pattern.permute.xlu0 0
    %281 = vperm.xlu0 %280, %v202
    %v282 = vpop.permute.xlu0 %281
    %v284 = vlaneseq
    %v285 = vshrl.u32 %v284, 7
    %v286 = vsub.s32 0, %v285
    %v287 = vrot.slane %v203, %v286
    %v288 = vmul.f32 %v207, %v287
    %v289 = vmul.f32 %v212, %v287
    %v290 = vmul.f32 %v217, %v287
    %v291 = vmul.f32 %v222, %v287
    %v292 = vmul.f32 %v227, %v287
    %v293 = vmul.f32 %v232, %v287
    %v294 = vmul.f32 %v237, %v287
    %v295 = vmul.f32 %v242, %v287
    %v296 = vmul.f32 %v247, %v287
    %v297 = vmul.f32 %v252, %v287
    %v298 = vmul.f32 %v257, %v287
    %v299 = vmul.f32 %v262, %v287
    %v300 = vmul.f32 %v267, %v287
    %v301 = vmul.f32 %v272, %v287
    %v302 = vmul.f32 %v277, %v287
    %v303 = vmul.f32 %v282, %v287
    %v304 = vadd.f32 %v171, %v288
    %v305 = vadd.f32 %v172, %v289
    %v306 = vadd.f32 %v173, %v290
    %v307 = vadd.f32 %v174, %v291
    %v308 = vadd.f32 %v175, %v292
    %v309 = vadd.f32 %v176, %v293
    %v310 = vadd.f32 %v177, %v294
    %v311 = vadd.f32 %v178, %v295
    %v312 = vadd.f32 %v179, %v296
    %v313 = vadd.f32 %v180, %v297
    %v314 = vadd.f32 %v181, %v298
    %v315 = vadd.f32 %v182, %v299
    %v316 = vadd.f32 %v183, %v300
    %v317 = vadd.f32 %v184, %v301
    %v318 = vadd.f32 %v185, %v302
    %v319 = vadd.f32 %v186, %v303
    %320 = vset.pattern.permute.xlu0 1
    %321 = vperm.xlu0 %320, %v187
    %v322 = vpop.permute.xlu0 %321
    %324 = vset.pattern.permute.xlu0 1
    %325 = vperm.xlu0 %324, %v188
    %v326 = vpop.permute.xlu0 %325
    %328 = vset.pattern.permute.xlu0 1
    %329 = vperm.xlu0 %328, %v189
    %v330 = vpop.permute.xlu0 %329
    %332 = vset.pattern.permute.xlu0 1
    %333 = vperm.xlu0 %332, %v190
    %v334 = vpop.permute.xlu0 %333
    %336 = vset.pattern.permute.xlu0 1
    %337 = vperm.xlu0 %336, %v191
    %v338 = vpop.permute.xlu0 %337
    %340 = vset.pattern.permute.xlu0 1
    %341 = vperm.xlu0 %340, %v192
    %v342 = vpop.permute.xlu0 %341
    %344 = vset.pattern.permute.xlu0 1
    %345 = vperm.xlu0 %344, %v193
    %v346 = vpop.permute.xlu0 %345
    %348 = vset.pattern.permute.xlu0 1
    %349 = vperm.xlu0 %348, %v194
    %v350 = vpop.permute.xlu0 %349
    %352 = vset.pattern.permute.xlu0 1
    %353 = vperm.xlu0 %352, %v195
    %v354 = vpop.permute.xlu0 %353
    %356 = vset.pattern.permute.xlu0 1
    %357 = vperm.xlu0 %356, %v196
    %v358 = vpop.permute.xlu0 %357
    %360 = vset.pattern.permute.xlu0 1
    %361 = vperm.xlu0 %360, %v197
    %v362 = vpop.permute.xlu0 %361
    %364 = vset.pattern.permute.xlu0 1
    %365 = vperm.xlu0 %364, %v198
    %v366 = vpop.permute.xlu0 %365
    %368 = vset.pattern.permute.xlu0 1
    %369 = vperm.xlu0 %368, %v199
    %v370 = vpop.permute.xlu0 %369
    %372 = vset.pattern.permute.xlu0 1
    %373 = vperm.xlu0 %372, %v200
    %v374 = vpop.permute.xlu0 %373
    %376 = vset.pattern.permute.xlu0 1
    %377 = vperm.xlu0 %376, %v201
    %v378 = vpop.permute.xlu0 %377
    %380 = vset.pattern.permute.xlu0 1
    %381 = vperm.xlu0 %380, %v202
    %v382 = vpop.permute.xlu0 %381
    %v384 = vlaneseq
    %v385 = vshrl.u32 %v384, 7
    %v386 = vsub.s32 1, %v385
    %v387 = vrot.slane %v203, %v386
    %v388 = vmul.f32 %v322, %v387
    %v389 = vmul.f32 %v326, %v387
    %v390 = vmul.f32 %v330, %v387
    %v391 = vmul.f32 %v334, %v387
    %v392 = vmul.f32 %v338, %v387
    %v393 = vmul.f32 %v342, %v387
    %v394 = vmul.f32 %v346, %v387
    %v395 = vmul.f32 %v350, %v387
    %v396 = vmul.f32 %v354, %v387
    %v397 = vmul.f32 %v358, %v387
    %v398 = vmul.f32 %v362, %v387
    %v399 = vmul.f32 %v366, %v387
    %v400 = vmul.f32 %v370, %v387
    %v401 = vmul.f32 %v374, %v387
    %v402 = vmul.f32 %v378, %v387
    %v403 = vmul.f32 %v382, %v387
    %v404 = vadd.f32 %v304, %v388
    %v405 = vadd.f32 %v305, %v389
    %v406 = vadd.f32 %v306, %v390
    %v407 = vadd.f32 %v307, %v391
    %v408 = vadd.f32 %v308, %v392
    %v409 = vadd.f32 %v309, %v393
    %v410 = vadd.f32 %v310, %v394
    %v411 = vadd.f32 %v311, %v395
    %v412 = vadd.f32 %v312, %v396
    %v413 = vadd.f32 %v313, %v397
    %v414 = vadd.f32 %v314, %v398
    %v415 = vadd.f32 %v315, %v399
    %v416 = vadd.f32 %v316, %v400
    %v417 = vadd.f32 %v317, %v401
    %v418 = vadd.f32 %v318, %v402
    %v419 = vadd.f32 %v319, %v403
    %420 = vset.pattern.permute.xlu0 2
    %421 = vperm.xlu0 %420, %v187
    %v422 = vpop.permute.xlu0 %421
    %424 = vset.pattern.permute.xlu0 2
    %425 = vperm.xlu0 %424, %v188
    %v426 = vpop.permute.xlu0 %425
    %428 = vset.pattern.permute.xlu0 2
    %429 = vperm.xlu0 %428, %v189
    %v430 = vpop.permute.xlu0 %429
    %432 = vset.pattern.permute.xlu0 2
    %433 = vperm.xlu0 %432, %v190
    %v434 = vpop.permute.xlu0 %433
    %436 = vset.pattern.permute.xlu0 2
    %437 = vperm.xlu0 %436, %v191
    %v438 = vpop.permute.xlu0 %437
    %440 = vset.pattern.permute.xlu0 2
    %441 = vperm.xlu0 %440, %v192
    %v442 = vpop.permute.xlu0 %441
    %444 = vset.pattern.permute.xlu0 2
    %445 = vperm.xlu0 %444, %v193
    %v446 = vpop.permute.xlu0 %445
    %448 = vset.pattern.permute.xlu0 2
    %449 = vperm.xlu0 %448, %v194
    %v450 = vpop.permute.xlu0 %449
    %452 = vset.pattern.permute.xlu0 2
    %453 = vperm.xlu0 %452, %v195
    %v454 = vpop.permute.xlu0 %453
    %456 = vset.pattern.permute.xlu0 2
    %457 = vperm.xlu0 %456, %v196
    %v458 = vpop.permute.xlu0 %457
    %460 = vset.pattern.permute.xlu0 2
    %461 = vperm.xlu0 %460, %v197
    %v462 = vpop.permute.xlu0 %461
    %464 = vset.pattern.permute.xlu0 2
    %465 = vperm.xlu0 %464, %v198
    %v466 = vpop.permute.xlu0 %465
    %468 = vset.pattern.permute.xlu0 2
    %469 = vperm.xlu0 %468, %v199
    %v470 = vpop.permute.xlu0 %469
    %472 = vset.pattern.permute.xlu0 2
    %473 = vperm.xlu0 %472, %v200
    %v474 = vpop.permute.xlu0 %473
    %476 = vset.pattern.permute.xlu0 2
    %477 = vperm.xlu0 %476, %v201
    %v478 = vpop.permute.xlu0 %477
    %480 = vset.pattern.permute.xlu0 2
    %481 = vperm.xlu0 %480, %v202
    %v482 = vpop.permute.xlu0 %481
    %v484 = vlaneseq
    %v485 = vshrl.u32 %v484, 7
    %v486 = vsub.s32 2, %v485
    %v487 = vrot.slane %v203, %v486
    %v488 = vmul.f32 %v422, %v487
    %v489 = vmul.f32 %v426, %v487
    %v490 = vmul.f32 %v430, %v487
    %v491 = vmul.f32 %v434, %v487
    %v492 = vmul.f32 %v438, %v487
    %v493 = vmul.f32 %v442, %v487
    %v494 = vmul.f32 %v446, %v487
    %v495 = vmul.f32 %v450, %v487
    %v496 = vmul.f32 %v454, %v487
    %v497 = vmul.f32 %v458, %v487
    %v498 = vmul.f32 %v462, %v487
    %v499 = vmul.f32 %v466, %v487
    %v500 = vmul.f32 %v470, %v487
    %v501 = vmul.f32 %v474, %v487
    %v502 = vmul.f32 %v478, %v487
    %v503 = vmul.f32 %v482, %v487
    %v504 = vadd.f32 %v404, %v488
    %v505 = vadd.f32 %v405, %v489
    %v506 = vadd.f32 %v406, %v490
    %v507 = vadd.f32 %v407, %v491
    %v508 = vadd.f32 %v408, %v492
    %v509 = vadd.f32 %v409, %v493
    %v510 = vadd.f32 %v410, %v494
    %v511 = vadd.f32 %v411, %v495
    %v512 = vadd.f32 %v412, %v496
    %v513 = vadd.f32 %v413, %v497
    %v514 = vadd.f32 %v414, %v498
    %v515 = vadd.f32 %v415, %v499
    %v516 = vadd.f32 %v416, %v500
    %v517 = vadd.f32 %v417, %v501
    %v518 = vadd.f32 %v418, %v502
    %v519 = vadd.f32 %v419, %v503
    %v520 = vmax.f32 %v504, 0.0
    %v521 = vmax.f32 %v505, 0.0
    %v522 = vmax.f32 %v506, 0.0
    %v523 = vmax.f32 %v507, 0.0
    %v524 = vmax.f32 %v508, 0.0
    %v525 = vmax.f32 %v509, 0.0
    %v526 = vmax.f32 %v510, 0.0
    %v527 = vmax.f32 %v511, 0.0
    %v528 = vmax.f32 %v512, 0.0
    %v529 = vmax.f32 %v513, 0.0
    %v530 = vmax.f32 %v514, 0.0
    %v531 = vmax.f32 %v515, 0.0
    %v532 = vmax.f32 %v516, 0.0
    %v533 = vmax.f32 %v517, 0.0
    %v534 = vmax.f32 %v518, 0.0
    %v535 = vmax.f32 %v519, 0.0
    %v536 = vpack.c.bf16 %v521, %v520
    %v537 = vpack.c.bf16 %v523, %v522
    %v538 = vpack.c.bf16 %v525, %v524
    %v539 = vpack.c.bf16 %v527, %v526
    %v540 = vpack.c.bf16 %v529, %v528
    %v541 = vpack.c.bf16 %v531, %v530
    %v542 = vpack.c.bf16 %v533, %v532
    %v543 = vpack.c.bf16 %v535, %v534
    %v544 = vld [vmem:[#allocation10] sm:$0xf]
    %v545 = vld [vmem:[#allocation10 + $0x4] sm:$0xf]
    %v546 = vld [vmem:[#allocation10 + $0x8] sm:$0xf]
    %v547 = vld [vmem:[#allocation10 + $0xc] sm:$0xf]
    %v548 = vld [vmem:[#allocation10 + $0x10] sm:$0xf]
    %v549 = vld [vmem:[#allocation10 + $0x14] sm:$0xf]
    %v550 = vld [vmem:[#allocation10 + $0x18] sm:$0xf]
    %v551 = vld [vmem:[#allocation10 + $0x1c] sm:$0xf]
    %v552 = vld [vmem:[#allocation10 + $0x20] sm:$0xf]
    %v553 = vld [vmem:[#allocation10 + $0x24] sm:$0xf]
    %v554 = vld [vmem:[#allocation10 + $0x28] sm:$0xf]
    %v555 = vld [vmem:[#allocation10 + $0x2c] sm:$0xf]
    %v556 = vld [vmem:[#allocation10 + $0x30] sm:$0xf]
    %v557 = vld [vmem:[#allocation10 + $0x34] sm:$0xf]
    %v558 = vld [vmem:[#allocation10 + $0x38] sm:$0xf]
    %v559 = vld [vmem:[#allocation10 + $0x3c] sm:$0xf]
    %v560 = vld [vmem:[#allocation11] sm:$0x1]
    %v562 = vlaneseq
    %v563 = vshrl.u32 %v562, 7
    %v564 = vsub.s32 0, %v563
    %v565 = vrot.slane %v560, %v564
    %v583 = vunpack.c.l.b16 %v544
    %v584 = vunpack.c.l.b16 %v545
    %v585 = vunpack.c.l.b16 %v546
    %v586 = vunpack.c.l.b16 %v547
    %v587 = vunpack.c.l.b16 %v548
    %v588 = vunpack.c.l.b16 %v549
    %v589 = vunpack.c.l.b16 %v550
    %v590 = vunpack.c.l.b16 %v551
    %v591 = vunpack.c.l.b16 %v552
    %v592 = vunpack.c.l.b16 %v553
    %v593 = vunpack.c.l.b16 %v554
    %v594 = vunpack.c.l.b16 %v555
    %v595 = vunpack.c.l.b16 %v556
    %v596 = vunpack.c.l.b16 %v557
    %v597 = vunpack.c.l.b16 %v558
    %v598 = vunpack.c.l.b16 %v559
    %v599 = vpack.c.b16 %v584, %v583
    %v600 = vpack.c.b16 %v586, %v585
    %v601 = vpack.c.b16 %v588, %v587
    %v602 = vpack.c.b16 %v590, %v589
    %v603 = vpack.c.b16 %v592, %v591
    %v604 = vpack.c.b16 %v594, %v593
    %v605 = vpack.c.b16 %v596, %v595
    %v606 = vpack.c.b16 %v598, %v597
    %615 = vmatprep.subr.bf16.mxu0 0
    %616 = vmatpush1.bf16.msra.mxu0 %v599
    %617 = vmatprep.subr.bf16.mxu0 0
    %618 = vmatpush1.bf16.msra.mxu0 %v600
    %619 = vmatprep.subr.bf16.mxu0 0
    %620 = vmatpush1.bf16.msra.mxu0 %v601
    %621 = vmatprep.subr.bf16.mxu0 0
    %622 = vmatpush1.bf16.msra.mxu0 %v602
    %623 = vmatprep.subr.bf16.mxu0 0
    %624 = vmatpush1.bf16.msra.mxu0 %v603
    %625 = vmatprep.subr.bf16.mxu0 0
    %626 = vmatpush1.bf16.msra.mxu0 %v604
    %627 = vmatprep.subr.bf16.mxu0 0
    %628 = vmatpush1.bf16.msra.mxu0 %v605
    %629 = vmatprep.subr.bf16.mxu0 0
    %630 = vmatpush1.bf16.msra.mxu0 %v606
    %631 = vmatprep.subr.bf16.mxu0 0
    %632 = vmatpush1.bf16.msra.mxu0 0
    %633 = vmatprep.subr.bf16.mxu0 0
    %634 = vmatpush1.bf16.msra.mxu0 0
    %635 = vmatprep.subr.bf16.mxu0 0
    %636 = vmatpush1.bf16.msra.mxu0 0
    %637 = vmatprep.subr.bf16.mxu0 0
    %638 = vmatpush1.bf16.msra.mxu0 0
    %639 = vmatprep.subr.bf16.mxu0 0
    %640 = vmatpush1.bf16.msra.mxu0 0
    %641 = vmatprep.subr.bf16.mxu0 0
    %642 = vmatpush1.bf16.msra.mxu0 0
    %643 = vmatprep.subr.bf16.mxu0 0
    %644 = vmatpush1.bf16.msra.mxu0 0
    %645 = vmatprep.subr.bf16.mxu0 0
    %646 = vmatpush1.bf16.msra.mxu0 0
    %647 = vmatprep.mubr.bf16.mxu0 0
    %648 = vmatmul.mubr.bf16.gmra.mrb[0].mxu0 %v536
    %v649 = vpop.f32.mrb[0].mxu0
    %v650 = vadd.f32 %v565, %v649
    %v651 = vpop.f32.mrb[0].mxu0
    %v652 = vpop.f32.mrb[0].mxu0
    %v653 = vadd.f32 %v565, %v652
    %v654 = vpop.f32.mrb[0].mxu0
    %655 = vmatprep.mubr.bf16.mxu0 0
    %656 = vmatmul.mubr.bf16.gmra.mrb[0].mxu0 %v537
    %v657 = vpop.f32.mrb[0].mxu0
    %v658 = vadd.f32 %v565, %v657
    %v659 = vpop.f32.mrb[0].mxu0
    %v660 = vpop.f32.mrb[0].mxu0
    %v661 = vadd.f32 %v565, %v660
    %v662 = vpop.f32.mrb[0].mxu0
    %663 = vmatprep.mubr.bf16.mxu0 0
    %664 = vmatmul.mubr.bf16.gmra.mrb[0].mxu0 %v538
    %v665 = vpop.f32.mrb[0].mxu0
    %v666 = vadd.f32 %v565, %v665
    %v667 = vpop.f32.mrb[0].mxu0
    %v668 = vpop.f32.mrb[0].mxu0
    %v669 = vadd.f32 %v565, %v668
    %v670 = vpop.f32.mrb[0].mxu0
    %671 = vmatprep.mubr.bf16.mxu0 0
    %672 = vmatmul.mubr.bf16.gmra.mrb[0].mxu0 %v539
    %v673 = vpop.f32.mrb[0].mxu0
    %v674 = vadd.f32 %v565, %v673
    %v675 = vpop.f32.mrb[0].mxu0
    %v676 = vpop.f32.mrb[0].mxu0
    %v677 = vadd.f32 %v565, %v676
    %v678 = vpop.f32.mrb[0].mxu0
    %679 = vmatprep.mubr.bf16.mxu0 0
    %680 = vmatmul.mubr.bf16.gmra.mrb[0].mxu0 %v540
    %v681 = vpop.f32.mrb[0].mxu0
    %v682 = vadd.f32 %v565, %v681
    %v683 = vpop.f32.mrb[0].mxu0
    %v684 = vpop.f32.mrb[0].mxu0
    %v685 = vadd.f32 %v565, %v684
    %v686 = vpop.f32.mrb[0].mxu0
    %687 = vmatprep.mubr.bf16.mxu0 0
    %688 = vmatmul.mubr.bf16.gmra.mrb[0].mxu0 %v541
    %v689 = vpop.f32.mrb[0].mxu0
    %v690 = vadd.f32 %v565, %v689
    %v691 = vpop.f32.mrb[0].mxu0
    %v692 = vpop.f32.mrb[0].mxu0
    %v693 = vadd.f32 %v565, %v692
    %v694 = vpop.f32.mrb[0].mxu0
    %695 = vmatprep.mubr.bf16.mxu0 0
    %696 = vmatmul.mubr.bf16.gmra.mrb[0].mxu0 %v542
    %v697 = vpop.f32.mrb[0].mxu0
    %v698 = vadd.f32 %v565, %v697
    %v699 = vpop.f32.mrb[0].mxu0
    %v700 = vpop.f32.mrb[0].mxu0
    %v701 = vadd.f32 %v565, %v700
    %v702 = vpop.f32.mrb[0].mxu0
    %703 = vmatprep.mubr.bf16.mxu0 0
    %704 = vmatmul.mubr.bf16.gmra.mrb[0].mxu0 %v543
    %v705 = vpop.f32.mrb[0].mxu0
    %v706 = vadd.f32 %v565, %v705
    %v707 = vpop.f32.mrb[0].mxu0
    %v708 = vpop.f32.mrb[0].mxu0
    %v709 = vadd.f32 %v565, %v708
    %v710 = vpop.f32.mrb[0].mxu0
    %711 = vdwg.mxu0
    %v712 = vmax.f32 %v650, 0.0
    %v713 = vmax.f32 %v653, 0.0
    %v714 = vmax.f32 %v658, 0.0
    %v715 = vmax.f32 %v661, 0.0
    %v716 = vmax.f32 %v666, 0.0
    %v717 = vmax.f32 %v669, 0.0
    %v718 = vmax.f32 %v674, 0.0
    %v719 = vmax.f32 %v677, 0.0
    %v720 = vmax.f32 %v682, 0.0
    %v721 = vmax.f32 %v685, 0.0
    %v722 = vmax.f32 %v690, 0.0
    %v723 = vmax.f32 %v693, 0.0
    %v724 = vmax.f32 %v698, 0.0
    %v725 = vmax.f32 %v701, 0.0
    %v726 = vmax.f32 %v706, 0.0
    %v727 = vmax.f32 %v709, 0.0
    %v728 = vpack.c.bf16 %v713, %v712
    %v729 = vpack.c.bf16 %v715, %v714
    %v730 = vpack.c.bf16 %v717, %v716
    %v731 = vpack.c.bf16 %v719, %v718
    %v732 = vpack.c.bf16 %v721, %v720
    %v733 = vpack.c.bf16 %v723, %v722
    %v734 = vpack.c.bf16 %v725, %v724
    %v735 = vpack.c.bf16 %v727, %v726
    %v736 = vld [vmem:[#allocation13] sm:$0xff]
    %v737 = vld [vmem:[#allocation13 + $0x8] sm:$0xff]
    %v738 = vld [vmem:[#allocation13 + $0x10] sm:$0xff]
    %v739 = vld [vmem:[#allocation13 + $0x18] sm:$0xff]
    %v740 = vld [vmem:[#allocation13 + $0x20] sm:$0xff]
    %v741 = vld [vmem:[#allocation13 + $0x28] sm:$0xff]
    %v742 = vld [vmem:[#allocation13 + $0x30] sm:$0xff]
    %v743 = vld [vmem:[#allocation13 + $0x38] sm:$0xff]
    %v744 = vld [vmem:[#allocation13 + $0x40] sm:$0xff]
    %v745 = vld [vmem:[#allocation13 + $0x48] sm:$0xff]
    %v746 = vld [vmem:[#allocation13 + $0x50] sm:$0xff]
    %v747 = vld [vmem:[#allocation13 + $0x58] sm:$0xff]
    %v748 = vld [vmem:[#allocation13 + $0x60] sm:$0xff]
    %v749 = vld [vmem:[#allocation13 + $0x68] sm:$0xff]
    %v750 = vld [vmem:[#allocation13 + $0x70] sm:$0xff]
    %v751 = vld [vmem:[#allocation13 + $0x78] sm:$0xff]
    %v752 = vld [vmem:[#allocation14] sm:$0x3]
    %v754 = vlaneseq
    %v755 = vshrl.u32 %v754, 7
    %v756 = vsub.s32 0, %v755
    %v757 = vrot.slane %v752, %v756
    %v758 = vlaneseq
    %v759 = vshrl.u32 %v758, 7
    %v760 = vsub.s32 1, %v759
    %v761 = vrot.slane %v752, %v760
    %v780 = vunpack.c.l.b16 %v736
    %v781 = vunpack.c.h.b16 %v736
    %v782 = vunpack.c.l.b16 %v737
    %v783 = vunpack.c.h.b16 %v737
    %v784 = vunpack.c.l.b16 %v738
    %v785 = vunpack.c.h.b16 %v738
    %v786 = vunpack.c.l.b16 %v739
    %v787 = vunpack.c.h.b16 %v739
    %v788 = vunpack.c.l.b16 %v740
    %v789 = vunpack.c.h.b16 %v740
    %v790 = vunpack.c.l.b16 %v741
    %v791 = vunpack.c.h.b16 %v741
    %v792 = vunpack.c.l.b16 %v742
    %v793 = vunpack.c.h.b16 %v742
    %v794 = vunpack.c.l.b16 %v743
    %v795 = vunpack.c.h.b16 %v743
    %v796 = vunpack.c.l.b16 %v744
    %v797 = vunpack.c.h.b16 %v744
    %v798 = vunpack.c.l.b16 %v745
    %v799 = vunpack.c.h.b16 %v745
    %v800 = vunpack.c.l.b16 %v746
    %v801 = vunpack.c.h.b16 %v746
    %v802 = vunpack.c.l.b16 %v747
    %v803 = vunpack.c.h.b16 %v747
    %v804 = vunpack.c.l.b16 %v748
    %v805 = vunpack.c.h.b16 %v748
    %v806 = vunpack.c.l.b16 %v749
    %v807 = vunpack.c.h.b16 %v749
    %v808 = vunpack.c.l.b16 %v750
    %v809 = vunpack.c.h.b16 %v750
    %v810 = vunpack.c.l.b16 %v751
    %v811 = vunpack.c.h.b16 %v751
    %v812 = vpack.c.b16 %v782, %v780
    %v813 = vpack.c.b16 %v783, %v781
    %v814 = vpack.c.b16 %v786, %v784
    %v815 = vpack.c.b16 %v787, %v785
    %v816 = vpack.c.b16 %v790, %v788
    %v817 = vpack.c.b16 %v791, %v789
    %v818 = vpack.c.b16 %v794, %v792
    %v819 = vpack.c.b16 %v795, %v793
    %v820 = vpack.c.b16 %v798, %v796
    %v821 = vpack.c.b16 %v799, %v797
    %v822 = vpack.c.b16 %v802, %v800
    %v823 = vpack.c.b16 %v803, %v801
    %v824 = vpack.c.b16 %v806, %v804
    %v825 = vpack.c.b16 %v807, %v805
    %v826 = vpack.c.b16 %v810, %v808
    %v827 = vpack.c.b16 %v811, %v809
    %844 = vmatprep.subr.bf16.mxu0 %v813
    %845 = vmatpush1.bf16.msra.mxu0 %v812
    %846 = vmatprep.subr.bf16.mxu0 %v815
    %847 = vmatpush1.bf16.msra.mxu0 %v814
    %848 = vmatprep.subr.bf16.mxu0 %v817
    %849 = vmatpush1.bf16.msra.mxu0 %v816
    %850 = vmatprep.subr.bf16.mxu0 %v819
    %851 = vmatpush1.bf16.msra.mxu0 %v818
    %852 = vmatprep.subr.bf16.mxu0 %v821
    %853 = vmatpush1.bf16.msra.mxu0 %v820
    %854 = vmatprep.subr.bf16.mxu0 %v823
    %855 = vmatpush1.bf16.msra.mxu0 %v822
    %856 = vmatprep.subr.bf16.mxu0 %v825
    %857 = vmatpush1.bf16.msra.mxu0 %v824
    %858 = vmatprep.subr.bf16.mxu0 %v827
    %859 = vmatpush1.bf16.msra.mxu0 %v826
    %860 = vmatprep.subr.bf16.mxu0 0
    %861 = vmatpush1.bf16.msra.mxu0 0
    %862 = vmatprep.subr.bf16.mxu0 0
    %863 = vmatpush1.bf16.msra.mxu0 0
    %864 = vmatprep.subr.bf16.mxu0 0
    %865 = vmatpush1.bf16.msra.mxu0 0
    %866 = vmatprep.subr.bf16.mxu0 0
    %867 = vmatpush1.bf16.msra.mxu0 0
    %868 = vmatprep.subr.bf16.mxu0 0
    %869 = vmatpush1.bf16.msra.mxu0 0
    %870 = vmatprep.subr.bf16.mxu0 0
    %871 = vmatpush1.bf16.msra.mxu0 0
    %872 = vmatprep.subr.bf16.mxu0 0
    %873 = vmatpush1.bf16.msra.mxu0 0
    %874 = vmatprep.subr.bf16.mxu0 0
    %875 = vmatpush1.bf16.msra.mxu0 0
    %876 = vmatprep.mubr.bf16.mxu0 0
    %877 = vmatmul.mubr.bf16.gmra.mrb[0].mxu0 %v728
    %v878 = vpop.f32.mrb[0].mxu0
    %v879 = vadd.f32 %v757, %v878
    %v880 = vpop.f32.mrb[0].mxu0
    %v881 = vadd.f32 %v761, %v880
    %v882 = vpop.f32.mrb[0].mxu0
    %v883 = vadd.f32 %v757, %v882
    %v884 = vpop.f32.mrb[0].mxu0
    %v885 = vadd.f32 %v761, %v884
    %886 = vmatprep.mubr.bf16.mxu0 0
    %887 = vmatmul.mubr.bf16.gmra.mrb[0].mxu0 %v729
    %v888 = vpop.f32.mrb[0].mxu0
    %v889 = vadd.f32 %v757, %v888
    %v890 = vpop.f32.mrb[0].mxu0
    %v891 = vadd.f32 %v761, %v890
    %v892 = vpop.f32.mrb[0].mxu0
    %v893 = vadd.f32 %v757, %v892
    %v894 = vpop.f32.mrb[0].mxu0
    %v895 = vadd.f32 %v761, %v894
    %896 = vmatprep.mubr.bf16.mxu0 0
    %897 = vmatmul.mubr.bf16.gmra.mrb[0].mxu0 %v730
    %v898 = vpop.f32.mrb[0].mxu0
    %v899 = vadd.f32 %v757, %v898
    %v900 = vpop.f32.mrb[0].mxu0
    %v901 = vadd.f32 %v761, %v900
    %v902 = vpop.f32.mrb[0].mxu0
    %v903 = vadd.f32 %v757, %v902
    %v904 = vpop.f32.mrb[0].mxu0
    %v905 = vadd.f32 %v761, %v904
    %906 = vmatprep.mubr.bf16.mxu0 0
    %907 = vmatmul.mubr.bf16.gmra.mrb[0].mxu0 %v731
    %v908 = vpop.f32.mrb[0].mxu0
    %v909 = vadd.f32 %v757, %v908
    %v910 = vpop.f32.mrb[0].mxu0
    %v911 = vadd.f32 %v761, %v910
    %v912 = vpop.f32.mrb[0].mxu0
    %v913 = vadd.f32 %v757, %v912
    %v914 = vpop.f32.mrb[0].mxu0
    %v915 = vadd.f32 %v761, %v914
    %916 = vmatprep.mubr.bf16.mxu0 0
    %917 = vmatmul.mubr.bf16.gmra.mrb[0].mxu0 %v732
    %v918 = vpop.f32.mrb[0].mxu0
    %v919 = vadd.f32 %v757, %v918
    %v920 = vpop.f32.mrb[0].mxu0
    %v921 = vadd.f32 %v761, %v920
    %v922 = vpop.f32.mrb[0].mxu0
    %v923 = vadd.f32 %v757, %v922
    %v924 = vpop.f32.mrb[0].mxu0
    %v925 = vadd.f32 %v761, %v924
    %926 = vmatprep.mubr.bf16.mxu0 0
    %927 = vmatmul.mubr.bf16.gmra.mrb[0].mxu0 %v733
    %v928 = vpop.f32.mrb[0].mxu0
    %v929 = vadd.f32 %v757, %v928
    %v930 = vpop.f32.mrb[0].mxu0
    %v931 = vadd.f32 %v761, %v930
    %v932 = vpop.f32.mrb[0].mxu0
    %v933 = vadd.f32 %v757, %v932
    %v934 = vpop.f32.mrb[0].mxu0
    %v935 = vadd.f32 %v761, %v934
    %936 = vmatprep.mubr.bf16.mxu0 0
    %937 = vmatmul.mubr.bf16.gmra.mrb[0].mxu0 %v734
    %v938 = vpop.f32.mrb[0].mxu0
    %v939 = vadd.f32 %v757, %v938
    %v940 = vpop.f32.mrb[0].mxu0
    %v941 = vadd.f32 %v761, %v940
    %v942 = vpop.f32.mrb[0].mxu0
    %v943 = vadd.f32 %v757, %v942
    %v944 = vpop.f32.mrb[0].mxu0
    %v945 = vadd.f32 %v761, %v944
    %946 = vmatprep.mubr.bf16.mxu0 0
    %947 = vmatmul.mubr.bf16.gmra.mrb[0].mxu0 %v735
    %v948 = vpop.f32.mrb[0].mxu0
    %v949 = vadd.f32 %v757, %v948
    %v950 = vpop.f32.mrb[0].mxu0
    %v951 = vadd.f32 %v761, %v950
    %v952 = vpop.f32.mrb[0].mxu0
    %v953 = vadd.f32 %v757, %v952
    %v954 = vpop.f32.mrb[0].mxu0
    %v955 = vadd.f32 %v761, %v954
    %956 = vdwg.mxu0
    %v957 = vrot.slane %v879, 4
    %v958 = vmax.f32 %v879, %v957
    %v959 = vrot.slane %v958, 2
    %v960 = vmax.f32 %v958, %v959
    %v961 = vrot.slane %v960, 1
    %v962 = vmax.f32 %v960, %v961
    %v963 = vrot.slane %v881, 4
    %v964 = vmax.f32 %v881, %v963
    %v965 = vrot.slane %v964, 2
    %v966 = vmax.f32 %v964, %v965
    %v967 = vrot.slane %v966, 1
    %v968 = vmax.f32 %v966, %v967
    %v969 = vrot.slane %v883, 4
    %v970 = vmax.f32 %v883, %v969
    %v971 = vrot.slane %v970, 2
    %v972 = vmax.f32 %v970, %v971
    %v973 = vrot.slane %v972, 1
    %v974 = vmax.f32 %v972, %v973
    %v975 = vrot.slane %v885, 4
    %v976 = vmax.f32 %v885, %v975
    %v977 = vrot.slane %v976, 2
    %v978 = vmax.f32 %v976, %v977
    %v979 = vrot.slane %v978, 1
    %v980 = vmax.f32 %v978, %v979
    %v981 = vrot.slane %v889, 4
    %v982 = vmax.f32 %v889, %v981
    %v983 = vrot.slane %v982, 2
    %v984 = vmax.f32 %v982, %v983
    %v985 = vrot.slane %v984, 1
    %v986 = vmax.f32 %v984, %v985
    %v987 = vrot.slane %v891, 4
    %v988 = vmax.f32 %v891, %v987
    %v989 = vrot.slane %v988, 2
    %v990 = vmax.f32 %v988, %v989
    %v991 = vrot.slane %v990, 1
    %v992 = vmax.f32 %v990, %v991
    %v993 = vrot.slane %v893, 4
    %v994 = vmax.f32 %v893, %v993
    %v995 = vrot.slane %v994, 2
    %v996 = vmax.f32 %v994, %v995
    %v997 = vrot.slane %v996, 1
    %v998 = vmax.f32 %v996, %v997
    %v999 = vrot.slane %v895, 4
    %v1000 = vmax.f32 %v895, %v999
    %v1001 = vrot.slane %v1000, 2
    %v1002 = vmax.f32 %v1000, %v1001
    %v1003 = vrot.slane %v1002, 1
    %v1004 = vmax.f32 %v1002, %v1003
    %v1005 = vrot.slane %v899, 4
    %v1006 = vmax.f32 %v899, %v1005
    %v1007 = vrot.slane %v1006, 2
    %v1008 = vmax.f32 %v1006, %v1007
    %v1009 = vrot.slane %v1008, 1
    %v1010 = vmax.f32 %v1008, %v1009
    %v1011 = vrot.slane %v901, 4
    %v1012 = vmax.f32 %v901, %v1011
    %v1013 = vrot.slane %v1012, 2
    %v1014 = vmax.f32 %v1012, %v1013
    %v1015 = vrot.slane %v1014, 1
    %v1016 = vmax.f32 %v1014, %v1015
    %v1017 = vrot.slane %v903, 4
    %v1018 = vmax.f32 %v903, %v1017
    %v1019 = vrot.slane %v1018, 2
    %v1020 = vmax.f32 %v1018, %v1019
    %v1021 = vrot.slane %v1020, 1
    %v1022 = vmax.f32 %v1020, %v1021
    %v1023 = vrot.slane %v905, 4
    %v1024 = vmax.f32 %v905, %v1023
    %v1025 = vrot.slane %v1024, 2
    %v1026 = vmax.f32 %v1024, %v1025
    %v1027 = vrot.slane %v1026, 1
    %v1028 = vmax.f32 %v1026, %v1027
    %v1029 = vrot.slane %v909, 4
    %v1030 = vmax.f32 %v909, %v1029
    %v1031 = vrot.slane %v1030, 2
    %v1032 = vmax.f32 %v1030, %v1031
    %v1033 = vrot.slane %v1032, 1
    %v1034 = vmax.f32 %v1032, %v1033
    %v1035 = vrot.slane %v911, 4
    %v1036 = vmax.f32 %v911, %v1035
    %v1037 = vrot.slane %v1036, 2
    %v1038 = vmax.f32 %v1036, %v1037
    %v1039 = vrot.slane %v1038, 1
    %v1040 = vmax.f32 %v1038, %v1039
    %v1041 = vrot.slane %v913, 4
    %v1042 = vmax.f32 %v913, %v1041
    %v1043 = vrot.slane %v1042, 2
    %v1044 = vmax.f32 %v1042, %v1043
    %v1045 = vrot.slane %v1044, 1
    %v1046 = vmax.f32 %v1044, %v1045
    %v1047 = vrot.slane %v915, 4
    %v1048 = vmax.f32 %v915, %v1047
    %v1049 = vrot.slane %v1048, 2
    %v1050 = vmax.f32 %v1048, %v1049
    %v1051 = vrot.slane %v1050, 1
    %v1052 = vmax.f32 %v1050, %v1051
    %v1053 = vrot.slane %v919, 4
    %v1054 = vmax.f32 %v919, %v1053
    %v1055 = vrot.slane %v1054, 2
    %v1056 = vmax.f32 %v1054, %v1055
    %v1057 = vrot.slane %v1056, 1
    %v1058 = vmax.f32 %v1056, %v1057
    %v1059 = vrot.slane %v921, 4
    %v1060 = vmax.f32 %v921, %v1059
    %v1061 = vrot.slane %v1060, 2
    %v1062 = vmax.f32 %v1060, %v1061
    %v1063 = vrot.slane %v1062, 1
    %v1064 = vmax.f32 %v1062, %v1063
    %v1065 = vrot.slane %v923, 4
    %v1066 = vmax.f32 %v923, %v1065
    %v1067 = vrot.slane %v1066, 2
    %v1068 = vmax.f32 %v1066, %v1067
    %v1069 = vrot.slane %v1068, 1
    %v1070 = vmax.f32 %v1068, %v1069
    %v1071 = vrot.slane %v925, 4
    %v1072 = vmax.f32 %v925, %v1071
    %v1073 = vrot.slane %v1072, 2
    %v1074 = vmax.f32 %v1072, %v1073
    %v1075 = vrot.slane %v1074, 1
    %v1076 = vmax.f32 %v1074, %v1075
    %v1077 = vrot.slane %v929, 4
    %v1078 = vmax.f32 %v929, %v1077
    %v1079 = vrot.slane %v1078, 2
    %v1080 = vmax.f32 %v1078, %v1079
    %v1081 = vrot.slane %v1080, 1
    %v1082 = vmax.f32 %v1080, %v1081
    %v1083 = vrot.slane %v931, 4
    %v1084 = vmax.f32 %v931, %v1083
    %v1085 = vrot.slane %v1084, 2
    %v1086 = vmax.f32 %v1084, %v1085
    %v1087 = vrot.slane %v1086, 1
    %v1088 = vmax.f32 %v1086, %v1087
    %v1089 = vrot.slane %v933, 4
    %v1090 = vmax.f32 %v933, %v1089
    %v1091 = vrot.slane %v1090, 2
    %v1092 = vmax.f32 %v1090, %v1091
    %v1093 = vrot.slane %v1092, 1
    %v1094 = vmax.f32 %v1092, %v1093
    %v1095 = vrot.slane %v935, 4
    %v1096 = vmax.f32 %v935, %v1095
    %v1097 = vrot.slane %v1096, 2
    %v1098 = vmax.f32 %v1096, %v1097
    %v1099 = vrot.slane %v1098, 1
    %v1100 = vmax.f32 %v1098, %v1099
    %v1101 = vrot.slane %v939, 4
    %v1102 = vmax.f32 %v939, %v1101
    %v1103 = vrot.slane %v1102, 2
    %v1104 = vmax.f32 %v1102, %v1103
    %v1105 = vrot.slane %v1104, 1
    %v1106 = vmax.f32 %v1104, %v1105
    %v1107 = vrot.slane %v941, 4
    %v1108 = vmax.f32 %v941, %v1107
    %v1109 = vrot.slane %v1108, 2
    %v1110 = vmax.f32 %v1108, %v1109
    %v1111 = vrot.slane %v1110, 1
    %v1112 = vmax.f32 %v1110, %v1111
    %v1113 = vrot.slane %v943, 4
    %v1114 = vmax.f32 %v943, %v1113
    %v1115 = vrot.slane %v1114, 2
    %v1116 = vmax.f32 %v1114, %v1115
    %v1117 = vrot.slane %v1116, 1
    %v1118 = vmax.f32 %v1116, %v1117
    %v1119 = vrot.slane %v945, 4
    %v1120 = vmax.f32 %v945, %v1119
    %v1121 = vrot.slane %v1120, 2
    %v1122 = vmax.f32 %v1120, %v1121
    %v1123 = vrot.slane %v1122, 1
    %v1124 = vmax.f32 %v1122, %v1123
    %v1125 = vrot.slane %v949, 4
    %v1126 = vmax.f32 %v949, %v1125
    %v1127 = vrot.slane %v1126, 2
    %v1128 = vmax.f32 %v1126, %v1127
    %v1129 = vrot.slane %v1128, 1
    %v1130 = vmax.f32 %v1128, %v1129
    %v1131 = vrot.slane %v951, 4
    %v1132 = vmax.f32 %v951, %v1131
    %v1133 = vrot.slane %v1132, 2
    %v1134 = vmax.f32 %v1132, %v1133
    %v1135 = vrot.slane %v1134, 1
    %v1136 = vmax.f32 %v1134, %v1135
    %v1137 = vrot.slane %v953, 4
    %v1138 = vmax.f32 %v953, %v1137
    %v1139 = vrot.slane %v1138, 2
    %v1140 = vmax.f32 %v1138, %v1139
    %v1141 = vrot.slane %v1140, 1
    %v1142 = vmax.f32 %v1140, %v1141
    %v1143 = vrot.slane %v955, 4
    %v1144 = vmax.f32 %v955, %v1143
    %v1145 = vrot.slane %v1144, 2
    %v1146 = vmax.f32 %v1144, %v1145
    %v1147 = vrot.slane %v1146, 1
    %v1148 = vmax.f32 %v1146, %v1147
    %v1149 = vpack.c.bf16 %v962, %v962
    %v1150 = vpack.c.bf16 %v968, %v968
    %v1151 = vpack.c.bf16 %v974, %v974
    %v1152 = vpack.c.bf16 %v980, %v980
    %v1153 = vpack.c.bf16 %v986, %v986
    %v1154 = vpack.c.bf16 %v992, %v992
    %v1155 = vpack.c.bf16 %v998, %v998
    %v1156 = vpack.c.bf16 %v1004, %v1004
    %v1157 = vpack.c.bf16 %v1010, %v1010
    %v1158 = vpack.c.bf16 %v1016, %v1016
    %v1159 = vpack.c.bf16 %v1022, %v1022
    %v1160 = vpack.c.bf16 %v1028, %v1028
    %v1161 = vpack.c.bf16 %v1034, %v1034
    %v1162 = vpack.c.bf16 %v1040, %v1040
    %v1163 = vpack.c.bf16 %v1046, %v1046
    %v1164 = vpack.c.bf16 %v1052, %v1052
    %v1165 = vpack.c.bf16 %v1058, %v1058
    %v1166 = vpack.c.bf16 %v1064, %v1064
    %v1167 = vpack.c.bf16 %v1070, %v1070
    %v1168 = vpack.c.bf16 %v1076, %v1076
    %v1169 = vpack.c.bf16 %v1082, %v1082
    %v1170 = vpack.c.bf16 %v1088, %v1088
    %v1171 = vpack.c.bf16 %v1094, %v1094
    %v1172 = vpack.c.bf16 %v1100, %v1100
    %v1173 = vpack.c.bf16 %v1106, %v1106
    %v1174 = vpack.c.bf16 %v1112, %v1112
    %v1175 = vpack.c.bf16 %v1118, %v1118
    %v1176 = vpack.c.bf16 %v1124, %v1124
    %v1177 = vpack.c.bf16 %v1130, %v1130
    %v1178 = vpack.c.bf16 %v1136, %v1136
    %v1179 = vpack.c.bf16 %v1142, %v1142
    %v1180 = vpack.c.bf16 %v1148, %v1148
    %v1213 = vunpack.c.l.b16 %v1149
    %v1214 = vunpack.c.l.b16 %v1150
    %v1215 = vunpack.c.l.b16 %v1151
    %v1216 = vunpack.c.l.b16 %v1152
    %v1217 = vunpack.c.l.b16 %v1153
    %v1218 = vunpack.c.l.b16 %v1154
    %v1219 = vunpack.c.l.b16 %v1155
    %v1220 = vunpack.c.l.b16 %v1156
    %v1221 = vunpack.c.l.b16 %v1157
    %v1222 = vunpack.c.l.b16 %v1158
    %v1223 = vunpack.c.l.b16 %v1159
    %v1224 = vunpack.c.l.b16 %v1160
    %v1225 = vunpack.c.l.b16 %v1161
    %v1226 = vunpack.c.l.b16 %v1162
    %v1227 = vunpack.c.l.b16 %v1163
    %v1228 = vunpack.c.l.b16 %v1164
    %v1229 = vunpack.c.l.b16 %v1165
    %v1230 = vunpack.c.l.b16 %v1166
    %v1231 = vunpack.c.l.b16 %v1167
    %v1232 = vunpack.c.l.b16 %v1168
    %v1233 = vunpack.c.l.b16 %v1169
    %v1234 = vunpack.c.l.b16 %v1170
    %v1235 = vunpack.c.l.b16 %v1171
    %v1236 = vunpack.c.l.b16 %v1172
    %v1237 = vunpack.c.l.b16 %v1173
    %v1238 = vunpack.c.l.b16 %v1174
    %v1239 = vunpack.c.l.b16 %v1175
    %v1240 = vunpack.c.l.b16 %v1176
    %v1241 = vunpack.c.l.b16 %v1177
    %v1242 = vunpack.c.l.b16 %v1178
    %v1243 = vunpack.c.l.b16 %v1179
    %v1244 = vunpack.c.l.b16 %v1180
    %v1245 = vpack.c.b16 %v1214, %v1213
    %v1246 = vpack.c.b16 %v1216, %v1215
    %v1247 = vpack.c.b16 %v1218, %v1217
    %v1248 = vpack.c.b16 %v1220, %v1219
    %v1249 = vpack.c.b16 %v1222, %v1221
    %v1250 = vpack.c.b16 %v1224, %v1223
    %v1251 = vpack.c.b16 %v1226, %v1225
    %v1252 = vpack.c.b16 %v1228, %v1227
    %v1253 = vpack.c.b16 %v1230, %v1229
    %v1254 = vpack.c.b16 %v1232, %v1231
    %v1255 = vpack.c.b16 %v1234, %v1233
    %v1256 = vpack.c.b16 %v1236, %v1235
    %v1257 = vpack.c.b16 %v1238, %v1237
    %v1258 = vpack.c.b16 %v1240, %v1239
    %v1259 = vpack.c.b16 %v1242, %v1241
    %v1260 = vpack.c.b16 %v1244, %v1243
    %v1261 = vunpack.c.l.b16 %v1245
    %v1262 = vunpack.c.h.b16 %v1245
    %v1263 = vunpack.c.l.b16 %v1246
    %v1264 = vunpack.c.h.b16 %v1246
    %v1265 = vunpack.c.l.b16 %v1247
    %v1266 = vunpack.c.h.b16 %v1247
    %v1267 = vunpack.c.l.b16 %v1248
    %v1268 = vunpack.c.h.b16 %v1248
    %v1269 = vunpack.c.l.b16 %v1249
    %v1270 = vunpack.c.h.b16 %v1249
    %v1271 = vunpack.c.l.b16 %v1250
    %v1272 = vunpack.c.h.b16 %v1250
    %v1273 = vunpack.c.l.b16 %v1251
    %v1274 = vunpack.c.h.b16 %v1251
    %v1275 = vunpack.c.l.b16 %v1252
    %v1276 = vunpack.c.h.b16 %v1252
    %v1277 = vunpack.c.l.b16 %v1253
    %v1278 = vunpack.c.h.b16 %v1253
    %v1279 = vunpack.c.l.b16 %v1254
    %v1280 = vunpack.c.h.b16 %v1254
    %v1281 = vunpack.c.l.b16 %v1255
    %v1282 = vunpack.c.h.b16 %v1255
    %v1283 = vunpack.c.l.b16 %v1256
    %v1284 = vunpack.c.h.b16 %v1256
    %v1285 = vunpack.c.l.b16 %v1257
    %v1286 = vunpack.c.h.b16 %v1257
    %v1287 = vunpack.c.l.b16 %v1258
    %v1288 = vunpack.c.h.b16 %v1258
    %v1289 = vunpack.c.l.b16 %v1259
    %v1290 = vunpack.c.h.b16 %v1259
    %v1291 = vunpack.c.l.b16 %v1260
    %v1292 = vunpack.c.h.b16 %v1260
    %vm1293 = vcmask 1041409
    %v1294 = vsel %vm1293, %v1263, %v1261
    %vm1295 = vcmask 1042434
    %v1296 = vsel %vm1295, %v1265, %v1294
    %vm1297 = vcmask 1043459
    %v1298 = vsel %vm1297, %v1267, %v1296
    %vm1299 = vcmask 1044484
    %v1300 = vsel %vm1299, %v1269, %v1298
    %vm1301 = vcmask 1045509
    %v1302 = vsel %vm1301, %v1271, %v1300
    %vm1303 = vcmask 1046534
    %v1304 = vsel %vm1303, %v1273, %v1302
    %vm1305 = vcmask 1047559
    %v1306 = vsel %vm1305, %v1275, %v1304
    %v1307 = vsel %vm1293, %v1264, %v1262
    %v1308 = vsel %vm1295, %v1266, %v1307
    %v1309 = vsel %vm1297, %v1268, %v1308
    %v1310 = vsel %vm1299, %v1270, %v1309
    %v1311 = vsel %vm1301, %v1272, %v1310
    %v1312 = vsel %vm1303, %v1274, %v1311
    %v1313 = vsel %vm1305, %v1276, %v1312
    %v1314 = vsel %vm1293, %v1279, %v1277
    %v1315 = vsel %vm1295, %v1281, %v1314
    %v1316 = vsel %vm1297, %v1283, %v1315
    %v1317 = vsel %vm1299, %v1285, %v1316
    %v1318 = vsel %vm1301, %v1287, %v1317
    %v1319 = vsel %vm1303, %v1289, %v1318
    %v1320 = vsel %vm1305, %v1291, %v1319
    %v1321 = vsel %vm1293, %v1280, %v1278
    %v1322 = vsel %vm1295, %v1282, %v1321
    %v1323 = vsel %vm1297, %v1284, %v1322
    %v1324 = vsel %vm1299, %v1286, %v1323
    %v1325 = vsel %vm1301, %v1288, %v1324
    %v1326 = vsel %vm1303, %v1290, %v1325
    %v1327 = vsel %vm1305, %v1292, %v1326
    %v1328 = vpack.c.b16 %v1313, %v1306
    %v1329 = vpack.c.b16 %v1327, %v1320
    %1332 = vst [vmem:[#allocation16] sm:$0xff] %v1328
    %1333 = vst [vmem:[#allocation16 + $0x8] sm:$0xff] %v1329
    // Predicated region
    $region66: #{a_call__.5} parent=1 // pred_check
      _
    $region67: #{a_call__.5} parent=1 // pred_check_branch
      %1335 = sbr.rel (0) target = $region69
    $region68: #{a_call__.5} parent=1 // pred_region
      %s1337 = ssub.s32 256, 256
      %1338 = vsyncadd [#allocation4], %s1337
      %s1339 = sshll.u32 [#allocation16], 4
      %s1340 = int_to_ptr.vmem [resolvable:$true] %s1339
      %1345 = dma.vmem_to_hbm [thread:$0]  %s1340, 256, %s8, [#allocation4], 128, 128, 8
    $region69: #{a_call__.5} parent=1 // pred_fallthru
      _
    // Predicated region
    $region70: #{a_call__.5} parent=1 // pred_check
      _
    $region71: #{a_call__.5} parent=1 // pred_check_branch
      %1347 = sbr.rel (0) target = $region73
    $region72: #{a_call__.5} parent=1 // pred_region
      %1348 = dma.done [#allocation4], 256
    $region73: #{a_call__.5} parent=1 // pred_fallthru
      _
    %1349 = vsyncpa [#allocation3], 1
    %1350 = vsyncpa [#allocation6], 1
    %1351 = vsyncpa [#allocation9], 1
    %1352 = vsyncpa [#allocation12], 1
    %1353 = vsyncpa [#allocation15], 1
    %1354 = vsyncpa [#allocation4], 1

// kernel: a_call__.7
$region0: #{a_call__.7}
  #allocation0 [shape = 'u32[]', space=smem, size = 0x4, offset = 0x4, fixed_abs, tag = 'smem constant byte address 0x4 - core index']
  #allocation1 [shape = 'u32[144,128]{1,0:T(1,128)}', space=vmem, size = 0x12000, scoped, tag = 'internal scratch']
  %s0 = inlined_call_operand.vmem [shape: bf16[2,1024], index: 0, kind: input, shape index: {}]
  %s1 = inlined_call_operand.vmem [shape: bf16[1024,512], index: 1, kind: input, shape index: {}]
  %s2 = inlined_call_operand.vmem [shape: f32[1,512], index: 2, kind: input, shape index: {}]
  %s3 = inlined_call_operand.vmem [shape: bf16[512,256], index: 3, kind: input, shape index: {}]
  %s4 = inlined_call_operand.vmem [shape: f32[1,256], index: 4, kind: input, shape index: {}]
  %s5 = inlined_call_operand.vmem [shape: bf16[256,128], index: 5, kind: input, shape index: {}]
  %s6 = inlined_call_operand.vmem [shape: f32[1,128], index: 6, kind: input, shape index: {}]
  %s7 = inlined_call_operand.hbm [shape: f32[2,128], index: 7, kind: output, shape index: {}]
  %s8 = sld [smem:[#allocation0]]
  $region38: #{a_call__.7} parent=0
    _
  %s10 = ssub.s32 1, %s8
  %s11 = scalar_select 0, %s10, %s8
  $region1: #{a_call__.7} parent=0
    #allocation2 [shape = 'u8[1024]{0}', space=vmem, size = 0x400, scoped, tag = 'output window, operand 0, single buffered']
    #allocation3 [shape = 's32[1]{0}', space=sflag, size = 0x4, scoped, tag = 'scoped memory for a_call__.7']
    %12 = vsyncpa [#allocation3], 0
    // Predicated region
    $region2: #{a_call__.7} parent=1 // pred_check
      _
    $region3: #{a_call__.7} parent=1 // pred_check_branch
      %14 = sbr.rel (0) target = $region5
    $region4: #{a_call__.7} parent=1 // pred_region
      _
    $region5: #{a_call__.7} parent=1 // pred_fallthru
      _
    // Predicated region
    $region6: #{a_call__.7} parent=1 // pred_check
      _
    $region7: #{a_call__.7} parent=1 // pred_check_branch
      %16 = sbr.rel (0) target = $region9
    $region8: #{a_call__.7} parent=1 // pred_region
      _
    $region9: #{a_call__.7} parent=1 // pred_fallthru
      _
    // Predicated region
    $region10: #{a_call__.7} parent=1 // pred_check
      _
    $region11: #{a_call__.7} parent=1 // pred_check_branch
      %18 = sbr.rel (0) target = $region13
    $region12: #{a_call__.7} parent=1 // pred_region
      _
    $region13: #{a_call__.7} parent=1 // pred_fallthru
      _
    // Predicated region
    $region14: #{a_call__.7} parent=1 // pred_check
      _
    $region15: #{a_call__.7} parent=1 // pred_check_branch
      %20 = sbr.rel (0) target = $region17
    $region16: #{a_call__.7} parent=1 // pred_region
      _
    $region17: #{a_call__.7} parent=1 // pred_fallthru
      _
    // Predicated region
    $region18: #{a_call__.7} parent=1 // pred_check
      _
    $region19: #{a_call__.7} parent=1 // pred_check_branch
      %22 = sbr.rel (0) target = $region21
    $region20: #{a_call__.7} parent=1 // pred_region
      _
    $region21: #{a_call__.7} parent=1 // pred_fallthru
      _
    // Predicated region
    $region22: #{a_call__.7} parent=1 // pred_check
      _
    $region23: #{a_call__.7} parent=1 // pred_check_branch
      %24 = sbr.rel (0) target = $region25
    $region24: #{a_call__.7} parent=1 // pred_region
      _
    $region25: #{a_call__.7} parent=1 // pred_fallthru
      _
    // Predicated region
    $region26: #{a_call__.7} parent=1 // pred_check
      _
    $region27: #{a_call__.7} parent=1 // pred_check_branch
      %26 = sbr.rel (0) target = $region29
    $region28: #{a_call__.7} parent=1 // pred_region
      _
    $region29: #{a_call__.7} parent=1 // pred_fallthru
      _
    %v28 = vld [vmem:[%s0] sm:$0xff]
    %v29 = vld [vmem:[%s1] sm:$0xff]
    %v30 = vld [vmem:[%s1 + $0x8] sm:$0xff]
    %v31 = vld [vmem:[%s1 + $0x10] sm:$0xff]
    %v32 = vld [vmem:[%s1 + $0x18] sm:$0xff]
    %v33 = vld [vmem:[%s1 + $0x20] sm:$0xff]
    %v34 = vld [vmem:[%s1 + $0x28] sm:$0xff]
    %v35 = vld [vmem:[%s1 + $0x30] sm:$0xff]
    %v36 = vld [vmem:[%s1 + $0x38] sm:$0xff]
    %v37 = vld [vmem:[%s1 + $0x40] sm:$0xff]
    %v38 = vld [vmem:[%s1 + $0x48] sm:$0xff]
    %v39 = vld [vmem:[%s1 + $0x50] sm:$0xff]
    %v40 = vld [vmem:[%s1 + $0x58] sm:$0xff]
    %v41 = vld [vmem:[%s1 + $0x60] sm:$0xff]
    %v42 = vld [vmem:[%s1 + $0x68] sm:$0xff]
    %v43 = vld [vmem:[%s1 + $0x70] sm:$0xff]
    %v44 = vld [vmem:[%s1 + $0x78] sm:$0xff]
    %v45 = vld [vmem:[%s1 + $0x80] sm:$0xff]
    %v46 = vld [vmem:[%s1 + $0x88] sm:$0xff]
    %v47 = vld [vmem:[%s1 + $0x90] sm:$0xff]
    %v48 = vld [vmem:[%s1 + $0x98] sm:$0xff]
    %v49 = vld [vmem:[%s1 + $0xa0] sm:$0xff]
    %v50 = vld [vmem:[%s1 + $0xa8] sm:$0xff]
    %v51 = vld [vmem:[%s1 + $0xb0] sm:$0xff]
    %v52 = vld [vmem:[%s1 + $0xb8] sm:$0xff]
    %v53 = vld [vmem:[%s1 + $0xc0] sm:$0xff]
    %v54 = vld [vmem:[%s1 + $0xc8] sm:$0xff]
    %v55 = vld [vmem:[%s1 + $0xd0] sm:$0xff]
    %v56 = vld [vmem:[%s1 + $0xd8] sm:$0xff]
    %v57 = vld [vmem:[%s1 + $0xe0] sm:$0xff]
    %v58 = vld [vmem:[%s1 + $0xe8] sm:$0xff]
    %v59 = vld [vmem:[%s1 + $0xf0] sm:$0xff]
    %v60 = vld [vmem:[%s1 + $0xf8] sm:$0xff]
    %v61 = vld [vmem:[%s1 + $0x100] sm:$0xff]
    %v62 = vld [vmem:[%s1 + $0x108] sm:$0xff]
    %v63 = vld [vmem:[%s1 + $0x110] sm:$0xff]
    %v64 = vld [vmem:[%s1 + $0x118] sm:$0xff]
    %v65 = vld [vmem:[%s1 + $0x120] sm:$0xff]
    %v66 = vld [vmem:[%s1 + $0x128] sm:$0xff]
    %v67 = vld [vmem:[%s1 + $0x130] sm:$0xff]
    %v68 = vld [vmem:[%s1 + $0x138] sm:$0xff]
    %v69 = vld [vmem:[%s1 + $0x140] sm:$0xff]
    %v70 = vld [vmem:[%s1 + $0x148] sm:$0xff]
    %v71 = vld [vmem:[%s1 + $0x150] sm:$0xff]
    %v72 = vld [vmem:[%s1 + $0x158] sm:$0xff]
    %v73 = vld [vmem:[%s1 + $0x160] sm:$0xff]
    %v74 = vld [vmem:[%s1 + $0x168] sm:$0xff]
    %v75 = vld [vmem:[%s1 + $0x170] sm:$0xff]
    %v76 = vld [vmem:[%s1 + $0x178] sm:$0xff]
    %v77 = vld [vmem:[%s1 + $0x180] sm:$0xff]
    %v78 = vld [vmem:[%s1 + $0x188] sm:$0xff]
    %v79 = vld [vmem:[%s1 + $0x190] sm:$0xff]
    %v80 = vld [vmem:[%s1 + $0x198] sm:$0xff]
    %v81 = vld [vmem:[%s1 + $0x1a0] sm:$0xff]
    %v82 = vld [vmem:[%s1 + $0x1a8] sm:$0xff]
    %v83 = vld [vmem:[%s1 + $0x1b0] sm:$0xff]
    %v84 = vld [vmem:[%s1 + $0x1b8] sm:$0xff]
    %v85 = vld [vmem:[%s1 + $0x1c0] sm:$0xff]
    %v86 = vld [vmem:[%s1 + $0x1c8] sm:$0xff]
    %v87 = vld [vmem:[%s1 + $0x1d0] sm:$0xff]
    %v88 = vld [vmem:[%s1 + $0x1d8] sm:$0xff]
    %v89 = vld [vmem:[%s1 + $0x1e0] sm:$0xff]
    %v90 = vld [vmem:[%s1 + $0x1e8] sm:$0xff]
    %v91 = vld [vmem:[%s1 + $0x1f0] sm:$0xff]
    %v92 = vld [vmem:[%s1 + $0x1f8] sm:$0xff]
    %v93 = vld [vmem:[%s1 + $0x200] sm:$0xff]
    %v94 = vld [vmem:[%s1 + $0x208] sm:$0xff]
    %v95 = vld [vmem:[%s1 + $0x210] sm:$0xff]
    %v96 = vld [vmem:[%s1 + $0x218] sm:$0xff]
    %v97 = vld [vmem:[%s1 + $0x220] sm:$0xff]
    %v98 = vld [vmem:[%s1 + $0x228] sm:$0xff]
    %v99 = vld [vmem:[%s1 + $0x230] sm:$0xff]
    %v100 = vld [vmem:[%s1 + $0x238] sm:$0xff]
    %v101 = vld [vmem:[%s1 + $0x240] sm:$0xff]
    %v102 = vld [vmem:[%s1 + $0x248] sm:$0xff]
    %v103 = vld [vmem:[%s1 + $0x250] sm:$0xff]
    %v104 = vld [vmem:[%s1 + $0x258] sm:$0xff]
    %v105 = vld [vmem:[%s1 + $0x260] sm:$0xff]
    %v106 = vld [vmem:[%s1 + $0x268] sm:$0xff]
    %v107 = vld [vmem:[%s1 + $0x270] sm:$0xff]
    %v108 = vld [vmem:[%s1 + $0x278] sm:$0xff]
    %v109 = vld [vmem:[%s1 + $0x280] sm:$0xff]
    %v110 = vld [vmem:[%s1 + $0x288] sm:$0xff]
    %v111 = vld [vmem:[%s1 + $0x290] sm:$0xff]
    %v112 = vld [vmem:[%s1 + $0x298] sm:$0xff]
    %v113 = vld [vmem:[%s1 + $0x2a0] sm:$0xff]
    %v114 = vld [vmem:[%s1 + $0x2a8] sm:$0xff]
    %v115 = vld [vmem:[%s1 + $0x2b0] sm:$0xff]
    %v116 = vld [vmem:[%s1 + $0x2b8] sm:$0xff]
    %v117 = vld [vmem:[%s1 + $0x2c0] sm:$0xff]
    %v118 = vld [vmem:[%s1 + $0x2c8] sm:$0xff]
    %v119 = vld [vmem:[%s1 + $0x2d0] sm:$0xff]
    %v120 = vld [vmem:[%s1 + $0x2d8] sm:$0xff]
    %v121 = vld [vmem:[%s1 + $0x2e0] sm:$0xff]
    %v122 = vld [vmem:[%s1 + $0x2e8] sm:$0xff]
    %v123 = vld [vmem:[%s1 + $0x2f0] sm:$0xff]
    %v124 = vld [vmem:[%s1 + $0x2f8] sm:$0xff]
    %v125 = vld [vmem:[%s1 + $0x300] sm:$0xff]
    %v126 = vld [vmem:[%s1 + $0x308] sm:$0xff]
    %v127 = vld [vmem:[%s1 + $0x310] sm:$0xff]
    %v128 = vld [vmem:[%s1 + $0x318] sm:$0xff]
    %v129 = vld [vmem:[%s1 + $0x320] sm:$0xff]
    %v130 = vld [vmem:[%s1 + $0x328] sm:$0xff]
    %v131 = vld [vmem:[%s1 + $0x330] sm:$0xff]
    %v132 = vld [vmem:[%s1 + $0x338] sm:$0xff]
    %v133 = vld [vmem:[%s1 + $0x340] sm:$0xff]
    %v134 = vld [vmem:[%s1 + $0x348] sm:$0xff]
    %v135 = vld [vmem:[%s1 + $0x350] sm:$0xff]
    %v136 = vld [vmem:[%s1 + $0x358] sm:$0xff]
    %v137 = vld [vmem:[%s1 + $0x360] sm:$0xff]
    %v138 = vld [vmem:[%s1 + $0x368] sm:$0xff]
    %v139 = vld [vmem:[%s1 + $0x370] sm:$0xff]
    %v140 = vld [vmem:[%s1 + $0x378] sm:$0xff]
    %v141 = vld [vmem:[%s1 + $0x380] sm:$0xff]
    %v142 = vld [vmem:[%s1 + $0x388] sm:$0xff]
    %v143 = vld [vmem:[%s1 + $0x390] sm:$0xff]
    %v144 = vld [vmem:[%s1 + $0x398] sm:$0xff]
    %v145 = vld [vmem:[%s1 + $0x3a0] sm:$0xff]
    %v146 = vld [vmem:[%s1 + $0x3a8] sm:$0xff]
    %v147 = vld [vmem:[%s1 + $0x3b0] sm:$0xff]
    %v148 = vld [vmem:[%s1 + $0x3b8] sm:$0xff]
    %v149 = vld [vmem:[%s1 + $0x3c0] sm:$0xff]
    %v150 = vld [vmem:[%s1 + $0x3c8] sm:$0xff]
    %v151 = vld [vmem:[%s1 + $0x3d0] sm:$0xff]
    %v152 = vld [vmem:[%s1 + $0x3d8] sm:$0xff]
    %v153 = vld [vmem:[%s1 + $0x3e0] sm:$0xff]
    %v154 = vld [vmem:[%s1 + $0x3e8] sm:$0xff]
    %v155 = vld [vmem:[%s1 + $0x3f0] sm:$0xff]
    %v156 = vld [vmem:[%s1 + $0x3f8] sm:$0xff]
    %v157 = vld [vmem:[%s1 + $0x400] sm:$0xff]
    %v158 = vld [vmem:[%s1 + $0x408] sm:$0xff]
    %v159 = vld [vmem:[%s1 + $0x410] sm:$0xff]
    %v160 = vld [vmem:[%s1 + $0x418] sm:$0xff]
    %v161 = vld [vmem:[%s1 + $0x420] sm:$0xff]
    %v162 = vld [vmem:[%s1 + $0x428] sm:$0xff]
    %v163 = vld [vmem:[%s1 + $0x430] sm:$0xff]
    %v164 = vld [vmem:[%s1 + $0x438] sm:$0xff]
    %v165 = vld [vmem:[%s1 + $0x440] sm:$0xff]
    %v166 = vld [vmem:[%s1 + $0x448] sm:$0xff]
    %v167 = vld [vmem:[%s1 + $0x450] sm:$0xff]
    %v168 = vld [vmem:[%s1 + $0x458] sm:$0xff]
    %v169 = vld [vmem:[%s1 + $0x460] sm:$0xff]
    %v170 = vld [vmem:[%s1 + $0x468] sm:$0xff]
    %v171 = vld [vmem:[%s1 + $0x470] sm:$0xff]
    %v172 = vld [vmem:[%s1 + $0x478] sm:$0xff]
    %v173 = vld [vmem:[%s1 + $0x480] sm:$0xff]
    %v174 = vld [vmem:[%s1 + $0x488] sm:$0xff]
    %v175 = vld [vmem:[%s1 + $0x490] sm:$0xff]
    %v176 = vld [vmem:[%s1 + $0x498] sm:$0xff]
    %v177 = vld [vmem:[%s1 + $0x4a0] sm:$0xff]
    %v178 = vld [vmem:[%s1 + $0x4a8] sm:$0xff]
    %v179 = vld [vmem:[%s1 + $0x4b0] sm:$0xff]
    %v180 = vld [vmem:[%s1 + $0x4b8] sm:$0xff]
    %v181 = vld [vmem:[%s1 + $0x4c0] sm:$0xff]
    %v182 = vld [vmem:[%s1 + $0x4c8] sm:$0xff]
    %v183 = vld [vmem:[%s1 + $0x4d0] sm:$0xff]
    %v184 = vld [vmem:[%s1 + $0x4d8] sm:$0xff]
    %v185 = vld [vmem:[%s1 + $0x4e0] sm:$0xff]
    %v186 = vld [vmem:[%s1 + $0x4e8] sm:$0xff]
    %v187 = vld [vmem:[%s1 + $0x4f0] sm:$0xff]
    %v188 = vld [vmem:[%s1 + $0x4f8] sm:$0xff]
    %v189 = vld [vmem:[%s1 + $0x500] sm:$0xff]
    %v190 = vld [vmem:[%s1 + $0x508] sm:$0xff]
    %v191 = vld [vmem:[%s1 + $0x510] sm:$0xff]
    %v192 = vld [vmem:[%s1 + $0x518] sm:$0xff]
    %v193 = vld [vmem:[%s1 + $0x520] sm:$0xff]
    %v194 = vld [vmem:[%s1 + $0x528] sm:$0xff]
    %v195 = vld [vmem:[%s1 + $0x530] sm:$0xff]
    %v196 = vld [vmem:[%s1 + $0x538] sm:$0xff]
    %v197 = vld [vmem:[%s1 + $0x540] sm:$0xff]
    %v198 = vld [vmem:[%s1 + $0x548] sm:$0xff]
    %v199 = vld [vmem:[%s1 + $0x550] sm:$0xff]
    %v200 = vld [vmem:[%s1 + $0x558] sm:$0xff]
    %v201 = vld [vmem:[%s1 + $0x560] sm:$0xff]
    %v202 = vld [vmem:[%s1 + $0x568] sm:$0xff]
    %v203 = vld [vmem:[%s1 + $0x570] sm:$0xff]
    %v204 = vld [vmem:[%s1 + $0x578] sm:$0xff]
    %v205 = vld [vmem:[%s1 + $0x580] sm:$0xff]
    %v206 = vld [vmem:[%s1 + $0x588] sm:$0xff]
    %v207 = vld [vmem:[%s1 + $0x590] sm:$0xff]
    %v208 = vld [vmem:[%s1 + $0x598] sm:$0xff]
    %v209 = vld [vmem:[%s1 + $0x5a0] sm:$0xff]
    %v210 = vld [vmem:[%s1 + $0x5a8] sm:$0xff]
    %v211 = vld [vmem:[%s1 + $0x5b0] sm:$0xff]
    %v212 = vld [vmem:[%s1 + $0x5b8] sm:$0xff]
    %v213 = vld [vmem:[%s1 + $0x5c0] sm:$0xff]
    %v214 = vld [vmem:[%s1 + $0x5c8] sm:$0xff]
    %v215 = vld [vmem:[%s1 + $0x5d0] sm:$0xff]
    %v216 = vld [vmem:[%s1 + $0x5d8] sm:$0xff]
    %v217 = vld [vmem:[%s1 + $0x5e0] sm:$0xff]
    %v218 = vld [vmem:[%s1 + $0x5e8] sm:$0xff]
    %v219 = vld [vmem:[%s1 + $0x5f0] sm:$0xff]
    %v220 = vld [vmem:[%s1 + $0x5f8] sm:$0xff]
    %v221 = vld [vmem:[%s1 + $0x600] sm:$0xff]
    %v222 = vld [vmem:[%s1 + $0x608] sm:$0xff]
    %v223 = vld [vmem:[%s1 + $0x610] sm:$0xff]
    %v224 = vld [vmem:[%s1 + $0x618] sm:$0xff]
    %v225 = vld [vmem:[%s1 + $0x620] sm:$0xff]
    %v226 = vld [vmem:[%s1 + $0x628] sm:$0xff]
    %v227 = vld [vmem:[%s1 + $0x630] sm:$0xff]
    %v228 = vld [vmem:[%s1 + $0x638] sm:$0xff]
    %v229 = vld [vmem:[%s1 + $0x640] sm:$0xff]
    %v230 = vld [vmem:[%s1 + $0x648] sm:$0xff]
    %v231 = vld [vmem:[%s1 + $0x650] sm:$0xff]
    %v232 = vld [vmem:[%s1 + $0x658] sm:$0xff]
    %v233 = vld [vmem:[%s1 + $0x660] sm:$0xff]
    %v234 = vld [vmem:[%s1 + $0x668] sm:$0xff]
    %v235 = vld [vmem:[%s1 + $0x670] sm:$0xff]
    %v236 = vld [vmem:[%s1 + $0x678] sm:$0xff]
    %v237 = vld [vmem:[%s1 + $0x680] sm:$0xff]
    %v238 = vld [vmem:[%s1 + $0x688] sm:$0xff]
    %v239 = vld [vmem:[%s1 + $0x690] sm:$0xff]
    %v240 = vld [vmem:[%s1 + $0x698] sm:$0xff]
    %v241 = vld [vmem:[%s1 + $0x6a0] sm:$0xff]
    %v242 = vld [vmem:[%s1 + $0x6a8] sm:$0xff]
    %v243 = vld [vmem:[%s1 + $0x6b0] sm:$0xff]
    %v244 = vld [vmem:[%s1 + $0x6b8] sm:$0xff]
    %v245 = vld [vmem:[%s1 + $0x6c0] sm:$0xff]
    %v246 = vld [vmem:[%s1 + $0x6c8] sm:$0xff]
    %v247 = vld [vmem:[%s1 + $0x6d0] sm:$0xff]
    %v248 = vld [vmem:[%s1 + $0x6d8] sm:$0xff]
    %v249 = vld [vmem:[%s1 + $0x6e0] sm:$0xff]
    %v250 = vld [vmem:[%s1 + $0x6e8] sm:$0xff]
    %v251 = vld [vmem:[%s1 + $0x6f0] sm:$0xff]
    %v252 = vld [vmem:[%s1 + $0x6f8] sm:$0xff]
    %v253 = vld [vmem:[%s1 + $0x700] sm:$0xff]
    %v254 = vld [vmem:[%s1 + $0x708] sm:$0xff]
    %v255 = vld [vmem:[%s1 + $0x710] sm:$0xff]
    %v256 = vld [vmem:[%s1 + $0x718] sm:$0xff]
    %v257 = vld [vmem:[%s1 + $0x720] sm:$0xff]
    %v258 = vld [vmem:[%s1 + $0x728] sm:$0xff]
    %v259 = vld [vmem:[%s1 + $0x730] sm:$0xff]
    %v260 = vld [vmem:[%s1 + $0x738] sm:$0xff]
    %v261 = vld [vmem:[%s1 + $0x740] sm:$0xff]
    %v262 = vld [vmem:[%s1 + $0x748] sm:$0xff]
    %v263 = vld [vmem:[%s1 + $0x750] sm:$0xff]
    %v264 = vld [vmem:[%s1 + $0x758] sm:$0xff]
    %v265 = vld [vmem:[%s1 + $0x760] sm:$0xff]
    %v266 = vld [vmem:[%s1 + $0x768] sm:$0xff]
    %v267 = vld [vmem:[%s1 + $0x770] sm:$0xff]
    %v268 = vld [vmem:[%s1 + $0x778] sm:$0xff]
    %v269 = vld [vmem:[%s1 + $0x780] sm:$0xff]
    %v270 = vld [vmem:[%s1 + $0x788] sm:$0xff]
    %v271 = vld [vmem:[%s1 + $0x790] sm:$0xff]
    %v272 = vld [vmem:[%s1 + $0x798] sm:$0xff]
    %v273 = vld [vmem:[%s1 + $0x7a0] sm:$0xff]
    %v274 = vld [vmem:[%s1 + $0x7a8] sm:$0xff]
    %v275 = vld [vmem:[%s1 + $0x7b0] sm:$0xff]
    %v276 = vld [vmem:[%s1 + $0x7b8] sm:$0xff]
    %v277 = vld [vmem:[%s1 + $0x7c0] sm:$0xff]
    %v278 = vld [vmem:[%s1 + $0x7c8] sm:$0xff]
    %v279 = vld [vmem:[%s1 + $0x7d0] sm:$0xff]
    %v280 = vld [vmem:[%s1 + $0x7d8] sm:$0xff]
    %v281 = vld [vmem:[%s1 + $0x7e0] sm:$0xff]
    %v282 = vld [vmem:[%s1 + $0x7e8] sm:$0xff]
    %v283 = vld [vmem:[%s1 + $0x7f0] sm:$0xff]
    %v284 = vld [vmem:[%s1 + $0x7f8] sm:$0xff]
    %v285 = vld [vmem:[%s2] sm:$0xf]
    %v287 = vlaneseq
    %v288 = vshrl.u32 %v287, 7
    %v289 = vsub.s32 0, %v288
    %v290 = vrot.slane %v285, %v289
    %v291 = vlaneseq
    %v292 = vshrl.u32 %v291, 7
    %v293 = vsub.s32 1, %v292
    %v294 = vrot.slane %v285, %v293
    %v295 = vlaneseq
    %v296 = vshrl.u32 %v295, 7
    %v297 = vsub.s32 2, %v296
    %v298 = vrot.slane %v285, %v297
    %v299 = vlaneseq
    %v300 = vshrl.u32 %v299, 7
    %v301 = vsub.s32 3, %v300
    %v302 = vrot.slane %v285, %v301
    %v308 = vcombine.high %v28, %v28
    %v310 = vunpack.c.l.s4 1966171168
    %v311 = vunpack.c.0.s8 %v310
    %v312 = vlaneseq
    %v313 = vshrl.u32 %v312, 7
    %v314 = vsub.s32 %v311, %v313
    %v315 = vrot.slane %v28, %v314
    %v317 = vunpack.c.l.s4 1966171168
    %v318 = vunpack.c.0.s8 %v317
    %v319 = vlaneseq
    %v320 = vshrl.u32 %v319, 7
    %v321 = vsub.s32 %v318, %v320
    %v322 = vrot.slane %v308, %v321
    %v323 = vcombine.high %v315, %v315
    %v324 = vcombine.high %v322, %v322
    %v326 = vunpack.c.l.s4 1966171168
    %v327 = vunpack.c.0.s8 %v326
    %v328 = vlaneseq
    %v329 = vshrl.u32 %v328, 7
    %v330 = vsub.s32 %v327, %v329
    %v331 = vrot.slane %v315, %v330
    %v333 = vunpack.c.l.s4 1966171168
    %v334 = vunpack.c.0.s8 %v333
    %v335 = vlaneseq
    %v336 = vshrl.u32 %v335, 7
    %v337 = vsub.s32 %v334, %v336
    %v338 = vrot.slane %v322, %v337
    %v340 = vunpack.c.l.s4 1966171168
    %v341 = vunpack.c.0.s8 %v340
    %v342 = vlaneseq
    %v343 = vshrl.u32 %v342, 7
    %v344 = vsub.s32 %v341, %v343
    %v345 = vrot.slane %v323, %v344
    %v347 = vunpack.c.l.s4 1966171168
    %v348 = vunpack.c.0.s8 %v347
    %v349 = vlaneseq
    %v350 = vshrl.u32 %v349, 7
    %v351 = vsub.s32 %v348, %v350
    %v352 = vrot.slane %v324, %v351
    %v353 = vcombine.high %v331, %v331
    %v354 = vcombine.high %v338, %v338
    %v355 = vcombine.high %v345, %v345
    %v356 = vcombine.high %v352, %v352
    %v621 = vunpack.c.l.b16 %v29
    %v622 = vunpack.c.h.b16 %v29
    %v623 = vunpack.c.l.b16 %v30
    %v624 = vunpack.c.h.b16 %v30
    %v625 = vunpack.c.l.b16 %v31
    %v626 = vunpack.c.h.b16 %v31
    %v627 = vunpack.c.l.b16 %v32
    %v628 = vunpack.c.h.b16 %v32
    %v629 = vunpack.c.l.b16 %v33
    %v630 = vunpack.c.h.b16 %v33
    %v631 = vunpack.c.l.b16 %v34
    %v632 = vunpack.c.h.b16 %v34
    %v633 = vunpack.c.l.b16 %v35
    %v634 = vunpack.c.h.b16 %v35
    %v635 = vunpack.c.l.b16 %v36
    %v636 = vunpack.c.h.b16 %v36
    %v637 = vunpack.c.l.b16 %v37
    %v638 = vunpack.c.h.b16 %v37
    %v639 = vunpack.c.l.b16 %v38
    %v640 = vunpack.c.h.b16 %v38
    %v641 = vunpack.c.l.b16 %v39
    %v642 = vunpack.c.h.b16 %v39
    %v643 = vunpack.c.l.b16 %v40
    %v644 = vunpack.c.h.b16 %v40
    %v645 = vunpack.c.l.b16 %v41
    %v646 = vunpack.c.h.b16 %v41
    %v647 = vunpack.c.l.b16 %v42
    %v648 = vunpack.c.h.b16 %v42
    %v649 = vunpack.c.l.b16 %v43
    %v650 = vunpack.c.h.b16 %v43
    %v651 = vunpack.c.l.b16 %v44
    %v652 = vunpack.c.h.b16 %v44
    %v653 = vunpack.c.l.b16 %v45
    %v654 = vunpack.c.h.b16 %v45
    %v655 = vunpack.c.l.b16 %v46
    %v656 = vunpack.c.h.b16 %v46
    %v657 = vunpack.c.l.b16 %v47
    %v658 = vunpack.c.h.b16 %v47
    %v659 = vunpack.c.l.b16 %v48
    %v660 = vunpack.c.h.b16 %v48
    %v661 = vunpack.c.l.b16 %v49
    %v662 = vunpack.c.h.b16 %v49
    %v663 = vunpack.c.l.b16 %v50
    %v664 = vunpack.c.h.b16 %v50
    %v665 = vunpack.c.l.b16 %v51
    %v666 = vunpack.c.h.b16 %v51
    %v667 = vunpack.c.l.b16 %v52
    %v668 = vunpack.c.h.b16 %v52
    %v669 = vunpack.c.l.b16 %v53
    %v670 = vunpack.c.h.b16 %v53
    %v671 = vunpack.c.l.b16 %v54
    %v672 = vunpack.c.h.b16 %v54
    %v673 = vunpack.c.l.b16 %v55
    %v674 = vunpack.c.h.b16 %v55
    %v675 = vunpack.c.l.b16 %v56
    %v676 = vunpack.c.h.b16 %v56
    %v677 = vunpack.c.l.b16 %v57
    %v678 = vunpack.c.h.b16 %v57
    %v679 = vunpack.c.l.b16 %v58
    %v680 = vunpack.c.h.b16 %v58
    %v681 = vunpack.c.l.b16 %v59
    %v682 = vunpack.c.h.b16 %v59
    %v683 = vunpack.c.l.b16 %v60
    %v684 = vunpack.c.h.b16 %v60
    %v685 = vunpack.c.l.b16 %v61
    %v686 = vunpack.c.h.b16 %v61
    %v687 = vunpack.c.l.b16 %v62
    %v688 = vunpack.c.h.b16 %v62
    %v689 = vunpack.c.l.b16 %v63
    %v690 = vunpack.c.h.b16 %v63
    %v691 = vunpack.c.l.b16 %v64
    %v692 = vunpack.c.h.b16 %v64
    %v693 = vunpack.c.l.b16 %v65
    %v694 = vunpack.c.h.b16 %v65
    %v695 = vunpack.c.l.b16 %v66
    %v696 = vunpack.c.h.b16 %v66
    %v697 = vunpack.c.l.b16 %v67
    %v698 = vunpack.c.h.b16 %v67
    %v699 = vunpack.c.l.b16 %v68
    %v700 = vunpack.c.h.b16 %v68
    %v701 = vunpack.c.l.b16 %v69
    %v702 = vunpack.c.h.b16 %v69
    %v703 = vunpack.c.l.b16 %v70
    %v704 = vunpack.c.h.b16 %v70
    %v705 = vunpack.c.l.b16 %v71
    %v706 = vunpack.c.h.b16 %v71
    %v707 = vunpack.c.l.b16 %v72
    %v708 = vunpack.c.h.b16 %v72
    %v709 = vunpack.c.l.b16 %v73
    %v710 = vunpack.c.h.b16 %v73
    %v711 = vunpack.c.l.b16 %v74
    %v712 = vunpack.c.h.b16 %v74
    %v713 = vunpack.c.l.b16 %v75
    %v714 = vunpack.c.h.b16 %v75
    %v715 = vunpack.c.l.b16 %v76
    %v716 = vunpack.c.h.b16 %v76
    %v717 = vunpack.c.l.b16 %v77
    %v718 = vunpack.c.h.b16 %v77
    %v719 = vunpack.c.l.b16 %v78
    %v720 = vunpack.c.h.b16 %v78
    %v721 = vunpack.c.l.b16 %v79
    %v722 = vunpack.c.h.b16 %v79
    %v723 = vunpack.c.l.b16 %v80
    %v724 = vunpack.c.h.b16 %v80
    %v725 = vunpack.c.l.b16 %v81
    %v726 = vunpack.c.h.b16 %v81
    %v727 = vunpack.c.l.b16 %v82
    %v728 = vunpack.c.h.b16 %v82
    %v729 = vunpack.c.l.b16 %v83
    %v730 = vunpack.c.h.b16 %v83
    %v731 = vunpack.c.l.b16 %v84
    %v732 = vunpack.c.h.b16 %v84
    %v733 = vunpack.c.l.b16 %v85
    %v734 = vunpack.c.h.b16 %v85
    %v735 = vunpack.c.l.b16 %v86
    %v736 = vunpack.c.h.b16 %v86
    %v737 = vunpack.c.l.b16 %v87
    %v738 = vunpack.c.h.b16 %v87
    %v739 = vunpack.c.l.b16 %v88
    %v740 = vunpack.c.h.b16 %v88
    %v741 = vunpack.c.l.b16 %v89
    %v742 = vunpack.c.h.b16 %v89
    %v743 = vunpack.c.l.b16 %v90
    %v744 = vunpack.c.h.b16 %v90
    %v745 = vunpack.c.l.b16 %v91
    %v746 = vunpack.c.h.b16 %v91
    %v747 = vunpack.c.l.b16 %v92
    %v748 = vunpack.c.h.b16 %v92
    %v749 = vunpack.c.l.b16 %v93
    %v750 = vunpack.c.h.b16 %v93
    %v751 = vunpack.c.l.b16 %v94
    %v752 = vunpack.c.h.b16 %v94
    %v753 = vunpack.c.l.b16 %v95
    %v754 = vunpack.c.h.b16 %v95
    %v755 = vunpack.c.l.b16 %v96
    %v756 = vunpack.c.h.b16 %v96
    %v757 = vunpack.c.l.b16 %v97
    %v758 = vunpack.c.h.b16 %v97
    %v759 = vunpack.c.l.b16 %v98
    %v760 = vunpack.c.h.b16 %v98
    %v761 = vunpack.c.l.b16 %v99
    %v762 = vunpack.c.h.b16 %v99
    %v763 = vunpack.c.l.b16 %v100
    %v764 = vunpack.c.h.b16 %v100
    %v765 = vunpack.c.l.b16 %v101
    %v766 = vunpack.c.h.b16 %v101
    %v767 = vunpack.c.l.b16 %v102
    %v768 = vunpack.c.h.b16 %v102
    %v769 = vunpack.c.l.b16 %v103
    %v770 = vunpack.c.h.b16 %v103
    %v771 = vunpack.c.l.b16 %v104
    %v772 = vunpack.c.h.b16 %v104
    %v773 = vunpack.c.l.b16 %v105
    %v774 = vunpack.c.h.b16 %v105
    %v775 = vunpack.c.l.b16 %v106
    %v776 = vunpack.c.h.b16 %v106
    %v777 = vunpack.c.l.b16 %v107
    %v778 = vunpack.c.h.b16 %v107
    %v779 = vunpack.c.l.b16 %v108
    %v780 = vunpack.c.h.b16 %v108
    %v781 = vunpack.c.l.b16 %v109
    %v782 = vunpack.c.h.b16 %v109
    %v783 = vunpack.c.l.b16 %v110
    %v784 = vunpack.c.h.b16 %v110
    %v785 = vunpack.c.l.b16 %v111
    %v786 = vunpack.c.h.b16 %v111
    %v787 = vunpack.c.l.b16 %v112
    %v788 = vunpack.c.h.b16 %v112
    %v789 = vunpack.c.l.b16 %v113
    %v790 = vunpack.c.h.b16 %v113
    %v791 = vunpack.c.l.b16 %v114
    %v792 = vunpack.c.h.b16 %v114
    %v793 = vunpack.c.l.b16 %v115
    %v794 = vunpack.c.h.b16 %v115
    %v795 = vunpack.c.l.b16 %v116
    %v796 = vunpack.c.h.b16 %v116
    %v797 = vunpack.c.l.b16 %v117
    %v798 = vunpack.c.h.b16 %v117
    %v799 = vunpack.c.l.b16 %v118
    %v800 = vunpack.c.h.b16 %v118
    %v801 = vunpack.c.l.b16 %v119
    %v802 = vunpack.c.h.b16 %v119
    %v803 = vunpack.c.l.b16 %v120
    %v804 = vunpack.c.h.b16 %v120
    %v805 = vunpack.c.l.b16 %v121
    %v806 = vunpack.c.h.b16 %v121
    %v807 = vunpack.c.l.b16 %v122
    %v808 = vunpack.c.h.b16 %v122
    %v809 = vunpack.c.l.b16 %v123
    %v810 = vunpack.c.h.b16 %v123
    %v811 = vunpack.c.l.b16 %v124
    %v812 = vunpack.c.h.b16 %v124
    %v813 = vunpack.c.l.b16 %v125
    %v814 = vunpack.c.h.b16 %v125
    %v815 = vunpack.c.l.b16 %v126
    %v816 = vunpack.c.h.b16 %v126
    %v817 = vunpack.c.l.b16 %v127
    %v818 = vunpack.c.h.b16 %v127
    %v819 = vunpack.c.l.b16 %v128
    %v820 = vunpack.c.h.b16 %v128
    %v821 = vunpack.c.l.b16 %v129
    %v822 = vunpack.c.h.b16 %v129
    %v823 = vunpack.c.l.b16 %v130
    %v824 = vunpack.c.h.b16 %v130
    %v825 = vunpack.c.l.b16 %v131
    %v826 = vunpack.c.h.b16 %v131
    %v827 = vunpack.c.l.b16 %v132
    %v828 = vunpack.c.h.b16 %v132
    %v829 = vunpack.c.l.b16 %v133
    %v830 = vunpack.c.h.b16 %v133
    %v831 = vunpack.c.l.b16 %v134
    %v832 = vunpack.c.h.b16 %v134
    %v833 = vunpack.c.l.b16 %v135
    %v834 = vunpack.c.h.b16 %v135
    %v835 = vunpack.c.l.b16 %v136
    %v836 = vunpack.c.h.b16 %v136
    %v837 = vunpack.c.l.b16 %v137
    %v838 = vunpack.c.h.b16 %v137
    %v839 = vunpack.c.l.b16 %v138
    %v840 = vunpack.c.h.b16 %v138
    %v841 = vunpack.c.l.b16 %v139
    %v842 = vunpack.c.h.b16 %v139
    %v843 = vunpack.c.l.b16 %v140
    %v844 = vunpack.c.h.b16 %v140
    %v845 = vunpack.c.l.b16 %v141
    %v846 = vunpack.c.h.b16 %v141
    %v847 = vunpack.c.l.b16 %v142
    %v848 = vunpack.c.h.b16 %v142
    %v849 = vunpack.c.l.b16 %v143
    %v850 = vunpack.c.h.b16 %v143
    %v851 = vunpack.c.l.b16 %v144
    %v852 = vunpack.c.h.b16 %v144
    %v853 = vunpack.c.l.b16 %v145
    %v854 = vunpack.c.h.b16 %v145
    %v855 = vunpack.c.l.b16 %v146
    %v856 = vunpack.c.h.b16 %v146
    %v857 = vunpack.c.l.b16 %v147
    %v858 = vunpack.c.h.b16 %v147
    %v859 = vunpack.c.l.b16 %v148
    %v860 = vunpack.c.h.b16 %v148
    %v861 = vunpack.c.l.b16 %v149
    %v862 = vunpack.c.h.b16 %v149
    %v863 = vunpack.c.l.b16 %v150
    %v864 = vunpack.c.h.b16 %v150
    %v865 = vunpack.c.l.b16 %v151
    %v866 = vunpack.c.h.b16 %v151
    %v867 = vunpack.c.l.b16 %v152
    %v868 = vunpack.c.h.b16 %v152
    %v869 = vunpack.c.l.b16 %v153
    %v870 = vunpack.c.h.b16 %v153
    %v871 = vunpack.c.l.b16 %v154
    %v872 = vunpack.c.h.b16 %v154
    %v873 = vunpack.c.l.b16 %v155
    %v874 = vunpack.c.h.b16 %v155
    %v875 = vunpack.c.l.b16 %v156
    %v876 = vunpack.c.h.b16 %v156
    %v877 = vunpack.c.l.b16 %v157
    %v878 = vunpack.c.h.b16 %v157
    %v879 = vunpack.c.l.b16 %v158
    %v880 = vunpack.c.h.b16 %v158
    %v881 = vunpack.c.l.b16 %v159
    %v882 = vunpack.c.h.b16 %v159
    %v883 = vunpack.c.l.b16 %v160
    %v884 = vunpack.c.h.b16 %v160
    %v885 = vunpack.c.l.b16 %v161
    %v886 = vunpack.c.h.b16 %v161
    %v887 = vunpack.c.l.b16 %v162
    %v888 = vunpack.c.h.b16 %v162
    %v889 = vunpack.c.l.b16 %v163
    %v890 = vunpack.c.h.b16 %v163
    %v891 = vunpack.c.l.b16 %v164
    %v892 = vunpack.c.h.b16 %v164
    %v893 = vunpack.c.l.b16 %v165
    %v894 = vunpack.c.h.b16 %v165
    %v895 = vunpack.c.l.b16 %v166
    %v896 = vunpack.c.h.b16 %v166
    %v897 = vunpack.c.l.b16 %v167
    %v898 = vunpack.c.h.b16 %v167
    %v899 = vunpack.c.l.b16 %v168
    %v900 = vunpack.c.h.b16 %v168
    %v901 = vunpack.c.l.b16 %v169
    %v902 = vunpack.c.h.b16 %v169
    %v903 = vunpack.c.l.b16 %v170
    %v904 = vunpack.c.h.b16 %v170
    %v905 = vunpack.c.l.b16 %v171
    %v906 = vunpack.c.h.b16 %v171
    %v907 = vunpack.c.l.b16 %v172
    %v908 = vunpack.c.h.b16 %v172
    %v909 = vunpack.c.l.b16 %v173
    %v910 = vunpack.c.h.b16 %v173
    %v911 = vunpack.c.l.b16 %v174
    %v912 = vunpack.c.h.b16 %v174
    %v913 = vunpack.c.l.b16 %v175
    %v914 = vunpack.c.h.b16 %v175
    %v915 = vunpack.c.l.b16 %v176
    %v916 = vunpack.c.h.b16 %v176
    %v917 = vunpack.c.l.b16 %v177
    %v918 = vunpack.c.h.b16 %v177
    %v919 = vunpack.c.l.b16 %v178
    %v920 = vunpack.c.h.b16 %v178
    %v921 = vunpack.c.l.b16 %v179
    %v922 = vunpack.c.h.b16 %v179
    %v923 = vunpack.c.l.b16 %v180
    %v924 = vunpack.c.h.b16 %v180
    %v925 = vunpack.c.l.b16 %v181
    %v926 = vunpack.c.h.b16 %v181
    %v927 = vunpack.c.l.b16 %v182
    %v928 = vunpack.c.h.b16 %v182
    %v929 = vunpack.c.l.b16 %v183
    %v930 = vunpack.c.h.b16 %v183
    %v931 = vunpack.c.l.b16 %v184
    %v932 = vunpack.c.h.b16 %v184
    %v933 = vunpack.c.l.b16 %v185
    %v934 = vunpack.c.h.b16 %v185
    %v935 = vunpack.c.l.b16 %v186
    %v936 = vunpack.c.h.b16 %v186
    %v937 = vunpack.c.l.b16 %v187
    %v938 = vunpack.c.h.b16 %v187
    %v939 = vunpack.c.l.b16 %v188
    %v940 = vunpack.c.h.b16 %v188
    %v941 = vunpack.c.l.b16 %v189
    %v942 = vunpack.c.h.b16 %v189
    %v943 = vunpack.c.l.b16 %v190
    %v944 = vunpack.c.h.b16 %v190
    %v945 = vunpack.c.l.b16 %v191
    %v946 = vunpack.c.h.b16 %v191
    %v947 = vunpack.c.l.b16 %v192
    %v948 = vunpack.c.h.b16 %v192
    %v949 = vunpack.c.l.b16 %v193
    %v950 = vunpack.c.h.b16 %v193
    %v951 = vunpack.c.l.b16 %v194
    %v952 = vunpack.c.h.b16 %v194
    %v953 = vunpack.c.l.b16 %v195
    %v954 = vunpack.c.h.b16 %v195
    %v955 = vunpack.c.l.b16 %v196
    %v956 = vunpack.c.h.b16 %v196
    %v957 = vunpack.c.l.b16 %v197
    %v958 = vunpack.c.h.b16 %v197
    %v959 = vunpack.c.l.b16 %v198
    %v960 = vunpack.c.h.b16 %v198
    %v961 = vunpack.c.l.b16 %v199
    %v962 = vunpack.c.h.b16 %v199
    %v963 = vunpack.c.l.b16 %v200
    %v964 = vunpack.c.h.b16 %v200
    %v965 = vunpack.c.l.b16 %v201
    %v966 = vunpack.c.h.b16 %v201
    %v967 = vunpack.c.l.b16 %v202
    %v968 = vunpack.c.h.b16 %v202
    %v969 = vunpack.c.l.b16 %v203
    %v970 = vunpack.c.h.b16 %v203
    %v971 = vunpack.c.l.b16 %v204
    %v972 = vunpack.c.h.b16 %v204
    %v973 = vunpack.c.l.b16 %v205
    %v974 = vunpack.c.h.b16 %v205
    %v975 = vunpack.c.l.b16 %v206
    %v976 = vunpack.c.h.b16 %v206
    %v977 = vunpack.c.l.b16 %v207
    %v978 = vunpack.c.h.b16 %v207
    %v979 = vunpack.c.l.b16 %v208
    %v980 = vunpack.c.h.b16 %v208
    %v981 = vunpack.c.l.b16 %v209
    %v982 = vunpack.c.h.b16 %v209
    %v983 = vunpack.c.l.b16 %v210
    %v984 = vunpack.c.h.b16 %v210
    %v985 = vunpack.c.l.b16 %v211
    %v986 = vunpack.c.h.b16 %v211
    %v987 = vunpack.c.l.b16 %v212
    %v988 = vunpack.c.h.b16 %v212
    %v989 = vunpack.c.l.b16 %v213
    %v990 = vunpack.c.h.b16 %v213
    %v991 = vunpack.c.l.b16 %v214
    %v992 = vunpack.c.h.b16 %v214
    %v993 = vunpack.c.l.b16 %v215
    %v994 = vunpack.c.h.b16 %v215
    %v995 = vunpack.c.l.b16 %v216
    %v996 = vunpack.c.h.b16 %v216
    %v997 = vunpack.c.l.b16 %v217
    %v998 = vunpack.c.h.b16 %v217
    %v999 = vunpack.c.l.b16 %v218
    %v1000 = vunpack.c.h.b16 %v218
    %v1001 = vunpack.c.l.b16 %v219
    %v1002 = vunpack.c.h.b16 %v219
    %v1003 = vunpack.c.l.b16 %v220
    %v1004 = vunpack.c.h.b16 %v220
    %v1005 = vunpack.c.l.b16 %v221
    %v1006 = vunpack.c.h.b16 %v221
    %v1007 = vunpack.c.l.b16 %v222
    %v1008 = vunpack.c.h.b16 %v222
    %v1009 = vunpack.c.l.b16 %v223
    %v1010 = vunpack.c.h.b16 %v223
    %v1011 = vunpack.c.l.b16 %v224
    %v1012 = vunpack.c.h.b16 %v224
    %v1013 = vunpack.c.l.b16 %v225
    %v1014 = vunpack.c.h.b16 %v225
    %v1015 = vunpack.c.l.b16 %v226
    %v1016 = vunpack.c.h.b16 %v226
    %v1017 = vunpack.c.l.b16 %v227
    %v1018 = vunpack.c.h.b16 %v227
    %v1019 = vunpack.c.l.b16 %v228
    %v1020 = vunpack.c.h.b16 %v228
    %v1021 = vunpack.c.l.b16 %v229
    %v1022 = vunpack.c.h.b16 %v229
    %v1023 = vunpack.c.l.b16 %v230
    %v1024 = vunpack.c.h.b16 %v230
    %v1025 = vunpack.c.l.b16 %v231
    %v1026 = vunpack.c.h.b16 %v231
    %v1027 = vunpack.c.l.b16 %v232
    %v1028 = vunpack.c.h.b16 %v232
    %v1029 = vunpack.c.l.b16 %v233
    %v1030 = vunpack.c.h.b16 %v233
    %v1031 = vunpack.c.l.b16 %v234
    %v1032 = vunpack.c.h.b16 %v234
    %v1033 = vunpack.c.l.b16 %v235
    %v1034 = vunpack.c.h.b16 %v235
    %v1035 = vunpack.c.l.b16 %v236
    %v1036 = vunpack.c.h.b16 %v236
    %v1037 = vunpack.c.l.b16 %v237
    %v1038 = vunpack.c.h.b16 %v237
    %v1039 = vunpack.c.l.b16 %v238
    %v1040 = vunpack.c.h.b16 %v238
    %v1041 = vunpack.c.l.b16 %v239
    %v1042 = vunpack.c.h.b16 %v239
    %v1043 = vunpack.c.l.b16 %v240
    %v1044 = vunpack.c.h.b16 %v240
    %v1045 = vunpack.c.l.b16 %v241
    %v1046 = vunpack.c.h.b16 %v241
    %v1047 = vunpack.c.l.b16 %v242
    %v1048 = vunpack.c.h.b16 %v242
    %v1049 = vunpack.c.l.b16 %v243
    %v1050 = vunpack.c.h.b16 %v243
    %v1051 = vunpack.c.l.b16 %v244
    %v1052 = vunpack.c.h.b16 %v244
    %v1053 = vunpack.c.l.b16 %v245
    %v1054 = vunpack.c.h.b16 %v245
    %v1055 = vunpack.c.l.b16 %v246
    %v1056 = vunpack.c.h.b16 %v246
    %v1057 = vunpack.c.l.b16 %v247
    %v1058 = vunpack.c.h.b16 %v247
    %v1059 = vunpack.c.l.b16 %v248
    %v1060 = vunpack.c.h.b16 %v248
    %v1061 = vunpack.c.l.b16 %v249
    %v1062 = vunpack.c.h.b16 %v249
    %v1063 = vunpack.c.l.b16 %v250
    %v1064 = vunpack.c.h.b16 %v250
    %v1065 = vunpack.c.l.b16 %v251
    %v1066 = vunpack.c.h.b16 %v251
    %v1067 = vunpack.c.l.b16 %v252
    %v1068 = vunpack.c.h.b16 %v252
    %v1069 = vunpack.c.l.b16 %v253
    %v1070 = vunpack.c.h.b16 %v253
    %v1071 = vunpack.c.l.b16 %v254
    %v1072 = vunpack.c.h.b16 %v254
    %v1073 = vunpack.c.l.b16 %v255
    %v1074 = vunpack.c.h.b16 %v255
    %v1075 = vunpack.c.l.b16 %v256
    %v1076 = vunpack.c.h.b16 %v256
    %v1077 = vunpack.c.l.b16 %v257
    %v1078 = vunpack.c.h.b16 %v257
    %v1079 = vunpack.c.l.b16 %v258
    %v1080 = vunpack.c.h.b16 %v258
    %v1081 = vunpack.c.l.b16 %v259
    %v1082 = vunpack.c.h.b16 %v259
    %v1083 = vunpack.c.l.b16 %v260
    %v1084 = vunpack.c.h.b16 %v260
    %v1085 = vunpack.c.l.b16 %v261
    %v1086 = vunpack.c.h.b16 %v261
    %v1087 = vunpack.c.l.b16 %v262
    %v1088 = vunpack.c.h.b16 %v262
    %v1089 = vunpack.c.l.b16 %v263
    %v1090 = vunpack.c.h.b16 %v263
    %v1091 = vunpack.c.l.b16 %v264
    %v1092 = vunpack.c.h.b16 %v264
    %v1093 = vunpack.c.l.b16 %v265
    %v1094 = vunpack.c.h.b16 %v265
    %v1095 = vunpack.c.l.b16 %v266
    %v1096 = vunpack.c.h.b16 %v266
    %v1097 = vunpack.c.l.b16 %v267
    %v1098 = vunpack.c.h.b16 %v267
    %v1099 = vunpack.c.l.b16 %v268
    %v1100 = vunpack.c.h.b16 %v268
    %v1101 = vunpack.c.l.b16 %v269
    %v1102 = vunpack.c.h.b16 %v269
    %v1103 = vunpack.c.l.b16 %v270
    %v1104 = vunpack.c.h.b16 %v270
    %v1105 = vunpack.c.l.b16 %v271
    %v1106 = vunpack.c.h.b16 %v271
    %v1107 = vunpack.c.l.b16 %v272
    %v1108 = vunpack.c.h.b16 %v272
    %v1109 = vunpack.c.l.b16 %v273
    %v1110 = vunpack.c.h.b16 %v273
    %v1111 = vunpack.c.l.b16 %v274
    %v1112 = vunpack.c.h.b16 %v274
    %v1113 = vunpack.c.l.b16 %v275
    %v1114 = vunpack.c.h.b16 %v275
    %v1115 = vunpack.c.l.b16 %v276
    %v1116 = vunpack.c.h.b16 %v276
    %v1117 = vunpack.c.l.b16 %v277
    %v1118 = vunpack.c.h.b16 %v277
    %v1119 = vunpack.c.l.b16 %v278
    %v1120 = vunpack.c.h.b16 %v278
    %v1121 = vunpack.c.l.b16 %v279
    %v1122 = vunpack.c.h.b16 %v279
    %v1123 = vunpack.c.l.b16 %v280
    %v1124 = vunpack.c.h.b16 %v280
    %v1125 = vunpack.c.l.b16 %v281
    %v1126 = vunpack.c.h.b16 %v281
    %v1127 = vunpack.c.l.b16 %v282
    %v1128 = vunpack.c.h.b16 %v282
    %v1129 = vunpack.c.l.b16 %v283
    %v1130 = vunpack.c.h.b16 %v283
    %v1131 = vunpack.c.l.b16 %v284
    %v1132 = vunpack.c.h.b16 %v284
    %v1133 = vpack.c.b16 %v625, %v621
    %v1134 = vpack.c.b16 %v626, %v622
    %v1135 = vpack.c.b16 %v627, %v623
    %v1136 = vpack.c.b16 %v628, %v624
    %v1137 = vpack.c.b16 %v633, %v629
    %v1138 = vpack.c.b16 %v634, %v630
    %v1139 = vpack.c.b16 %v635, %v631
    %v1140 = vpack.c.b16 %v636, %v632
    %v1141 = vpack.c.b16 %v641, %v637
    %v1142 = vpack.c.b16 %v642, %v638
    %v1143 = vpack.c.b16 %v643, %v639
    %v1144 = vpack.c.b16 %v644, %v640
    %v1145 = vpack.c.b16 %v649, %v645
    %v1146 = vpack.c.b16 %v650, %v646
    %v1147 = vpack.c.b16 %v651, %v647
    %v1148 = vpack.c.b16 %v652, %v648
    %v1149 = vpack.c.b16 %v657, %v653
    %v1150 = vpack.c.b16 %v658, %v654
    %v1151 = vpack.c.b16 %v659, %v655
    %v1152 = vpack.c.b16 %v660, %v656
    %v1153 = vpack.c.b16 %v665, %v661
    %v1154 = vpack.c.b16 %v666, %v662
    %v1155 = vpack.c.b16 %v667, %v663
    %v1156 = vpack.c.b16 %v668, %v664
    %v1157 = vpack.c.b16 %v673, %v669
    %v1158 = vpack.c.b16 %v674, %v670
    %v1159 = vpack.c.b16 %v675, %v671
    %v1160 = vpack.c.b16 %v676, %v672
    %v1161 = vpack.c.b16 %v681, %v677
    %v1162 = vpack.c.b16 %v682, %v678
    %v1163 = vpack.c.b16 %v683, %v679
    %v1164 = vpack.c.b16 %v684, %v680
    %v1165 = vpack.c.b16 %v689, %v685
    %v1166 = vpack.c.b16 %v690, %v686
    %v1167 = vpack.c.b16 %v691, %v687
    %v1168 = vpack.c.b16 %v692, %v688
    %v1169 = vpack.c.b16 %v697, %v693
    %v1170 = vpack.c.b16 %v698, %v694
    %v1171 = vpack.c.b16 %v699, %v695
    %v1172 = vpack.c.b16 %v700, %v696
    %v1173 = vpack.c.b16 %v705, %v701
    %v1174 = vpack.c.b16 %v706, %v702
    %v1175 = vpack.c.b16 %v707, %v703
    %v1176 = vpack.c.b16 %v708, %v704
    %v1177 = vpack.c.b16 %v713, %v709
    %v1178 = vpack.c.b16 %v714, %v710
    %v1179 = vpack.c.b16 %v715, %v711
    %v1180 = vpack.c.b16 %v716, %v712
    %v1181 = vpack.c.b16 %v721, %v717
    %v1182 = vpack.c.b16 %v722, %v718
    %v1183 = vpack.c.b16 %v723, %v719
    %v1184 = vpack.c.b16 %v724, %v720
    %v1185 = vpack.c.b16 %v729, %v725
    %v1186 = vpack.c.b16 %v730, %v726
    %v1187 = vpack.c.b16 %v731, %v727
    %v1188 = vpack.c.b16 %v732, %v728
    %v1189 = vpack.c.b16 %v737, %v733
    %v1190 = vpack.c.b16 %v738, %v734
    %v1191 = vpack.c.b16 %v739, %v735
    %v1192 = vpack.c.b16 %v740, %v736
    %v1193 = vpack.c.b16 %v745, %v741
    %v1194 = vpack.c.b16 %v746, %v742
    %v1195 = vpack.c.b16 %v747, %v743
    %v1196 = vpack.c.b16 %v748, %v744
    %v1197 = vpack.c.b16 %v753, %v749
    %v1198 = vpack.c.b16 %v754, %v750
    %v1199 = vpack.c.b16 %v755, %v751
    %v1200 = vpack.c.b16 %v756, %v752
    %v1201 = vpack.c.b16 %v761, %v757
    %v1202 = vpack.c.b16 %v762, %v758
    %v1203 = vpack.c.b16 %v763, %v759
    %v1204 = vpack.c.b16 %v764, %v760
    %v1205 = vpack.c.b16 %v769, %v765
    %v1206 = vpack.c.b16 %v770, %v766
    %v1207 = vpack.c.b16 %v771, %v767
    %v1208 = vpack.c.b16 %v772, %v768
    %v1209 = vpack.c.b16 %v777, %v773
    %v1210 = vpack.c.b16 %v778, %v774
    %v1211 = vpack.c.b16 %v779, %v775
    %v1212 = vpack.c.b16 %v780, %v776
    %v1213 = vpack.c.b16 %v785, %v781
    %v1214 = vpack.c.b16 %v786, %v782
    %v1215 = vpack.c.b16 %v787, %v783
    %v1216 = vpack.c.b16 %v788, %v784
    %v1217 = vpack.c.b16 %v793, %v789
    %v1218 = vpack.c.b16 %v794, %v790
    %v1219 = vpack.c.b16 %v795, %v791
    %v1220 = vpack.c.b16 %v796, %v792
    %v1221 = vpack.c.b16 %v801, %v797
    %v1222 = vpack.c.b16 %v802, %v798
    %v1223 = vpack.c.b16 %v803, %v799
    %v1224 = vpack.c.b16 %v804, %v800
    %v1225 = vpack.c.b16 %v809, %v805
    %v1226 = vpack.c.b16 %v810, %v806
    %v1227 = vpack.c.b16 %v811, %v807
    %v1228 = vpack.c.b16 %v812, %v808
    %v1229 = vpack.c.b16 %v817, %v813
    %v1230 = vpack.c.b16 %v818, %v814
    %v1231 = vpack.c.b16 %v819, %v815
    %v1232 = vpack.c.b16 %v820, %v816
    %v1233 = vpack.c.b16 %v825, %v821
    %v1234 = vpack.c.b16 %v826, %v822
    %v1235 = vpack.c.b16 %v827, %v823
    %v1236 = vpack.c.b16 %v828, %v824
    %v1237 = vpack.c.b16 %v833, %v829
    %v1238 = vpack.c.b16 %v834, %v830
    %v1239 = vpack.c.b16 %v835, %v831
    %v1240 = vpack.c.b16 %v836, %v832
    %v1241 = vpack.c.b16 %v841, %v837
    %v1242 = vpack.c.b16 %v842, %v838
    %v1243 = vpack.c.b16 %v843, %v839
    %v1244 = vpack.c.b16 %v844, %v840
    %v1245 = vpack.c.b16 %v849, %v845
    %v1246 = vpack.c.b16 %v850, %v846
    %v1247 = vpack.c.b16 %v851, %v847
    %v1248 = vpack.c.b16 %v852, %v848
    %v1249 = vpack.c.b16 %v857, %v853
    %v1250 = vpack.c.b16 %v858, %v854
    %v1251 = vpack.c.b16 %v859, %v855
    %v1252 = vpack.c.b16 %v860, %v856
    %v1253 = vpack.c.b16 %v865, %v861
    %v1254 = vpack.c.b16 %v866, %v862
    %v1255 = vpack.c.b16 %v867, %v863
    %v1256 = vpack.c.b16 %v868, %v864
    %v1257 = vpack.c.b16 %v873, %v869
    %v1258 = vpack.c.b16 %v874, %v870
    %v1259 = vpack.c.b16 %v875, %v871
    %v1260 = vpack.c.b16 %v876, %v872
    %v1261 = vpack.c.b16 %v881, %v877
    %v1262 = vpack.c.b16 %v882, %v878
    %v1263 = vpack.c.b16 %v883, %v879
    %v1264 = vpack.c.b16 %v884, %v880
    %v1265 = vpack.c.b16 %v889, %v885
    %v1266 = vpack.c.b16 %v890, %v886
    %v1267 = vpack.c.b16 %v891, %v887
    %v1268 = vpack.c.b16 %v892, %v888
    %v1269 = vpack.c.b16 %v897, %v893
    %v1270 = vpack.c.b16 %v898, %v894
    %v1271 = vpack.c.b16 %v899, %v895
    %v1272 = vpack.c.b16 %v900, %v896
    %v1273 = vpack.c.b16 %v905, %v901
    %v1274 = vpack.c.b16 %v906, %v902
    %v1275 = vpack.c.b16 %v907, %v903
    %v1276 = vpack.c.b16 %v908, %v904
    %v1277 = vpack.c.b16 %v913, %v909
    %v1278 = vpack.c.b16 %v914, %v910
    %v1279 = vpack.c.b16 %v915, %v911
    %v1280 = vpack.c.b16 %v916, %v912
    %v1281 = vpack.c.b16 %v921, %v917
    %v1282 = vpack.c.b16 %v922, %v918
    %v1283 = vpack.c.b16 %v923, %v919
    %v1284 = vpack.c.b16 %v924, %v920
    %v1285 = vpack.c.b16 %v929, %v925
    %v1286 = vpack.c.b16 %v930, %v926
    %v1287 = vpack.c.b16 %v931, %v927
    %v1288 = vpack.c.b16 %v932, %v928
    %v1289 = vpack.c.b16 %v937, %v933
    %v1290 = vpack.c.b16 %v938, %v934
    %v1291 = vpack.c.b16 %v939, %v935
    %v1292 = vpack.c.b16 %v940, %v936
    %v1293 = vpack.c.b16 %v945, %v941
    %v1294 = vpack.c.b16 %v946, %v942
    %v1295 = vpack.c.b16 %v947, %v943
    %v1296 = vpack.c.b16 %v948, %v944
    %v1297 = vpack.c.b16 %v953, %v949
    %v1298 = vpack.c.b16 %v954, %v950
    %v1299 = vpack.c.b16 %v955, %v951
    %v1300 = vpack.c.b16 %v956, %v952
    %v1301 = vpack.c.b16 %v961, %v957
    %v1302 = vpack.c.b16 %v962, %v958
    %v1303 = vpack.c.b16 %v963, %v959
    %v1304 = vpack.c.b16 %v964, %v960
    %v1305 = vpack.c.b16 %v969, %v965
    %v1306 = vpack.c.b16 %v970, %v966
    %v1307 = vpack.c.b16 %v971, %v967
    %v1308 = vpack.c.b16 %v972, %v968
    %v1309 = vpack.c.b16 %v977, %v973
    %v1310 = vpack.c.b16 %v978, %v974
    %v1311 = vpack.c.b16 %v979, %v975
    %v1312 = vpack.c.b16 %v980, %v976
    %v1313 = vpack.c.b16 %v985, %v981
    %v1314 = vpack.c.b16 %v986, %v982
    %v1315 = vpack.c.b16 %v987, %v983
    %v1316 = vpack.c.b16 %v988, %v984
    %v1317 = vpack.c.b16 %v993, %v989
    %v1318 = vpack.c.b16 %v994, %v990
    %v1319 = vpack.c.b16 %v995, %v991
    %v1320 = vpack.c.b16 %v996, %v992
    %v1321 = vpack.c.b16 %v1001, %v997
    %v1322 = vpack.c.b16 %v1002, %v998
    %v1323 = vpack.c.b16 %v1003, %v999
    %v1324 = vpack.c.b16 %v1004, %v1000
    %v1325 = vpack.c.b16 %v1009, %v1005
    %v1326 = vpack.c.b16 %v1010, %v1006
    %v1327 = vpack.c.b16 %v1011, %v1007
    %v1328 = vpack.c.b16 %v1012, %v1008
    %v1329 = vpack.c.b16 %v1017, %v1013
    %v1330 = vpack.c.b16 %v1018, %v1014
    %v1331 = vpack.c.b16 %v1019, %v1015
    %v1332 = vpack.c.b16 %v1020, %v1016
    %v1333 = vpack.c.b16 %v1025, %v1021
    %v1334 = vpack.c.b16 %v1026, %v1022
    %v1335 = vpack.c.b16 %v1027, %v1023
    %v1336 = vpack.c.b16 %v1028, %v1024
    %v1337 = vpack.c.b16 %v1033, %v1029
    %v1338 = vpack.c.b16 %v1034, %v1030
    %v1339 = vpack.c.b16 %v1035, %v1031
    %v1340 = vpack.c.b16 %v1036, %v1032
    %v1341 = vpack.c.b16 %v1041, %v1037
    %v1342 = vpack.c.b16 %v1042, %v1038
    %v1343 = vpack.c.b16 %v1043, %v1039
    %v1344 = vpack.c.b16 %v1044, %v1040
    %v1345 = vpack.c.b16 %v1049, %v1045
    %v1346 = vpack.c.b16 %v1050, %v1046
    %v1347 = vpack.c.b16 %v1051, %v1047
    %v1348 = vpack.c.b16 %v1052, %v1048
    %v1349 = vpack.c.b16 %v1057, %v1053
    %v1350 = vpack.c.b16 %v1058, %v1054
    %v1351 = vpack.c.b16 %v1059, %v1055
    %v1352 = vpack.c.b16 %v1060, %v1056
    %v1353 = vpack.c.b16 %v1065, %v1061
    %v1354 = vpack.c.b16 %v1066, %v1062
    %v1355 = vpack.c.b16 %v1067, %v1063
    %v1356 = vpack.c.b16 %v1068, %v1064
    %v1357 = vpack.c.b16 %v1073, %v1069
    %v1358 = vpack.c.b16 %v1074, %v1070
    %v1359 = vpack.c.b16 %v1075, %v1071
    %v1360 = vpack.c.b16 %v1076, %v1072
    %v1361 = vpack.c.b16 %v1081, %v1077
    %v1362 = vpack.c.b16 %v1082, %v1078
    %v1363 = vpack.c.b16 %v1083, %v1079
    %v1364 = vpack.c.b16 %v1084, %v1080
    %v1365 = vpack.c.b16 %v1089, %v1085
    %v1366 = vpack.c.b16 %v1090, %v1086
    %v1367 = vpack.c.b16 %v1091, %v1087
    %v1368 = vpack.c.b16 %v1092, %v1088
    %v1369 = vpack.c.b16 %v1097, %v1093
    %v1370 = vpack.c.b16 %v1098, %v1094
    %v1371 = vpack.c.b16 %v1099, %v1095
    %v1372 = vpack.c.b16 %v1100, %v1096
    %v1373 = vpack.c.b16 %v1105, %v1101
    %v1374 = vpack.c.b16 %v1106, %v1102
    %v1375 = vpack.c.b16 %v1107, %v1103
    %v1376 = vpack.c.b16 %v1108, %v1104
    %v1377 = vpack.c.b16 %v1113, %v1109
    %v1378 = vpack.c.b16 %v1114, %v1110
    %v1379 = vpack.c.b16 %v1115, %v1111
    %v1380 = vpack.c.b16 %v1116, %v1112
    %v1381 = vpack.c.b16 %v1121, %v1117
    %v1382 = vpack.c.b16 %v1122, %v1118
    %v1383 = vpack.c.b16 %v1123, %v1119
    %v1384 = vpack.c.b16 %v1124, %v1120
    %v1385 = vpack.c.b16 %v1129, %v1125
    %v1386 = vpack.c.b16 %v1130, %v1126
    %v1387 = vpack.c.b16 %v1131, %v1127
    %v1388 = vpack.c.b16 %v1132, %v1128
    %1645 = vmatprep.subr.bf16.mxu0 %v1134
    %1646 = vmatpush1.bf16.msra.mxu0 %v1133
    %1647 = vmatprep.subr.bf16.mxu0 %v1138
    %1648 = vmatpush1.bf16.msra.mxu0 %v1137
    %1649 = vmatprep.subr.bf16.mxu0 %v1142
    %1650 = vmatpush1.bf16.msra.mxu0 %v1141
    %1651 = vmatprep.subr.bf16.mxu0 %v1146
    %1652 = vmatpush1.bf16.msra.mxu0 %v1145
    %1653 = vmatprep.subr.bf16.mxu0 %v1150
    %1654 = vmatpush1.bf16.msra.mxu0 %v1149
    %1655 = vmatprep.subr.bf16.mxu0 %v1154
    %1656 = vmatpush1.bf16.msra.mxu0 %v1153
    %1657 = vmatprep.subr.bf16.mxu0 %v1158
    %1658 = vmatpush1.bf16.msra.mxu0 %v1157
    %1659 = vmatprep.subr.bf16.mxu0 %v1162
    %1660 = vmatpush1.bf16.msra.mxu0 %v1161
    %1661 = vmatprep.subr.bf16.mxu0 %v1166
    %1662 = vmatpush1.bf16.msra.mxu0 %v1165
    %1663 = vmatprep.subr.bf16.mxu0 %v1170
    %1664 = vmatpush1.bf16.msra.mxu0 %v1169
    %1665 = vmatprep.subr.bf16.mxu0 %v1174
    %1666 = vmatpush1.bf16.msra.mxu0 %v1173
    %1667 = vmatprep.subr.bf16.mxu0 %v1178
    %1668 = vmatpush1.bf16.msra.mxu0 %v1177
    %1669 = vmatprep.subr.bf16.mxu0 %v1182
    %1670 = vmatpush1.bf16.msra.mxu0 %v1181
    %1671 = vmatprep.subr.bf16.mxu0 %v1186
    %1672 = vmatpush1.bf16.msra.mxu0 %v1185
    %1673 = vmatprep.subr.bf16.mxu0 %v1190
    %1674 = vmatpush1.bf16.msra.mxu0 %v1189
    %1675 = vmatprep.subr.bf16.mxu0 %v1194
    %1676 = vmatpush1.bf16.msra.mxu0 %v1193
    %1677 = vmatprep.mubr.bf16.mxu0 %v345
    %1678 = vmatmul.mubr.bf16.gmra.mrb[0].mxu0 %v331
    %v1679 = vpop.f32.mrb[0].mxu0
    %v1680 = vadd.f32 %v290, %v1679
    %v1681 = vpop.f32.mrb[0].mxu0
    %v1682 = vadd.f32 %v294, %v1681
    %v1683 = vpop.f32.mrb[0].mxu0
    %v1684 = vpop.f32.mrb[0].mxu0
    %1685 = vdwg.mxu0
    %1686 = vmatprep.subr.bf16.mxu0 %v1198
    %1687 = vmatpush1.bf16.msra.mxu0 %v1197
    %1688 = vmatprep.subr.bf16.mxu0 %v1202
    %1689 = vmatpush1.bf16.msra.mxu0 %v1201
    %1690 = vmatprep.subr.bf16.mxu0 %v1206
    %1691 = vmatpush1.bf16.msra.mxu0 %v1205
    %1692 = vmatprep.subr.bf16.mxu0 %v1210
    %1693 = vmatpush1.bf16.msra.mxu0 %v1209
    %1694 = vmatprep.subr.bf16.mxu0 %v1214
    %1695 = vmatpush1.bf16.msra.mxu0 %v1213
    %1696 = vmatprep.subr.bf16.mxu0 %v1218
    %1697 = vmatpush1.bf16.msra.mxu0 %v1217
    %1698 = vmatprep.subr.bf16.mxu0 %v1222
    %1699 = vmatpush1.bf16.msra.mxu0 %v1221
    %1700 = vmatprep.subr.bf16.mxu0 %v1226
    %1701 = vmatpush1.bf16.msra.mxu0 %v1225
    %1702 = vmatprep.subr.bf16.mxu0 %v1230
    %1703 = vmatpush1.bf16.msra.mxu0 %v1229
    %1704 = vmatprep.subr.bf16.mxu0 %v1234
    %1705 = vmatpush1.bf16.msra.mxu0 %v1233
    %1706 = vmatprep.subr.bf16.mxu0 %v1238
    %1707 = vmatpush1.bf16.msra.mxu0 %v1237
    %1708 = vmatprep.subr.bf16.mxu0 %v1242
    %1709 = vmatpush1.bf16.msra.mxu0 %v1241
    %1710 = vmatprep.subr.bf16.mxu0 %v1246
    %1711 = vmatpush1.bf16.msra.mxu0 %v1245
    %1712 = vmatprep.subr.bf16.mxu0 %v1250
    %1713 = vmatpush1.bf16.msra.mxu0 %v1249
    %1714 = vmatprep.subr.bf16.mxu0 %v1254
    %1715 = vmatpush1.bf16.msra.mxu0 %v1253
    %1716 = vmatprep.subr.bf16.mxu0 %v1258
    %1717 = vmatpush1.bf16.msra.mxu0 %v1257
    %1718 = vmatprep.mubr.bf16.mxu0 %v355
    %1719 = vmatmul.mubr.bf16.gmra.mrb[0].mxu0 %v353
    %v1720 = vpop.f32.mrb[0].mxu0
    %v1721 = vadd.f32 %v1680, %v1720
    %v1722 = vpop.f32.mrb[0].mxu0
    %v1723 = vadd.f32 %v1682, %v1722
    %v1724 = vpop.f32.mrb[0].mxu0
    %v1725 = vpop.f32.mrb[0].mxu0
    %1726 = vdwg.mxu0
    %1727 = vmatprep.subr.bf16.mxu0 %v1262
    %1728 = vmatpush1.bf16.msra.mxu0 %v1261
    %1729 = vmatprep.subr.bf16.mxu0 %v1266
    %1730 = vmatpush1.bf16.msra.mxu0 %v1265
    %1731 = vmatprep.subr.bf16.mxu0 %v1270
    %1732 = vmatpush1.bf16.msra.mxu0 %v1269
    %1733 = vmatprep.subr.bf16.mxu0 %v1274
    %1734 = vmatpush1.bf16.msra.mxu0 %v1273
    %1735 = vmatprep.subr.bf16.mxu0 %v1278
    %1736 = vmatpush1.bf16.msra.mxu0 %v1277
    %1737 = vmatprep.subr.bf16.mxu0 %v1282
    %1738 = vmatpush1.bf16.msra.mxu0 %v1281
    %1739 = vmatprep.subr.bf16.mxu0 %v1286
    %1740 = vmatpush1.bf16.msra.mxu0 %v1285
    %1741 = vmatprep.subr.bf16.mxu0 %v1290
    %1742 = vmatpush1.bf16.msra.mxu0 %v1289
    %1743 = vmatprep.subr.bf16.mxu0 %v1294
    %1744 = vmatpush1.bf16.msra.mxu0 %v1293
    %1745 = vmatprep.subr.bf16.mxu0 %v1298
    %1746 = vmatpush1.bf16.msra.mxu0 %v1297
    %1747 = vmatprep.subr.bf16.mxu0 %v1302
    %1748 = vmatpush1.bf16.msra.mxu0 %v1301
    %1749 = vmatprep.subr.bf16.mxu0 %v1306
    %1750 = vmatpush1.bf16.msra.mxu0 %v1305
    %1751 = vmatprep.subr.bf16.mxu0 %v1310
    %1752 = vmatpush1.bf16.msra.mxu0 %v1309
    %1753 = vmatprep.subr.bf16.mxu0 %v1314
    %1754 = vmatpush1.bf16.msra.mxu0 %v1313
    %1755 = vmatprep.subr.bf16.mxu0 %v1318
    %1756 = vmatpush1.bf16.msra.mxu0 %v1317
    %1757 = vmatprep.subr.bf16.mxu0 %v1322
    %1758 = vmatpush1.bf16.msra.mxu0 %v1321
    %1759 = vmatprep.mubr.bf16.mxu0 %v352
    %1760 = vmatmul.mubr.bf16.gmra.mrb[0].mxu0 %v338
    %v1761 = vpop.f32.mrb[0].mxu0
    %v1762 = vadd.f32 %v1721, %v1761
    %v1763 = vpop.f32.mrb[0].mxu0
    %v1764 = vadd.f32 %v1723, %v1763
    %v1765 = vpop.f32.mrb[0].mxu0
    %v1766 = vpop.f32.mrb[0].mxu0
    %1767 = vdwg.mxu0
    %1768 = vmatprep.subr.bf16.mxu0 %v1326
    %1769 = vmatpush1.bf16.msra.mxu0 %v1325
    %1770 = vmatprep.subr.bf16.mxu0 %v1330
    %1771 = vmatpush1.bf16.msra.mxu0 %v1329
    %1772 = vmatprep.subr.bf16.mxu0 %v1334
    %1773 = vmatpush1.bf16.msra.mxu0 %v1333
    %1774 = vmatprep.subr.bf16.mxu0 %v1338
    %1775 = vmatpush1.bf16.msra.mxu0 %v1337
    %1776 = vmatprep.subr.bf16.mxu0 %v1342
    %1777 = vmatpush1.bf16.msra.mxu0 %v1341
    %1778 = vmatprep.subr.bf16.mxu0 %v1346
    %1779 = vmatpush1.bf16.msra.mxu0 %v1345
    %1780 = vmatprep.subr.bf16.mxu0 %v1350
    %1781 = vmatpush1.bf16.msra.mxu0 %v1349
    %1782 = vmatprep.subr.bf16.mxu0 %v1354
    %1783 = vmatpush1.bf16.msra.mxu0 %v1353
    %1784 = vmatprep.subr.bf16.mxu0 %v1358
    %1785 = vmatpush1.bf16.msra.mxu0 %v1357
    %1786 = vmatprep.subr.bf16.mxu0 %v1362
    %1787 = vmatpush1.bf16.msra.mxu0 %v1361
    %1788 = vmatprep.subr.bf16.mxu0 %v1366
    %1789 = vmatpush1.bf16.msra.mxu0 %v1365
    %1790 = vmatprep.subr.bf16.mxu0 %v1370
    %1791 = vmatpush1.bf16.msra.mxu0 %v1369
    %1792 = vmatprep.subr.bf16.mxu0 %v1374
    %1793 = vmatpush1.bf16.msra.mxu0 %v1373
    %1794 = vmatprep.subr.bf16.mxu0 %v1378
    %1795 = vmatpush1.bf16.msra.mxu0 %v1377
    %1796 = vmatprep.subr.bf16.mxu0 %v1382
    %1797 = vmatpush1.bf16.msra.mxu0 %v1381
    %1798 = vmatprep.subr.bf16.mxu0 %v1386
    %1799 = vmatpush1.bf16.msra.mxu0 %v1385
    %1800 = vmatprep.mubr.bf16.mxu0 %v356
    %1801 = vmatmul.mubr.bf16.gmra.mrb[0].mxu0 %v354
    %v1802 = vpop.f32.mrb[0].mxu0
    %v1803 = vadd.f32 %v1762, %v1802
    %v1804 = vpop.f32.mrb[0].mxu0
    %v1805 = vadd.f32 %v1764, %v1804
    %v1806 = vpop.f32.mrb[0].mxu0
    %v1807 = vpop.f32.mrb[0].mxu0
    %1808 = vdwg.mxu0
    %1809 = vmatprep.subr.bf16.mxu0 %v1136
    %1810 = vmatpush1.bf16.msra.mxu0 %v1135
    %1811 = vmatprep.subr.bf16.mxu0 %v1140
    %1812 = vmatpush1.bf16.msra.mxu0 %v1139
    %1813 = vmatprep.subr.bf16.mxu0 %v1144
    %1814 = vmatpush1.bf16.msra.mxu0 %v1143
    %1815 = vmatprep.subr.bf16.mxu0 %v1148
    %1816 = vmatpush1.bf16.msra.mxu0 %v1147
    %1817 = vmatprep.subr.bf16.mxu0 %v1152
    %1818 = vmatpush1.bf16.msra.mxu0 %v1151
    %1819 = vmatprep.subr.bf16.mxu0 %v1156
    %1820 = vmatpush1.bf16.msra.mxu0 %v1155
    %1821 = vmatprep.subr.bf16.mxu0 %v1160
    %1822 = vmatpush1.bf16.msra.mxu0 %v1159
    %1823 = vmatprep.subr.bf16.mxu0 %v1164
    %1824 = vmatpush1.bf16.msra.mxu0 %v1163
    %1825 = vmatprep.subr.bf16.mxu0 %v1168
    %1826 = vmatpush1.bf16.msra.mxu0 %v1167
    %1827 = vmatprep.subr.bf16.mxu0 %v1172
    %1828 = vmatpush1.bf16.msra.mxu0 %v1171
    %1829 = vmatprep.subr.bf16.mxu0 %v1176
    %1830 = vmatpush1.bf16.msra.mxu0 %v1175
    %1831 = vmatprep.subr.bf16.mxu0 %v1180
    %1832 = vmatpush1.bf16.msra.mxu0 %v1179
    %1833 = vmatprep.subr.bf16.mxu0 %v1184
    %1834 = vmatpush1.bf16.msra.mxu0 %v1183
    %1835 = vmatprep.subr.bf16.mxu0 %v1188
    %1836 = vmatpush1.bf16.msra.mxu0 %v1187
    %1837 = vmatprep.subr.bf16.mxu0 %v1192
    %1838 = vmatpush1.bf16.msra.mxu0 %v1191
    %1839 = vmatprep.subr.bf16.mxu0 %v1196
    %1840 = vmatpush1.bf16.msra.mxu0 %v1195
    %1841 = vmatprep.mubr.bf16.mxu0 %v345
    %1842 = vmatmul.mubr.bf16.gmra.mrb[0].mxu0 %v331
    %v1843 = vpop.f32.mrb[0].mxu0
    %v1844 = vadd.f32 %v298, %v1843
    %v1845 = vpop.f32.mrb[0].mxu0
    %v1846 = vadd.f32 %v302, %v1845
    %v1847 = vpop.f32.mrb[0].mxu0
    %v1848 = vpop.f32.mrb[0].mxu0
    %1849 = vdwg.mxu0
    %1850 = vmatprep.subr.bf16.mxu0 %v1200
    %1851 = vmatpush1.bf16.msra.mxu0 %v1199
    %1852 = vmatprep.subr.bf16.mxu0 %v1204
    %1853 = vmatpush1.bf16.msra.mxu0 %v1203
    %1854 = vmatprep.subr.bf16.mxu0 %v1208
    %1855 = vmatpush1.bf16.msra.mxu0 %v1207
    %1856 = vmatprep.subr.bf16.mxu0 %v1212
    %1857 = vmatpush1.bf16.msra.mxu0 %v1211
    %1858 = vmatprep.subr.bf16.mxu0 %v1216
    %1859 = vmatpush1.bf16.msra.mxu0 %v1215
    %1860 = vmatprep.subr.bf16.mxu0 %v1220
    %1861 = vmatpush1.bf16.msra.mxu0 %v1219
    %1862 = vmatprep.subr.bf16.mxu0 %v1224
    %1863 = vmatpush1.bf16.msra.mxu0 %v1223
    %1864 = vmatprep.subr.bf16.mxu0 %v1228
    %1865 = vmatpush1.bf16.msra.mxu0 %v1227
    %1866 = vmatprep.subr.bf16.mxu0 %v1232
    %1867 = vmatpush1.bf16.msra.mxu0 %v1231
    %1868 = vmatprep.subr.bf16.mxu0 %v1236
    %1869 = vmatpush1.bf16.msra.mxu0 %v1235
    %1870 = vmatprep.subr.bf16.mxu0 %v1240
    %1871 = vmatpush1.bf16.msra.mxu0 %v1239
    %1872 = vmatprep.subr.bf16.mxu0 %v1244
    %1873 = vmatpush1.bf16.msra.mxu0 %v1243
    %1874 = vmatprep.subr.bf16.mxu0 %v1248
    %1875 = vmatpush1.bf16.msra.mxu0 %v1247
    %1876 = vmatprep.subr.bf16.mxu0 %v1252
    %1877 = vmatpush1.bf16.msra.mxu0 %v1251
    %1878 = vmatprep.subr.bf16.mxu0 %v1256
    %1879 = vmatpush1.bf16.msra.mxu0 %v1255
    %1880 = vmatprep.subr.bf16.mxu0 %v1260
    %1881 = vmatpush1.bf16.msra.mxu0 %v1259
    %1882 = vmatprep.mubr.bf16.mxu0 %v355
    %1883 = vmatmul.mubr.bf16.gmra.mrb[0].mxu0 %v353
    %v1884 = vpop.f32.mrb[0].mxu0
    %v1885 = vadd.f32 %v1844, %v1884
    %v1886 = vpop.f32.mrb[0].mxu0
    %v1887 = vadd.f32 %v1846, %v1886
    %v1888 = vpop.f32.mrb[0].mxu0
    %v1889 = vpop.f32.mrb[0].mxu0
    %1890 = vdwg.mxu0
    %1891 = vmatprep.subr.bf16.mxu0 %v1264
    %1892 = vmatpush1.bf16.msra.mxu0 %v1263
    %1893 = vmatprep.subr.bf16.mxu0 %v1268
    %1894 = vmatpush1.bf16.msra.mxu0 %v1267
    %1895 = vmatprep.subr.bf16.mxu0 %v1272
    %1896 = vmatpush1.bf16.msra.mxu0 %v1271
    %1897 = vmatprep.subr.bf16.mxu0 %v1276
    %1898 = vmatpush1.bf16.msra.mxu0 %v1275
    %1899 = vmatprep.subr.bf16.mxu0 %v1280
    %1900 = vmatpush1.bf16.msra.mxu0 %v1279
    %1901 = vmatprep.subr.bf16.mxu0 %v1284
    %1902 = vmatpush1.bf16.msra.mxu0 %v1283
    %1903 = vmatprep.subr.bf16.mxu0 %v1288
    %1904 = vmatpush1.bf16.msra.mxu0 %v1287
    %1905 = vmatprep.subr.bf16.mxu0 %v1292
    %1906 = vmatpush1.bf16.msra.mxu0 %v1291
    %1907 = vmatprep.subr.bf16.mxu0 %v1296
    %1908 = vmatpush1.bf16.msra.mxu0 %v1295
    %1909 = vmatprep.subr.bf16.mxu0 %v1300
    %1910 = vmatpush1.bf16.msra.mxu0 %v1299
    %1911 = vmatprep.subr.bf16.mxu0 %v1304
    %1912 = vmatpush1.bf16.msra.mxu0 %v1303
    %1913 = vmatprep.subr.bf16.mxu0 %v1308
    %1914 = vmatpush1.bf16.msra.mxu0 %v1307
    %1915 = vmatprep.subr.bf16.mxu0 %v1312
    %1916 = vmatpush1.bf16.msra.mxu0 %v1311
    %1917 = vmatprep.subr.bf16.mxu0 %v1316
    %1918 = vmatpush1.bf16.msra.mxu0 %v1315
    %1919 = vmatprep.subr.bf16.mxu0 %v1320
    %1920 = vmatpush1.bf16.msra.mxu0 %v1319
    %1921 = vmatprep.subr.bf16.mxu0 %v1324
    %1922 = vmatpush1.bf16.msra.mxu0 %v1323
    %1923 = vmatprep.mubr.bf16.mxu0 %v352
    %1924 = vmatmul.mubr.bf16.gmra.mrb[0].mxu0 %v338
    %v1925 = vpop.f32.mrb[0].mxu0
    %v1926 = vadd.f32 %v1885, %v1925
    %v1927 = vpop.f32.mrb[0].mxu0
    %v1928 = vadd.f32 %v1887, %v1927
    %v1929 = vpop.f32.mrb[0].mxu0
    %v1930 = vpop.f32.mrb[0].mxu0
    %1931 = vdwg.mxu0
    %1932 = vmatprep.subr.bf16.mxu0 %v1328
    %1933 = vmatpush1.bf16.msra.mxu0 %v1327
    %1934 = vmatprep.subr.bf16.mxu0 %v1332
    %1935 = vmatpush1.bf16.msra.mxu0 %v1331
    %1936 = vmatprep.subr.bf16.mxu0 %v1336
    %1937 = vmatpush1.bf16.msra.mxu0 %v1335
    %1938 = vmatprep.subr.bf16.mxu0 %v1340
    %1939 = vmatpush1.bf16.msra.mxu0 %v1339
    %1940 = vmatprep.subr.bf16.mxu0 %v1344
    %1941 = vmatpush1.bf16.msra.mxu0 %v1343
    %1942 = vmatprep.subr.bf16.mxu0 %v1348
    %1943 = vmatpush1.bf16.msra.mxu0 %v1347
    %1944 = vmatprep.subr.bf16.mxu0 %v1352
    %1945 = vmatpush1.bf16.msra.mxu0 %v1351
    %1946 = vmatprep.subr.bf16.mxu0 %v1356
    %1947 = vmatpush1.bf16.msra.mxu0 %v1355
    %1948 = vmatprep.subr.bf16.mxu0 %v1360
    %1949 = vmatpush1.bf16.msra.mxu0 %v1359
    %1950 = vmatprep.subr.bf16.mxu0 %v1364
    %1951 = vmatpush1.bf16.msra.mxu0 %v1363
    %1952 = vmatprep.subr.bf16.mxu0 %v1368
    %1953 = vmatpush1.bf16.msra.mxu0 %v1367
    %1954 = vmatprep.subr.bf16.mxu0 %v1372
    %1955 = vmatpush1.bf16.msra.mxu0 %v1371
    %1956 = vmatprep.subr.bf16.mxu0 %v1376
    %1957 = vmatpush1.bf16.msra.mxu0 %v1375
    %1958 = vmatprep.subr.bf16.mxu0 %v1380
    %1959 = vmatpush1.bf16.msra.mxu0 %v1379
    %1960 = vmatprep.subr.bf16.mxu0 %v1384
    %1961 = vmatpush1.bf16.msra.mxu0 %v1383
    %1962 = vmatprep.subr.bf16.mxu0 %v1388
    %1963 = vmatpush1.bf16.msra.mxu0 %v1387
    %1964 = vmatprep.mubr.bf16.mxu0 %v356
    %1965 = vmatmul.mubr.bf16.gmra.mrb[0].mxu0 %v354
    %v1966 = vpop.f32.mrb[0].mxu0
    %v1967 = vadd.f32 %v1926, %v1966
    %v1968 = vpop.f32.mrb[0].mxu0
    %v1969 = vadd.f32 %v1928, %v1968
    %v1970 = vpop.f32.mrb[0].mxu0
    %v1971 = vpop.f32.mrb[0].mxu0
    %1972 = vdwg.mxu0
    %v1973 = vmax.f32 %v1803, 0.0
    %v1974 = vmax.f32 %v1805, 0.0
    %v1975 = vmax.f32 %v1967, 0.0
    %v1976 = vmax.f32 %v1969, 0.0
    %v1977 = vpack.c.bf16 %v1973, %v1973
    %v1978 = vpack.c.bf16 %v1974, %v1974
    %v1979 = vpack.c.bf16 %v1975, %v1975
    %v1980 = vpack.c.bf16 %v1976, %v1976
    %v1981 = vld [vmem:[%s3] sm:$0xff]
    %v1982 = vld [vmem:[%s3 + $0x8] sm:$0xff]
    %v1983 = vld [vmem:[%s3 + $0x10] sm:$0xff]
    %v1984 = vld [vmem:[%s3 + $0x18] sm:$0xff]
    %v1985 = vld [vmem:[%s3 + $0x20] sm:$0xff]
    %v1986 = vld [vmem:[%s3 + $0x28] sm:$0xff]
    %v1987 = vld [vmem:[%s3 + $0x30] sm:$0xff]
    %v1988 = vld [vmem:[%s3 + $0x38] sm:$0xff]
    %v1989 = vld [vmem:[%s3 + $0x40] sm:$0xff]
    %v1990 = vld [vmem:[%s3 + $0x48] sm:$0xff]
    %v1991 = vld [vmem:[%s3 + $0x50] sm:$0xff]
    %v1992 = vld [vmem:[%s3 + $0x58] sm:$0xff]
    %v1993 = vld [vmem:[%s3 + $0x60] sm:$0xff]
    %v1994 = vld [vmem:[%s3 + $0x68] sm:$0xff]
    %v1995 = vld [vmem:[%s3 + $0x70] sm:$0xff]
    %v1996 = vld [vmem:[%s3 + $0x78] sm:$0xff]
    %v1997 = vld [vmem:[%s3 + $0x80] sm:$0xff]
    %v1998 = vld [vmem:[%s3 + $0x88] sm:$0xff]
    %v1999 = vld [vmem:[%s3 + $0x90] sm:$0xff]
    %v2000 = vld [vmem:[%s3 + $0x98] sm:$0xff]
    %v2001 = vld [vmem:[%s3 + $0xa0] sm:$0xff]
    %v2002 = vld [vmem:[%s3 + $0xa8] sm:$0xff]
    %v2003 = vld [vmem:[%s3 + $0xb0] sm:$0xff]
    %v2004 = vld [vmem:[%s3 + $0xb8] sm:$0xff]
    %v2005 = vld [vmem:[%s3 + $0xc0] sm:$0xff]
    %v2006 = vld [vmem:[%s3 + $0xc8] sm:$0xff]
    %v2007 = vld [vmem:[%s3 + $0xd0] sm:$0xff]
    %v2008 = vld [vmem:[%s3 + $0xd8] sm:$0xff]
    %v2009 = vld [vmem:[%s3 + $0xe0] sm:$0xff]
    %v2010 = vld [vmem:[%s3 + $0xe8] sm:$0xff]
    %v2011 = vld [vmem:[%s3 + $0xf0] sm:$0xff]
    %v2012 = vld [vmem:[%s3 + $0xf8] sm:$0xff]
    %v2013 = vld [vmem:[%s3 + $0x100] sm:$0xff]
    %v2014 = vld [vmem:[%s3 + $0x108] sm:$0xff]
    %v2015 = vld [vmem:[%s3 + $0x110] sm:$0xff]
    %v2016 = vld [vmem:[%s3 + $0x118] sm:$0xff]
    %v2017 = vld [vmem:[%s3 + $0x120] sm:$0xff]
    %v2018 = vld [vmem:[%s3 + $0x128] sm:$0xff]
    %v2019 = vld [vmem:[%s3 + $0x130] sm:$0xff]
    %v2020 = vld [vmem:[%s3 + $0x138] sm:$0xff]
    %v2021 = vld [vmem:[%s3 + $0x140] sm:$0xff]
    %v2022 = vld [vmem:[%s3 + $0x148] sm:$0xff]
    %v2023 = vld [vmem:[%s3 + $0x150] sm:$0xff]
    %v2024 = vld [vmem:[%s3 + $0x158] sm:$0xff]
    %v2025 = vld [vmem:[%s3 + $0x160] sm:$0xff]
    %v2026 = vld [vmem:[%s3 + $0x168] sm:$0xff]
    %v2027 = vld [vmem:[%s3 + $0x170] sm:$0xff]
    %v2028 = vld [vmem:[%s3 + $0x178] sm:$0xff]
    %v2029 = vld [vmem:[%s3 + $0x180] sm:$0xff]
    %v2030 = vld [vmem:[%s3 + $0x188] sm:$0xff]
    %v2031 = vld [vmem:[%s3 + $0x190] sm:$0xff]
    %v2032 = vld [vmem:[%s3 + $0x198] sm:$0xff]
    %v2033 = vld [vmem:[%s3 + $0x1a0] sm:$0xff]
    %v2034 = vld [vmem:[%s3 + $0x1a8] sm:$0xff]
    %v2035 = vld [vmem:[%s3 + $0x1b0] sm:$0xff]
    %v2036 = vld [vmem:[%s3 + $0x1b8] sm:$0xff]
    %v2037 = vld [vmem:[%s3 + $0x1c0] sm:$0xff]
    %v2038 = vld [vmem:[%s3 + $0x1c8] sm:$0xff]
    %v2039 = vld [vmem:[%s3 + $0x1d0] sm:$0xff]
    %v2040 = vld [vmem:[%s3 + $0x1d8] sm:$0xff]
    %v2041 = vld [vmem:[%s3 + $0x1e0] sm:$0xff]
    %v2042 = vld [vmem:[%s3 + $0x1e8] sm:$0xff]
    %v2043 = vld [vmem:[%s3 + $0x1f0] sm:$0xff]
    %v2044 = vld [vmem:[%s3 + $0x1f8] sm:$0xff]
    %v2045 = vld [vmem:[%s4] sm:$0x3]
    %v2047 = vlaneseq
    %v2048 = vshrl.u32 %v2047, 7
    %v2049 = vsub.s32 0, %v2048
    %v2050 = vrot.slane %v2045, %v2049
    %v2051 = vlaneseq
    %v2052 = vshrl.u32 %v2051, 7
    %v2053 = vsub.s32 1, %v2052
    %v2054 = vrot.slane %v2045, %v2053
    %v2121 = vunpack.c.l.b16 %v1981
    %v2122 = vunpack.c.h.b16 %v1981
    %v2123 = vunpack.c.l.b16 %v1982
    %v2124 = vunpack.c.h.b16 %v1982
    %v2125 = vunpack.c.l.b16 %v1983
    %v2126 = vunpack.c.h.b16 %v1983
    %v2127 = vunpack.c.l.b16 %v1984
    %v2128 = vunpack.c.h.b16 %v1984
    %v2129 = vunpack.c.l.b16 %v1985
    %v2130 = vunpack.c.h.b16 %v1985
    %v2131 = vunpack.c.l.b16 %v1986
    %v2132 = vunpack.c.h.b16 %v1986
    %v2133 = vunpack.c.l.b16 %v1987
    %v2134 = vunpack.c.h.b16 %v1987
    %v2135 = vunpack.c.l.b16 %v1988
    %v2136 = vunpack.c.h.b16 %v1988
    %v2137 = vunpack.c.l.b16 %v1989
    %v2138 = vunpack.c.h.b16 %v1989
    %v2139 = vunpack.c.l.b16 %v1990
    %v2140 = vunpack.c.h.b16 %v1990
    %v2141 = vunpack.c.l.b16 %v1991
    %v2142 = vunpack.c.h.b16 %v1991
    %v2143 = vunpack.c.l.b16 %v1992
    %v2144 = vunpack.c.h.b16 %v1992
    %v2145 = vunpack.c.l.b16 %v1993
    %v2146 = vunpack.c.h.b16 %v1993
    %v2147 = vunpack.c.l.b16 %v1994
    %v2148 = vunpack.c.h.b16 %v1994
    %v2149 = vunpack.c.l.b16 %v1995
    %v2150 = vunpack.c.h.b16 %v1995
    %v2151 = vunpack.c.l.b16 %v1996
    %v2152 = vunpack.c.h.b16 %v1996
    %v2153 = vunpack.c.l.b16 %v1997
    %v2154 = vunpack.c.h.b16 %v1997
    %v2155 = vunpack.c.l.b16 %v1998
    %v2156 = vunpack.c.h.b16 %v1998
    %v2157 = vunpack.c.l.b16 %v1999
    %v2158 = vunpack.c.h.b16 %v1999
    %v2159 = vunpack.c.l.b16 %v2000
    %v2160 = vunpack.c.h.b16 %v2000
    %v2161 = vunpack.c.l.b16 %v2001
    %v2162 = vunpack.c.h.b16 %v2001
    %v2163 = vunpack.c.l.b16 %v2002
    %v2164 = vunpack.c.h.b16 %v2002
    %v2165 = vunpack.c.l.b16 %v2003
    %v2166 = vunpack.c.h.b16 %v2003
    %v2167 = vunpack.c.l.b16 %v2004
    %v2168 = vunpack.c.h.b16 %v2004
    %v2169 = vunpack.c.l.b16 %v2005
    %v2170 = vunpack.c.h.b16 %v2005
    %v2171 = vunpack.c.l.b16 %v2006
    %v2172 = vunpack.c.h.b16 %v2006
    %v2173 = vunpack.c.l.b16 %v2007
    %v2174 = vunpack.c.h.b16 %v2007
    %v2175 = vunpack.c.l.b16 %v2008
    %v2176 = vunpack.c.h.b16 %v2008
    %v2177 = vunpack.c.l.b16 %v2009
    %v2178 = vunpack.c.h.b16 %v2009
    %v2179 = vunpack.c.l.b16 %v2010
    %v2180 = vunpack.c.h.b16 %v2010
    %v2181 = vunpack.c.l.b16 %v2011
    %v2182 = vunpack.c.h.b16 %v2011
    %v2183 = vunpack.c.l.b16 %v2012
    %v2184 = vunpack.c.h.b16 %v2012
    %v2185 = vunpack.c.l.b16 %v2013
    %v2186 = vunpack.c.h.b16 %v2013
    %v2187 = vunpack.c.l.b16 %v2014
    %v2188 = vunpack.c.h.b16 %v2014
    %v2189 = vunpack.c.l.b16 %v2015
    %v2190 = vunpack.c.h.b16 %v2015
    %v2191 = vunpack.c.l.b16 %v2016
    %v2192 = vunpack.c.h.b16 %v2016
    %v2193 = vunpack.c.l.b16 %v2017
    %v2194 = vunpack.c.h.b16 %v2017
    %v2195 = vunpack.c.l.b16 %v2018
    %v2196 = vunpack.c.h.b16 %v2018
    %v2197 = vunpack.c.l.b16 %v2019
    %v2198 = vunpack.c.h.b16 %v2019
    %v2199 = vunpack.c.l.b16 %v2020
    %v2200 = vunpack.c.h.b16 %v2020
    %v2201 = vunpack.c.l.b16 %v2021
    %v2202 = vunpack.c.h.b16 %v2021
    %v2203 = vunpack.c.l.b16 %v2022
    %v2204 = vunpack.c.h.b16 %v2022
    %v2205 = vunpack.c.l.b16 %v2023
    %v2206 = vunpack.c.h.b16 %v2023
    %v2207 = vunpack.c.l.b16 %v2024
    %v2208 = vunpack.c.h.b16 %v2024
    %v2209 = vunpack.c.l.b16 %v2025
    %v2210 = vunpack.c.h.b16 %v2025
    %v2211 = vunpack.c.l.b16 %v2026
    %v2212 = vunpack.c.h.b16 %v2026
    %v2213 = vunpack.c.l.b16 %v2027
    %v2214 = vunpack.c.h.b16 %v2027
    %v2215 = vunpack.c.l.b16 %v2028
    %v2216 = vunpack.c.h.b16 %v2028
    %v2217 = vunpack.c.l.b16 %v2029
    %v2218 = vunpack.c.h.b16 %v2029
    %v2219 = vunpack.c.l.b16 %v2030
    %v2220 = vunpack.c.h.b16 %v2030
    %v2221 = vunpack.c.l.b16 %v2031
    %v2222 = vunpack.c.h.b16 %v2031
    %v2223 = vunpack.c.l.b16 %v2032
    %v2224 = vunpack.c.h.b16 %v2032
    %v2225 = vunpack.c.l.b16 %v2033
    %v2226 = vunpack.c.h.b16 %v2033
    %v2227 = vunpack.c.l.b16 %v2034
    %v2228 = vunpack.c.h.b16 %v2034
    %v2229 = vunpack.c.l.b16 %v2035
    %v2230 = vunpack.c.h.b16 %v2035
    %v2231 = vunpack.c.l.b16 %v2036
    %v2232 = vunpack.c.h.b16 %v2036
    %v2233 = vunpack.c.l.b16 %v2037
    %v2234 = vunpack.c.h.b16 %v2037
    %v2235 = vunpack.c.l.b16 %v2038
    %v2236 = vunpack.c.h.b16 %v2038
    %v2237 = vunpack.c.l.b16 %v2039
    %v2238 = vunpack.c.h.b16 %v2039
    %v2239 = vunpack.c.l.b16 %v2040
    %v2240 = vunpack.c.h.b16 %v2040
    %v2241 = vunpack.c.l.b16 %v2041
    %v2242 = vunpack.c.h.b16 %v2041
    %v2243 = vunpack.c.l.b16 %v2042
    %v2244 = vunpack.c.h.b16 %v2042
    %v2245 = vunpack.c.l.b16 %v2043
    %v2246 = vunpack.c.h.b16 %v2043
    %v2247 = vunpack.c.l.b16 %v2044
    %v2248 = vunpack.c.h.b16 %v2044
    %v2249 = vpack.c.b16 %v2123, %v2121
    %v2250 = vpack.c.b16 %v2124, %v2122
    %v2251 = vpack.c.b16 %v2127, %v2125
    %v2252 = vpack.c.b16 %v2128, %v2126
    %v2253 = vpack.c.b16 %v2131, %v2129
    %v2254 = vpack.c.b16 %v2132, %v2130
    %v2255 = vpack.c.b16 %v2135, %v2133
    %v2256 = vpack.c.b16 %v2136, %v2134
    %v2257 = vpack.c.b16 %v2139, %v2137
    %v2258 = vpack.c.b16 %v2140, %v2138
    %v2259 = vpack.c.b16 %v2143, %v2141
    %v2260 = vpack.c.b16 %v2144, %v2142
    %v2261 = vpack.c.b16 %v2147, %v2145
    %v2262 = vpack.c.b16 %v2148, %v2146
    %v2263 = vpack.c.b16 %v2151, %v2149
    %v2264 = vpack.c.b16 %v2152, %v2150
    %v2265 = vpack.c.b16 %v2155, %v2153
    %v2266 = vpack.c.b16 %v2156, %v2154
    %v2267 = vpack.c.b16 %v2159, %v2157
    %v2268 = vpack.c.b16 %v2160, %v2158
    %v2269 = vpack.c.b16 %v2163, %v2161
    %v2270 = vpack.c.b16 %v2164, %v2162
    %v2271 = vpack.c.b16 %v2167, %v2165
    %v2272 = vpack.c.b16 %v2168, %v2166
    %v2273 = vpack.c.b16 %v2171, %v2169
    %v2274 = vpack.c.b16 %v2172, %v2170
    %v2275 = vpack.c.b16 %v2175, %v2173
    %v2276 = vpack.c.b16 %v2176, %v2174
    %v2277 = vpack.c.b16 %v2179, %v2177
    %v2278 = vpack.c.b16 %v2180, %v2178
    %v2279 = vpack.c.b16 %v2183, %v2181
    %v2280 = vpack.c.b16 %v2184, %v2182
    %v2281 = vpack.c.b16 %v2187, %v2185
    %v2282 = vpack.c.b16 %v2188, %v2186
    %v2283 = vpack.c.b16 %v2191, %v2189
    %v2284 = vpack.c.b16 %v2192, %v2190
    %v2285 = vpack.c.b16 %v2195, %v2193
    %v2286 = vpack.c.b16 %v2196, %v2194
    %v2287 = vpack.c.b16 %v2199, %v2197
    %v2288 = vpack.c.b16 %v2200, %v2198
    %v2289 = vpack.c.b16 %v2203, %v2201
    %v2290 = vpack.c.b16 %v2204, %v2202
    %v2291 = vpack.c.b16 %v2207, %v2205
    %v2292 = vpack.c.b16 %v2208, %v2206
    %v2293 = vpack.c.b16 %v2211, %v2209
    %v2294 = vpack.c.b16 %v2212, %v2210
    %v2295 = vpack.c.b16 %v2215, %v2213
    %v2296 = vpack.c.b16 %v2216, %v2214
    %v2297 = vpack.c.b16 %v2219, %v2217
    %v2298 = vpack.c.b16 %v2220, %v2218
    %v2299 = vpack.c.b16 %v2223, %v2221
    %v2300 = vpack.c.b16 %v2224, %v2222
    %v2301 = vpack.c.b16 %v2227, %v2225
    %v2302 = vpack.c.b16 %v2228, %v2226
    %v2303 = vpack.c.b16 %v2231, %v2229
    %v2304 = vpack.c.b16 %v2232, %v2230
    %v2305 = vpack.c.b16 %v2235, %v2233
    %v2306 = vpack.c.b16 %v2236, %v2234
    %v2307 = vpack.c.b16 %v2239, %v2237
    %v2308 = vpack.c.b16 %v2240, %v2238
    %v2309 = vpack.c.b16 %v2243, %v2241
    %v2310 = vpack.c.b16 %v2244, %v2242
    %v2311 = vpack.c.b16 %v2247, %v2245
    %v2312 = vpack.c.b16 %v2248, %v2246
    %2377 = vmatprep.subr.bf16.mxu0 %v2250
    %2378 = vmatpush1.bf16.msra.mxu0 %v2249
    %2379 = vmatprep.subr.bf16.mxu0 %v2252
    %2380 = vmatpush1.bf16.msra.mxu0 %v2251
    %2381 = vmatprep.subr.bf16.mxu0 %v2254
    %2382 = vmatpush1.bf16.msra.mxu0 %v2253
    %2383 = vmatprep.subr.bf16.mxu0 %v2256
    %2384 = vmatpush1.bf16.msra.mxu0 %v2255
    %2385 = vmatprep.subr.bf16.mxu0 %v2258
    %2386 = vmatpush1.bf16.msra.mxu0 %v2257
    %2387 = vmatprep.subr.bf16.mxu0 %v2260
    %2388 = vmatpush1.bf16.msra.mxu0 %v2259
    %2389 = vmatprep.subr.bf16.mxu0 %v2262
    %2390 = vmatpush1.bf16.msra.mxu0 %v2261
    %2391 = vmatprep.subr.bf16.mxu0 %v2264
    %2392 = vmatpush1.bf16.msra.mxu0 %v2263
    %2393 = vmatprep.subr.bf16.mxu0 %v2266
    %2394 = vmatpush1.bf16.msra.mxu0 %v2265
    %2395 = vmatprep.subr.bf16.mxu0 %v2268
    %2396 = vmatpush1.bf16.msra.mxu0 %v2267
    %2397 = vmatprep.subr.bf16.mxu0 %v2270
    %2398 = vmatpush1.bf16.msra.mxu0 %v2269
    %2399 = vmatprep.subr.bf16.mxu0 %v2272
    %2400 = vmatpush1.bf16.msra.mxu0 %v2271
    %2401 = vmatprep.subr.bf16.mxu0 %v2274
    %2402 = vmatpush1.bf16.msra.mxu0 %v2273
    %2403 = vmatprep.subr.bf16.mxu0 %v2276
    %2404 = vmatpush1.bf16.msra.mxu0 %v2275
    %2405 = vmatprep.subr.bf16.mxu0 %v2278
    %2406 = vmatpush1.bf16.msra.mxu0 %v2277
    %2407 = vmatprep.subr.bf16.mxu0 %v2280
    %2408 = vmatpush1.bf16.msra.mxu0 %v2279
    %2409 = vmatprep.mubr.bf16.mxu0 %v1978
    %2410 = vmatmul.mubr.bf16.gmra.mrb[0].mxu0 %v1977
    %v2411 = vpop.f32.mrb[0].mxu0
    %v2412 = vadd.f32 %v2050, %v2411
    %v2413 = vpop.f32.mrb[0].mxu0
    %v2414 = vadd.f32 %v2054, %v2413
    %v2415 = vpop.f32.mrb[0].mxu0
    %v2416 = vpop.f32.mrb[0].mxu0
    %2417 = vdwg.mxu0
    %2418 = vmatprep.subr.bf16.mxu0 %v2282
    %2419 = vmatpush1.bf16.msra.mxu0 %v2281
    %2420 = vmatprep.subr.bf16.mxu0 %v2284
    %2421 = vmatpush1.bf16.msra.mxu0 %v2283
    %2422 = vmatprep.subr.bf16.mxu0 %v2286
    %2423 = vmatpush1.bf16.msra.mxu0 %v2285
    %2424 = vmatprep.subr.bf16.mxu0 %v2288
    %2425 = vmatpush1.bf16.msra.mxu0 %v2287
    %2426 = vmatprep.subr.bf16.mxu0 %v2290
    %2427 = vmatpush1.bf16.msra.mxu0 %v2289
    %2428 = vmatprep.subr.bf16.mxu0 %v2292
    %2429 = vmatpush1.bf16.msra.mxu0 %v2291
    %2430 = vmatprep.subr.bf16.mxu0 %v2294
    %2431 = vmatpush1.bf16.msra.mxu0 %v2293
    %2432 = vmatprep.subr.bf16.mxu0 %v2296
    %2433 = vmatpush1.bf16.msra.mxu0 %v2295
    %2434 = vmatprep.subr.bf16.mxu0 %v2298
    %2435 = vmatpush1.bf16.msra.mxu0 %v2297
    %2436 = vmatprep.subr.bf16.mxu0 %v2300
    %2437 = vmatpush1.bf16.msra.mxu0 %v2299
    %2438 = vmatprep.subr.bf16.mxu0 %v2302
    %2439 = vmatpush1.bf16.msra.mxu0 %v2301
    %2440 = vmatprep.subr.bf16.mxu0 %v2304
    %2441 = vmatpush1.bf16.msra.mxu0 %v2303
    %2442 = vmatprep.subr.bf16.mxu0 %v2306
    %2443 = vmatpush1.bf16.msra.mxu0 %v2305
    %2444 = vmatprep.subr.bf16.mxu0 %v2308
    %2445 = vmatpush1.bf16.msra.mxu0 %v2307
    %2446 = vmatprep.subr.bf16.mxu0 %v2310
    %2447 = vmatpush1.bf16.msra.mxu0 %v2309
    %2448 = vmatprep.subr.bf16.mxu0 %v2312
    %2449 = vmatpush1.bf16.msra.mxu0 %v2311
    %2450 = vmatprep.mubr.bf16.mxu0 %v1980
    %2451 = vmatmul.mubr.bf16.gmra.mrb[0].mxu0 %v1979
    %v2452 = vpop.f32.mrb[0].mxu0
    %v2453 = vadd.f32 %v2412, %v2452
    %v2454 = vpop.f32.mrb[0].mxu0
    %v2455 = vadd.f32 %v2414, %v2454
    %v2456 = vpop.f32.mrb[0].mxu0
    %v2457 = vpop.f32.mrb[0].mxu0
    %2458 = vdwg.mxu0
    %v2459 = vmax.f32 %v2453, 0.0
    %v2460 = vmax.f32 %v2455, 0.0
    %v2461 = vpack.c.bf16 %v2459, %v2459
    %v2462 = vpack.c.bf16 %v2460, %v2460
    %v2463 = vld [vmem:[%s5] sm:$0xf]
    %v2464 = vld [vmem:[%s5 + $0x4] sm:$0xf]
    %v2465 = vld [vmem:[%s5 + $0x8] sm:$0xf]
    %v2466 = vld [vmem:[%s5 + $0xc] sm:$0xf]
    %v2467 = vld [vmem:[%s5 + $0x10] sm:$0xf]
    %v2468 = vld [vmem:[%s5 + $0x14] sm:$0xf]
    %v2469 = vld [vmem:[%s5 + $0x18] sm:$0xf]
    %v2470 = vld [vmem:[%s5 + $0x1c] sm:$0xf]
    %v2471 = vld [vmem:[%s5 + $0x20] sm:$0xf]
    %v2472 = vld [vmem:[%s5 + $0x24] sm:$0xf]
    %v2473 = vld [vmem:[%s5 + $0x28] sm:$0xf]
    %v2474 = vld [vmem:[%s5 + $0x2c] sm:$0xf]
    %v2475 = vld [vmem:[%s5 + $0x30] sm:$0xf]
    %v2476 = vld [vmem:[%s5 + $0x34] sm:$0xf]
    %v2477 = vld [vmem:[%s5 + $0x38] sm:$0xf]
    %v2478 = vld [vmem:[%s5 + $0x3c] sm:$0xf]
    %v2479 = vld [vmem:[%s5 + $0x40] sm:$0xf]
    %v2480 = vld [vmem:[%s5 + $0x44] sm:$0xf]
    %v2481 = vld [vmem:[%s5 + $0x48] sm:$0xf]
    %v2482 = vld [vmem:[%s5 + $0x4c] sm:$0xf]
    %v2483 = vld [vmem:[%s5 + $0x50] sm:$0xf]
    %v2484 = vld [vmem:[%s5 + $0x54] sm:$0xf]
    %v2485 = vld [vmem:[%s5 + $0x58] sm:$0xf]
    %v2486 = vld [vmem:[%s5 + $0x5c] sm:$0xf]
    %v2487 = vld [vmem:[%s5 + $0x60] sm:$0xf]
    %v2488 = vld [vmem:[%s5 + $0x64] sm:$0xf]
    %v2489 = vld [vmem:[%s5 + $0x68] sm:$0xf]
    %v2490 = vld [vmem:[%s5 + $0x6c] sm:$0xf]
    %v2491 = vld [vmem:[%s5 + $0x70] sm:$0xf]
    %v2492 = vld [vmem:[%s5 + $0x74] sm:$0xf]
    %v2493 = vld [vmem:[%s5 + $0x78] sm:$0xf]
    %v2494 = vld [vmem:[%s5 + $0x7c] sm:$0xf]
    %v2495 = vld [vmem:[%s6] sm:$0x1]
    %v2497 = vlaneseq
    %v2498 = vshrl.u32 %v2497, 7
    %v2499 = vsub.s32 0, %v2498
    %v2500 = vrot.slane %v2495, %v2499
    %v2534 = vunpack.c.l.b16 %v2463
    %v2535 = vunpack.c.l.b16 %v2464
    %v2536 = vunpack.c.l.b16 %v2465
    %v2537 = vunpack.c.l.b16 %v2466
    %v2538 = vunpack.c.l.b16 %v2467
    %v2539 = vunpack.c.l.b16 %v2468
    %v2540 = vunpack.c.l.b16 %v2469
    %v2541 = vunpack.c.l.b16 %v2470
    %v2542 = vunpack.c.l.b16 %v2471
    %v2543 = vunpack.c.l.b16 %v2472
    %v2544 = vunpack.c.l.b16 %v2473
    %v2545 = vunpack.c.l.b16 %v2474
    %v2546 = vunpack.c.l.b16 %v2475
    %v2547 = vunpack.c.l.b16 %v2476
    %v2548 = vunpack.c.l.b16 %v2477
    %v2549 = vunpack.c.l.b16 %v2478
    %v2550 = vunpack.c.l.b16 %v2479
    %v2551 = vunpack.c.l.b16 %v2480
    %v2552 = vunpack.c.l.b16 %v2481
    %v2553 = vunpack.c.l.b16 %v2482
    %v2554 = vunpack.c.l.b16 %v2483
    %v2555 = vunpack.c.l.b16 %v2484
    %v2556 = vunpack.c.l.b16 %v2485
    %v2557 = vunpack.c.l.b16 %v2486
    %v2558 = vunpack.c.l.b16 %v2487
    %v2559 = vunpack.c.l.b16 %v2488
    %v2560 = vunpack.c.l.b16 %v2489
    %v2561 = vunpack.c.l.b16 %v2490
    %v2562 = vunpack.c.l.b16 %v2491
    %v2563 = vunpack.c.l.b16 %v2492
    %v2564 = vunpack.c.l.b16 %v2493
    %v2565 = vunpack.c.l.b16 %v2494
    %v2566 = vpack.c.b16 %v2535, %v2534
    %v2567 = vpack.c.b16 %v2537, %v2536
    %v2568 = vpack.c.b16 %v2539, %v2538
    %v2569 = vpack.c.b16 %v2541, %v2540
    %v2570 = vpack.c.b16 %v2543, %v2542
    %v2571 = vpack.c.b16 %v2545, %v2544
    %v2572 = vpack.c.b16 %v2547, %v2546
    %v2573 = vpack.c.b16 %v2549, %v2548
    %v2574 = vpack.c.b16 %v2551, %v2550
    %v2575 = vpack.c.b16 %v2553, %v2552
    %v2576 = vpack.c.b16 %v2555, %v2554
    %v2577 = vpack.c.b16 %v2557, %v2556
    %v2578 = vpack.c.b16 %v2559, %v2558
    %v2579 = vpack.c.b16 %v2561, %v2560
    %v2580 = vpack.c.b16 %v2563, %v2562
    %v2581 = vpack.c.b16 %v2565, %v2564
    %2598 = vmatprep.subr.bf16.mxu0 0
    %2599 = vmatpush1.bf16.msra.mxu0 %v2566
    %2600 = vmatprep.subr.bf16.mxu0 0
    %2601 = vmatpush1.bf16.msra.mxu0 %v2567
    %2602 = vmatprep.subr.bf16.mxu0 0
    %2603 = vmatpush1.bf16.msra.mxu0 %v2568
    %2604 = vmatprep.subr.bf16.mxu0 0
    %2605 = vmatpush1.bf16.msra.mxu0 %v2569
    %2606 = vmatprep.subr.bf16.mxu0 0
    %2607 = vmatpush1.bf16.msra.mxu0 %v2570
    %2608 = vmatprep.subr.bf16.mxu0 0
    %2609 = vmatpush1.bf16.msra.mxu0 %v2571
    %2610 = vmatprep.subr.bf16.mxu0 0
    %2611 = vmatpush1.bf16.msra.mxu0 %v2572
    %2612 = vmatprep.subr.bf16.mxu0 0
    %2613 = vmatpush1.bf16.msra.mxu0 %v2573
    %2614 = vmatprep.subr.bf16.mxu0 0
    %2615 = vmatpush1.bf16.msra.mxu0 %v2574
    %2616 = vmatprep.subr.bf16.mxu0 0
    %2617 = vmatpush1.bf16.msra.mxu0 %v2575
    %2618 = vmatprep.subr.bf16.mxu0 0
    %2619 = vmatpush1.bf16.msra.mxu0 %v2576
    %2620 = vmatprep.subr.bf16.mxu0 0
    %2621 = vmatpush1.bf16.msra.mxu0 %v2577
    %2622 = vmatprep.subr.bf16.mxu0 0
    %2623 = vmatpush1.bf16.msra.mxu0 %v2578
    %2624 = vmatprep.subr.bf16.mxu0 0
    %2625 = vmatpush1.bf16.msra.mxu0 %v2579
    %2626 = vmatprep.subr.bf16.mxu0 0
    %2627 = vmatpush1.bf16.msra.mxu0 %v2580
    %2628 = vmatprep.subr.bf16.mxu0 0
    %2629 = vmatpush1.bf16.msra.mxu0 %v2581
    %2630 = vmatprep.mubr.bf16.mxu0 %v2462
    %2631 = vmatmul.mubr.bf16.gmra.mrb[0].mxu0 %v2461
    %v2632 = vpop.f32.mrb[0].mxu0
    %v2633 = vadd.f32 %v2500, %v2632
    %v2634 = vpop.f32.mrb[0].mxu0
    %v2635 = vpop.f32.mrb[0].mxu0
    %v2636 = vpop.f32.mrb[0].mxu0
    %2637 = vdwg.mxu0
    %2638 = vst [vmem:[#allocation2] sm:$0x3] %v2633
    // Predicated region
    $region30: #{a_call__.7} parent=1 // pred_check
      _
    $region31: #{a_call__.7} parent=1 // pred_check_branch
      %2640 = sbr.rel (0) target = $region33
    $region32: #{a_call__.7} parent=1 // pred_region
      %s2642 = ssub.s32 32, 32
      %2643 = vsyncadd [#allocation3], %s2642
      %s2645 = sshll.u32 [#allocation2], 4
      %s2646 = int_to_ptr.vmem [resolvable:$true] %s2645
      %2648 = dma.vmem_to_hbm [thread:$0]  %s2646, 32, %s7, [#allocation3]
    $region33: #{a_call__.7} parent=1 // pred_fallthru
      _
    // Predicated region
    $region34: #{a_call__.7} parent=1 // pred_check
      _
    $region35: #{a_call__.7} parent=1 // pred_check_branch
      %2650 = sbr.rel (0) target = $region37
    $region36: #{a_call__.7} parent=1 // pred_region
      %2651 = dma.done [#allocation3], 32
    $region37: #{a_call__.7} parent=1 // pred_fallthru
      _
    %2652 = vsyncpa [#allocation3], 1

// kernel: a_call__.6
$region0: #{a_call__.6}
  #allocation0 [shape = 'u32[]', space=smem, size = 0x4, offset = 0x4, fixed_abs, tag = 'smem constant byte address 0x4 - core index']
  #allocation1 [shape = 'u32[144,128]{1,0:T(1,128)}', space=vmem, size = 0x12000, scoped, tag = 'internal scratch']
  %s0 = inlined_call_operand.hbm [shape: bf16[16,8,256], index: 0, kind: input, shape index: {}]
  %s1 = inlined_call_operand.hbm [shape: f32[16,8,3], index: 1, kind: input, shape index: {}]
  %s2 = inlined_call_operand.hbm [shape: bf16[256,256], index: 2, kind: input, shape index: {}]
  %s3 = inlined_call_operand.hbm [shape: f32[3,256], index: 3, kind: input, shape index: {}]
  %s4 = inlined_call_operand.hbm [shape: f32[1,256], index: 4, kind: input, shape index: {}]
  %s5 = inlined_call_operand.hbm [shape: bf16[256,512], index: 5, kind: input, shape index: {}]
  %s6 = inlined_call_operand.hbm [shape: f32[1,512], index: 6, kind: input, shape index: {}]
  %s7 = inlined_call_operand.hbm [shape: bf16[512,1024], index: 7, kind: input, shape index: {}]
  %s8 = inlined_call_operand.hbm [shape: f32[1,1024], index: 8, kind: input, shape index: {}]
  %s9 = inlined_call_operand.hbm [shape: bf16[16,1024], index: 9, kind: output, shape index: {}]
  %s10 = sld [smem:[#allocation0]]
  $region82: #{a_call__.6} parent=0
    _
  %s12 = ssub.s32 1, %s10
  %s13 = scalar_select 0, %s12, %s10
  $region1: #{a_call__.6} parent=0
    #allocation2 [shape = 'u8[65536]{0}', space=vmem, size = 0x10000, scoped, tag = 'input window, operand 0, single buffered']
    #allocation3 [shape = 's32[1]{0}', space=sflag, size = 0x4, scoped, tag = 'scoped memory for a_call__.6']
    #allocation4 [shape = 's32[1]{0}', space=sflag, size = 0x4, scoped, tag = 'scoped memory for a_call__.6']
    #allocation5 [shape = 'u8[65536]{0}', space=vmem, size = 0x10000, scoped, tag = 'input window, operand 1, single buffered']
    #allocation6 [shape = 's32[1]{0}', space=sflag, size = 0x4, scoped, tag = 'scoped memory for a_call__.6']
    #allocation7 [shape = 'u8[131072]{0}', space=vmem, size = 0x20000, scoped, tag = 'input window, operand 2, single buffered']
    #allocation8 [shape = 'u8[4096]{0}', space=vmem, size = 0x1000, scoped, tag = 'input window, operand 3, single buffered']
    #allocation9 [shape = 's32[1]{0}', space=sflag, size = 0x4, scoped, tag = 'scoped memory for a_call__.6']
    #allocation10 [shape = 'u8[1024]{0}', space=vmem, size = 0x400, scoped, tag = 'input window, operand 4, single buffered']
    #allocation11 [shape = 'u8[262144]{0}', space=vmem, size = 0x40000, scoped, tag = 'input window, operand 5, single buffered']
    #allocation12 [shape = 's32[1]{0}', space=sflag, size = 0x4, scoped, tag = 'scoped memory for a_call__.6']
    #allocation13 [shape = 'u8[2048]{0}', space=vmem, size = 0x800, scoped, tag = 'input window, operand 6, single buffered']
    #allocation14 [shape = 'u8[1048576]{0}', space=vmem, size = 0x100000, scoped, tag = 'input window, operand 7, single buffered']
    #allocation15 [shape = 's32[1]{0}', space=sflag, size = 0x4, scoped, tag = 'scoped memory for a_call__.6']
    #allocation16 [shape = 'u8[4096]{0}', space=vmem, size = 0x1000, scoped, tag = 'input window, operand 8, single buffered']
    #allocation17 [shape = 'u8[32768]{0}', space=vmem, size = 0x8000, scoped, tag = 'output window, operand 0, single buffered']
    %14 = vsyncpa [#allocation3], 0
    %15 = vsyncpa [#allocation6], 0
    %16 = vsyncpa [#allocation9], 0
    %17 = vsyncpa [#allocation12], 0
    %18 = vsyncpa [#allocation15], 0
    %19 = vsyncpa [#allocation4], 0
    // Predicated region
    $region2: #{a_call__.6} parent=1 // pred_check
      _
    $region3: #{a_call__.6} parent=1 // pred_check_branch
      %21 = sbr.rel (0) target = $region5
    $region4: #{a_call__.6} parent=1 // pred_region
      %s23 = ssub.s32 2048, 2048
      %24 = vsyncadd [#allocation3], %s23
      %s25 = sshll.u32 [#allocation2], 4
      %s26 = int_to_ptr.vmem [resolvable:$true] %s25
      %31 = dma.hbm_to_vmem [thread:$0]  %s0, 2048, %s26, [#allocation3], 128, 128, 8
    $region5: #{a_call__.6} parent=1 // pred_fallthru
      _
    // Predicated region
    $region6: #{a_call__.6} parent=1 // pred_check
      _
    $region7: #{a_call__.6} parent=1 // pred_check_branch
      %33 = sbr.rel (0) target = $region9
    $region8: #{a_call__.6} parent=1 // pred_region
      %s35 = ssub.s32 2048, 2048
      %36 = vsyncadd [#allocation6], %s35
      %s37 = sshll.u32 [#allocation5], 4
      %s38 = int_to_ptr.vmem [resolvable:$true] %s37
      %43 = dma.hbm_to_vmem [thread:$0]  %s1, 2048, %s38, [#allocation6], 128, 128, 8
    $region9: #{a_call__.6} parent=1 // pred_fallthru
      _
    // Predicated region
    $region10: #{a_call__.6} parent=1 // pred_check
      _
    $region11: #{a_call__.6} parent=1 // pred_check_branch
      %45 = sbr.rel (0) target = $region13
    $region12: #{a_call__.6} parent=1 // pred_region
      %s47 = ssub.s32 4096, 4096
      %48 = vsyncadd [#allocation6], %s47
      %s49 = sshll.u32 [#allocation7], 4
      %s50 = int_to_ptr.vmem [resolvable:$true] %s49
      %55 = dma.hbm_to_vmem [thread:$0]  %s2, 4096, %s50, [#allocation6], 128, 128, 8
    $region13: #{a_call__.6} parent=1 // pred_fallthru
      _
    // Predicated region
    $region14: #{a_call__.6} parent=1 // pred_check
      _
    $region15: #{a_call__.6} parent=1 // pred_check_branch
      %57 = sbr.rel (0) target = $region17
    $region16: #{a_call__.6} parent=1 // pred_region
      %s59 = ssub.s32 128, 128
      %60 = vsyncadd [#allocation9], %s59
      %s62 = sshll.u32 [#allocation8], 4
      %s63 = int_to_ptr.vmem [resolvable:$true] %s62
      %65 = dma.hbm_to_vmem [thread:$0]  %s3, 128, %s63, [#allocation9]
    $region17: #{a_call__.6} parent=1 // pred_fallthru
      _
    // Predicated region
    $region18: #{a_call__.6} parent=1 // pred_check
      _
    $region19: #{a_call__.6} parent=1 // pred_check_branch
      %67 = sbr.rel (0) target = $region21
    $region20: #{a_call__.6} parent=1 // pred_region
      %s69 = ssub.s32 32, 32
      %70 = vsyncadd [#allocation9], %s69
      %s72 = sshll.u32 [#allocation10], 4
      %s73 = int_to_ptr.vmem [resolvable:$true] %s72
      %75 = dma.hbm_to_vmem [thread:$0]  %s4, 32, %s73, [#allocation9]
    $region21: #{a_call__.6} parent=1 // pred_fallthru
      _
    // Predicated region
    $region22: #{a_call__.6} parent=1 // pred_check
      _
    $region23: #{a_call__.6} parent=1 // pred_check_branch
      %77 = sbr.rel (0) target = $region25
    $region24: #{a_call__.6} parent=1 // pred_region
      %s79 = ssub.s32 8192, 8192
      %80 = vsyncadd [#allocation12], %s79
      %s81 = sshll.u32 [#allocation11], 4
      %s82 = int_to_ptr.vmem [resolvable:$true] %s81
      %87 = dma.hbm_to_vmem [thread:$0]  %s5, 8192, %s82, [#allocation12], 256, 256, 16
    $region25: #{a_call__.6} parent=1 // pred_fallthru
      _
    // Predicated region
    $region26: #{a_call__.6} parent=1 // pred_check
      _
    $region27: #{a_call__.6} parent=1 // pred_check_branch
      %89 = sbr.rel (0) target = $region29
    $region28: #{a_call__.6} parent=1 // pred_region
      %s91 = ssub.s32 64, 64
      %92 = vsyncadd [#allocation12], %s91
      %s94 = sshll.u32 [#allocation13], 4
      %s95 = int_to_ptr.vmem [resolvable:$true] %s94
      %97 = dma.hbm_to_vmem [thread:$0]  %s6, 64, %s95, [#allocation12]
    $region29: #{a_call__.6} parent=1 // pred_fallthru
      _
    // Predicated region
    $region30: #{a_call__.6} parent=1 // pred_check
      _
    $region31: #{a_call__.6} parent=1 // pred_check_branch
      %99 = sbr.rel (0) target = $region33
    $region32: #{a_call__.6} parent=1 // pred_region
      %s101 = ssub.s32 32768, 32768
      %102 = vsyncadd [#allocation15], %s101
      %s103 = sshll.u32 [#allocation14], 4
      %s104 = int_to_ptr.vmem [resolvable:$true] %s103
      %109 = dma.hbm_to_vmem [thread:$0]  %s7, 32768, %s104, [#allocation15], 512, 512, 32
    $region33: #{a_call__.6} parent=1 // pred_fallthru
      _
    // Predicated region
    $region34: #{a_call__.6} parent=1 // pred_check
      _
    $region35: #{a_call__.6} parent=1 // pred_check_branch
      %111 = sbr.rel (0) target = $region37
    $region36: #{a_call__.6} parent=1 // pred_region
      %s113 = ssub.s32 128, 128
      %114 = vsyncadd [#allocation15], %s113
      %s116 = sshll.u32 [#allocation16], 4
      %s117 = int_to_ptr.vmem [resolvable:$true] %s116
      %119 = dma.hbm_to_vmem [thread:$0]  %s8, 128, %s117, [#allocation15]
    $region37: #{a_call__.6} parent=1 // pred_fallthru
      _
    // Predicated region
    $region38: #{a_call__.6} parent=1 // pred_check
      _
    $region39: #{a_call__.6} parent=1 // pred_check_branch
      %121 = sbr.rel (0) target = $region41
    $region40: #{a_call__.6} parent=1 // pred_region
      %122 = dma.done [#allocation3], 2048
    $region41: #{a_call__.6} parent=1 // pred_fallthru
      _
    // Predicated region
    $region42: #{a_call__.6} parent=1 // pred_check
      _
    $region43: #{a_call__.6} parent=1 // pred_check_branch
      %124 = sbr.rel (0) target = $region45
    $region44: #{a_call__.6} parent=1 // pred_region
      %125 = dma.done [#allocation6], 2048
    $region45: #{a_call__.6} parent=1 // pred_fallthru
      _
    // Predicated region
    $region46: #{a_call__.6} parent=1 // pred_check
      _
    $region47: #{a_call__.6} parent=1 // pred_check_branch
      %127 = sbr.rel (0) target = $region49
    $region48: #{a_call__.6} parent=1 // pred_region
      %128 = dma.done [#allocation6], 4096
    $region49: #{a_call__.6} parent=1 // pred_fallthru
      _
    // Predicated region
    $region50: #{a_call__.6} parent=1 // pred_check
      _
    $region51: #{a_call__.6} parent=1 // pred_check_branch
      %130 = sbr.rel (0) target = $region53
    $region52: #{a_call__.6} parent=1 // pred_region
      %131 = dma.done [#allocation9], 128
    $region53: #{a_call__.6} parent=1 // pred_fallthru
      _
    // Predicated region
    $region54: #{a_call__.6} parent=1 // pred_check
      _
    $region55: #{a_call__.6} parent=1 // pred_check_branch
      %133 = sbr.rel (0) target = $region57
    $region56: #{a_call__.6} parent=1 // pred_region
      %134 = dma.done [#allocation9], 32
    $region57: #{a_call__.6} parent=1 // pred_fallthru
      _
    // Predicated region
    $region58: #{a_call__.6} parent=1 // pred_check
      _
    $region59: #{a_call__.6} parent=1 // pred_check_branch
      %136 = sbr.rel (0) target = $region61
    $region60: #{a_call__.6} parent=1 // pred_region
      %137 = dma.done [#allocation12], 8192
    $region61: #{a_call__.6} parent=1 // pred_fallthru
      _
    // Predicated region
    $region62: #{a_call__.6} parent=1 // pred_check
      _
    $region63: #{a_call__.6} parent=1 // pred_check_branch
      %139 = sbr.rel (0) target = $region65
    $region64: #{a_call__.6} parent=1 // pred_region
      %140 = dma.done [#allocation12], 64
    $region65: #{a_call__.6} parent=1 // pred_fallthru
      _
    // Predicated region
    $region66: #{a_call__.6} parent=1 // pred_check
      _
    $region67: #{a_call__.6} parent=1 // pred_check_branch
      %142 = sbr.rel (0) target = $region69
    $region68: #{a_call__.6} parent=1 // pred_region
      %143 = dma.done [#allocation15], 32768
    $region69: #{a_call__.6} parent=1 // pred_fallthru
      _
    // Predicated region
    $region70: #{a_call__.6} parent=1 // pred_check
      _
    $region71: #{a_call__.6} parent=1 // pred_check_branch
      %145 = sbr.rel (0) target = $region73
    $region72: #{a_call__.6} parent=1 // pred_region
      %146 = dma.done [#allocation15], 128
    $region73: #{a_call__.6} parent=1 // pred_fallthru
      _
    %v147 = vld [vmem:[#allocation10] sm:$0x3]
    %v148 = vld [vmem:[#allocation2] sm:$0xff]
    %v149 = vld [vmem:[#allocation2 + $0x8] sm:$0xff]
    %v150 = vld [vmem:[#allocation2 + $0x10] sm:$0xff]
    %v151 = vld [vmem:[#allocation2 + $0x18] sm:$0xff]
    %v152 = vld [vmem:[#allocation2 + $0x20] sm:$0xff]
    %v153 = vld [vmem:[#allocation2 + $0x28] sm:$0xff]
    %v154 = vld [vmem:[#allocation2 + $0x30] sm:$0xff]
    %v155 = vld [vmem:[#allocation2 + $0x38] sm:$0xff]
    %v156 = vld [vmem:[#allocation2 + $0x40] sm:$0xff]
    %v157 = vld [vmem:[#allocation2 + $0x48] sm:$0xff]
    %v158 = vld [vmem:[#allocation2 + $0x50] sm:$0xff]
    %v159 = vld [vmem:[#allocation2 + $0x58] sm:$0xff]
    %v160 = vld [vmem:[#allocation2 + $0x60] sm:$0xff]
    %v161 = vld [vmem:[#allocation2 + $0x68] sm:$0xff]
    %v162 = vld [vmem:[#allocation2 + $0x70] sm:$0xff]
    %v163 = vld [vmem:[#allocation2 + $0x78] sm:$0xff]
    %v164 = vld [vmem:[#allocation7] sm:$0xff]
    %v165 = vld [vmem:[#allocation7 + $0x8] sm:$0xff]
    %v166 = vld [vmem:[#allocation7 + $0x10] sm:$0xff]
    %v167 = vld [vmem:[#allocation7 + $0x18] sm:$0xff]
    %v168 = vld [vmem:[#allocation7 + $0x20] sm:$0xff]
    %v169 = vld [vmem:[#allocation7 + $0x28] sm:$0xff]
    %v170 = vld [vmem:[#allocation7 + $0x30] sm:$0xff]
    %v171 = vld [vmem:[#allocation7 + $0x38] sm:$0xff]
    %v172 = vld [vmem:[#allocation7 + $0x40] sm:$0xff]
    %v173 = vld [vmem:[#allocation7 + $0x48] sm:$0xff]
    %v174 = vld [vmem:[#allocation7 + $0x50] sm:$0xff]
    %v175 = vld [vmem:[#allocation7 + $0x58] sm:$0xff]
    %v176 = vld [vmem:[#allocation7 + $0x60] sm:$0xff]
    %v177 = vld [vmem:[#allocation7 + $0x68] sm:$0xff]
    %v178 = vld [vmem:[#allocation7 + $0x70] sm:$0xff]
    %v179 = vld [vmem:[#allocation7 + $0x78] sm:$0xff]
    %v180 = vld [vmem:[#allocation7 + $0x80] sm:$0xff]
    %v181 = vld [vmem:[#allocation7 + $0x88] sm:$0xff]
    %v182 = vld [vmem:[#allocation7 + $0x90] sm:$0xff]
    %v183 = vld [vmem:[#allocation7 + $0x98] sm:$0xff]
    %v184 = vld [vmem:[#allocation7 + $0xa0] sm:$0xff]
    %v185 = vld [vmem:[#allocation7 + $0xa8] sm:$0xff]
    %v186 = vld [vmem:[#allocation7 + $0xb0] sm:$0xff]
    %v187 = vld [vmem:[#allocation7 + $0xb8] sm:$0xff]
    %v188 = vld [vmem:[#allocation7 + $0xc0] sm:$0xff]
    %v189 = vld [vmem:[#allocation7 + $0xc8] sm:$0xff]
    %v190 = vld [vmem:[#allocation7 + $0xd0] sm:$0xff]
    %v191 = vld [vmem:[#allocation7 + $0xd8] sm:$0xff]
    %v192 = vld [vmem:[#allocation7 + $0xe0] sm:$0xff]
    %v193 = vld [vmem:[#allocation7 + $0xe8] sm:$0xff]
    %v194 = vld [vmem:[#allocation7 + $0xf0] sm:$0xff]
    %v195 = vld [vmem:[#allocation7 + $0xf8] sm:$0xff]
    %v197 = vlaneseq
    %v198 = vshrl.u32 %v197, 7
    %v199 = vsub.s32 0, %v198
    %v200 = vrot.slane %v147, %v199
    %v201 = vlaneseq
    %v202 = vshrl.u32 %v201, 7
    %v203 = vsub.s32 1, %v202
    %v204 = vrot.slane %v147, %v203
    %v223 = vunpack.c.l.b16 %v148
    %v224 = vunpack.c.h.b16 %v148
    %v225 = vunpack.c.l.b16 %v149
    %v226 = vunpack.c.h.b16 %v149
    %v227 = vunpack.c.l.b16 %v150
    %v228 = vunpack.c.h.b16 %v150
    %v229 = vunpack.c.l.b16 %v151
    %v230 = vunpack.c.h.b16 %v151
    %v231 = vunpack.c.l.b16 %v152
    %v232 = vunpack.c.h.b16 %v152
    %v233 = vunpack.c.l.b16 %v153
    %v234 = vunpack.c.h.b16 %v153
    %v235 = vunpack.c.l.b16 %v154
    %v236 = vunpack.c.h.b16 %v154
    %v237 = vunpack.c.l.b16 %v155
    %v238 = vunpack.c.h.b16 %v155
    %v239 = vunpack.c.l.b16 %v156
    %v240 = vunpack.c.h.b16 %v156
    %v241 = vunpack.c.l.b16 %v157
    %v242 = vunpack.c.h.b16 %v157
    %v243 = vunpack.c.l.b16 %v158
    %v244 = vunpack.c.h.b16 %v158
    %v245 = vunpack.c.l.b16 %v159
    %v246 = vunpack.c.h.b16 %v159
    %v247 = vunpack.c.l.b16 %v160
    %v248 = vunpack.c.h.b16 %v160
    %v249 = vunpack.c.l.b16 %v161
    %v250 = vunpack.c.h.b16 %v161
    %v251 = vunpack.c.l.b16 %v162
    %v252 = vunpack.c.h.b16 %v162
    %v253 = vunpack.c.l.b16 %v163
    %v254 = vunpack.c.h.b16 %v163
    %v255 = vpack.c.b16 %v225, %v223
    %v256 = vpack.c.b16 %v226, %v224
    %v257 = vpack.c.b16 %v229, %v227
    %v258 = vpack.c.b16 %v230, %v228
    %v259 = vpack.c.b16 %v233, %v231
    %v260 = vpack.c.b16 %v234, %v232
    %v261 = vpack.c.b16 %v237, %v235
    %v262 = vpack.c.b16 %v238, %v236
    %v263 = vpack.c.b16 %v241, %v239
    %v264 = vpack.c.b16 %v242, %v240
    %v265 = vpack.c.b16 %v245, %v243
    %v266 = vpack.c.b16 %v246, %v244
    %v267 = vpack.c.b16 %v249, %v247
    %v268 = vpack.c.b16 %v250, %v248
    %v269 = vpack.c.b16 %v253, %v251
    %v270 = vpack.c.b16 %v254, %v252
    %v319 = vunpack.c.l.b16 %v164
    %v320 = vunpack.c.h.b16 %v164
    %v321 = vunpack.c.l.b16 %v165
    %v322 = vunpack.c.h.b16 %v165
    %v323 = vunpack.c.l.b16 %v166
    %v324 = vunpack.c.h.b16 %v166
    %v325 = vunpack.c.l.b16 %v167
    %v326 = vunpack.c.h.b16 %v167
    %v327 = vunpack.c.l.b16 %v168
    %v328 = vunpack.c.h.b16 %v168
    %v329 = vunpack.c.l.b16 %v169
    %v330 = vunpack.c.h.b16 %v169
    %v331 = vunpack.c.l.b16 %v170
    %v332 = vunpack.c.h.b16 %v170
    %v333 = vunpack.c.l.b16 %v171
    %v334 = vunpack.c.h.b16 %v171
    %v335 = vunpack.c.l.b16 %v172
    %v336 = vunpack.c.h.b16 %v172
    %v337 = vunpack.c.l.b16 %v173
    %v338 = vunpack.c.h.b16 %v173
    %v339 = vunpack.c.l.b16 %v174
    %v340 = vunpack.c.h.b16 %v174
    %v341 = vunpack.c.l.b16 %v175
    %v342 = vunpack.c.h.b16 %v175
    %v343 = vunpack.c.l.b16 %v176
    %v344 = vunpack.c.h.b16 %v176
    %v345 = vunpack.c.l.b16 %v177
    %v346 = vunpack.c.h.b16 %v177
    %v347 = vunpack.c.l.b16 %v178
    %v348 = vunpack.c.h.b16 %v178
    %v349 = vunpack.c.l.b16 %v179
    %v350 = vunpack.c.h.b16 %v179
    %v351 = vunpack.c.l.b16 %v180
    %v352 = vunpack.c.h.b16 %v180
    %v353 = vunpack.c.l.b16 %v181
    %v354 = vunpack.c.h.b16 %v181
    %v355 = vunpack.c.l.b16 %v182
    %v356 = vunpack.c.h.b16 %v182
    %v357 = vunpack.c.l.b16 %v183
    %v358 = vunpack.c.h.b16 %v183
    %v359 = vunpack.c.l.b16 %v184
    %v360 = vunpack.c.h.b16 %v184
    %v361 = vunpack.c.l.b16 %v185
    %v362 = vunpack.c.h.b16 %v185
    %v363 = vunpack.c.l.b16 %v186
    %v364 = vunpack.c.h.b16 %v186
    %v365 = vunpack.c.l.b16 %v187
    %v366 = vunpack.c.h.b16 %v187
    %v367 = vunpack.c.l.b16 %v188
    %v368 = vunpack.c.h.b16 %v188
    %v369 = vunpack.c.l.b16 %v189
    %v370 = vunpack.c.h.b16 %v189
    %v371 = vunpack.c.l.b16 %v190
    %v372 = vunpack.c.h.b16 %v190
    %v373 = vunpack.c.l.b16 %v191
    %v374 = vunpack.c.h.b16 %v191
    %v375 = vunpack.c.l.b16 %v192
    %v376 = vunpack.c.h.b16 %v192
    %v377 = vunpack.c.l.b16 %v193
    %v378 = vunpack.c.h.b16 %v193
    %v379 = vunpack.c.l.b16 %v194
    %v380 = vunpack.c.h.b16 %v194
    %v381 = vunpack.c.l.b16 %v195
    %v382 = vunpack.c.h.b16 %v195
    %v383 = vpack.c.b16 %v321, %v319
    %v384 = vpack.c.b16 %v322, %v320
    %v385 = vpack.c.b16 %v325, %v323
    %v386 = vpack.c.b16 %v326, %v324
    %v387 = vpack.c.b16 %v329, %v327
    %v388 = vpack.c.b16 %v330, %v328
    %v389 = vpack.c.b16 %v333, %v331
    %v390 = vpack.c.b16 %v334, %v332
    %v391 = vpack.c.b16 %v337, %v335
    %v392 = vpack.c.b16 %v338, %v336
    %v393 = vpack.c.b16 %v341, %v339
    %v394 = vpack.c.b16 %v342, %v340
    %v395 = vpack.c.b16 %v345, %v343
    %v396 = vpack.c.b16 %v346, %v344
    %v397 = vpack.c.b16 %v349, %v347
    %v398 = vpack.c.b16 %v350, %v348
    %v399 = vpack.c.b16 %v353, %v351
    %v400 = vpack.c.b16 %v354, %v352
    %v401 = vpack.c.b16 %v357, %v355
    %v402 = vpack.c.b16 %v358, %v356
    %v403 = vpack.c.b16 %v361, %v359
    %v404 = vpack.c.b16 %v362, %v360
    %v405 = vpack.c.b16 %v365, %v363
    %v406 = vpack.c.b16 %v366, %v364
    %v407 = vpack.c.b16 %v369, %v367
    %v408 = vpack.c.b16 %v370, %v368
    %v409 = vpack.c.b16 %v373, %v371
    %v410 = vpack.c.b16 %v374, %v372
    %v411 = vpack.c.b16 %v377, %v375
    %v412 = vpack.c.b16 %v378, %v376
    %v413 = vpack.c.b16 %v381, %v379
    %v414 = vpack.c.b16 %v382, %v380
    %447 = vmatprep.subr.bf16.mxu0 %v384
    %448 = vmatpush1.bf16.msra.mxu0 %v383
    %449 = vmatprep.subr.bf16.mxu0 %v386
    %450 = vmatpush1.bf16.msra.mxu0 %v385
    %451 = vmatprep.subr.bf16.mxu0 %v388
    %452 = vmatpush1.bf16.msra.mxu0 %v387
    %453 = vmatprep.subr.bf16.mxu0 %v390
    %454 = vmatpush1.bf16.msra.mxu0 %v389
    %455 = vmatprep.subr.bf16.mxu0 %v392
    %456 = vmatpush1.bf16.msra.mxu0 %v391
    %457 = vmatprep.subr.bf16.mxu0 %v394
    %458 = vmatpush1.bf16.msra.mxu0 %v393
    %459 = vmatprep.subr.bf16.mxu0 %v396
    %460 = vmatpush1.bf16.msra.mxu0 %v395
    %461 = vmatprep.subr.bf16.mxu0 %v398
    %462 = vmatpush1.bf16.msra.mxu0 %v397
    %463 = vmatprep.subr.bf16.mxu0 %v400
    %464 = vmatpush1.bf16.msra.mxu0 %v399
    %465 = vmatprep.subr.bf16.mxu0 %v402
    %466 = vmatpush1.bf16.msra.mxu0 %v401
    %467 = vmatprep.subr.bf16.mxu0 %v404
    %468 = vmatpush1.bf16.msra.mxu0 %v403
    %469 = vmatprep.subr.bf16.mxu0 %v406
    %470 = vmatpush1.bf16.msra.mxu0 %v405
    %471 = vmatprep.subr.bf16.mxu0 %v408
    %472 = vmatpush1.bf16.msra.mxu0 %v407
    %473 = vmatprep.subr.bf16.mxu0 %v410
    %474 = vmatpush1.bf16.msra.mxu0 %v409
    %475 = vmatprep.subr.bf16.mxu0 %v412
    %476 = vmatpush1.bf16.msra.mxu0 %v411
    %477 = vmatprep.subr.bf16.mxu0 %v414
    %478 = vmatpush1.bf16.msra.mxu0 %v413
    %479 = vmatprep.mubr.bf16.mxu0 %v256
    %480 = vmatmul.mubr.bf16.gmra.mrb[0].mxu0 %v255
    %v481 = vpop.f32.mrb[0].mxu0
    %v482 = vadd.f32 %v200, %v481
    %v483 = vpop.f32.mrb[0].mxu0
    %v484 = vadd.f32 %v204, %v483
    %v485 = vpop.f32.mrb[0].mxu0
    %v486 = vadd.f32 %v200, %v485
    %v487 = vpop.f32.mrb[0].mxu0
    %v488 = vadd.f32 %v204, %v487
    %489 = vmatprep.mubr.bf16.mxu0 %v258
    %490 = vmatmul.mubr.bf16.gmra.mrb[0].mxu0 %v257
    %v491 = vpop.f32.mrb[0].mxu0
    %v492 = vadd.f32 %v200, %v491
    %v493 = vpop.f32.mrb[0].mxu0
    %v494 = vadd.f32 %v204, %v493
    %v495 = vpop.f32.mrb[0].mxu0
    %v496 = vadd.f32 %v200, %v495
    %v497 = vpop.f32.mrb[0].mxu0
    %v498 = vadd.f32 %v204, %v497
    %499 = vmatprep.mubr.bf16.mxu0 %v260
    %500 = vmatmul.mubr.bf16.gmra.mrb[0].mxu0 %v259
    %v501 = vpop.f32.mrb[0].mxu0
    %v502 = vadd.f32 %v200, %v501
    %v503 = vpop.f32.mrb[0].mxu0
    %v504 = vadd.f32 %v204, %v503
    %v505 = vpop.f32.mrb[0].mxu0
    %v506 = vadd.f32 %v200, %v505
    %v507 = vpop.f32.mrb[0].mxu0
    %v508 = vadd.f32 %v204, %v507
    %509 = vmatprep.mubr.bf16.mxu0 %v262
    %510 = vmatmul.mubr.bf16.gmra.mrb[0].mxu0 %v261
    %v511 = vpop.f32.mrb[0].mxu0
    %v512 = vadd.f32 %v200, %v511
    %v513 = vpop.f32.mrb[0].mxu0
    %v514 = vadd.f32 %v204, %v513
    %v515 = vpop.f32.mrb[0].mxu0
    %v516 = vadd.f32 %v200, %v515
    %v517 = vpop.f32.mrb[0].mxu0
    %v518 = vadd.f32 %v204, %v517
    %519 = vmatprep.mubr.bf16.mxu0 %v264
    %520 = vmatmul.mubr.bf16.gmra.mrb[0].mxu0 %v263
    %v521 = vpop.f32.mrb[0].mxu0
    %v522 = vadd.f32 %v200, %v521
    %v523 = vpop.f32.mrb[0].mxu0
    %v524 = vadd.f32 %v204, %v523
    %v525 = vpop.f32.mrb[0].mxu0
    %v526 = vadd.f32 %v200, %v525
    %v527 = vpop.f32.mrb[0].mxu0
    %v528 = vadd.f32 %v204, %v527
    %529 = vmatprep.mubr.bf16.mxu0 %v266
    %530 = vmatmul.mubr.bf16.gmra.mrb[0].mxu0 %v265
    %v531 = vpop.f32.mrb[0].mxu0
    %v532 = vadd.f32 %v200, %v531
    %v533 = vpop.f32.mrb[0].mxu0
    %v534 = vadd.f32 %v204, %v533
    %v535 = vpop.f32.mrb[0].mxu0
    %v536 = vadd.f32 %v200, %v535
    %v537 = vpop.f32.mrb[0].mxu0
    %v538 = vadd.f32 %v204, %v537
    %539 = vmatprep.mubr.bf16.mxu0 %v268
    %540 = vmatmul.mubr.bf16.gmra.mrb[0].mxu0 %v267
    %v541 = vpop.f32.mrb[0].mxu0
    %v542 = vadd.f32 %v200, %v541
    %v543 = vpop.f32.mrb[0].mxu0
    %v544 = vadd.f32 %v204, %v543
    %v545 = vpop.f32.mrb[0].mxu0
    %v546 = vadd.f32 %v200, %v545
    %v547 = vpop.f32.mrb[0].mxu0
    %v548 = vadd.f32 %v204, %v547
    %549 = vmatprep.mubr.bf16.mxu0 %v270
    %550 = vmatmul.mubr.bf16.gmra.mrb[0].mxu0 %v269
    %v551 = vpop.f32.mrb[0].mxu0
    %v552 = vadd.f32 %v200, %v551
    %v553 = vpop.f32.mrb[0].mxu0
    %v554 = vadd.f32 %v204, %v553
    %v555 = vpop.f32.mrb[0].mxu0
    %v556 = vadd.f32 %v200, %v555
    %v557 = vpop.f32.mrb[0].mxu0
    %v558 = vadd.f32 %v204, %v557
    %559 = vdwg.mxu0
    %v560 = vld [vmem:[#allocation5] sm:$0xff]
    %v561 = vld [vmem:[#allocation5 + $0x8] sm:$0xff]
    %v562 = vld [vmem:[#allocation5 + $0x10] sm:$0xff]
    %v563 = vld [vmem:[#allocation5 + $0x18] sm:$0xff]
    %v564 = vld [vmem:[#allocation5 + $0x20] sm:$0xff]
    %v565 = vld [vmem:[#allocation5 + $0x28] sm:$0xff]
    %v566 = vld [vmem:[#allocation5 + $0x30] sm:$0xff]
    %v567 = vld [vmem:[#allocation5 + $0x38] sm:$0xff]
    %v568 = vld [vmem:[#allocation5 + $0x40] sm:$0xff]
    %v569 = vld [vmem:[#allocation5 + $0x48] sm:$0xff]
    %v570 = vld [vmem:[#allocation5 + $0x50] sm:$0xff]
    %v571 = vld [vmem:[#allocation5 + $0x58] sm:$0xff]
    %v572 = vld [vmem:[#allocation5 + $0x60] sm:$0xff]
    %v573 = vld [vmem:[#allocation5 + $0x68] sm:$0xff]
    %v574 = vld [vmem:[#allocation5 + $0x70] sm:$0xff]
    %v575 = vld [vmem:[#allocation5 + $0x78] sm:$0xff]
    %v576 = vld [vmem:[#allocation8] sm:$0x77]
    %578 = vset.pattern.permute.xlu0 0
    %579 = vperm.xlu0 %578, %v560
    %v580 = vpop.permute.xlu0 %579
    %583 = vset.pattern.permute.xlu0 0
    %584 = vperm.xlu0 %583, %v561
    %v585 = vpop.permute.xlu0 %584
    %588 = vset.pattern.permute.xlu0 0
    %589 = vperm.xlu0 %588, %v562
    %v590 = vpop.permute.xlu0 %589
    %593 = vset.pattern.permute.xlu0 0
    %594 = vperm.xlu0 %593, %v563
    %v595 = vpop.permute.xlu0 %594
    %598 = vset.pattern.permute.xlu0 0
    %599 = vperm.xlu0 %598, %v564
    %v600 = vpop.permute.xlu0 %599
    %603 = vset.pattern.permute.xlu0 0
    %604 = vperm.xlu0 %603, %v565
    %v605 = vpop.permute.xlu0 %604
    %608 = vset.pattern.permute.xlu0 0
    %609 = vperm.xlu0 %608, %v566
    %v610 = vpop.permute.xlu0 %609
    %613 = vset.pattern.permute.xlu0 0
    %614 = vperm.xlu0 %613, %v567
    %v615 = vpop.permute.xlu0 %614
    %618 = vset.pattern.permute.xlu0 0
    %619 = vperm.xlu0 %618, %v568
    %v620 = vpop.permute.xlu0 %619
    %623 = vset.pattern.permute.xlu0 0
    %624 = vperm.xlu0 %623, %v569
    %v625 = vpop.permute.xlu0 %624
    %628 = vset.pattern.permute.xlu0 0
    %629 = vperm.xlu0 %628, %v570
    %v630 = vpop.permute.xlu0 %629
    %633 = vset.pattern.permute.xlu0 0
    %634 = vperm.xlu0 %633, %v571
    %v635 = vpop.permute.xlu0 %634
    %638 = vset.pattern.permute.xlu0 0
    %639 = vperm.xlu0 %638, %v572
    %v640 = vpop.permute.xlu0 %639
    %643 = vset.pattern.permute.xlu0 0
    %644 = vperm.xlu0 %643, %v573
    %v645 = vpop.permute.xlu0 %644
    %648 = vset.pattern.permute.xlu0 0
    %649 = vperm.xlu0 %648, %v574
    %v650 = vpop.permute.xlu0 %649
    %653 = vset.pattern.permute.xlu0 0
    %654 = vperm.xlu0 %653, %v575
    %v655 = vpop.permute.xlu0 %654
    %v658 = vlaneseq
    %v659 = vshrl.u32 %v658, 7
    %v660 = vsub.s32 0, %v659
    %v661 = vrot.slane %v576, %v660
    %v662 = vlaneseq
    %v663 = vshrl.u32 %v662, 7
    %v664 = vsub.s32 4, %v663
    %v665 = vrot.slane %v576, %v664
    %v668 = vlaneseq
    %v669 = vshrl.u32 %v668, 7
    %v670 = vsub.s32 0, %v669
    %v671 = vrot.slane %v661, %v670
    %v672 = vlaneseq
    %v673 = vshrl.u32 %v672, 7
    %v674 = vsub.s32 0, %v673
    %v675 = vrot.slane %v665, %v674
    %v676 = vmul.f32 %v580, %v671
    %v677 = vmul.f32 %v580, %v675
    %v678 = vmul.f32 %v585, %v671
    %v679 = vmul.f32 %v585, %v675
    %v680 = vmul.f32 %v590, %v671
    %v681 = vmul.f32 %v590, %v675
    %v682 = vmul.f32 %v595, %v671
    %v683 = vmul.f32 %v595, %v675
    %v684 = vmul.f32 %v600, %v671
    %v685 = vmul.f32 %v600, %v675
    %v686 = vmul.f32 %v605, %v671
    %v687 = vmul.f32 %v605, %v675
    %v688 = vmul.f32 %v610, %v671
    %v689 = vmul.f32 %v610, %v675
    %v690 = vmul.f32 %v615, %v671
    %v691 = vmul.f32 %v615, %v675
    %v692 = vmul.f32 %v620, %v671
    %v693 = vmul.f32 %v620, %v675
    %v694 = vmul.f32 %v625, %v671
    %v695 = vmul.f32 %v625, %v675
    %v696 = vmul.f32 %v630, %v671
    %v697 = vmul.f32 %v630, %v675
    %v698 = vmul.f32 %v635, %v671
    %v699 = vmul.f32 %v635, %v675
    %v700 = vmul.f32 %v640, %v671
    %v701 = vmul.f32 %v640, %v675
    %v702 = vmul.f32 %v645, %v671
    %v703 = vmul.f32 %v645, %v675
    %v704 = vmul.f32 %v650, %v671
    %v705 = vmul.f32 %v650, %v675
    %v706 = vmul.f32 %v655, %v671
    %v707 = vmul.f32 %v655, %v675
    %v708 = vadd.f32 %v482, %v676
    %v709 = vadd.f32 %v484, %v677
    %v710 = vadd.f32 %v486, %v678
    %v711 = vadd.f32 %v488, %v679
    %v712 = vadd.f32 %v492, %v680
    %v713 = vadd.f32 %v494, %v681
    %v714 = vadd.f32 %v496, %v682
    %v715 = vadd.f32 %v498, %v683
    %v716 = vadd.f32 %v502, %v684
    %v717 = vadd.f32 %v504, %v685
    %v718 = vadd.f32 %v506, %v686
    %v719 = vadd.f32 %v508, %v687
    %v720 = vadd.f32 %v512, %v688
    %v721 = vadd.f32 %v514, %v689
    %v722 = vadd.f32 %v516, %v690
    %v723 = vadd.f32 %v518, %v691
    %v724 = vadd.f32 %v522, %v692
    %v725 = vadd.f32 %v524, %v693
    %v726 = vadd.f32 %v526, %v694
    %v727 = vadd.f32 %v528, %v695
    %v728 = vadd.f32 %v532, %v696
    %v729 = vadd.f32 %v534, %v697
    %v730 = vadd.f32 %v536, %v698
    %v731 = vadd.f32 %v538, %v699
    %v732 = vadd.f32 %v542, %v700
    %v733 = vadd.f32 %v544, %v701
    %v734 = vadd.f32 %v546, %v702
    %v735 = vadd.f32 %v548, %v703
    %v736 = vadd.f32 %v552, %v704
    %v737 = vadd.f32 %v554, %v705
    %v738 = vadd.f32 %v556, %v706
    %v739 = vadd.f32 %v558, %v707
    %740 = vset.pattern.permute.xlu0 1
    %741 = vperm.xlu0 %740, %v560
    %v742 = vpop.permute.xlu0 %741
    %744 = vset.pattern.permute.xlu0 1
    %745 = vperm.xlu0 %744, %v561
    %v746 = vpop.permute.xlu0 %745
    %748 = vset.pattern.permute.xlu0 1
    %749 = vperm.xlu0 %748, %v562
    %v750 = vpop.permute.xlu0 %749
    %752 = vset.pattern.permute.xlu0 1
    %753 = vperm.xlu0 %752, %v563
    %v754 = vpop.permute.xlu0 %753
    %756 = vset.pattern.permute.xlu0 1
    %757 = vperm.xlu0 %756, %v564
    %v758 = vpop.permute.xlu0 %757
    %760 = vset.pattern.permute.xlu0 1
    %761 = vperm.xlu0 %760, %v565
    %v762 = vpop.permute.xlu0 %761
    %764 = vset.pattern.permute.xlu0 1
    %765 = vperm.xlu0 %764, %v566
    %v766 = vpop.permute.xlu0 %765
    %768 = vset.pattern.permute.xlu0 1
    %769 = vperm.xlu0 %768, %v567
    %v770 = vpop.permute.xlu0 %769
    %772 = vset.pattern.permute.xlu0 1
    %773 = vperm.xlu0 %772, %v568
    %v774 = vpop.permute.xlu0 %773
    %776 = vset.pattern.permute.xlu0 1
    %777 = vperm.xlu0 %776, %v569
    %v778 = vpop.permute.xlu0 %777
    %780 = vset.pattern.permute.xlu0 1
    %781 = vperm.xlu0 %780, %v570
    %v782 = vpop.permute.xlu0 %781
    %784 = vset.pattern.permute.xlu0 1
    %785 = vperm.xlu0 %784, %v571
    %v786 = vpop.permute.xlu0 %785
    %788 = vset.pattern.permute.xlu0 1
    %789 = vperm.xlu0 %788, %v572
    %v790 = vpop.permute.xlu0 %789
    %792 = vset.pattern.permute.xlu0 1
    %793 = vperm.xlu0 %792, %v573
    %v794 = vpop.permute.xlu0 %793
    %796 = vset.pattern.permute.xlu0 1
    %797 = vperm.xlu0 %796, %v574
    %v798 = vpop.permute.xlu0 %797
    %800 = vset.pattern.permute.xlu0 1
    %801 = vperm.xlu0 %800, %v575
    %v802 = vpop.permute.xlu0 %801
    %v804 = vlaneseq
    %v805 = vshrl.u32 %v804, 7
    %v806 = vsub.s32 1, %v805
    %v807 = vrot.slane %v576, %v806
    %v808 = vlaneseq
    %v809 = vshrl.u32 %v808, 7
    %v810 = vsub.s32 5, %v809
    %v811 = vrot.slane %v576, %v810
    %v814 = vlaneseq
    %v815 = vshrl.u32 %v814, 7
    %v816 = vsub.s32 1, %v815
    %v817 = vrot.slane %v807, %v816
    %v818 = vlaneseq
    %v819 = vshrl.u32 %v818, 7
    %v820 = vsub.s32 1, %v819
    %v821 = vrot.slane %v811, %v820
    %v822 = vmul.f32 %v742, %v817
    %v823 = vmul.f32 %v742, %v821
    %v824 = vmul.f32 %v746, %v817
    %v825 = vmul.f32 %v746, %v821
    %v826 = vmul.f32 %v750, %v817
    %v827 = vmul.f32 %v750, %v821
    %v828 = vmul.f32 %v754, %v817
    %v829 = vmul.f32 %v754, %v821
    %v830 = vmul.f32 %v758, %v817
    %v831 = vmul.f32 %v758, %v821
    %v832 = vmul.f32 %v762, %v817
    %v833 = vmul.f32 %v762, %v821
    %v834 = vmul.f32 %v766, %v817
    %v835 = vmul.f32 %v766, %v821
    %v836 = vmul.f32 %v770, %v817
    %v837 = vmul.f32 %v770, %v821
    %v838 = vmul.f32 %v774, %v817
    %v839 = vmul.f32 %v774, %v821
    %v840 = vmul.f32 %v778, %v817
    %v841 = vmul.f32 %v778, %v821
    %v842 = vmul.f32 %v782, %v817
    %v843 = vmul.f32 %v782, %v821
    %v844 = vmul.f32 %v786, %v817
    %v845 = vmul.f32 %v786, %v821
    %v846 = vmul.f32 %v790, %v817
    %v847 = vmul.f32 %v790, %v821
    %v848 = vmul.f32 %v794, %v817
    %v849 = vmul.f32 %v794, %v821
    %v850 = vmul.f32 %v798, %v817
    %v851 = vmul.f32 %v798, %v821
    %v852 = vmul.f32 %v802, %v817
    %v853 = vmul.f32 %v802, %v821
    %v854 = vadd.f32 %v708, %v822
    %v855 = vadd.f32 %v709, %v823
    %v856 = vadd.f32 %v710, %v824
    %v857 = vadd.f32 %v711, %v825
    %v858 = vadd.f32 %v712, %v826
    %v859 = vadd.f32 %v713, %v827
    %v860 = vadd.f32 %v714, %v828
    %v861 = vadd.f32 %v715, %v829
    %v862 = vadd.f32 %v716, %v830
    %v863 = vadd.f32 %v717, %v831
    %v864 = vadd.f32 %v718, %v832
    %v865 = vadd.f32 %v719, %v833
    %v866 = vadd.f32 %v720, %v834
    %v867 = vadd.f32 %v721, %v835
    %v868 = vadd.f32 %v722, %v836
    %v869 = vadd.f32 %v723, %v837
    %v870 = vadd.f32 %v724, %v838
    %v871 = vadd.f32 %v725, %v839
    %v872 = vadd.f32 %v726, %v840
    %v873 = vadd.f32 %v727, %v841
    %v874 = vadd.f32 %v728, %v842
    %v875 = vadd.f32 %v729, %v843
    %v876 = vadd.f32 %v730, %v844
    %v877 = vadd.f32 %v731, %v845
    %v878 = vadd.f32 %v732, %v846
    %v879 = vadd.f32 %v733, %v847
    %v880 = vadd.f32 %v734, %v848
    %v881 = vadd.f32 %v735, %v849
    %v882 = vadd.f32 %v736, %v850
    %v883 = vadd.f32 %v737, %v851
    %v884 = vadd.f32 %v738, %v852
    %v885 = vadd.f32 %v739, %v853
    %886 = vset.pattern.permute.xlu0 2
    %887 = vperm.xlu0 %886, %v560
    %v888 = vpop.permute.xlu0 %887
    %890 = vset.pattern.permute.xlu0 2
    %891 = vperm.xlu0 %890, %v561
    %v892 = vpop.permute.xlu0 %891
    %894 = vset.pattern.permute.xlu0 2
    %895 = vperm.xlu0 %894, %v562
    %v896 = vpop.permute.xlu0 %895
    %898 = vset.pattern.permute.xlu0 2
    %899 = vperm.xlu0 %898, %v563
    %v900 = vpop.permute.xlu0 %899
    %902 = vset.pattern.permute.xlu0 2
    %903 = vperm.xlu0 %902, %v564
    %v904 = vpop.permute.xlu0 %903
    %906 = vset.pattern.permute.xlu0 2
    %907 = vperm.xlu0 %906, %v565
    %v908 = vpop.permute.xlu0 %907
    %910 = vset.pattern.permute.xlu0 2
    %911 = vperm.xlu0 %910, %v566
    %v912 = vpop.permute.xlu0 %911
    %914 = vset.pattern.permute.xlu0 2
    %915 = vperm.xlu0 %914, %v567
    %v916 = vpop.permute.xlu0 %915
    %918 = vset.pattern.permute.xlu0 2
    %919 = vperm.xlu0 %918, %v568
    %v920 = vpop.permute.xlu0 %919
    %922 = vset.pattern.permute.xlu0 2
    %923 = vperm.xlu0 %922, %v569
    %v924 = vpop.permute.xlu0 %923
    %926 = vset.pattern.permute.xlu0 2
    %927 = vperm.xlu0 %926, %v570
    %v928 = vpop.permute.xlu0 %927
    %930 = vset.pattern.permute.xlu0 2
    %931 = vperm.xlu0 %930, %v571
    %v932 = vpop.permute.xlu0 %931
    %934 = vset.pattern.permute.xlu0 2
    %935 = vperm.xlu0 %934, %v572
    %v936 = vpop.permute.xlu0 %935
    %938 = vset.pattern.permute.xlu0 2
    %939 = vperm.xlu0 %938, %v573
    %v940 = vpop.permute.xlu0 %939
    %942 = vset.pattern.permute.xlu0 2
    %943 = vperm.xlu0 %942, %v574
    %v944 = vpop.permute.xlu0 %943
    %946 = vset.pattern.permute.xlu0 2
    %947 = vperm.xlu0 %946, %v575
    %v948 = vpop.permute.xlu0 %947
    %v950 = vlaneseq
    %v951 = vshrl.u32 %v950, 7
    %v952 = vsub.s32 2, %v951
    %v953 = vrot.slane %v576, %v952
    %v954 = vlaneseq
    %v955 = vshrl.u32 %v954, 7
    %v956 = vsub.s32 6, %v955
    %v957 = vrot.slane %v576, %v956
    %v960 = vlaneseq
    %v961 = vshrl.u32 %v960, 7
    %v962 = vsub.s32 2, %v961
    %v963 = vrot.slane %v953, %v962
    %v964 = vlaneseq
    %v965 = vshrl.u32 %v964, 7
    %v966 = vsub.s32 2, %v965
    %v967 = vrot.slane %v957, %v966
    %v968 = vmul.f32 %v888, %v963
    %v969 = vmul.f32 %v888, %v967
    %v970 = vmul.f32 %v892, %v963
    %v971 = vmul.f32 %v892, %v967
    %v972 = vmul.f32 %v896, %v963
    %v973 = vmul.f32 %v896, %v967
    %v974 = vmul.f32 %v900, %v963
    %v975 = vmul.f32 %v900, %v967
    %v976 = vmul.f32 %v904, %v963
    %v977 = vmul.f32 %v904, %v967
    %v978 = vmul.f32 %v908, %v963
    %v979 = vmul.f32 %v908, %v967
    %v980 = vmul.f32 %v912, %v963
    %v981 = vmul.f32 %v912, %v967
    %v982 = vmul.f32 %v916, %v963
    %v983 = vmul.f32 %v916, %v967
    %v984 = vmul.f32 %v920, %v963
    %v985 = vmul.f32 %v920, %v967
    %v986 = vmul.f32 %v924, %v963
    %v987 = vmul.f32 %v924, %v967
    %v988 = vmul.f32 %v928, %v963
    %v989 = vmul.f32 %v928, %v967
    %v990 = vmul.f32 %v932, %v963
    %v991 = vmul.f32 %v932, %v967
    %v992 = vmul.f32 %v936, %v963
    %v993 = vmul.f32 %v936, %v967
    %v994 = vmul.f32 %v940, %v963
    %v995 = vmul.f32 %v940, %v967
    %v996 = vmul.f32 %v944, %v963
    %v997 = vmul.f32 %v944, %v967
    %v998 = vmul.f32 %v948, %v963
    %v999 = vmul.f32 %v948, %v967
    %v1000 = vadd.f32 %v854, %v968
    %v1001 = vadd.f32 %v855, %v969
    %v1002 = vadd.f32 %v856, %v970
    %v1003 = vadd.f32 %v857, %v971
    %v1004 = vadd.f32 %v858, %v972
    %v1005 = vadd.f32 %v859, %v973
    %v1006 = vadd.f32 %v860, %v974
    %v1007 = vadd.f32 %v861, %v975
    %v1008 = vadd.f32 %v862, %v976
    %v1009 = vadd.f32 %v863, %v977
    %v1010 = vadd.f32 %v864, %v978
    %v1011 = vadd.f32 %v865, %v979
    %v1012 = vadd.f32 %v866, %v980
    %v1013 = vadd.f32 %v867, %v981
    %v1014 = vadd.f32 %v868, %v982
    %v1015 = vadd.f32 %v869, %v983
    %v1016 = vadd.f32 %v870, %v984
    %v1017 = vadd.f32 %v871, %v985
    %v1018 = vadd.f32 %v872, %v986
    %v1019 = vadd.f32 %v873, %v987
    %v1020 = vadd.f32 %v874, %v988
    %v1021 = vadd.f32 %v875, %v989
    %v1022 = vadd.f32 %v876, %v990
    %v1023 = vadd.f32 %v877, %v991
    %v1024 = vadd.f32 %v878, %v992
    %v1025 = vadd.f32 %v879, %v993
    %v1026 = vadd.f32 %v880, %v994
    %v1027 = vadd.f32 %v881, %v995
    %v1028 = vadd.f32 %v882, %v996
    %v1029 = vadd.f32 %v883, %v997
    %v1030 = vadd.f32 %v884, %v998
    %v1031 = vadd.f32 %v885, %v999
    %v1032 = vmax.f32 %v1000, 0.0
    %v1033 = vmax.f32 %v1001, 0.0
    %v1034 = vmax.f32 %v1002, 0.0
    %v1035 = vmax.f32 %v1003, 0.0
    %v1036 = vmax.f32 %v1004, 0.0
    %v1037 = vmax.f32 %v1005, 0.0
    %v1038 = vmax.f32 %v1006, 0.0
    %v1039 = vmax.f32 %v1007, 0.0
    %v1040 = vmax.f32 %v1008, 0.0
    %v1041 = vmax.f32 %v1009, 0.0
    %v1042 = vmax.f32 %v1010, 0.0
    %v1043 = vmax.f32 %v1011, 0.0
    %v1044 = vmax.f32 %v1012, 0.0
    %v1045 = vmax.f32 %v1013, 0.0
    %v1046 = vmax.f32 %v1014, 0.0
    %v1047 = vmax.f32 %v1015, 0.0
    %v1048 = vmax.f32 %v1016, 0.0
    %v1049 = vmax.f32 %v1017, 0.0
    %v1050 = vmax.f32 %v1018, 0.0
    %v1051 = vmax.f32 %v1019, 0.0
    %v1052 = vmax.f32 %v1020, 0.0
    %v1053 = vmax.f32 %v1021, 0.0
    %v1054 = vmax.f32 %v1022, 0.0
    %v1055 = vmax.f32 %v1023, 0.0
    %v1056 = vmax.f32 %v1024, 0.0
    %v1057 = vmax.f32 %v1025, 0.0
    %v1058 = vmax.f32 %v1026, 0.0
    %v1059 = vmax.f32 %v1027, 0.0
    %v1060 = vmax.f32 %v1028, 0.0
    %v1061 = vmax.f32 %v1029, 0.0
    %v1062 = vmax.f32 %v1030, 0.0
    %v1063 = vmax.f32 %v1031, 0.0
    %v1064 = vpack.c.bf16 %v1034, %v1032
    %v1065 = vpack.c.bf16 %v1035, %v1033
    %v1066 = vpack.c.bf16 %v1038, %v1036
    %v1067 = vpack.c.bf16 %v1039, %v1037
    %v1068 = vpack.c.bf16 %v1042, %v1040
    %v1069 = vpack.c.bf16 %v1043, %v1041
    %v1070 = vpack.c.bf16 %v1046, %v1044
    %v1071 = vpack.c.bf16 %v1047, %v1045
    %v1072 = vpack.c.bf16 %v1050, %v1048
    %v1073 = vpack.c.bf16 %v1051, %v1049
    %v1074 = vpack.c.bf16 %v1054, %v1052
    %v1075 = vpack.c.bf16 %v1055, %v1053
    %v1076 = vpack.c.bf16 %v1058, %v1056
    %v1077 = vpack.c.bf16 %v1059, %v1057
    %v1078 = vpack.c.bf16 %v1062, %v1060
    %v1079 = vpack.c.bf16 %v1063, %v1061
    %v1080 = vld [vmem:[#allocation11] sm:$0xff]
    %v1081 = vld [vmem:[#allocation11 + $0x8] sm:$0xff]
    %v1082 = vld [vmem:[#allocation11 + $0x10] sm:$0xff]
    %v1083 = vld [vmem:[#allocation11 + $0x18] sm:$0xff]
    %v1084 = vld [vmem:[#allocation11 + $0x20] sm:$0xff]
    %v1085 = vld [vmem:[#allocation11 + $0x28] sm:$0xff]
    %v1086 = vld [vmem:[#allocation11 + $0x30] sm:$0xff]
    %v1087 = vld [vmem:[#allocation11 + $0x38] sm:$0xff]
    %v1088 = vld [vmem:[#allocation11 + $0x40] sm:$0xff]
    %v1089 = vld [vmem:[#allocation11 + $0x48] sm:$0xff]
    %v1090 = vld [vmem:[#allocation11 + $0x50] sm:$0xff]
    %v1091 = vld [vmem:[#allocation11 + $0x58] sm:$0xff]
    %v1092 = vld [vmem:[#allocation11 + $0x60] sm:$0xff]
    %v1093 = vld [vmem:[#allocation11 + $0x68] sm:$0xff]
    %v1094 = vld [vmem:[#allocation11 + $0x70] sm:$0xff]
    %v1095 = vld [vmem:[#allocation11 + $0x78] sm:$0xff]
    %v1096 = vld [vmem:[#allocation11 + $0x80] sm:$0xff]
    %v1097 = vld [vmem:[#allocation11 + $0x88] sm:$0xff]
    %v1098 = vld [vmem:[#allocation11 + $0x90] sm:$0xff]
    %v1099 = vld [vmem:[#allocation11 + $0x98] sm:$0xff]
    %v1100 = vld [vmem:[#allocation11 + $0xa0] sm:$0xff]
    %v1101 = vld [vmem:[#allocation11 + $0xa8] sm:$0xff]
    %v1102 = vld [vmem:[#allocation11 + $0xb0] sm:$0xff]
    %v1103 = vld [vmem:[#allocation11 + $0xb8] sm:$0xff]
    %v1104 = vld [vmem:[#allocation11 + $0xc0] sm:$0xff]
    %v1105 = vld [vmem:[#allocation11 + $0xc8] sm:$0xff]
    %v1106 = vld [vmem:[#allocation11 + $0xd0] sm:$0xff]
    %v1107 = vld [vmem:[#allocation11 + $0xd8] sm:$0xff]
    %v1108 = vld [vmem:[#allocation11 + $0xe0] sm:$0xff]
    %v1109 = vld [vmem:[#allocation11 + $0xe8] sm:$0xff]
    %v1110 = vld [vmem:[#allocation11 + $0xf0] sm:$0xff]
    %v1111 = vld [vmem:[#allocation11 + $0xf8] sm:$0xff]
    %v1112 = vld [vmem:[#allocation11 + $0x100] sm:$0xff]
    %v1113 = vld [vmem:[#allocation11 + $0x108] sm:$0xff]
    %v1114 = vld [vmem:[#allocation11 + $0x110] sm:$0xff]
    %v1115 = vld [vmem:[#allocation11 + $0x118] sm:$0xff]
    %v1116 = vld [vmem:[#allocation11 + $0x120] sm:$0xff]
    %v1117 = vld [vmem:[#allocation11 + $0x128] sm:$0xff]
    %v1118 = vld [vmem:[#allocation11 + $0x130] sm:$0xff]
    %v1119 = vld [vmem:[#allocation11 + $0x138] sm:$0xff]
    %v1120 = vld [vmem:[#allocation11 + $0x140] sm:$0xff]
    %v1121 = vld [vmem:[#allocation11 + $0x148] sm:$0xff]
    %v1122 = vld [vmem:[#allocation11 + $0x150] sm:$0xff]
    %v1123 = vld [vmem:[#allocation11 + $0x158] sm:$0xff]
    %v1124 = vld [vmem:[#allocation11 + $0x160] sm:$0xff]
    %v1125 = vld [vmem:[#allocation11 + $0x168] sm:$0xff]
    %v1126 = vld [vmem:[#allocation11 + $0x170] sm:$0xff]
    %v1127 = vld [vmem:[#allocation11 + $0x178] sm:$0xff]
    %v1128 = vld [vmem:[#allocation11 + $0x180] sm:$0xff]
    %v1129 = vld [vmem:[#allocation11 + $0x188] sm:$0xff]
    %v1130 = vld [vmem:[#allocation11 + $0x190] sm:$0xff]
    %v1131 = vld [vmem:[#allocation11 + $0x198] sm:$0xff]
    %v1132 = vld [vmem:[#allocation11 + $0x1a0] sm:$0xff]
    %v1133 = vld [vmem:[#allocation11 + $0x1a8] sm:$0xff]
    %v1134 = vld [vmem:[#allocation11 + $0x1b0] sm:$0xff]
    %v1135 = vld [vmem:[#allocation11 + $0x1b8] sm:$0xff]
    %v1136 = vld [vmem:[#allocation11 + $0x1c0] sm:$0xff]
    %v1137 = vld [vmem:[#allocation11 + $0x1c8] sm:$0xff]
    %v1138 = vld [vmem:[#allocation11 + $0x1d0] sm:$0xff]
    %v1139 = vld [vmem:[#allocation11 + $0x1d8] sm:$0xff]
    %v1140 = vld [vmem:[#allocation11 + $0x1e0] sm:$0xff]
    %v1141 = vld [vmem:[#allocation11 + $0x1e8] sm:$0xff]
    %v1142 = vld [vmem:[#allocation11 + $0x1f0] sm:$0xff]
    %v1143 = vld [vmem:[#allocation11 + $0x1f8] sm:$0xff]
    %v1144 = vld [vmem:[#allocation13] sm:$0xf]
    %v1146 = vlaneseq
    %v1147 = vshrl.u32 %v1146, 7
    %v1148 = vsub.s32 0, %v1147
    %v1149 = vrot.slane %v1144, %v1148
    %v1150 = vlaneseq
    %v1151 = vshrl.u32 %v1150, 7
    %v1152 = vsub.s32 1, %v1151
    %v1153 = vrot.slane %v1144, %v1152
    %v1154 = vlaneseq
    %v1155 = vshrl.u32 %v1154, 7
    %v1156 = vsub.s32 2, %v1155
    %v1157 = vrot.slane %v1144, %v1156
    %v1158 = vlaneseq
    %v1159 = vshrl.u32 %v1158, 7
    %v1160 = vsub.s32 3, %v1159
    %v1161 = vrot.slane %v1144, %v1160
    %v1230 = vunpack.c.l.b16 %v1080
    %v1231 = vunpack.c.h.b16 %v1080
    %v1232 = vunpack.c.l.b16 %v1081
    %v1233 = vunpack.c.h.b16 %v1081
    %v1234 = vunpack.c.l.b16 %v1082
    %v1235 = vunpack.c.h.b16 %v1082
    %v1236 = vunpack.c.l.b16 %v1083
    %v1237 = vunpack.c.h.b16 %v1083
    %v1238 = vunpack.c.l.b16 %v1084
    %v1239 = vunpack.c.h.b16 %v1084
    %v1240 = vunpack.c.l.b16 %v1085
    %v1241 = vunpack.c.h.b16 %v1085
    %v1242 = vunpack.c.l.b16 %v1086
    %v1243 = vunpack.c.h.b16 %v1086
    %v1244 = vunpack.c.l.b16 %v1087
    %v1245 = vunpack.c.h.b16 %v1087
    %v1246 = vunpack.c.l.b16 %v1088
    %v1247 = vunpack.c.h.b16 %v1088
    %v1248 = vunpack.c.l.b16 %v1089
    %v1249 = vunpack.c.h.b16 %v1089
    %v1250 = vunpack.c.l.b16 %v1090
    %v1251 = vunpack.c.h.b16 %v1090
    %v1252 = vunpack.c.l.b16 %v1091
    %v1253 = vunpack.c.h.b16 %v1091
    %v1254 = vunpack.c.l.b16 %v1092
    %v1255 = vunpack.c.h.b16 %v1092
    %v1256 = vunpack.c.l.b16 %v1093
    %v1257 = vunpack.c.h.b16 %v1093
    %v1258 = vunpack.c.l.b16 %v1094
    %v1259 = vunpack.c.h.b16 %v1094
    %v1260 = vunpack.c.l.b16 %v1095
    %v1261 = vunpack.c.h.b16 %v1095
    %v1262 = vunpack.c.l.b16 %v1096
    %v1263 = vunpack.c.h.b16 %v1096
    %v1264 = vunpack.c.l.b16 %v1097
    %v1265 = vunpack.c.h.b16 %v1097
    %v1266 = vunpack.c.l.b16 %v1098
    %v1267 = vunpack.c.h.b16 %v1098
    %v1268 = vunpack.c.l.b16 %v1099
    %v1269 = vunpack.c.h.b16 %v1099
    %v1270 = vunpack.c.l.b16 %v1100
    %v1271 = vunpack.c.h.b16 %v1100
    %v1272 = vunpack.c.l.b16 %v1101
    %v1273 = vunpack.c.h.b16 %v1101
    %v1274 = vunpack.c.l.b16 %v1102
    %v1275 = vunpack.c.h.b16 %v1102
    %v1276 = vunpack.c.l.b16 %v1103
    %v1277 = vunpack.c.h.b16 %v1103
    %v1278 = vunpack.c.l.b16 %v1104
    %v1279 = vunpack.c.h.b16 %v1104
    %v1280 = vunpack.c.l.b16 %v1105
    %v1281 = vunpack.c.h.b16 %v1105
    %v1282 = vunpack.c.l.b16 %v1106
    %v1283 = vunpack.c.h.b16 %v1106
    %v1284 = vunpack.c.l.b16 %v1107
    %v1285 = vunpack.c.h.b16 %v1107
    %v1286 = vunpack.c.l.b16 %v1108
    %v1287 = vunpack.c.h.b16 %v1108
    %v1288 = vunpack.c.l.b16 %v1109
    %v1289 = vunpack.c.h.b16 %v1109
    %v1290 = vunpack.c.l.b16 %v1110
    %v1291 = vunpack.c.h.b16 %v1110
    %v1292 = vunpack.c.l.b16 %v1111
    %v1293 = vunpack.c.h.b16 %v1111
    %v1294 = vunpack.c.l.b16 %v1112
    %v1295 = vunpack.c.h.b16 %v1112
    %v1296 = vunpack.c.l.b16 %v1113
    %v1297 = vunpack.c.h.b16 %v1113
    %v1298 = vunpack.c.l.b16 %v1114
    %v1299 = vunpack.c.h.b16 %v1114
    %v1300 = vunpack.c.l.b16 %v1115
    %v1301 = vunpack.c.h.b16 %v1115
    %v1302 = vunpack.c.l.b16 %v1116
    %v1303 = vunpack.c.h.b16 %v1116
    %v1304 = vunpack.c.l.b16 %v1117
    %v1305 = vunpack.c.h.b16 %v1117
    %v1306 = vunpack.c.l.b16 %v1118
    %v1307 = vunpack.c.h.b16 %v1118
    %v1308 = vunpack.c.l.b16 %v1119
    %v1309 = vunpack.c.h.b16 %v1119
    %v1310 = vunpack.c.l.b16 %v1120
    %v1311 = vunpack.c.h.b16 %v1120
    %v1312 = vunpack.c.l.b16 %v1121
    %v1313 = vunpack.c.h.b16 %v1121
    %v1314 = vunpack.c.l.b16 %v1122
    %v1315 = vunpack.c.h.b16 %v1122
    %v1316 = vunpack.c.l.b16 %v1123
    %v1317 = vunpack.c.h.b16 %v1123
    %v1318 = vunpack.c.l.b16 %v1124
    %v1319 = vunpack.c.h.b16 %v1124
    %v1320 = vunpack.c.l.b16 %v1125
    %v1321 = vunpack.c.h.b16 %v1125
    %v1322 = vunpack.c.l.b16 %v1126
    %v1323 = vunpack.c.h.b16 %v1126
    %v1324 = vunpack.c.l.b16 %v1127
    %v1325 = vunpack.c.h.b16 %v1127
    %v1326 = vunpack.c.l.b16 %v1128
    %v1327 = vunpack.c.h.b16 %v1128
    %v1328 = vunpack.c.l.b16 %v1129
    %v1329 = vunpack.c.h.b16 %v1129
    %v1330 = vunpack.c.l.b16 %v1130
    %v1331 = vunpack.c.h.b16 %v1130
    %v1332 = vunpack.c.l.b16 %v1131
    %v1333 = vunpack.c.h.b16 %v1131
    %v1334 = vunpack.c.l.b16 %v1132
    %v1335 = vunpack.c.h.b16 %v1132
    %v1336 = vunpack.c.l.b16 %v1133
    %v1337 = vunpack.c.h.b16 %v1133
    %v1338 = vunpack.c.l.b16 %v1134
    %v1339 = vunpack.c.h.b16 %v1134
    %v1340 = vunpack.c.l.b16 %v1135
    %v1341 = vunpack.c.h.b16 %v1135
    %v1342 = vunpack.c.l.b16 %v1136
    %v1343 = vunpack.c.h.b16 %v1136
    %v1344 = vunpack.c.l.b16 %v1137
    %v1345 = vunpack.c.h.b16 %v1137
    %v1346 = vunpack.c.l.b16 %v1138
    %v1347 = vunpack.c.h.b16 %v1138
    %v1348 = vunpack.c.l.b16 %v1139
    %v1349 = vunpack.c.h.b16 %v1139
    %v1350 = vunpack.c.l.b16 %v1140
    %v1351 = vunpack.c.h.b16 %v1140
    %v1352 = vunpack.c.l.b16 %v1141
    %v1353 = vunpack.c.h.b16 %v1141
    %v1354 = vunpack.c.l.b16 %v1142
    %v1355 = vunpack.c.h.b16 %v1142
    %v1356 = vunpack.c.l.b16 %v1143
    %v1357 = vunpack.c.h.b16 %v1143
    %v1358 = vpack.c.b16 %v1234, %v1230
    %v1359 = vpack.c.b16 %v1235, %v1231
    %v1360 = vpack.c.b16 %v1236, %v1232
    %v1361 = vpack.c.b16 %v1237, %v1233
    %v1362 = vpack.c.b16 %v1242, %v1238
    %v1363 = vpack.c.b16 %v1243, %v1239
    %v1364 = vpack.c.b16 %v1244, %v1240
    %v1365 = vpack.c.b16 %v1245, %v1241
    %v1366 = vpack.c.b16 %v1250, %v1246
    %v1367 = vpack.c.b16 %v1251, %v1247
    %v1368 = vpack.c.b16 %v1252, %v1248
    %v1369 = vpack.c.b16 %v1253, %v1249
    %v1370 = vpack.c.b16 %v1258, %v1254
    %v1371 = vpack.c.b16 %v1259, %v1255
    %v1372 = vpack.c.b16 %v1260, %v1256
    %v1373 = vpack.c.b16 %v1261, %v1257
    %v1374 = vpack.c.b16 %v1266, %v1262
    %v1375 = vpack.c.b16 %v1267, %v1263
    %v1376 = vpack.c.b16 %v1268, %v1264
    %v1377 = vpack.c.b16 %v1269, %v1265
    %v1378 = vpack.c.b16 %v1274, %v1270
    %v1379 = vpack.c.b16 %v1275, %v1271
    %v1380 = vpack.c.b16 %v1276, %v1272
    %v1381 = vpack.c.b16 %v1277, %v1273
    %v1382 = vpack.c.b16 %v1282, %v1278
    %v1383 = vpack.c.b16 %v1283, %v1279
    %v1384 = vpack.c.b16 %v1284, %v1280
    %v1385 = vpack.c.b16 %v1285, %v1281
    %v1386 = vpack.c.b16 %v1290, %v1286
    %v1387 = vpack.c.b16 %v1291, %v1287
    %v1388 = vpack.c.b16 %v1292, %v1288
    %v1389 = vpack.c.b16 %v1293, %v1289
    %v1390 = vpack.c.b16 %v1298, %v1294
    %v1391 = vpack.c.b16 %v1299, %v1295
    %v1392 = vpack.c.b16 %v1300, %v1296
    %v1393 = vpack.c.b16 %v1301, %v1297
    %v1394 = vpack.c.b16 %v1306, %v1302
    %v1395 = vpack.c.b16 %v1307, %v1303
    %v1396 = vpack.c.b16 %v1308, %v1304
    %v1397 = vpack.c.b16 %v1309, %v1305
    %v1398 = vpack.c.b16 %v1314, %v1310
    %v1399 = vpack.c.b16 %v1315, %v1311
    %v1400 = vpack.c.b16 %v1316, %v1312
    %v1401 = vpack.c.b16 %v1317, %v1313
    %v1402 = vpack.c.b16 %v1322, %v1318
    %v1403 = vpack.c.b16 %v1323, %v1319
    %v1404 = vpack.c.b16 %v1324, %v1320
    %v1405 = vpack.c.b16 %v1325, %v1321
    %v1406 = vpack.c.b16 %v1330, %v1326
    %v1407 = vpack.c.b16 %v1331, %v1327
    %v1408 = vpack.c.b16 %v1332, %v1328
    %v1409 = vpack.c.b16 %v1333, %v1329
    %v1410 = vpack.c.b16 %v1338, %v1334
    %v1411 = vpack.c.b16 %v1339, %v1335
    %v1412 = vpack.c.b16 %v1340, %v1336
    %v1413 = vpack.c.b16 %v1341, %v1337
    %v1414 = vpack.c.b16 %v1346, %v1342
    %v1415 = vpack.c.b16 %v1347, %v1343
    %v1416 = vpack.c.b16 %v1348, %v1344
    %v1417 = vpack.c.b16 %v1349, %v1345
    %v1418 = vpack.c.b16 %v1354, %v1350
    %v1419 = vpack.c.b16 %v1355, %v1351
    %v1420 = vpack.c.b16 %v1356, %v1352
    %v1421 = vpack.c.b16 %v1357, %v1353
    %1486 = vmatprep.subr.bf16.mxu0 %v1359
    %1487 = vmatpush1.bf16.msra.mxu0 %v1358
    %1488 = vmatprep.subr.bf16.mxu0 %v1363
    %1489 = vmatpush1.bf16.msra.mxu0 %v1362
    %1490 = vmatprep.subr.bf16.mxu0 %v1367
    %1491 = vmatpush1.bf16.msra.mxu0 %v1366
    %1492 = vmatprep.subr.bf16.mxu0 %v1371
    %1493 = vmatpush1.bf16.msra.mxu0 %v1370
    %1494 = vmatprep.subr.bf16.mxu0 %v1375
    %1495 = vmatpush1.bf16.msra.mxu0 %v1374
    %1496 = vmatprep.subr.bf16.mxu0 %v1379
    %1497 = vmatpush1.bf16.msra.mxu0 %v1378
    %1498 = vmatprep.subr.bf16.mxu0 %v1383
    %1499 = vmatpush1.bf16.msra.mxu0 %v1382
    %1500 = vmatprep.subr.bf16.mxu0 %v1387
    %1501 = vmatpush1.bf16.msra.mxu0 %v1386
    %1502 = vmatprep.subr.bf16.mxu0 %v1391
    %1503 = vmatpush1.bf16.msra.mxu0 %v1390
    %1504 = vmatprep.subr.bf16.mxu0 %v1395
    %1505 = vmatpush1.bf16.msra.mxu0 %v1394
    %1506 = vmatprep.subr.bf16.mxu0 %v1399
    %1507 = vmatpush1.bf16.msra.mxu0 %v1398
    %1508 = vmatprep.subr.bf16.mxu0 %v1403
    %1509 = vmatpush1.bf16.msra.mxu0 %v1402
    %1510 = vmatprep.subr.bf16.mxu0 %v1407
    %1511 = vmatpush1.bf16.msra.mxu0 %v1406
    %1512 = vmatprep.subr.bf16.mxu0 %v1411
    %1513 = vmatpush1.bf16.msra.mxu0 %v1410
    %1514 = vmatprep.subr.bf16.mxu0 %v1415
    %1515 = vmatpush1.bf16.msra.mxu0 %v1414
    %1516 = vmatprep.subr.bf16.mxu0 %v1419
    %1517 = vmatpush1.bf16.msra.mxu0 %v1418
    %1518 = vmatprep.mubr.bf16.mxu0 %v1065
    %1519 = vmatmul.mubr.bf16.gmra.mrb[0].mxu0 %v1064
    %v1520 = vpop.f32.mrb[0].mxu0
    %v1521 = vadd.f32 %v1149, %v1520
    %v1522 = vpop.f32.mrb[0].mxu0
    %v1523 = vadd.f32 %v1153, %v1522
    %v1524 = vpop.f32.mrb[0].mxu0
    %v1525 = vadd.f32 %v1149, %v1524
    %v1526 = vpop.f32.mrb[0].mxu0
    %v1527 = vadd.f32 %v1153, %v1526
    %1528 = vmatprep.mubr.bf16.mxu0 %v1067
    %1529 = vmatmul.mubr.bf16.gmra.mrb[0].mxu0 %v1066
    %v1530 = vpop.f32.mrb[0].mxu0
    %v1531 = vadd.f32 %v1149, %v1530
    %v1532 = vpop.f32.mrb[0].mxu0
    %v1533 = vadd.f32 %v1153, %v1532
    %v1534 = vpop.f32.mrb[0].mxu0
    %v1535 = vadd.f32 %v1149, %v1534
    %v1536 = vpop.f32.mrb[0].mxu0
    %v1537 = vadd.f32 %v1153, %v1536
    %1538 = vmatprep.mubr.bf16.mxu0 %v1069
    %1539 = vmatmul.mubr.bf16.gmra.mrb[0].mxu0 %v1068
    %v1540 = vpop.f32.mrb[0].mxu0
    %v1541 = vadd.f32 %v1149, %v1540
    %v1542 = vpop.f32.mrb[0].mxu0
    %v1543 = vadd.f32 %v1153, %v1542
    %v1544 = vpop.f32.mrb[0].mxu0
    %v1545 = vadd.f32 %v1149, %v1544
    %v1546 = vpop.f32.mrb[0].mxu0
    %v1547 = vadd.f32 %v1153, %v1546
    %1548 = vmatprep.mubr.bf16.mxu0 %v1071
    %1549 = vmatmul.mubr.bf16.gmra.mrb[0].mxu0 %v1070
    %v1550 = vpop.f32.mrb[0].mxu0
    %v1551 = vadd.f32 %v1149, %v1550
    %v1552 = vpop.f32.mrb[0].mxu0
    %v1553 = vadd.f32 %v1153, %v1552
    %v1554 = vpop.f32.mrb[0].mxu0
    %v1555 = vadd.f32 %v1149, %v1554
    %v1556 = vpop.f32.mrb[0].mxu0
    %v1557 = vadd.f32 %v1153, %v1556
    %1558 = vmatprep.mubr.bf16.mxu0 %v1073
    %1559 = vmatmul.mubr.bf16.gmra.mrb[0].mxu0 %v1072
    %v1560 = vpop.f32.mrb[0].mxu0
    %v1561 = vadd.f32 %v1149, %v1560
    %v1562 = vpop.f32.mrb[0].mxu0
    %v1563 = vadd.f32 %v1153, %v1562
    %v1564 = vpop.f32.mrb[0].mxu0
    %v1565 = vadd.f32 %v1149, %v1564
    %v1566 = vpop.f32.mrb[0].mxu0
    %v1567 = vadd.f32 %v1153, %v1566
    %1568 = vmatprep.mubr.bf16.mxu0 %v1075
    %1569 = vmatmul.mubr.bf16.gmra.mrb[0].mxu0 %v1074
    %v1570 = vpop.f32.mrb[0].mxu0
    %v1571 = vadd.f32 %v1149, %v1570
    %v1572 = vpop.f32.mrb[0].mxu0
    %v1573 = vadd.f32 %v1153, %v1572
    %v1574 = vpop.f32.mrb[0].mxu0
    %v1575 = vadd.f32 %v1149, %v1574
    %v1576 = vpop.f32.mrb[0].mxu0
    %v1577 = vadd.f32 %v1153, %v1576
    %1578 = vmatprep.mubr.bf16.mxu0 %v1077
    %1579 = vmatmul.mubr.bf16.gmra.mrb[0].mxu0 %v1076
    %v1580 = vpop.f32.mrb[0].mxu0
    %v1581 = vadd.f32 %v1149, %v1580
    %v1582 = vpop.f32.mrb[0].mxu0
    %v1583 = vadd.f32 %v1153, %v1582
    %v1584 = vpop.f32.mrb[0].mxu0
    %v1585 = vadd.f32 %v1149, %v1584
    %v1586 = vpop.f32.mrb[0].mxu0
    %v1587 = vadd.f32 %v1153, %v1586
    %1588 = vmatprep.mubr.bf16.mxu0 %v1079
    %1589 = vmatmul.mubr.bf16.gmra.mrb[0].mxu0 %v1078
    %v1590 = vpop.f32.mrb[0].mxu0
    %v1591 = vadd.f32 %v1149, %v1590
    %v1592 = vpop.f32.mrb[0].mxu0
    %v1593 = vadd.f32 %v1153, %v1592
    %v1594 = vpop.f32.mrb[0].mxu0
    %v1595 = vadd.f32 %v1149, %v1594
    %v1596 = vpop.f32.mrb[0].mxu0
    %v1597 = vadd.f32 %v1153, %v1596
    %1598 = vdwg.mxu0
    %1599 = vmatprep.subr.bf16.mxu0 %v1361
    %1600 = vmatpush1.bf16.msra.mxu0 %v1360
    %1601 = vmatprep.subr.bf16.mxu0 %v1365
    %1602 = vmatpush1.bf16.msra.mxu0 %v1364
    %1603 = vmatprep.subr.bf16.mxu0 %v1369
    %1604 = vmatpush1.bf16.msra.mxu0 %v1368
    %1605 = vmatprep.subr.bf16.mxu0 %v1373
    %1606 = vmatpush1.bf16.msra.mxu0 %v1372
    %1607 = vmatprep.subr.bf16.mxu0 %v1377
    %1608 = vmatpush1.bf16.msra.mxu0 %v1376
    %1609 = vmatprep.subr.bf16.mxu0 %v1381
    %1610 = vmatpush1.bf16.msra.mxu0 %v1380
    %1611 = vmatprep.subr.bf16.mxu0 %v1385
    %1612 = vmatpush1.bf16.msra.mxu0 %v1384
    %1613 = vmatprep.subr.bf16.mxu0 %v1389
    %1614 = vmatpush1.bf16.msra.mxu0 %v1388
    %1615 = vmatprep.subr.bf16.mxu0 %v1393
    %1616 = vmatpush1.bf16.msra.mxu0 %v1392
    %1617 = vmatprep.subr.bf16.mxu0 %v1397
    %1618 = vmatpush1.bf16.msra.mxu0 %v1396
    %1619 = vmatprep.subr.bf16.mxu0 %v1401
    %1620 = vmatpush1.bf16.msra.mxu0 %v1400
    %1621 = vmatprep.subr.bf16.mxu0 %v1405
    %1622 = vmatpush1.bf16.msra.mxu0 %v1404
    %1623 = vmatprep.subr.bf16.mxu0 %v1409
    %1624 = vmatpush1.bf16.msra.mxu0 %v1408
    %1625 = vmatprep.subr.bf16.mxu0 %v1413
    %1626 = vmatpush1.bf16.msra.mxu0 %v1412
    %1627 = vmatprep.subr.bf16.mxu0 %v1417
    %1628 = vmatpush1.bf16.msra.mxu0 %v1416
    %1629 = vmatprep.subr.bf16.mxu0 %v1421
    %1630 = vmatpush1.bf16.msra.mxu0 %v1420
    %1631 = vmatprep.mubr.bf16.mxu0 %v1065
    %1632 = vmatmul.mubr.bf16.gmra.mrb[0].mxu0 %v1064
    %v1633 = vpop.f32.mrb[0].mxu0
    %v1634 = vadd.f32 %v1157, %v1633
    %v1635 = vpop.f32.mrb[0].mxu0
    %v1636 = vadd.f32 %v1161, %v1635
    %v1637 = vpop.f32.mrb[0].mxu0
    %v1638 = vadd.f32 %v1157, %v1637
    %v1639 = vpop.f32.mrb[0].mxu0
    %v1640 = vadd.f32 %v1161, %v1639
    %1641 = vmatprep.mubr.bf16.mxu0 %v1067
    %1642 = vmatmul.mubr.bf16.gmra.mrb[0].mxu0 %v1066
    %v1643 = vpop.f32.mrb[0].mxu0
    %v1644 = vadd.f32 %v1157, %v1643
    %v1645 = vpop.f32.mrb[0].mxu0
    %v1646 = vadd.f32 %v1161, %v1645
    %v1647 = vpop.f32.mrb[0].mxu0
    %v1648 = vadd.f32 %v1157, %v1647
    %v1649 = vpop.f32.mrb[0].mxu0
    %v1650 = vadd.f32 %v1161, %v1649
    %1651 = vmatprep.mubr.bf16.mxu0 %v1069
    %1652 = vmatmul.mubr.bf16.gmra.mrb[0].mxu0 %v1068
    %v1653 = vpop.f32.mrb[0].mxu0
    %v1654 = vadd.f32 %v1157, %v1653
    %v1655 = vpop.f32.mrb[0].mxu0
    %v1656 = vadd.f32 %v1161, %v1655
    %v1657 = vpop.f32.mrb[0].mxu0
    %v1658 = vadd.f32 %v1157, %v1657
    %v1659 = vpop.f32.mrb[0].mxu0
    %v1660 = vadd.f32 %v1161, %v1659
    %1661 = vmatprep.mubr.bf16.mxu0 %v1071
    %1662 = vmatmul.mubr.bf16.gmra.mrb[0].mxu0 %v1070
    %v1663 = vpop.f32.mrb[0].mxu0
    %v1664 = vadd.f32 %v1157, %v1663
    %v1665 = vpop.f32.mrb[0].mxu0
    %v1666 = vadd.f32 %v1161, %v1665
    %v1667 = vpop.f32.mrb[0].mxu0
    %v1668 = vadd.f32 %v1157, %v1667
    %v1669 = vpop.f32.mrb[0].mxu0
    %v1670 = vadd.f32 %v1161, %v1669
    %1671 = vmatprep.mubr.bf16.mxu0 %v1073
    %1672 = vmatmul.mubr.bf16.gmra.mrb[0].mxu0 %v1072
    %v1673 = vpop.f32.mrb[0].mxu0
    %v1674 = vadd.f32 %v1157, %v1673
    %v1675 = vpop.f32.mrb[0].mxu0
    %v1676 = vadd.f32 %v1161, %v1675
    %v1677 = vpop.f32.mrb[0].mxu0
    %v1678 = vadd.f32 %v1157, %v1677
    %v1679 = vpop.f32.mrb[0].mxu0
    %v1680 = vadd.f32 %v1161, %v1679
    %1681 = vmatprep.mubr.bf16.mxu0 %v1075
    %1682 = vmatmul.mubr.bf16.gmra.mrb[0].mxu0 %v1074
    %v1683 = vpop.f32.mrb[0].mxu0
    %v1684 = vadd.f32 %v1157, %v1683
    %v1685 = vpop.f32.mrb[0].mxu0
    %v1686 = vadd.f32 %v1161, %v1685
    %v1687 = vpop.f32.mrb[0].mxu0
    %v1688 = vadd.f32 %v1157, %v1687
    %v1689 = vpop.f32.mrb[0].mxu0
    %v1690 = vadd.f32 %v1161, %v1689
    %1691 = vmatprep.mubr.bf16.mxu0 %v1077
    %1692 = vmatmul.mubr.bf16.gmra.mrb[0].mxu0 %v1076
    %v1693 = vpop.f32.mrb[0].mxu0
    %v1694 = vadd.f32 %v1157, %v1693
    %v1695 = vpop.f32.mrb[0].mxu0
    %v1696 = vadd.f32 %v1161, %v1695
    %v1697 = vpop.f32.mrb[0].mxu0
    %v1698 = vadd.f32 %v1157, %v1697
    %v1699 = vpop.f32.mrb[0].mxu0
    %v1700 = vadd.f32 %v1161, %v1699
    %1701 = vmatprep.mubr.bf16.mxu0 %v1079
    %1702 = vmatmul.mubr.bf16.gmra.mrb[0].mxu0 %v1078
    %v1703 = vpop.f32.mrb[0].mxu0
    %v1704 = vadd.f32 %v1157, %v1703
    %v1705 = vpop.f32.mrb[0].mxu0
    %v1706 = vadd.f32 %v1161, %v1705
    %v1707 = vpop.f32.mrb[0].mxu0
    %v1708 = vadd.f32 %v1157, %v1707
    %v1709 = vpop.f32.mrb[0].mxu0
    %v1710 = vadd.f32 %v1161, %v1709
    %1711 = vdwg.mxu0
    %v1712 = vmax.f32 %v1521, 0.0
    %v1713 = vmax.f32 %v1523, 0.0
    %v1714 = vmax.f32 %v1634, 0.0
    %v1715 = vmax.f32 %v1636, 0.0
    %v1716 = vmax.f32 %v1525, 0.0
    %v1717 = vmax.f32 %v1527, 0.0
    %v1718 = vmax.f32 %v1638, 0.0
    %v1719 = vmax.f32 %v1640, 0.0
    %v1720 = vmax.f32 %v1531, 0.0
    %v1721 = vmax.f32 %v1533, 0.0
    %v1722 = vmax.f32 %v1644, 0.0
    %v1723 = vmax.f32 %v1646, 0.0
    %v1724 = vmax.f32 %v1535, 0.0
    %v1725 = vmax.f32 %v1537, 0.0
    %v1726 = vmax.f32 %v1648, 0.0
    %v1727 = vmax.f32 %v1650, 0.0
    %v1728 = vmax.f32 %v1541, 0.0
    %v1729 = vmax.f32 %v1543, 0.0
    %v1730 = vmax.f32 %v1654, 0.0
    %v1731 = vmax.f32 %v1656, 0.0
    %v1732 = vmax.f32 %v1545, 0.0
    %v1733 = vmax.f32 %v1547, 0.0
    %v1734 = vmax.f32 %v1658, 0.0
    %v1735 = vmax.f32 %v1660, 0.0
    %v1736 = vmax.f32 %v1551, 0.0
    %v1737 = vmax.f32 %v1553, 0.0
    %v1738 = vmax.f32 %v1664, 0.0
    %v1739 = vmax.f32 %v1666, 0.0
    %v1740 = vmax.f32 %v1555, 0.0
    %v1741 = vmax.f32 %v1557, 0.0
    %v1742 = vmax.f32 %v1668, 0.0
    %v1743 = vmax.f32 %v1670, 0.0
    %v1744 = vmax.f32 %v1561, 0.0
    %v1745 = vmax.f32 %v1563, 0.0
    %v1746 = vmax.f32 %v1674, 0.0
    %v1747 = vmax.f32 %v1676, 0.0
    %v1748 = vmax.f32 %v1565, 0.0
    %v1749 = vmax.f32 %v1567, 0.0
    %v1750 = vmax.f32 %v1678, 0.0
    %v1751 = vmax.f32 %v1680, 0.0
    %v1752 = vmax.f32 %v1571, 0.0
    %v1753 = vmax.f32 %v1573, 0.0
    %v1754 = vmax.f32 %v1684, 0.0
    %v1755 = vmax.f32 %v1686, 0.0
    %v1756 = vmax.f32 %v1575, 0.0
    %v1757 = vmax.f32 %v1577, 0.0
    %v1758 = vmax.f32 %v1688, 0.0
    %v1759 = vmax.f32 %v1690, 0.0
    %v1760 = vmax.f32 %v1581, 0.0
    %v1761 = vmax.f32 %v1583, 0.0
    %v1762 = vmax.f32 %v1694, 0.0
    %v1763 = vmax.f32 %v1696, 0.0
    %v1764 = vmax.f32 %v1585, 0.0
    %v1765 = vmax.f32 %v1587, 0.0
    %v1766 = vmax.f32 %v1698, 0.0
    %v1767 = vmax.f32 %v1700, 0.0
    %v1768 = vmax.f32 %v1591, 0.0
    %v1769 = vmax.f32 %v1593, 0.0
    %v1770 = vmax.f32 %v1704, 0.0
    %v1771 = vmax.f32 %v1706, 0.0
    %v1772 = vmax.f32 %v1595, 0.0
    %v1773 = vmax.f32 %v1597, 0.0
    %v1774 = vmax.f32 %v1708, 0.0
    %v1775 = vmax.f32 %v1710, 0.0
    %v1776 = vpack.c.bf16 %v1716, %v1712
    %v1777 = vpack.c.bf16 %v1717, %v1713
    %v1778 = vpack.c.bf16 %v1718, %v1714
    %v1779 = vpack.c.bf16 %v1719, %v1715
    %v1780 = vpack.c.bf16 %v1724, %v1720
    %v1781 = vpack.c.bf16 %v1725, %v1721
    %v1782 = vpack.c.bf16 %v1726, %v1722
    %v1783 = vpack.c.bf16 %v1727, %v1723
    %v1784 = vpack.c.bf16 %v1732, %v1728
    %v1785 = vpack.c.bf16 %v1733, %v1729
    %v1786 = vpack.c.bf16 %v1734, %v1730
    %v1787 = vpack.c.bf16 %v1735, %v1731
    %v1788 = vpack.c.bf16 %v1740, %v1736
    %v1789 = vpack.c.bf16 %v1741, %v1737
    %v1790 = vpack.c.bf16 %v1742, %v1738
    %v1791 = vpack.c.bf16 %v1743, %v1739
    %v1792 = vpack.c.bf16 %v1748, %v1744
    %v1793 = vpack.c.bf16 %v1749, %v1745
    %v1794 = vpack.c.bf16 %v1750, %v1746
    %v1795 = vpack.c.bf16 %v1751, %v1747
    %v1796 = vpack.c.bf16 %v1756, %v1752
    %v1797 = vpack.c.bf16 %v1757, %v1753
    %v1798 = vpack.c.bf16 %v1758, %v1754
    %v1799 = vpack.c.bf16 %v1759, %v1755
    %v1800 = vpack.c.bf16 %v1764, %v1760
    %v1801 = vpack.c.bf16 %v1765, %v1761
    %v1802 = vpack.c.bf16 %v1766, %v1762
    %v1803 = vpack.c.bf16 %v1767, %v1763
    %v1804 = vpack.c.bf16 %v1772, %v1768
    %v1805 = vpack.c.bf16 %v1773, %v1769
    %v1806 = vpack.c.bf16 %v1774, %v1770
    %v1807 = vpack.c.bf16 %v1775, %v1771
    %v1808 = vld [vmem:[#allocation14] sm:$0xff]
    %v1809 = vld [vmem:[#allocation14 + $0x8] sm:$0xff]
    %v1810 = vld [vmem:[#allocation14 + $0x10] sm:$0xff]
    %v1811 = vld [vmem:[#allocation14 + $0x18] sm:$0xff]
    %v1812 = vld [vmem:[#allocation14 + $0x20] sm:$0xff]
    %v1813 = vld [vmem:[#allocation14 + $0x28] sm:$0xff]
    %v1814 = vld [vmem:[#allocation14 + $0x30] sm:$0xff]
    %v1815 = vld [vmem:[#allocation14 + $0x38] sm:$0xff]
    %v1816 = vld [vmem:[#allocation14 + $0x40] sm:$0xff]
    %v1817 = vld [vmem:[#allocation14 + $0x48] sm:$0xff]
    %v1818 = vld [vmem:[#allocation14 + $0x50] sm:$0xff]
    %v1819 = vld [vmem:[#allocation14 + $0x58] sm:$0xff]
    %v1820 = vld [vmem:[#allocation14 + $0x60] sm:$0xff]
    %v1821 = vld [vmem:[#allocation14 + $0x68] sm:$0xff]
    %v1822 = vld [vmem:[#allocation14 + $0x70] sm:$0xff]
    %v1823 = vld [vmem:[#allocation14 + $0x78] sm:$0xff]
    %v1824 = vld [vmem:[#allocation14 + $0x80] sm:$0xff]
    %v1825 = vld [vmem:[#allocation14 + $0x88] sm:$0xff]
    %v1826 = vld [vmem:[#allocation14 + $0x90] sm:$0xff]
    %v1827 = vld [vmem:[#allocation14 + $0x98] sm:$0xff]
    %v1828 = vld [vmem:[#allocation14 + $0xa0] sm:$0xff]
    %v1829 = vld [vmem:[#allocation14 + $0xa8] sm:$0xff]
    %v1830 = vld [vmem:[#allocation14 + $0xb0] sm:$0xff]
    %v1831 = vld [vmem:[#allocation14 + $0xb8] sm:$0xff]
    %v1832 = vld [vmem:[#allocation14 + $0xc0] sm:$0xff]
    %v1833 = vld [vmem:[#allocation14 + $0xc8] sm:$0xff]
    %v1834 = vld [vmem:[#allocation14 + $0xd0] sm:$0xff]
    %v1835 = vld [vmem:[#allocation14 + $0xd8] sm:$0xff]
    %v1836 = vld [vmem:[#allocation14 + $0xe0] sm:$0xff]
    %v1837 = vld [vmem:[#allocation14 + $0xe8] sm:$0xff]
    %v1838 = vld [vmem:[#allocation14 + $0xf0] sm:$0xff]
    %v1839 = vld [vmem:[#allocation14 + $0xf8] sm:$0xff]
    %v1840 = vld [vmem:[#allocation14 + $0x100] sm:$0xff]
    %v1841 = vld [vmem:[#allocation14 + $0x108] sm:$0xff]
    %v1842 = vld [vmem:[#allocation14 + $0x110] sm:$0xff]
    %v1843 = vld [vmem:[#allocation14 + $0x118] sm:$0xff]
    %v1844 = vld [vmem:[#allocation14 + $0x120] sm:$0xff]
    %v1845 = vld [vmem:[#allocation14 + $0x128] sm:$0xff]
    %v1846 = vld [vmem:[#allocation14 + $0x130] sm:$0xff]
    %v1847 = vld [vmem:[#allocation14 + $0x138] sm:$0xff]
    %v1848 = vld [vmem:[#allocation14 + $0x140] sm:$0xff]
    %v1849 = vld [vmem:[#allocation14 + $0x148] sm:$0xff]
    %v1850 = vld [vmem:[#allocation14 + $0x150] sm:$0xff]
    %v1851 = vld [vmem:[#allocation14 + $0x158] sm:$0xff]
    %v1852 = vld [vmem:[#allocation14 + $0x160] sm:$0xff]
    %v1853 = vld [vmem:[#allocation14 + $0x168] sm:$0xff]
    %v1854 = vld [vmem:[#allocation14 + $0x170] sm:$0xff]
    %v1855 = vld [vmem:[#allocation14 + $0x178] sm:$0xff]
    %v1856 = vld [vmem:[#allocation14 + $0x180] sm:$0xff]
    %v1857 = vld [vmem:[#allocation14 + $0x188] sm:$0xff]
    %v1858 = vld [vmem:[#allocation14 + $0x190] sm:$0xff]
    %v1859 = vld [vmem:[#allocation14 + $0x198] sm:$0xff]
    %v1860 = vld [vmem:[#allocation14 + $0x1a0] sm:$0xff]
    %v1861 = vld [vmem:[#allocation14 + $0x1a8] sm:$0xff]
    %v1862 = vld [vmem:[#allocation14 + $0x1b0] sm:$0xff]
    %v1863 = vld [vmem:[#allocation14 + $0x1b8] sm:$0xff]
    %v1864 = vld [vmem:[#allocation14 + $0x1c0] sm:$0xff]
    %v1865 = vld [vmem:[#allocation14 + $0x1c8] sm:$0xff]
    %v1866 = vld [vmem:[#allocation14 + $0x1d0] sm:$0xff]
    %v1867 = vld [vmem:[#allocation14 + $0x1d8] sm:$0xff]
    %v1868 = vld [vmem:[#allocation14 + $0x1e0] sm:$0xff]
    %v1869 = vld [vmem:[#allocation14 + $0x1e8] sm:$0xff]
    %v1870 = vld [vmem:[#allocation14 + $0x1f0] sm:$0xff]
    %v1871 = vld [vmem:[#allocation14 + $0x1f8] sm:$0xff]
    %v1872 = vld [vmem:[#allocation14 + $0x200] sm:$0xff]
    %v1873 = vld [vmem:[#allocation14 + $0x208] sm:$0xff]
    %v1874 = vld [vmem:[#allocation14 + $0x210] sm:$0xff]
    %v1875 = vld [vmem:[#allocation14 + $0x218] sm:$0xff]
    %v1876 = vld [vmem:[#allocation14 + $0x220] sm:$0xff]
    %v1877 = vld [vmem:[#allocation14 + $0x228] sm:$0xff]
    %v1878 = vld [vmem:[#allocation14 + $0x230] sm:$0xff]
    %v1879 = vld [vmem:[#allocation14 + $0x238] sm:$0xff]
    %v1880 = vld [vmem:[#allocation14 + $0x240] sm:$0xff]
    %v1881 = vld [vmem:[#allocation14 + $0x248] sm:$0xff]
    %v1882 = vld [vmem:[#allocation14 + $0x250] sm:$0xff]
    %v1883 = vld [vmem:[#allocation14 + $0x258] sm:$0xff]
    %v1884 = vld [vmem:[#allocation14 + $0x260] sm:$0xff]
    %v1885 = vld [vmem:[#allocation14 + $0x268] sm:$0xff]
    %v1886 = vld [vmem:[#allocation14 + $0x270] sm:$0xff]
    %v1887 = vld [vmem:[#allocation14 + $0x278] sm:$0xff]
    %v1888 = vld [vmem:[#allocation14 + $0x280] sm:$0xff]
    %v1889 = vld [vmem:[#allocation14 + $0x288] sm:$0xff]
    %v1890 = vld [vmem:[#allocation14 + $0x290] sm:$0xff]
    %v1891 = vld [vmem:[#allocation14 + $0x298] sm:$0xff]
    %v1892 = vld [vmem:[#allocation14 + $0x2a0] sm:$0xff]
    %v1893 = vld [vmem:[#allocation14 + $0x2a8] sm:$0xff]
    %v1894 = vld [vmem:[#allocation14 + $0x2b0] sm:$0xff]
    %v1895 = vld [vmem:[#allocation14 + $0x2b8] sm:$0xff]
    %v1896 = vld [vmem:[#allocation14 + $0x2c0] sm:$0xff]
    %v1897 = vld [vmem:[#allocation14 + $0x2c8] sm:$0xff]
    %v1898 = vld [vmem:[#allocation14 + $0x2d0] sm:$0xff]
    %v1899 = vld [vmem:[#allocation14 + $0x2d8] sm:$0xff]
    %v1900 = vld [vmem:[#allocation14 + $0x2e0] sm:$0xff]
    %v1901 = vld [vmem:[#allocation14 + $0x2e8] sm:$0xff]
    %v1902 = vld [vmem:[#allocation14 + $0x2f0] sm:$0xff]
    %v1903 = vld [vmem:[#allocation14 + $0x2f8] sm:$0xff]
    %v1904 = vld [vmem:[#allocation14 + $0x300] sm:$0xff]
    %v1905 = vld [vmem:[#allocation14 + $0x308] sm:$0xff]
    %v1906 = vld [vmem:[#allocation14 + $0x310] sm:$0xff]
    %v1907 = vld [vmem:[#allocation14 + $0x318] sm:$0xff]
    %v1908 = vld [vmem:[#allocation14 + $0x320] sm:$0xff]
    %v1909 = vld [vmem:[#allocation14 + $0x328] sm:$0xff]
    %v1910 = vld [vmem:[#allocation14 + $0x330] sm:$0xff]
    %v1911 = vld [vmem:[#allocation14 + $0x338] sm:$0xff]
    %v1912 = vld [vmem:[#allocation14 + $0x340] sm:$0xff]
    %v1913 = vld [vmem:[#allocation14 + $0x348] sm:$0xff]
    %v1914 = vld [vmem:[#allocation14 + $0x350] sm:$0xff]
    %v1915 = vld [vmem:[#allocation14 + $0x358] sm:$0xff]
    %v1916 = vld [vmem:[#allocation14 + $0x360] sm:$0xff]
    %v1917 = vld [vmem:[#allocation14 + $0x368] sm:$0xff]
    %v1918 = vld [vmem:[#allocation14 + $0x370] sm:$0xff]
    %v1919 = vld [vmem:[#allocation14 + $0x378] sm:$0xff]
    %v1920 = vld [vmem:[#allocation14 + $0x380] sm:$0xff]
    %v1921 = vld [vmem:[#allocation14 + $0x388] sm:$0xff]
    %v1922 = vld [vmem:[#allocation14 + $0x390] sm:$0xff]
    %v1923 = vld [vmem:[#allocation14 + $0x398] sm:$0xff]
    %v1924 = vld [vmem:[#allocation14 + $0x3a0] sm:$0xff]
    %v1925 = vld [vmem:[#allocation14 + $0x3a8] sm:$0xff]
    %v1926 = vld [vmem:[#allocation14 + $0x3b0] sm:$0xff]
    %v1927 = vld [vmem:[#allocation14 + $0x3b8] sm:$0xff]
    %v1928 = vld [vmem:[#allocation14 + $0x3c0] sm:$0xff]
    %v1929 = vld [vmem:[#allocation14 + $0x3c8] sm:$0xff]
    %v1930 = vld [vmem:[#allocation14 + $0x3d0] sm:$0xff]
    %v1931 = vld [vmem:[#allocation14 + $0x3d8] sm:$0xff]
    %v1932 = vld [vmem:[#allocation14 + $0x3e0] sm:$0xff]
    %v1933 = vld [vmem:[#allocation14 + $0x3e8] sm:$0xff]
    %v1934 = vld [vmem:[#allocation14 + $0x3f0] sm:$0xff]
    %v1935 = vld [vmem:[#allocation14 + $0x3f8] sm:$0xff]
    %v1936 = vld [vmem:[#allocation14 + $0x400] sm:$0xff]
    %v1937 = vld [vmem:[#allocation14 + $0x408] sm:$0xff]
    %v1938 = vld [vmem:[#allocation14 + $0x410] sm:$0xff]
    %v1939 = vld [vmem:[#allocation14 + $0x418] sm:$0xff]
    %v1940 = vld [vmem:[#allocation14 + $0x420] sm:$0xff]
    %v1941 = vld [vmem:[#allocation14 + $0x428] sm:$0xff]
    %v1942 = vld [vmem:[#allocation14 + $0x430] sm:$0xff]
    %v1943 = vld [vmem:[#allocation14 + $0x438] sm:$0xff]
    %v1944 = vld [vmem:[#allocation14 + $0x440] sm:$0xff]
    %v1945 = vld [vmem:[#allocation14 + $0x448] sm:$0xff]
    %v1946 = vld [vmem:[#allocation14 + $0x450] sm:$0xff]
    %v1947 = vld [vmem:[#allocation14 + $0x458] sm:$0xff]
    %v1948 = vld [vmem:[#allocation14 + $0x460] sm:$0xff]
    %v1949 = vld [vmem:[#allocation14 + $0x468] sm:$0xff]
    %v1950 = vld [vmem:[#allocation14 + $0x470] sm:$0xff]
    %v1951 = vld [vmem:[#allocation14 + $0x478] sm:$0xff]
    %v1952 = vld [vmem:[#allocation14 + $0x480] sm:$0xff]
    %v1953 = vld [vmem:[#allocation14 + $0x488] sm:$0xff]
    %v1954 = vld [vmem:[#allocation14 + $0x490] sm:$0xff]
    %v1955 = vld [vmem:[#allocation14 + $0x498] sm:$0xff]
    %v1956 = vld [vmem:[#allocation14 + $0x4a0] sm:$0xff]
    %v1957 = vld [vmem:[#allocation14 + $0x4a8] sm:$0xff]
    %v1958 = vld [vmem:[#allocation14 + $0x4b0] sm:$0xff]
    %v1959 = vld [vmem:[#allocation14 + $0x4b8] sm:$0xff]
    %v1960 = vld [vmem:[#allocation14 + $0x4c0] sm:$0xff]
    %v1961 = vld [vmem:[#allocation14 + $0x4c8] sm:$0xff]
    %v1962 = vld [vmem:[#allocation14 + $0x4d0] sm:$0xff]
    %v1963 = vld [vmem:[#allocation14 + $0x4d8] sm:$0xff]
    %v1964 = vld [vmem:[#allocation14 + $0x4e0] sm:$0xff]
    %v1965 = vld [vmem:[#allocation14 + $0x4e8] sm:$0xff]
    %v1966 = vld [vmem:[#allocation14 + $0x4f0] sm:$0xff]
    %v1967 = vld [vmem:[#allocation14 + $0x4f8] sm:$0xff]
    %v1968 = vld [vmem:[#allocation14 + $0x500] sm:$0xff]
    %v1969 = vld [vmem:[#allocation14 + $0x508] sm:$0xff]
    %v1970 = vld [vmem:[#allocation14 + $0x510] sm:$0xff]
    %v1971 = vld [vmem:[#allocation14 + $0x518] sm:$0xff]
    %v1972 = vld [vmem:[#allocation14 + $0x520] sm:$0xff]
    %v1973 = vld [vmem:[#allocation14 + $0x528] sm:$0xff]
    %v1974 = vld [vmem:[#allocation14 + $0x530] sm:$0xff]
    %v1975 = vld [vmem:[#allocation14 + $0x538] sm:$0xff]
    %v1976 = vld [vmem:[#allocation14 + $0x540] sm:$0xff]
    %v1977 = vld [vmem:[#allocation14 + $0x548] sm:$0xff]
    %v1978 = vld [vmem:[#allocation14 + $0x550] sm:$0xff]
    %v1979 = vld [vmem:[#allocation14 + $0x558] sm:$0xff]
    %v1980 = vld [vmem:[#allocation14 + $0x560] sm:$0xff]
    %v1981 = vld [vmem:[#allocation14 + $0x568] sm:$0xff]
    %v1982 = vld [vmem:[#allocation14 + $0x570] sm:$0xff]
    %v1983 = vld [vmem:[#allocation14 + $0x578] sm:$0xff]
    %v1984 = vld [vmem:[#allocation14 + $0x580] sm:$0xff]
    %v1985 = vld [vmem:[#allocation14 + $0x588] sm:$0xff]
    %v1986 = vld [vmem:[#allocation14 + $0x590] sm:$0xff]
    %v1987 = vld [vmem:[#allocation14 + $0x598] sm:$0xff]
    %v1988 = vld [vmem:[#allocation14 + $0x5a0] sm:$0xff]
    %v1989 = vld [vmem:[#allocation14 + $0x5a8] sm:$0xff]
    %v1990 = vld [vmem:[#allocation14 + $0x5b0] sm:$0xff]
    %v1991 = vld [vmem:[#allocation14 + $0x5b8] sm:$0xff]
    %v1992 = vld [vmem:[#allocation14 + $0x5c0] sm:$0xff]
    %v1993 = vld [vmem:[#allocation14 + $0x5c8] sm:$0xff]
    %v1994 = vld [vmem:[#allocation14 + $0x5d0] sm:$0xff]
    %v1995 = vld [vmem:[#allocation14 + $0x5d8] sm:$0xff]
    %v1996 = vld [vmem:[#allocation14 + $0x5e0] sm:$0xff]
    %v1997 = vld [vmem:[#allocation14 + $0x5e8] sm:$0xff]
    %v1998 = vld [vmem:[#allocation14 + $0x5f0] sm:$0xff]
    %v1999 = vld [vmem:[#allocation14 + $0x5f8] sm:$0xff]
    %v2000 = vld [vmem:[#allocation14 + $0x600] sm:$0xff]
    %v2001 = vld [vmem:[#allocation14 + $0x608] sm:$0xff]
    %v2002 = vld [vmem:[#allocation14 + $0x610] sm:$0xff]
    %v2003 = vld [vmem:[#allocation14 + $0x618] sm:$0xff]
    %v2004 = vld [vmem:[#allocation14 + $0x620] sm:$0xff]
    %v2005 = vld [vmem:[#allocation14 + $0x628] sm:$0xff]
    %v2006 = vld [vmem:[#allocation14 + $0x630] sm:$0xff]
    %v2007 = vld [vmem:[#allocation14 + $0x638] sm:$0xff]
    %v2008 = vld [vmem:[#allocation14 + $0x640] sm:$0xff]
    %v2009 = vld [vmem:[#allocation14 + $0x648] sm:$0xff]
    %v2010 = vld [vmem:[#allocation14 + $0x650] sm:$0xff]
    %v2011 = vld [vmem:[#allocation14 + $0x658] sm:$0xff]
    %v2012 = vld [vmem:[#allocation14 + $0x660] sm:$0xff]
    %v2013 = vld [vmem:[#allocation14 + $0x668] sm:$0xff]
    %v2014 = vld [vmem:[#allocation14 + $0x670] sm:$0xff]
    %v2015 = vld [vmem:[#allocation14 + $0x678] sm:$0xff]
    %v2016 = vld [vmem:[#allocation14 + $0x680] sm:$0xff]
    %v2017 = vld [vmem:[#allocation14 + $0x688] sm:$0xff]
    %v2018 = vld [vmem:[#allocation14 + $0x690] sm:$0xff]
    %v2019 = vld [vmem:[#allocation14 + $0x698] sm:$0xff]
    %v2020 = vld [vmem:[#allocation14 + $0x6a0] sm:$0xff]
    %v2021 = vld [vmem:[#allocation14 + $0x6a8] sm:$0xff]
    %v2022 = vld [vmem:[#allocation14 + $0x6b0] sm:$0xff]
    %v2023 = vld [vmem:[#allocation14 + $0x6b8] sm:$0xff]
    %v2024 = vld [vmem:[#allocation14 + $0x6c0] sm:$0xff]
    %v2025 = vld [vmem:[#allocation14 + $0x6c8] sm:$0xff]
    %v2026 = vld [vmem:[#allocation14 + $0x6d0] sm:$0xff]
    %v2027 = vld [vmem:[#allocation14 + $0x6d8] sm:$0xff]
    %v2028 = vld [vmem:[#allocation14 + $0x6e0] sm:$0xff]
    %v2029 = vld [vmem:[#allocation14 + $0x6e8] sm:$0xff]
    %v2030 = vld [vmem:[#allocation14 + $0x6f0] sm:$0xff]
    %v2031 = vld [vmem:[#allocation14 + $0x6f8] sm:$0xff]
    %v2032 = vld [vmem:[#allocation14 + $0x700] sm:$0xff]
    %v2033 = vld [vmem:[#allocation14 + $0x708] sm:$0xff]
    %v2034 = vld [vmem:[#allocation14 + $0x710] sm:$0xff]
    %v2035 = vld [vmem:[#allocation14 + $0x718] sm:$0xff]
    %v2036 = vld [vmem:[#allocation14 + $0x720] sm:$0xff]
    %v2037 = vld [vmem:[#allocation14 + $0x728] sm:$0xff]
    %v2038 = vld [vmem:[#allocation14 + $0x730] sm:$0xff]
    %v2039 = vld [vmem:[#allocation14 + $0x738] sm:$0xff]
    %v2040 = vld [vmem:[#allocation14 + $0x740] sm:$0xff]
    %v2041 = vld [vmem:[#allocation14 + $0x748] sm:$0xff]
    %v2042 = vld [vmem:[#allocation14 + $0x750] sm:$0xff]
    %v2043 = vld [vmem:[#allocation14 + $0x758] sm:$0xff]
    %v2044 = vld [vmem:[#allocation14 + $0x760] sm:$0xff]
    %v2045 = vld [vmem:[#allocation14 + $0x768] sm:$0xff]
    %v2046 = vld [vmem:[#allocation14 + $0x770] sm:$0xff]
    %v2047 = vld [vmem:[#allocation14 + $0x778] sm:$0xff]
    %v2048 = vld [vmem:[#allocation14 + $0x780] sm:$0xff]
    %v2049 = vld [vmem:[#allocation14 + $0x788] sm:$0xff]
    %v2050 = vld [vmem:[#allocation14 + $0x790] sm:$0xff]
    %v2051 = vld [vmem:[#allocation14 + $0x798] sm:$0xff]
    %v2052 = vld [vmem:[#allocation14 + $0x7a0] sm:$0xff]
    %v2053 = vld [vmem:[#allocation14 + $0x7a8] sm:$0xff]
    %v2054 = vld [vmem:[#allocation14 + $0x7b0] sm:$0xff]
    %v2055 = vld [vmem:[#allocation14 + $0x7b8] sm:$0xff]
    %v2056 = vld [vmem:[#allocation14 + $0x7c0] sm:$0xff]
    %v2057 = vld [vmem:[#allocation14 + $0x7c8] sm:$0xff]
    %v2058 = vld [vmem:[#allocation14 + $0x7d0] sm:$0xff]
    %v2059 = vld [vmem:[#allocation14 + $0x7d8] sm:$0xff]
    %v2060 = vld [vmem:[#allocation14 + $0x7e0] sm:$0xff]
    %v2061 = vld [vmem:[#allocation14 + $0x7e8] sm:$0xff]
    %v2062 = vld [vmem:[#allocation14 + $0x7f0] sm:$0xff]
    %v2063 = vld [vmem:[#allocation14 + $0x7f8] sm:$0xff]
    %v2064 = vld [vmem:[#allocation16] sm:$0xff]
    %v2066 = vlaneseq
    %v2067 = vshrl.u32 %v2066, 7
    %v2068 = vsub.s32 0, %v2067
    %v2069 = vrot.slane %v2064, %v2068
    %v2070 = vlaneseq
    %v2071 = vshrl.u32 %v2070, 7
    %v2072 = vsub.s32 1, %v2071
    %v2073 = vrot.slane %v2064, %v2072
    %v2074 = vlaneseq
    %v2075 = vshrl.u32 %v2074, 7
    %v2076 = vsub.s32 2, %v2075
    %v2077 = vrot.slane %v2064, %v2076
    %v2078 = vlaneseq
    %v2079 = vshrl.u32 %v2078, 7
    %v2080 = vsub.s32 3, %v2079
    %v2081 = vrot.slane %v2064, %v2080
    %v2082 = vlaneseq
    %v2083 = vshrl.u32 %v2082, 7
    %v2084 = vsub.s32 4, %v2083
    %v2085 = vrot.slane %v2064, %v2084
    %v2086 = vlaneseq
    %v2087 = vshrl.u32 %v2086, 7
    %v2088 = vsub.s32 5, %v2087
    %v2089 = vrot.slane %v2064, %v2088
    %v2090 = vlaneseq
    %v2091 = vshrl.u32 %v2090, 7
    %v2092 = vsub.s32 6, %v2091
    %v2093 = vrot.slane %v2064, %v2092
    %v2094 = vlaneseq
    %v2095 = vshrl.u32 %v2094, 7
    %v2096 = vsub.s32 7, %v2095
    %v2097 = vrot.slane %v2064, %v2096
    %v2362 = vunpack.c.l.b16 %v1808
    %v2363 = vunpack.c.h.b16 %v1808
    %v2364 = vunpack.c.l.b16 %v1809
    %v2365 = vunpack.c.h.b16 %v1809
    %v2366 = vunpack.c.l.b16 %v1810
    %v2367 = vunpack.c.h.b16 %v1810
    %v2368 = vunpack.c.l.b16 %v1811
    %v2369 = vunpack.c.h.b16 %v1811
    %v2370 = vunpack.c.l.b16 %v1812
    %v2371 = vunpack.c.h.b16 %v1812
    %v2372 = vunpack.c.l.b16 %v1813
    %v2373 = vunpack.c.h.b16 %v1813
    %v2374 = vunpack.c.l.b16 %v1814
    %v2375 = vunpack.c.h.b16 %v1814
    %v2376 = vunpack.c.l.b16 %v1815
    %v2377 = vunpack.c.h.b16 %v1815
    %v2378 = vunpack.c.l.b16 %v1816
    %v2379 = vunpack.c.h.b16 %v1816
    %v2380 = vunpack.c.l.b16 %v1817
    %v2381 = vunpack.c.h.b16 %v1817
    %v2382 = vunpack.c.l.b16 %v1818
    %v2383 = vunpack.c.h.b16 %v1818
    %v2384 = vunpack.c.l.b16 %v1819
    %v2385 = vunpack.c.h.b16 %v1819
    %v2386 = vunpack.c.l.b16 %v1820
    %v2387 = vunpack.c.h.b16 %v1820
    %v2388 = vunpack.c.l.b16 %v1821
    %v2389 = vunpack.c.h.b16 %v1821
    %v2390 = vunpack.c.l.b16 %v1822
    %v2391 = vunpack.c.h.b16 %v1822
    %v2392 = vunpack.c.l.b16 %v1823
    %v2393 = vunpack.c.h.b16 %v1823
    %v2394 = vunpack.c.l.b16 %v1824
    %v2395 = vunpack.c.h.b16 %v1824
    %v2396 = vunpack.c.l.b16 %v1825
    %v2397 = vunpack.c.h.b16 %v1825
    %v2398 = vunpack.c.l.b16 %v1826
    %v2399 = vunpack.c.h.b16 %v1826
    %v2400 = vunpack.c.l.b16 %v1827
    %v2401 = vunpack.c.h.b16 %v1827
    %v2402 = vunpack.c.l.b16 %v1828
    %v2403 = vunpack.c.h.b16 %v1828
    %v2404 = vunpack.c.l.b16 %v1829
    %v2405 = vunpack.c.h.b16 %v1829
    %v2406 = vunpack.c.l.b16 %v1830
    %v2407 = vunpack.c.h.b16 %v1830
    %v2408 = vunpack.c.l.b16 %v1831
    %v2409 = vunpack.c.h.b16 %v1831
    %v2410 = vunpack.c.l.b16 %v1832
    %v2411 = vunpack.c.h.b16 %v1832
    %v2412 = vunpack.c.l.b16 %v1833
    %v2413 = vunpack.c.h.b16 %v1833
    %v2414 = vunpack.c.l.b16 %v1834
    %v2415 = vunpack.c.h.b16 %v1834
    %v2416 = vunpack.c.l.b16 %v1835
    %v2417 = vunpack.c.h.b16 %v1835
    %v2418 = vunpack.c.l.b16 %v1836
    %v2419 = vunpack.c.h.b16 %v1836
    %v2420 = vunpack.c.l.b16 %v1837
    %v2421 = vunpack.c.h.b16 %v1837
    %v2422 = vunpack.c.l.b16 %v1838
    %v2423 = vunpack.c.h.b16 %v1838
    %v2424 = vunpack.c.l.b16 %v1839
    %v2425 = vunpack.c.h.b16 %v1839
    %v2426 = vunpack.c.l.b16 %v1840
    %v2427 = vunpack.c.h.b16 %v1840
    %v2428 = vunpack.c.l.b16 %v1841
    %v2429 = vunpack.c.h.b16 %v1841
    %v2430 = vunpack.c.l.b16 %v1842
    %v2431 = vunpack.c.h.b16 %v1842
    %v2432 = vunpack.c.l.b16 %v1843
    %v2433 = vunpack.c.h.b16 %v1843
    %v2434 = vunpack.c.l.b16 %v1844
    %v2435 = vunpack.c.h.b16 %v1844
    %v2436 = vunpack.c.l.b16 %v1845
    %v2437 = vunpack.c.h.b16 %v1845
    %v2438 = vunpack.c.l.b16 %v1846
    %v2439 = vunpack.c.h.b16 %v1846
    %v2440 = vunpack.c.l.b16 %v1847
    %v2441 = vunpack.c.h.b16 %v1847
    %v2442 = vunpack.c.l.b16 %v1848
    %v2443 = vunpack.c.h.b16 %v1848
    %v2444 = vunpack.c.l.b16 %v1849
    %v2445 = vunpack.c.h.b16 %v1849
    %v2446 = vunpack.c.l.b16 %v1850
    %v2447 = vunpack.c.h.b16 %v1850
    %v2448 = vunpack.c.l.b16 %v1851
    %v2449 = vunpack.c.h.b16 %v1851
    %v2450 = vunpack.c.l.b16 %v1852
    %v2451 = vunpack.c.h.b16 %v1852
    %v2452 = vunpack.c.l.b16 %v1853
    %v2453 = vunpack.c.h.b16 %v1853
    %v2454 = vunpack.c.l.b16 %v1854
    %v2455 = vunpack.c.h.b16 %v1854
    %v2456 = vunpack.c.l.b16 %v1855
    %v2457 = vunpack.c.h.b16 %v1855
    %v2458 = vunpack.c.l.b16 %v1856
    %v2459 = vunpack.c.h.b16 %v1856
    %v2460 = vunpack.c.l.b16 %v1857
    %v2461 = vunpack.c.h.b16 %v1857
    %v2462 = vunpack.c.l.b16 %v1858
    %v2463 = vunpack.c.h.b16 %v1858
    %v2464 = vunpack.c.l.b16 %v1859
    %v2465 = vunpack.c.h.b16 %v1859
    %v2466 = vunpack.c.l.b16 %v1860
    %v2467 = vunpack.c.h.b16 %v1860
    %v2468 = vunpack.c.l.b16 %v1861
    %v2469 = vunpack.c.h.b16 %v1861
    %v2470 = vunpack.c.l.b16 %v1862
    %v2471 = vunpack.c.h.b16 %v1862
    %v2472 = vunpack.c.l.b16 %v1863
    %v2473 = vunpack.c.h.b16 %v1863
    %v2474 = vunpack.c.l.b16 %v1864
    %v2475 = vunpack.c.h.b16 %v1864
    %v2476 = vunpack.c.l.b16 %v1865
    %v2477 = vunpack.c.h.b16 %v1865
    %v2478 = vunpack.c.l.b16 %v1866
    %v2479 = vunpack.c.h.b16 %v1866
    %v2480 = vunpack.c.l.b16 %v1867
    %v2481 = vunpack.c.h.b16 %v1867
    %v2482 = vunpack.c.l.b16 %v1868
    %v2483 = vunpack.c.h.b16 %v1868
    %v2484 = vunpack.c.l.b16 %v1869
    %v2485 = vunpack.c.h.b16 %v1869
    %v2486 = vunpack.c.l.b16 %v1870
    %v2487 = vunpack.c.h.b16 %v1870
    %v2488 = vunpack.c.l.b16 %v1871
    %v2489 = vunpack.c.h.b16 %v1871
    %v2490 = vunpack.c.l.b16 %v1872
    %v2491 = vunpack.c.h.b16 %v1872
    %v2492 = vunpack.c.l.b16 %v1873
    %v2493 = vunpack.c.h.b16 %v1873
    %v2494 = vunpack.c.l.b16 %v1874
    %v2495 = vunpack.c.h.b16 %v1874
    %v2496 = vunpack.c.l.b16 %v1875
    %v2497 = vunpack.c.h.b16 %v1875
    %v2498 = vunpack.c.l.b16 %v1876
    %v2499 = vunpack.c.h.b16 %v1876
    %v2500 = vunpack.c.l.b16 %v1877
    %v2501 = vunpack.c.h.b16 %v1877
    %v2502 = vunpack.c.l.b16 %v1878
    %v2503 = vunpack.c.h.b16 %v1878
    %v2504 = vunpack.c.l.b16 %v1879
    %v2505 = vunpack.c.h.b16 %v1879
    %v2506 = vunpack.c.l.b16 %v1880
    %v2507 = vunpack.c.h.b16 %v1880
    %v2508 = vunpack.c.l.b16 %v1881
    %v2509 = vunpack.c.h.b16 %v1881
    %v2510 = vunpack.c.l.b16 %v1882
    %v2511 = vunpack.c.h.b16 %v1882
    %v2512 = vunpack.c.l.b16 %v1883
    %v2513 = vunpack.c.h.b16 %v1883
    %v2514 = vunpack.c.l.b16 %v1884
    %v2515 = vunpack.c.h.b16 %v1884
    %v2516 = vunpack.c.l.b16 %v1885
    %v2517 = vunpack.c.h.b16 %v1885
    %v2518 = vunpack.c.l.b16 %v1886
    %v2519 = vunpack.c.h.b16 %v1886
    %v2520 = vunpack.c.l.b16 %v1887
    %v2521 = vunpack.c.h.b16 %v1887
    %v2522 = vunpack.c.l.b16 %v1888
    %v2523 = vunpack.c.h.b16 %v1888
    %v2524 = vunpack.c.l.b16 %v1889
    %v2525 = vunpack.c.h.b16 %v1889
    %v2526 = vunpack.c.l.b16 %v1890
    %v2527 = vunpack.c.h.b16 %v1890
    %v2528 = vunpack.c.l.b16 %v1891
    %v2529 = vunpack.c.h.b16 %v1891
    %v2530 = vunpack.c.l.b16 %v1892
    %v2531 = vunpack.c.h.b16 %v1892
    %v2532 = vunpack.c.l.b16 %v1893
    %v2533 = vunpack.c.h.b16 %v1893
    %v2534 = vunpack.c.l.b16 %v1894
    %v2535 = vunpack.c.h.b16 %v1894
    %v2536 = vunpack.c.l.b16 %v1895
    %v2537 = vunpack.c.h.b16 %v1895
    %v2538 = vunpack.c.l.b16 %v1896
    %v2539 = vunpack.c.h.b16 %v1896
    %v2540 = vunpack.c.l.b16 %v1897
    %v2541 = vunpack.c.h.b16 %v1897
    %v2542 = vunpack.c.l.b16 %v1898
    %v2543 = vunpack.c.h.b16 %v1898
    %v2544 = vunpack.c.l.b16 %v1899
    %v2545 = vunpack.c.h.b16 %v1899
    %v2546 = vunpack.c.l.b16 %v1900
    %v2547 = vunpack.c.h.b16 %v1900
    %v2548 = vunpack.c.l.b16 %v1901
    %v2549 = vunpack.c.h.b16 %v1901
    %v2550 = vunpack.c.l.b16 %v1902
    %v2551 = vunpack.c.h.b16 %v1902
    %v2552 = vunpack.c.l.b16 %v1903
    %v2553 = vunpack.c.h.b16 %v1903
    %v2554 = vunpack.c.l.b16 %v1904
    %v2555 = vunpack.c.h.b16 %v1904
    %v2556 = vunpack.c.l.b16 %v1905
    %v2557 = vunpack.c.h.b16 %v1905
    %v2558 = vunpack.c.l.b16 %v1906
    %v2559 = vunpack.c.h.b16 %v1906
    %v2560 = vunpack.c.l.b16 %v1907
    %v2561 = vunpack.c.h.b16 %v1907
    %v2562 = vunpack.c.l.b16 %v1908
    %v2563 = vunpack.c.h.b16 %v1908
    %v2564 = vunpack.c.l.b16 %v1909
    %v2565 = vunpack.c.h.b16 %v1909
    %v2566 = vunpack.c.l.b16 %v1910
    %v2567 = vunpack.c.h.b16 %v1910
    %v2568 = vunpack.c.l.b16 %v1911
    %v2569 = vunpack.c.h.b16 %v1911
    %v2570 = vunpack.c.l.b16 %v1912
    %v2571 = vunpack.c.h.b16 %v1912
    %v2572 = vunpack.c.l.b16 %v1913
    %v2573 = vunpack.c.h.b16 %v1913
    %v2574 = vunpack.c.l.b16 %v1914
    %v2575 = vunpack.c.h.b16 %v1914
    %v2576 = vunpack.c.l.b16 %v1915
    %v2577 = vunpack.c.h.b16 %v1915
    %v2578 = vunpack.c.l.b16 %v1916
    %v2579 = vunpack.c.h.b16 %v1916
    %v2580 = vunpack.c.l.b16 %v1917
    %v2581 = vunpack.c.h.b16 %v1917
    %v2582 = vunpack.c.l.b16 %v1918
    %v2583 = vunpack.c.h.b16 %v1918
    %v2584 = vunpack.c.l.b16 %v1919
    %v2585 = vunpack.c.h.b16 %v1919
    %v2586 = vunpack.c.l.b16 %v1920
    %v2587 = vunpack.c.h.b16 %v1920
    %v2588 = vunpack.c.l.b16 %v1921
    %v2589 = vunpack.c.h.b16 %v1921
    %v2590 = vunpack.c.l.b16 %v1922
    %v2591 = vunpack.c.h.b16 %v1922
    %v2592 = vunpack.c.l.b16 %v1923
    %v2593 = vunpack.c.h.b16 %v1923
    %v2594 = vunpack.c.l.b16 %v1924
    %v2595 = vunpack.c.h.b16 %v1924
    %v2596 = vunpack.c.l.b16 %v1925
    %v2597 = vunpack.c.h.b16 %v1925
    %v2598 = vunpack.c.l.b16 %v1926
    %v2599 = vunpack.c.h.b16 %v1926
    %v2600 = vunpack.c.l.b16 %v1927
    %v2601 = vunpack.c.h.b16 %v1927
    %v2602 = vunpack.c.l.b16 %v1928
    %v2603 = vunpack.c.h.b16 %v1928
    %v2604 = vunpack.c.l.b16 %v1929
    %v2605 = vunpack.c.h.b16 %v1929
    %v2606 = vunpack.c.l.b16 %v1930
    %v2607 = vunpack.c.h.b16 %v1930
    %v2608 = vunpack.c.l.b16 %v1931
    %v2609 = vunpack.c.h.b16 %v1931
    %v2610 = vunpack.c.l.b16 %v1932
    %v2611 = vunpack.c.h.b16 %v1932
    %v2612 = vunpack.c.l.b16 %v1933
    %v2613 = vunpack.c.h.b16 %v1933
    %v2614 = vunpack.c.l.b16 %v1934
    %v2615 = vunpack.c.h.b16 %v1934
    %v2616 = vunpack.c.l.b16 %v1935
    %v2617 = vunpack.c.h.b16 %v1935
    %v2618 = vunpack.c.l.b16 %v1936
    %v2619 = vunpack.c.h.b16 %v1936
    %v2620 = vunpack.c.l.b16 %v1937
    %v2621 = vunpack.c.h.b16 %v1937
    %v2622 = vunpack.c.l.b16 %v1938
    %v2623 = vunpack.c.h.b16 %v1938
    %v2624 = vunpack.c.l.b16 %v1939
    %v2625 = vunpack.c.h.b16 %v1939
    %v2626 = vunpack.c.l.b16 %v1940
    %v2627 = vunpack.c.h.b16 %v1940
    %v2628 = vunpack.c.l.b16 %v1941
    %v2629 = vunpack.c.h.b16 %v1941
    %v2630 = vunpack.c.l.b16 %v1942
    %v2631 = vunpack.c.h.b16 %v1942
    %v2632 = vunpack.c.l.b16 %v1943
    %v2633 = vunpack.c.h.b16 %v1943
    %v2634 = vunpack.c.l.b16 %v1944
    %v2635 = vunpack.c.h.b16 %v1944
    %v2636 = vunpack.c.l.b16 %v1945
    %v2637 = vunpack.c.h.b16 %v1945
    %v2638 = vunpack.c.l.b16 %v1946
    %v2639 = vunpack.c.h.b16 %v1946
    %v2640 = vunpack.c.l.b16 %v1947
    %v2641 = vunpack.c.h.b16 %v1947
    %v2642 = vunpack.c.l.b16 %v1948
    %v2643 = vunpack.c.h.b16 %v1948
    %v2644 = vunpack.c.l.b16 %v1949
    %v2645 = vunpack.c.h.b16 %v1949
    %v2646 = vunpack.c.l.b16 %v1950
    %v2647 = vunpack.c.h.b16 %v1950
    %v2648 = vunpack.c.l.b16 %v1951
    %v2649 = vunpack.c.h.b16 %v1951
    %v2650 = vunpack.c.l.b16 %v1952
    %v2651 = vunpack.c.h.b16 %v1952
    %v2652 = vunpack.c.l.b16 %v1953
    %v2653 = vunpack.c.h.b16 %v1953
    %v2654 = vunpack.c.l.b16 %v1954
    %v2655 = vunpack.c.h.b16 %v1954
    %v2656 = vunpack.c.l.b16 %v1955
    %v2657 = vunpack.c.h.b16 %v1955
    %v2658 = vunpack.c.l.b16 %v1956
    %v2659 = vunpack.c.h.b16 %v1956
    %v2660 = vunpack.c.l.b16 %v1957
    %v2661 = vunpack.c.h.b16 %v1957
    %v2662 = vunpack.c.l.b16 %v1958
    %v2663 = vunpack.c.h.b16 %v1958
    %v2664 = vunpack.c.l.b16 %v1959
    %v2665 = vunpack.c.h.b16 %v1959
    %v2666 = vunpack.c.l.b16 %v1960
    %v2667 = vunpack.c.h.b16 %v1960
    %v2668 = vunpack.c.l.b16 %v1961
    %v2669 = vunpack.c.h.b16 %v1961
    %v2670 = vunpack.c.l.b16 %v1962
    %v2671 = vunpack.c.h.b16 %v1962
    %v2672 = vunpack.c.l.b16 %v1963
    %v2673 = vunpack.c.h.b16 %v1963
    %v2674 = vunpack.c.l.b16 %v1964
    %v2675 = vunpack.c.h.b16 %v1964
    %v2676 = vunpack.c.l.b16 %v1965
    %v2677 = vunpack.c.h.b16 %v1965
    %v2678 = vunpack.c.l.b16 %v1966
    %v2679 = vunpack.c.h.b16 %v1966
    %v2680 = vunpack.c.l.b16 %v1967
    %v2681 = vunpack.c.h.b16 %v1967
    %v2682 = vunpack.c.l.b16 %v1968
    %v2683 = vunpack.c.h.b16 %v1968
    %v2684 = vunpack.c.l.b16 %v1969
    %v2685 = vunpack.c.h.b16 %v1969
    %v2686 = vunpack.c.l.b16 %v1970
    %v2687 = vunpack.c.h.b16 %v1970
    %v2688 = vunpack.c.l.b16 %v1971
    %v2689 = vunpack.c.h.b16 %v1971
    %v2690 = vunpack.c.l.b16 %v1972
    %v2691 = vunpack.c.h.b16 %v1972
    %v2692 = vunpack.c.l.b16 %v1973
    %v2693 = vunpack.c.h.b16 %v1973
    %v2694 = vunpack.c.l.b16 %v1974
    %v2695 = vunpack.c.h.b16 %v1974
    %v2696 = vunpack.c.l.b16 %v1975
    %v2697 = vunpack.c.h.b16 %v1975
    %v2698 = vunpack.c.l.b16 %v1976
    %v2699 = vunpack.c.h.b16 %v1976
    %v2700 = vunpack.c.l.b16 %v1977
    %v2701 = vunpack.c.h.b16 %v1977
    %v2702 = vunpack.c.l.b16 %v1978
    %v2703 = vunpack.c.h.b16 %v1978
    %v2704 = vunpack.c.l.b16 %v1979
    %v2705 = vunpack.c.h.b16 %v1979
    %v2706 = vunpack.c.l.b16 %v1980
    %v2707 = vunpack.c.h.b16 %v1980
    %v2708 = vunpack.c.l.b16 %v1981
    %v2709 = vunpack.c.h.b16 %v1981
    %v2710 = vunpack.c.l.b16 %v1982
    %v2711 = vunpack.c.h.b16 %v1982
    %v2712 = vunpack.c.l.b16 %v1983
    %v2713 = vunpack.c.h.b16 %v1983
    %v2714 = vunpack.c.l.b16 %v1984
    %v2715 = vunpack.c.h.b16 %v1984
    %v2716 = vunpack.c.l.b16 %v1985
    %v2717 = vunpack.c.h.b16 %v1985
    %v2718 = vunpack.c.l.b16 %v1986
    %v2719 = vunpack.c.h.b16 %v1986
    %v2720 = vunpack.c.l.b16 %v1987
    %v2721 = vunpack.c.h.b16 %v1987
    %v2722 = vunpack.c.l.b16 %v1988
    %v2723 = vunpack.c.h.b16 %v1988
    %v2724 = vunpack.c.l.b16 %v1989
    %v2725 = vunpack.c.h.b16 %v1989
    %v2726 = vunpack.c.l.b16 %v1990
    %v2727 = vunpack.c.h.b16 %v1990
    %v2728 = vunpack.c.l.b16 %v1991
    %v2729 = vunpack.c.h.b16 %v1991
    %v2730 = vunpack.c.l.b16 %v1992
    %v2731 = vunpack.c.h.b16 %v1992
    %v2732 = vunpack.c.l.b16 %v1993
    %v2733 = vunpack.c.h.b16 %v1993
    %v2734 = vunpack.c.l.b16 %v1994
    %v2735 = vunpack.c.h.b16 %v1994
    %v2736 = vunpack.c.l.b16 %v1995
    %v2737 = vunpack.c.h.b16 %v1995
    %v2738 = vunpack.c.l.b16 %v1996
    %v2739 = vunpack.c.h.b16 %v1996
    %v2740 = vunpack.c.l.b16 %v1997
    %v2741 = vunpack.c.h.b16 %v1997
    %v2742 = vunpack.c.l.b16 %v1998
    %v2743 = vunpack.c.h.b16 %v1998
    %v2744 = vunpack.c.l.b16 %v1999
    %v2745 = vunpack.c.h.b16 %v1999
    %v2746 = vunpack.c.l.b16 %v2000
    %v2747 = vunpack.c.h.b16 %v2000
    %v2748 = vunpack.c.l.b16 %v2001
    %v2749 = vunpack.c.h.b16 %v2001
    %v2750 = vunpack.c.l.b16 %v2002
    %v2751 = vunpack.c.h.b16 %v2002
    %v2752 = vunpack.c.l.b16 %v2003
    %v2753 = vunpack.c.h.b16 %v2003
    %v2754 = vunpack.c.l.b16 %v2004
    %v2755 = vunpack.c.h.b16 %v2004
    %v2756 = vunpack.c.l.b16 %v2005
    %v2757 = vunpack.c.h.b16 %v2005
    %v2758 = vunpack.c.l.b16 %v2006
    %v2759 = vunpack.c.h.b16 %v2006
    %v2760 = vunpack.c.l.b16 %v2007
    %v2761 = vunpack.c.h.b16 %v2007
    %v2762 = vunpack.c.l.b16 %v2008
    %v2763 = vunpack.c.h.b16 %v2008
    %v2764 = vunpack.c.l.b16 %v2009
    %v2765 = vunpack.c.h.b16 %v2009
    %v2766 = vunpack.c.l.b16 %v2010
    %v2767 = vunpack.c.h.b16 %v2010
    %v2768 = vunpack.c.l.b16 %v2011
    %v2769 = vunpack.c.h.b16 %v2011
    %v2770 = vunpack.c.l.b16 %v2012
    %v2771 = vunpack.c.h.b16 %v2012
    %v2772 = vunpack.c.l.b16 %v2013
    %v2773 = vunpack.c.h.b16 %v2013
    %v2774 = vunpack.c.l.b16 %v2014
    %v2775 = vunpack.c.h.b16 %v2014
    %v2776 = vunpack.c.l.b16 %v2015
    %v2777 = vunpack.c.h.b16 %v2015
    %v2778 = vunpack.c.l.b16 %v2016
    %v2779 = vunpack.c.h.b16 %v2016
    %v2780 = vunpack.c.l.b16 %v2017
    %v2781 = vunpack.c.h.b16 %v2017
    %v2782 = vunpack.c.l.b16 %v2018
    %v2783 = vunpack.c.h.b16 %v2018
    %v2784 = vunpack.c.l.b16 %v2019
    %v2785 = vunpack.c.h.b16 %v2019
    %v2786 = vunpack.c.l.b16 %v2020
    %v2787 = vunpack.c.h.b16 %v2020
    %v2788 = vunpack.c.l.b16 %v2021
    %v2789 = vunpack.c.h.b16 %v2021
    %v2790 = vunpack.c.l.b16 %v2022
    %v2791 = vunpack.c.h.b16 %v2022
    %v2792 = vunpack.c.l.b16 %v2023
    %v2793 = vunpack.c.h.b16 %v2023
    %v2794 = vunpack.c.l.b16 %v2024
    %v2795 = vunpack.c.h.b16 %v2024
    %v2796 = vunpack.c.l.b16 %v2025
    %v2797 = vunpack.c.h.b16 %v2025
    %v2798 = vunpack.c.l.b16 %v2026
    %v2799 = vunpack.c.h.b16 %v2026
    %v2800 = vunpack.c.l.b16 %v2027
    %v2801 = vunpack.c.h.b16 %v2027
    %v2802 = vunpack.c.l.b16 %v2028
    %v2803 = vunpack.c.h.b16 %v2028
    %v2804 = vunpack.c.l.b16 %v2029
    %v2805 = vunpack.c.h.b16 %v2029
    %v2806 = vunpack.c.l.b16 %v2030
    %v2807 = vunpack.c.h.b16 %v2030
    %v2808 = vunpack.c.l.b16 %v2031
    %v2809 = vunpack.c.h.b16 %v2031
    %v2810 = vunpack.c.l.b16 %v2032
    %v2811 = vunpack.c.h.b16 %v2032
    %v2812 = vunpack.c.l.b16 %v2033
    %v2813 = vunpack.c.h.b16 %v2033
    %v2814 = vunpack.c.l.b16 %v2034
    %v2815 = vunpack.c.h.b16 %v2034
    %v2816 = vunpack.c.l.b16 %v2035
    %v2817 = vunpack.c.h.b16 %v2035
    %v2818 = vunpack.c.l.b16 %v2036
    %v2819 = vunpack.c.h.b16 %v2036
    %v2820 = vunpack.c.l.b16 %v2037
    %v2821 = vunpack.c.h.b16 %v2037
    %v2822 = vunpack.c.l.b16 %v2038
    %v2823 = vunpack.c.h.b16 %v2038
    %v2824 = vunpack.c.l.b16 %v2039
    %v2825 = vunpack.c.h.b16 %v2039
    %v2826 = vunpack.c.l.b16 %v2040
    %v2827 = vunpack.c.h.b16 %v2040
    %v2828 = vunpack.c.l.b16 %v2041
    %v2829 = vunpack.c.h.b16 %v2041
    %v2830 = vunpack.c.l.b16 %v2042
    %v2831 = vunpack.c.h.b16 %v2042
    %v2832 = vunpack.c.l.b16 %v2043
    %v2833 = vunpack.c.h.b16 %v2043
    %v2834 = vunpack.c.l.b16 %v2044
    %v2835 = vunpack.c.h.b16 %v2044
    %v2836 = vunpack.c.l.b16 %v2045
    %v2837 = vunpack.c.h.b16 %v2045
    %v2838 = vunpack.c.l.b16 %v2046
    %v2839 = vunpack.c.h.b16 %v2046
    %v2840 = vunpack.c.l.b16 %v2047
    %v2841 = vunpack.c.h.b16 %v2047
    %v2842 = vunpack.c.l.b16 %v2048
    %v2843 = vunpack.c.h.b16 %v2048
    %v2844 = vunpack.c.l.b16 %v2049
    %v2845 = vunpack.c.h.b16 %v2049
    %v2846 = vunpack.c.l.b16 %v2050
    %v2847 = vunpack.c.h.b16 %v2050
    %v2848 = vunpack.c.l.b16 %v2051
    %v2849 = vunpack.c.h.b16 %v2051
    %v2850 = vunpack.c.l.b16 %v2052
    %v2851 = vunpack.c.h.b16 %v2052
    %v2852 = vunpack.c.l.b16 %v2053
    %v2853 = vunpack.c.h.b16 %v2053
    %v2854 = vunpack.c.l.b16 %v2054
    %v2855 = vunpack.c.h.b16 %v2054
    %v2856 = vunpack.c.l.b16 %v2055
    %v2857 = vunpack.c.h.b16 %v2055
    %v2858 = vunpack.c.l.b16 %v2056
    %v2859 = vunpack.c.h.b16 %v2056
    %v2860 = vunpack.c.l.b16 %v2057
    %v2861 = vunpack.c.h.b16 %v2057
    %v2862 = vunpack.c.l.b16 %v2058
    %v2863 = vunpack.c.h.b16 %v2058
    %v2864 = vunpack.c.l.b16 %v2059
    %v2865 = vunpack.c.h.b16 %v2059
    %v2866 = vunpack.c.l.b16 %v2060
    %v2867 = vunpack.c.h.b16 %v2060
    %v2868 = vunpack.c.l.b16 %v2061
    %v2869 = vunpack.c.h.b16 %v2061
    %v2870 = vunpack.c.l.b16 %v2062
    %v2871 = vunpack.c.h.b16 %v2062
    %v2872 = vunpack.c.l.b16 %v2063
    %v2873 = vunpack.c.h.b16 %v2063
    %v2874 = vpack.c.b16 %v2370, %v2362
    %v2875 = vpack.c.b16 %v2371, %v2363
    %v2876 = vpack.c.b16 %v2372, %v2364
    %v2877 = vpack.c.b16 %v2373, %v2365
    %v2878 = vpack.c.b16 %v2374, %v2366
    %v2879 = vpack.c.b16 %v2375, %v2367
    %v2880 = vpack.c.b16 %v2376, %v2368
    %v2881 = vpack.c.b16 %v2377, %v2369
    %v2882 = vpack.c.b16 %v2386, %v2378
    %v2883 = vpack.c.b16 %v2387, %v2379
    %v2884 = vpack.c.b16 %v2388, %v2380
    %v2885 = vpack.c.b16 %v2389, %v2381
    %v2886 = vpack.c.b16 %v2390, %v2382
    %v2887 = vpack.c.b16 %v2391, %v2383
    %v2888 = vpack.c.b16 %v2392, %v2384
    %v2889 = vpack.c.b16 %v2393, %v2385
    %v2890 = vpack.c.b16 %v2402, %v2394
    %v2891 = vpack.c.b16 %v2403, %v2395
    %v2892 = vpack.c.b16 %v2404, %v2396
    %v2893 = vpack.c.b16 %v2405, %v2397
    %v2894 = vpack.c.b16 %v2406, %v2398
    %v2895 = vpack.c.b16 %v2407, %v2399
    %v2896 = vpack.c.b16 %v2408, %v2400
    %v2897 = vpack.c.b16 %v2409, %v2401
    %v2898 = vpack.c.b16 %v2418, %v2410
    %v2899 = vpack.c.b16 %v2419, %v2411
    %v2900 = vpack.c.b16 %v2420, %v2412
    %v2901 = vpack.c.b16 %v2421, %v2413
    %v2902 = vpack.c.b16 %v2422, %v2414
    %v2903 = vpack.c.b16 %v2423, %v2415
    %v2904 = vpack.c.b16 %v2424, %v2416
    %v2905 = vpack.c.b16 %v2425, %v2417
    %v2906 = vpack.c.b16 %v2434, %v2426
    %v2907 = vpack.c.b16 %v2435, %v2427
    %v2908 = vpack.c.b16 %v2436, %v2428
    %v2909 = vpack.c.b16 %v2437, %v2429
    %v2910 = vpack.c.b16 %v2438, %v2430
    %v2911 = vpack.c.b16 %v2439, %v2431
    %v2912 = vpack.c.b16 %v2440, %v2432
    %v2913 = vpack.c.b16 %v2441, %v2433
    %v2914 = vpack.c.b16 %v2450, %v2442
    %v2915 = vpack.c.b16 %v2451, %v2443
    %v2916 = vpack.c.b16 %v2452, %v2444
    %v2917 = vpack.c.b16 %v2453, %v2445
    %v2918 = vpack.c.b16 %v2454, %v2446
    %v2919 = vpack.c.b16 %v2455, %v2447
    %v2920 = vpack.c.b16 %v2456, %v2448
    %v2921 = vpack.c.b16 %v2457, %v2449
    %v2922 = vpack.c.b16 %v2466, %v2458
    %v2923 = vpack.c.b16 %v2467, %v2459
    %v2924 = vpack.c.b16 %v2468, %v2460
    %v2925 = vpack.c.b16 %v2469, %v2461
    %v2926 = vpack.c.b16 %v2470, %v2462
    %v2927 = vpack.c.b16 %v2471, %v2463
    %v2928 = vpack.c.b16 %v2472, %v2464
    %v2929 = vpack.c.b16 %v2473, %v2465
    %v2930 = vpack.c.b16 %v2482, %v2474
    %v2931 = vpack.c.b16 %v2483, %v2475
    %v2932 = vpack.c.b16 %v2484, %v2476
    %v2933 = vpack.c.b16 %v2485, %v2477
    %v2934 = vpack.c.b16 %v2486, %v2478
    %v2935 = vpack.c.b16 %v2487, %v2479
    %v2936 = vpack.c.b16 %v2488, %v2480
    %v2937 = vpack.c.b16 %v2489, %v2481
    %v2938 = vpack.c.b16 %v2498, %v2490
    %v2939 = vpack.c.b16 %v2499, %v2491
    %v2940 = vpack.c.b16 %v2500, %v2492
    %v2941 = vpack.c.b16 %v2501, %v2493
    %v2942 = vpack.c.b16 %v2502, %v2494
    %v2943 = vpack.c.b16 %v2503, %v2495
    %v2944 = vpack.c.b16 %v2504, %v2496
    %v2945 = vpack.c.b16 %v2505, %v2497
    %v2946 = vpack.c.b16 %v2514, %v2506
    %v2947 = vpack.c.b16 %v2515, %v2507
    %v2948 = vpack.c.b16 %v2516, %v2508
    %v2949 = vpack.c.b16 %v2517, %v2509
    %v2950 = vpack.c.b16 %v2518, %v2510
    %v2951 = vpack.c.b16 %v2519, %v2511
    %v2952 = vpack.c.b16 %v2520, %v2512
    %v2953 = vpack.c.b16 %v2521, %v2513
    %v2954 = vpack.c.b16 %v2530, %v2522
    %v2955 = vpack.c.b16 %v2531, %v2523
    %v2956 = vpack.c.b16 %v2532, %v2524
    %v2957 = vpack.c.b16 %v2533, %v2525
    %v2958 = vpack.c.b16 %v2534, %v2526
    %v2959 = vpack.c.b16 %v2535, %v2527
    %v2960 = vpack.c.b16 %v2536, %v2528
    %v2961 = vpack.c.b16 %v2537, %v2529
    %v2962 = vpack.c.b16 %v2546, %v2538
    %v2963 = vpack.c.b16 %v2547, %v2539
    %v2964 = vpack.c.b16 %v2548, %v2540
    %v2965 = vpack.c.b16 %v2549, %v2541
    %v2966 = vpack.c.b16 %v2550, %v2542
    %v2967 = vpack.c.b16 %v2551, %v2543
    %v2968 = vpack.c.b16 %v2552, %v2544
    %v2969 = vpack.c.b16 %v2553, %v2545
    %v2970 = vpack.c.b16 %v2562, %v2554
    %v2971 = vpack.c.b16 %v2563, %v2555
    %v2972 = vpack.c.b16 %v2564, %v2556
    %v2973 = vpack.c.b16 %v2565, %v2557
    %v2974 = vpack.c.b16 %v2566, %v2558
    %v2975 = vpack.c.b16 %v2567, %v2559
    %v2976 = vpack.c.b16 %v2568, %v2560
    %v2977 = vpack.c.b16 %v2569, %v2561
    %v2978 = vpack.c.b16 %v2578, %v2570
    %v2979 = vpack.c.b16 %v2579, %v2571
    %v2980 = vpack.c.b16 %v2580, %v2572
    %v2981 = vpack.c.b16 %v2581, %v2573
    %v2982 = vpack.c.b16 %v2582, %v2574
    %v2983 = vpack.c.b16 %v2583, %v2575
    %v2984 = vpack.c.b16 %v2584, %v2576
    %v2985 = vpack.c.b16 %v2585, %v2577
    %v2986 = vpack.c.b16 %v2594, %v2586
    %v2987 = vpack.c.b16 %v2595, %v2587
    %v2988 = vpack.c.b16 %v2596, %v2588
    %v2989 = vpack.c.b16 %v2597, %v2589
    %v2990 = vpack.c.b16 %v2598, %v2590
    %v2991 = vpack.c.b16 %v2599, %v2591
    %v2992 = vpack.c.b16 %v2600, %v2592
    %v2993 = vpack.c.b16 %v2601, %v2593
    %v2994 = vpack.c.b16 %v2610, %v2602
    %v2995 = vpack.c.b16 %v2611, %v2603
    %v2996 = vpack.c.b16 %v2612, %v2604
    %v2997 = vpack.c.b16 %v2613, %v2605
    %v2998 = vpack.c.b16 %v2614, %v2606
    %v2999 = vpack.c.b16 %v2615, %v2607
    %v3000 = vpack.c.b16 %v2616, %v2608
    %v3001 = vpack.c.b16 %v2617, %v2609
    %v3002 = vpack.c.b16 %v2626, %v2618
    %v3003 = vpack.c.b16 %v2627, %v2619
    %v3004 = vpack.c.b16 %v2628, %v2620
    %v3005 = vpack.c.b16 %v2629, %v2621
    %v3006 = vpack.c.b16 %v2630, %v2622
    %v3007 = vpack.c.b16 %v2631, %v2623
    %v3008 = vpack.c.b16 %v2632, %v2624
    %v3009 = vpack.c.b16 %v2633, %v2625
    %v3010 = vpack.c.b16 %v2642, %v2634
    %v3011 = vpack.c.b16 %v2643, %v2635
    %v3012 = vpack.c.b16 %v2644, %v2636
    %v3013 = vpack.c.b16 %v2645, %v2637
    %v3014 = vpack.c.b16 %v2646, %v2638
    %v3015 = vpack.c.b16 %v2647, %v2639
    %v3016 = vpack.c.b16 %v2648, %v2640
    %v3017 = vpack.c.b16 %v2649, %v2641
    %v3018 = vpack.c.b16 %v2658, %v2650
    %v3019 = vpack.c.b16 %v2659, %v2651
    %v3020 = vpack.c.b16 %v2660, %v2652
    %v3021 = vpack.c.b16 %v2661, %v2653
    %v3022 = vpack.c.b16 %v2662, %v2654
    %v3023 = vpack.c.b16 %v2663, %v2655
    %v3024 = vpack.c.b16 %v2664, %v2656
    %v3025 = vpack.c.b16 %v2665, %v2657
    %v3026 = vpack.c.b16 %v2674, %v2666
    %v3027 = vpack.c.b16 %v2675, %v2667
    %v3028 = vpack.c.b16 %v2676, %v2668
    %v3029 = vpack.c.b16 %v2677, %v2669
    %v3030 = vpack.c.b16 %v2678, %v2670
    %v3031 = vpack.c.b16 %v2679, %v2671
    %v3032 = vpack.c.b16 %v2680, %v2672
    %v3033 = vpack.c.b16 %v2681, %v2673
    %v3034 = vpack.c.b16 %v2690, %v2682
    %v3035 = vpack.c.b16 %v2691, %v2683
    %v3036 = vpack.c.b16 %v2692, %v2684
    %v3037 = vpack.c.b16 %v2693, %v2685
    %v3038 = vpack.c.b16 %v2694, %v2686
    %v3039 = vpack.c.b16 %v2695, %v2687
    %v3040 = vpack.c.b16 %v2696, %v2688
    %v3041 = vpack.c.b16 %v2697, %v2689
    %v3042 = vpack.c.b16 %v2706, %v2698
    %v3043 = vpack.c.b16 %v2707, %v2699
    %v3044 = vpack.c.b16 %v2708, %v2700
    %v3045 = vpack.c.b16 %v2709, %v2701
    %v3046 = vpack.c.b16 %v2710, %v2702
    %v3047 = vpack.c.b16 %v2711, %v2703
    %v3048 = vpack.c.b16 %v2712, %v2704
    %v3049 = vpack.c.b16 %v2713, %v2705
    %v3050 = vpack.c.b16 %v2722, %v2714
    %v3051 = vpack.c.b16 %v2723, %v2715
    %v3052 = vpack.c.b16 %v2724, %v2716
    %v3053 = vpack.c.b16 %v2725, %v2717
    %v3054 = vpack.c.b16 %v2726, %v2718
    %v3055 = vpack.c.b16 %v2727, %v2719
    %v3056 = vpack.c.b16 %v2728, %v2720
    %v3057 = vpack.c.b16 %v2729, %v2721
    %v3058 = vpack.c.b16 %v2738, %v2730
    %v3059 = vpack.c.b16 %v2739, %v2731
    %v3060 = vpack.c.b16 %v2740, %v2732
    %v3061 = vpack.c.b16 %v2741, %v2733
    %v3062 = vpack.c.b16 %v2742, %v2734
    %v3063 = vpack.c.b16 %v2743, %v2735
    %v3064 = vpack.c.b16 %v2744, %v2736
    %v3065 = vpack.c.b16 %v2745, %v2737
    %v3066 = vpack.c.b16 %v2754, %v2746
    %v3067 = vpack.c.b16 %v2755, %v2747
    %v3068 = vpack.c.b16 %v2756, %v2748
    %v3069 = vpack.c.b16 %v2757, %v2749
    %v3070 = vpack.c.b16 %v2758, %v2750
    %v3071 = vpack.c.b16 %v2759, %v2751
    %v3072 = vpack.c.b16 %v2760, %v2752
    %v3073 = vpack.c.b16 %v2761, %v2753
    %v3074 = vpack.c.b16 %v2770, %v2762
    %v3075 = vpack.c.b16 %v2771, %v2763
    %v3076 = vpack.c.b16 %v2772, %v2764
    %v3077 = vpack.c.b16 %v2773, %v2765
    %v3078 = vpack.c.b16 %v2774, %v2766
    %v3079 = vpack.c.b16 %v2775, %v2767
    %v3080 = vpack.c.b16 %v2776, %v2768
    %v3081 = vpack.c.b16 %v2777, %v2769
    %v3082 = vpack.c.b16 %v2786, %v2778
    %v3083 = vpack.c.b16 %v2787, %v2779
    %v3084 = vpack.c.b16 %v2788, %v2780
    %v3085 = vpack.c.b16 %v2789, %v2781
    %v3086 = vpack.c.b16 %v2790, %v2782
    %v3087 = vpack.c.b16 %v2791, %v2783
    %v3088 = vpack.c.b16 %v2792, %v2784
    %v3089 = vpack.c.b16 %v2793, %v2785
    %v3090 = vpack.c.b16 %v2802, %v2794
    %v3091 = vpack.c.b16 %v2803, %v2795
    %v3092 = vpack.c.b16 %v2804, %v2796
    %v3093 = vpack.c.b16 %v2805, %v2797
    %v3094 = vpack.c.b16 %v2806, %v2798
    %v3095 = vpack.c.b16 %v2807, %v2799
    %v3096 = vpack.c.b16 %v2808, %v2800
    %v3097 = vpack.c.b16 %v2809, %v2801
    %v3098 = vpack.c.b16 %v2818, %v2810
    %v3099 = vpack.c.b16 %v2819, %v2811
    %v3100 = vpack.c.b16 %v2820, %v2812
    %v3101 = vpack.c.b16 %v2821, %v2813
    %v3102 = vpack.c.b16 %v2822, %v2814
    %v3103 = vpack.c.b16 %v2823, %v2815
    %v3104 = vpack.c.b16 %v2824, %v2816
    %v3105 = vpack.c.b16 %v2825, %v2817
    %v3106 = vpack.c.b16 %v2834, %v2826
    %v3107 = vpack.c.b16 %v2835, %v2827
    %v3108 = vpack.c.b16 %v2836, %v2828
    %v3109 = vpack.c.b16 %v2837, %v2829
    %v3110 = vpack.c.b16 %v2838, %v2830
    %v3111 = vpack.c.b16 %v2839, %v2831
    %v3112 = vpack.c.b16 %v2840, %v2832
    %v3113 = vpack.c.b16 %v2841, %v2833
    %v3114 = vpack.c.b16 %v2850, %v2842
    %v3115 = vpack.c.b16 %v2851, %v2843
    %v3116 = vpack.c.b16 %v2852, %v2844
    %v3117 = vpack.c.b16 %v2853, %v2845
    %v3118 = vpack.c.b16 %v2854, %v2846
    %v3119 = vpack.c.b16 %v2855, %v2847
    %v3120 = vpack.c.b16 %v2856, %v2848
    %v3121 = vpack.c.b16 %v2857, %v2849
    %v3122 = vpack.c.b16 %v2866, %v2858
    %v3123 = vpack.c.b16 %v2867, %v2859
    %v3124 = vpack.c.b16 %v2868, %v2860
    %v3125 = vpack.c.b16 %v2869, %v2861
    %v3126 = vpack.c.b16 %v2870, %v2862
    %v3127 = vpack.c.b16 %v2871, %v2863
    %v3128 = vpack.c.b16 %v2872, %v2864
    %v3129 = vpack.c.b16 %v2873, %v2865
    %3386 = vmatprep.subr.bf16.mxu0 %v2875
    %3387 = vmatpush1.bf16.msra.mxu0 %v2874
    %3388 = vmatprep.subr.bf16.mxu0 %v2883
    %3389 = vmatpush1.bf16.msra.mxu0 %v2882
    %3390 = vmatprep.subr.bf16.mxu0 %v2891
    %3391 = vmatpush1.bf16.msra.mxu0 %v2890
    %3392 = vmatprep.subr.bf16.mxu0 %v2899
    %3393 = vmatpush1.bf16.msra.mxu0 %v2898
    %3394 = vmatprep.subr.bf16.mxu0 %v2907
    %3395 = vmatpush1.bf16.msra.mxu0 %v2906
    %3396 = vmatprep.subr.bf16.mxu0 %v2915
    %3397 = vmatpush1.bf16.msra.mxu0 %v2914
    %3398 = vmatprep.subr.bf16.mxu0 %v2923
    %3399 = vmatpush1.bf16.msra.mxu0 %v2922
    %3400 = vmatprep.subr.bf16.mxu0 %v2931
    %3401 = vmatpush1.bf16.msra.mxu0 %v2930
    %3402 = vmatprep.subr.bf16.mxu0 %v2939
    %3403 = vmatpush1.bf16.msra.mxu0 %v2938
    %3404 = vmatprep.subr.bf16.mxu0 %v2947
    %3405 = vmatpush1.bf16.msra.mxu0 %v2946
    %3406 = vmatprep.subr.bf16.mxu0 %v2955
    %3407 = vmatpush1.bf16.msra.mxu0 %v2954
    %3408 = vmatprep.subr.bf16.mxu0 %v2963
    %3409 = vmatpush1.bf16.msra.mxu0 %v2962
    %3410 = vmatprep.subr.bf16.mxu0 %v2971
    %3411 = vmatpush1.bf16.msra.mxu0 %v2970
    %3412 = vmatprep.subr.bf16.mxu0 %v2979
    %3413 = vmatpush1.bf16.msra.mxu0 %v2978
    %3414 = vmatprep.subr.bf16.mxu0 %v2987
    %3415 = vmatpush1.bf16.msra.mxu0 %v2986
    %3416 = vmatprep.subr.bf16.mxu0 %v2995
    %3417 = vmatpush1.bf16.msra.mxu0 %v2994
    %3418 = vmatprep.mubr.bf16.mxu0 %v1777
    %3419 = vmatmul.mubr.bf16.gmra.mrb[0].mxu0 %v1776
    %v3420 = vpop.f32.mrb[0].mxu0
    %v3421 = vadd.f32 %v2069, %v3420
    %v3422 = vpop.f32.mrb[0].mxu0
    %v3423 = vadd.f32 %v2073, %v3422
    %v3424 = vpop.f32.mrb[0].mxu0
    %v3425 = vadd.f32 %v2069, %v3424
    %v3426 = vpop.f32.mrb[0].mxu0
    %v3427 = vadd.f32 %v2073, %v3426
    %3428 = vmatprep.mubr.bf16.mxu0 %v1781
    %3429 = vmatmul.mubr.bf16.gmra.mrb[0].mxu0 %v1780
    %v3430 = vpop.f32.mrb[0].mxu0
    %v3431 = vadd.f32 %v2069, %v3430
    %v3432 = vpop.f32.mrb[0].mxu0
    %v3433 = vadd.f32 %v2073, %v3432
    %v3434 = vpop.f32.mrb[0].mxu0
    %v3435 = vadd.f32 %v2069, %v3434
    %v3436 = vpop.f32.mrb[0].mxu0
    %v3437 = vadd.f32 %v2073, %v3436
    %3438 = vmatprep.mubr.bf16.mxu0 %v1785
    %3439 = vmatmul.mubr.bf16.gmra.mrb[0].mxu0 %v1784
    %v3440 = vpop.f32.mrb[0].mxu0
    %v3441 = vadd.f32 %v2069, %v3440
    %v3442 = vpop.f32.mrb[0].mxu0
    %v3443 = vadd.f32 %v2073, %v3442
    %v3444 = vpop.f32.mrb[0].mxu0
    %v3445 = vadd.f32 %v2069, %v3444
    %v3446 = vpop.f32.mrb[0].mxu0
    %v3447 = vadd.f32 %v2073, %v3446
    %3448 = vmatprep.mubr.bf16.mxu0 %v1789
    %3449 = vmatmul.mubr.bf16.gmra.mrb[0].mxu0 %v1788
    %v3450 = vpop.f32.mrb[0].mxu0
    %v3451 = vadd.f32 %v2069, %v3450
    %v3452 = vpop.f32.mrb[0].mxu0
    %v3453 = vadd.f32 %v2073, %v3452
    %v3454 = vpop.f32.mrb[0].mxu0
    %v3455 = vadd.f32 %v2069, %v3454
    %v3456 = vpop.f32.mrb[0].mxu0
    %v3457 = vadd.f32 %v2073, %v3456
    %3458 = vmatprep.mubr.bf16.mxu0 %v1793
    %3459 = vmatmul.mubr.bf16.gmra.mrb[0].mxu0 %v1792
    %v3460 = vpop.f32.mrb[0].mxu0
    %v3461 = vadd.f32 %v2069, %v3460
    %v3462 = vpop.f32.mrb[0].mxu0
    %v3463 = vadd.f32 %v2073, %v3462
    %v3464 = vpop.f32.mrb[0].mxu0
    %v3465 = vadd.f32 %v2069, %v3464
    %v3466 = vpop.f32.mrb[0].mxu0
    %v3467 = vadd.f32 %v2073, %v3466
    %3468 = vmatprep.mubr.bf16.mxu0 %v1797
    %3469 = vmatmul.mubr.bf16.gmra.mrb[0].mxu0 %v1796
    %v3470 = vpop.f32.mrb[0].mxu0
    %v3471 = vadd.f32 %v2069, %v3470
    %v3472 = vpop.f32.mrb[0].mxu0
    %v3473 = vadd.f32 %v2073, %v3472
    %v3474 = vpop.f32.mrb[0].mxu0
    %v3475 = vadd.f32 %v2069, %v3474
    %v3476 = vpop.f32.mrb[0].mxu0
    %v3477 = vadd.f32 %v2073, %v3476
    %3478 = vmatprep.mubr.bf16.mxu0 %v1801
    %3479 = vmatmul.mubr.bf16.gmra.mrb[0].mxu0 %v1800
    %v3480 = vpop.f32.mrb[0].mxu0
    %v3481 = vadd.f32 %v2069, %v3480
    %v3482 = vpop.f32.mrb[0].mxu0
    %v3483 = vadd.f32 %v2073, %v3482
    %v3484 = vpop.f32.mrb[0].mxu0
    %v3485 = vadd.f32 %v2069, %v3484
    %v3486 = vpop.f32.mrb[0].mxu0
    %v3487 = vadd.f32 %v2073, %v3486
    %3488 = vmatprep.mubr.bf16.mxu0 %v1805
    %3489 = vmatmul.mubr.bf16.gmra.mrb[0].mxu0 %v1804
    %v3490 = vpop.f32.mrb[0].mxu0
    %v3491 = vadd.f32 %v2069, %v3490
    %v3492 = vpop.f32.mrb[0].mxu0
    %v3493 = vadd.f32 %v2073, %v3492
    %v3494 = vpop.f32.mrb[0].mxu0
    %v3495 = vadd.f32 %v2069, %v3494
    %v3496 = vpop.f32.mrb[0].mxu0
    %v3497 = vadd.f32 %v2073, %v3496
    %3498 = vdwg.mxu0
    %3499 = vmatprep.subr.bf16.mxu0 %v3003
    %3500 = vmatpush1.bf16.msra.mxu0 %v3002
    %3501 = vmatprep.subr.bf16.mxu0 %v3011
    %3502 = vmatpush1.bf16.msra.mxu0 %v3010
    %3503 = vmatprep.subr.bf16.mxu0 %v3019
    %3504 = vmatpush1.bf16.msra.mxu0 %v3018
    %3505 = vmatprep.subr.bf16.mxu0 %v3027
    %3506 = vmatpush1.bf16.msra.mxu0 %v3026
    %3507 = vmatprep.subr.bf16.mxu0 %v3035
    %3508 = vmatpush1.bf16.msra.mxu0 %v3034
    %3509 = vmatprep.subr.bf16.mxu0 %v3043
    %3510 = vmatpush1.bf16.msra.mxu0 %v3042
    %3511 = vmatprep.subr.bf16.mxu0 %v3051
    %3512 = vmatpush1.bf16.msra.mxu0 %v3050
    %3513 = vmatprep.subr.bf16.mxu0 %v3059
    %3514 = vmatpush1.bf16.msra.mxu0 %v3058
    %3515 = vmatprep.subr.bf16.mxu0 %v3067
    %3516 = vmatpush1.bf16.msra.mxu0 %v3066
    %3517 = vmatprep.subr.bf16.mxu0 %v3075
    %3518 = vmatpush1.bf16.msra.mxu0 %v3074
    %3519 = vmatprep.subr.bf16.mxu0 %v3083
    %3520 = vmatpush1.bf16.msra.mxu0 %v3082
    %3521 = vmatprep.subr.bf16.mxu0 %v3091
    %3522 = vmatpush1.bf16.msra.mxu0 %v3090
    %3523 = vmatprep.subr.bf16.mxu0 %v3099
    %3524 = vmatpush1.bf16.msra.mxu0 %v3098
    %3525 = vmatprep.subr.bf16.mxu0 %v3107
    %3526 = vmatpush1.bf16.msra.mxu0 %v3106
    %3527 = vmatprep.subr.bf16.mxu0 %v3115
    %3528 = vmatpush1.bf16.msra.mxu0 %v3114
    %3529 = vmatprep.subr.bf16.mxu0 %v3123
    %3530 = vmatpush1.bf16.msra.mxu0 %v3122
    %3531 = vmatprep.mubr.bf16.mxu0 %v1779
    %3532 = vmatmul.mubr.bf16.gmra.mrb[0].mxu0 %v1778
    %v3533 = vpop.f32.mrb[0].mxu0
    %v3534 = vadd.f32 %v3421, %v3533
    %v3535 = vpop.f32.mrb[0].mxu0
    %v3536 = vadd.f32 %v3423, %v3535
    %v3537 = vpop.f32.mrb[0].mxu0
    %v3538 = vadd.f32 %v3425, %v3537
    %v3539 = vpop.f32.mrb[0].mxu0
    %v3540 = vadd.f32 %v3427, %v3539
    %3541 = vmatprep.mubr.bf16.mxu0 %v1783
    %3542 = vmatmul.mubr.bf16.gmra.mrb[0].mxu0 %v1782
    %v3543 = vpop.f32.mrb[0].mxu0
    %v3544 = vadd.f32 %v3431, %v3543
    %v3545 = vpop.f32.mrb[0].mxu0
    %v3546 = vadd.f32 %v3433, %v3545
    %v3547 = vpop.f32.mrb[0].mxu0
    %v3548 = vadd.f32 %v3435, %v3547
    %v3549 = vpop.f32.mrb[0].mxu0
    %v3550 = vadd.f32 %v3437, %v3549
    %3551 = vmatprep.mubr.bf16.mxu0 %v1787
    %3552 = vmatmul.mubr.bf16.gmra.mrb[0].mxu0 %v1786
    %v3553 = vpop.f32.mrb[0].mxu0
    %v3554 = vadd.f32 %v3441, %v3553
    %v3555 = vpop.f32.mrb[0].mxu0
    %v3556 = vadd.f32 %v3443, %v3555
    %v3557 = vpop.f32.mrb[0].mxu0
    %v3558 = vadd.f32 %v3445, %v3557
    %v3559 = vpop.f32.mrb[0].mxu0
    %v3560 = vadd.f32 %v3447, %v3559
    %3561 = vmatprep.mubr.bf16.mxu0 %v1791
    %3562 = vmatmul.mubr.bf16.gmra.mrb[0].mxu0 %v1790
    %v3563 = vpop.f32.mrb[0].mxu0
    %v3564 = vadd.f32 %v3451, %v3563
    %v3565 = vpop.f32.mrb[0].mxu0
    %v3566 = vadd.f32 %v3453, %v3565
    %v3567 = vpop.f32.mrb[0].mxu0
    %v3568 = vadd.f32 %v3455, %v3567
    %v3569 = vpop.f32.mrb[0].mxu0
    %v3570 = vadd.f32 %v3457, %v3569
    %3571 = vmatprep.mubr.bf16.mxu0 %v1795
    %3572 = vmatmul.mubr.bf16.gmra.mrb[0].mxu0 %v1794
    %v3573 = vpop.f32.mrb[0].mxu0
    %v3574 = vadd.f32 %v3461, %v3573
    %v3575 = vpop.f32.mrb[0].mxu0
    %v3576 = vadd.f32 %v3463, %v3575
    %v3577 = vpop.f32.mrb[0].mxu0
    %v3578 = vadd.f32 %v3465, %v3577
    %v3579 = vpop.f32.mrb[0].mxu0
    %v3580 = vadd.f32 %v3467, %v3579
    %3581 = vmatprep.mubr.bf16.mxu0 %v1799
    %3582 = vmatmul.mubr.bf16.gmra.mrb[0].mxu0 %v1798
    %v3583 = vpop.f32.mrb[0].mxu0
    %v3584 = vadd.f32 %v3471, %v3583
    %v3585 = vpop.f32.mrb[0].mxu0
    %v3586 = vadd.f32 %v3473, %v3585
    %v3587 = vpop.f32.mrb[0].mxu0
    %v3588 = vadd.f32 %v3475, %v3587
    %v3589 = vpop.f32.mrb[0].mxu0
    %v3590 = vadd.f32 %v3477, %v3589
    %3591 = vmatprep.mubr.bf16.mxu0 %v1803
    %3592 = vmatmul.mubr.bf16.gmra.mrb[0].mxu0 %v1802
    %v3593 = vpop.f32.mrb[0].mxu0
    %v3594 = vadd.f32 %v3481, %v3593
    %v3595 = vpop.f32.mrb[0].mxu0
    %v3596 = vadd.f32 %v3483, %v3595
    %v3597 = vpop.f32.mrb[0].mxu0
    %v3598 = vadd.f32 %v3485, %v3597
    %v3599 = vpop.f32.mrb[0].mxu0
    %v3600 = vadd.f32 %v3487, %v3599
    %3601 = vmatprep.mubr.bf16.mxu0 %v1807
    %3602 = vmatmul.mubr.bf16.gmra.mrb[0].mxu0 %v1806
    %v3603 = vpop.f32.mrb[0].mxu0
    %v3604 = vadd.f32 %v3491, %v3603
    %v3605 = vpop.f32.mrb[0].mxu0
    %v3606 = vadd.f32 %v3493, %v3605
    %v3607 = vpop.f32.mrb[0].mxu0
    %v3608 = vadd.f32 %v3495, %v3607
    %v3609 = vpop.f32.mrb[0].mxu0
    %v3610 = vadd.f32 %v3497, %v3609
    %3611 = vdwg.mxu0
    %3612 = vmatprep.subr.bf16.mxu0 %v2877
    %3613 = vmatpush1.bf16.msra.mxu0 %v2876
    %3614 = vmatprep.subr.bf16.mxu0 %v2885
    %3615 = vmatpush1.bf16.msra.mxu0 %v2884
    %3616 = vmatprep.subr.bf16.mxu0 %v2893
    %3617 = vmatpush1.bf16.msra.mxu0 %v2892
    %3618 = vmatprep.subr.bf16.mxu0 %v2901
    %3619 = vmatpush1.bf16.msra.mxu0 %v2900
    %3620 = vmatprep.subr.bf16.mxu0 %v2909
    %3621 = vmatpush1.bf16.msra.mxu0 %v2908
    %3622 = vmatprep.subr.bf16.mxu0 %v2917
    %3623 = vmatpush1.bf16.msra.mxu0 %v2916
    %3624 = vmatprep.subr.bf16.mxu0 %v2925
    %3625 = vmatpush1.bf16.msra.mxu0 %v2924
    %3626 = vmatprep.subr.bf16.mxu0 %v2933
    %3627 = vmatpush1.bf16.msra.mxu0 %v2932
    %3628 = vmatprep.subr.bf16.mxu0 %v2941
    %3629 = vmatpush1.bf16.msra.mxu0 %v2940
    %3630 = vmatprep.subr.bf16.mxu0 %v2949
    %3631 = vmatpush1.bf16.msra.mxu0 %v2948
    %3632 = vmatprep.subr.bf16.mxu0 %v2957
    %3633 = vmatpush1.bf16.msra.mxu0 %v2956
    %3634 = vmatprep.subr.bf16.mxu0 %v2965
    %3635 = vmatpush1.bf16.msra.mxu0 %v2964
    %3636 = vmatprep.subr.bf16.mxu0 %v2973
    %3637 = vmatpush1.bf16.msra.mxu0 %v2972
    %3638 = vmatprep.subr.bf16.mxu0 %v2981
    %3639 = vmatpush1.bf16.msra.mxu0 %v2980
    %3640 = vmatprep.subr.bf16.mxu0 %v2989
    %3641 = vmatpush1.bf16.msra.mxu0 %v2988
    %3642 = vmatprep.subr.bf16.mxu0 %v2997
    %3643 = vmatpush1.bf16.msra.mxu0 %v2996
    %3644 = vmatprep.mubr.bf16.mxu0 %v1777
    %3645 = vmatmul.mubr.bf16.gmra.mrb[0].mxu0 %v1776
    %v3646 = vpop.f32.mrb[0].mxu0
    %v3647 = vadd.f32 %v2077, %v3646
    %v3648 = vpop.f32.mrb[0].mxu0
    %v3649 = vadd.f32 %v2081, %v3648
    %v3650 = vpop.f32.mrb[0].mxu0
    %v3651 = vadd.f32 %v2077, %v3650
    %v3652 = vpop.f32.mrb[0].mxu0
    %v3653 = vadd.f32 %v2081, %v3652
    %3654 = vmatprep.mubr.bf16.mxu0 %v1781
    %3655 = vmatmul.mubr.bf16.gmra.mrb[0].mxu0 %v1780
    %v3656 = vpop.f32.mrb[0].mxu0
    %v3657 = vadd.f32 %v2077, %v3656
    %v3658 = vpop.f32.mrb[0].mxu0
    %v3659 = vadd.f32 %v2081, %v3658
    %v3660 = vpop.f32.mrb[0].mxu0
    %v3661 = vadd.f32 %v2077, %v3660
    %v3662 = vpop.f32.mrb[0].mxu0
    %v3663 = vadd.f32 %v2081, %v3662
    %3664 = vmatprep.mubr.bf16.mxu0 %v1785
    %3665 = vmatmul.mubr.bf16.gmra.mrb[0].mxu0 %v1784
    %v3666 = vpop.f32.mrb[0].mxu0
    %v3667 = vadd.f32 %v2077, %v3666
    %v3668 = vpop.f32.mrb[0].mxu0
    %v3669 = vadd.f32 %v2081, %v3668
    %v3670 = vpop.f32.mrb[0].mxu0
    %v3671 = vadd.f32 %v2077, %v3670
    %v3672 = vpop.f32.mrb[0].mxu0
    %v3673 = vadd.f32 %v2081, %v3672
    %3674 = vmatprep.mubr.bf16.mxu0 %v1789
    %3675 = vmatmul.mubr.bf16.gmra.mrb[0].mxu0 %v1788
    %v3676 = vpop.f32.mrb[0].mxu0
    %v3677 = vadd.f32 %v2077, %v3676
    %v3678 = vpop.f32.mrb[0].mxu0
    %v3679 = vadd.f32 %v2081, %v3678
    %v3680 = vpop.f32.mrb[0].mxu0
    %v3681 = vadd.f32 %v2077, %v3680
    %v3682 = vpop.f32.mrb[0].mxu0
    %v3683 = vadd.f32 %v2081, %v3682
    %3684 = vmatprep.mubr.bf16.mxu0 %v1793
    %3685 = vmatmul.mubr.bf16.gmra.mrb[0].mxu0 %v1792
    %v3686 = vpop.f32.mrb[0].mxu0
    %v3687 = vadd.f32 %v2077, %v3686
    %v3688 = vpop.f32.mrb[0].mxu0
    %v3689 = vadd.f32 %v2081, %v3688
    %v3690 = vpop.f32.mrb[0].mxu0
    %v3691 = vadd.f32 %v2077, %v3690
    %v3692 = vpop.f32.mrb[0].mxu0
    %v3693 = vadd.f32 %v2081, %v3692
    %3694 = vmatprep.mubr.bf16.mxu0 %v1797
    %3695 = vmatmul.mubr.bf16.gmra.mrb[0].mxu0 %v1796
    %v3696 = vpop.f32.mrb[0].mxu0
    %v3697 = vadd.f32 %v2077, %v3696
    %v3698 = vpop.f32.mrb[0].mxu0
    %v3699 = vadd.f32 %v2081, %v3698
    %v3700 = vpop.f32.mrb[0].mxu0
    %v3701 = vadd.f32 %v2077, %v3700
    %v3702 = vpop.f32.mrb[0].mxu0
    %v3703 = vadd.f32 %v2081, %v3702
    %3704 = vmatprep.mubr.bf16.mxu0 %v1801
    %3705 = vmatmul.mubr.bf16.gmra.mrb[0].mxu0 %v1800
    %v3706 = vpop.f32.mrb[0].mxu0
    %v3707 = vadd.f32 %v2077, %v3706
    %v3708 = vpop.f32.mrb[0].mxu0
    %v3709 = vadd.f32 %v2081, %v3708
    %v3710 = vpop.f32.mrb[0].mxu0
    %v3711 = vadd.f32 %v2077, %v3710
    %v3712 = vpop.f32.mrb[0].mxu0
    %v3713 = vadd.f32 %v2081, %v3712
    %3714 = vmatprep.mubr.bf16.mxu0 %v1805
    %3715 = vmatmul.mubr.bf16.gmra.mrb[0].mxu0 %v1804
    %v3716 = vpop.f32.mrb[0].mxu0
    %v3717 = vadd.f32 %v2077, %v3716
    %v3718 = vpop.f32.mrb[0].mxu0
    %v3719 = vadd.f32 %v2081, %v3718
    %v3720 = vpop.f32.mrb[0].mxu0
    %v3721 = vadd.f32 %v2077, %v3720
    %v3722 = vpop.f32.mrb[0].mxu0
    %v3723 = vadd.f32 %v2081, %v3722
    %3724 = vdwg.mxu0
    %3725 = vmatprep.subr.bf16.mxu0 %v3005
    %3726 = vmatpush1.bf16.msra.mxu0 %v3004
    %3727 = vmatprep.subr.bf16.mxu0 %v3013
    %3728 = vmatpush1.bf16.msra.mxu0 %v3012
    %3729 = vmatprep.subr.bf16.mxu0 %v3021
    %3730 = vmatpush1.bf16.msra.mxu0 %v3020
    %3731 = vmatprep.subr.bf16.mxu0 %v3029
    %3732 = vmatpush1.bf16.msra.mxu0 %v3028
    %3733 = vmatprep.subr.bf16.mxu0 %v3037
    %3734 = vmatpush1.bf16.msra.mxu0 %v3036
    %3735 = vmatprep.subr.bf16.mxu0 %v3045
    %3736 = vmatpush1.bf16.msra.mxu0 %v3044
    %3737 = vmatprep.subr.bf16.mxu0 %v3053
    %3738 = vmatpush1.bf16.msra.mxu0 %v3052
    %3739 = vmatprep.subr.bf16.mxu0 %v3061
    %3740 = vmatpush1.bf16.msra.mxu0 %v3060
    %3741 = vmatprep.subr.bf16.mxu0 %v3069
    %3742 = vmatpush1.bf16.msra.mxu0 %v3068
    %3743 = vmatprep.subr.bf16.mxu0 %v3077
    %3744 = vmatpush1.bf16.msra.mxu0 %v3076
    %3745 = vmatprep.subr.bf16.mxu0 %v3085
    %3746 = vmatpush1.bf16.msra.mxu0 %v3084
    %3747 = vmatprep.subr.bf16.mxu0 %v3093
    %3748 = vmatpush1.bf16.msra.mxu0 %v3092
    %3749 = vmatprep.subr.bf16.mxu0 %v3101
    %3750 = vmatpush1.bf16.msra.mxu0 %v3100
    %3751 = vmatprep.subr.bf16.mxu0 %v3109
    %3752 = vmatpush1.bf16.msra.mxu0 %v3108
    %3753 = vmatprep.subr.bf16.mxu0 %v3117
    %3754 = vmatpush1.bf16.msra.mxu0 %v3116
    %3755 = vmatprep.subr.bf16.mxu0 %v3125
    %3756 = vmatpush1.bf16.msra.mxu0 %v3124
    %3757 = vmatprep.mubr.bf16.mxu0 %v1779
    %3758 = vmatmul.mubr.bf16.gmra.mrb[0].mxu0 %v1778
    %v3759 = vpop.f32.mrb[0].mxu0
    %v3760 = vadd.f32 %v3647, %v3759
    %v3761 = vpop.f32.mrb[0].mxu0
    %v3762 = vadd.f32 %v3649, %v3761
    %v3763 = vpop.f32.mrb[0].mxu0
    %v3764 = vadd.f32 %v3651, %v3763
    %v3765 = vpop.f32.mrb[0].mxu0
    %v3766 = vadd.f32 %v3653, %v3765
    %3767 = vmatprep.mubr.bf16.mxu0 %v1783
    %3768 = vmatmul.mubr.bf16.gmra.mrb[0].mxu0 %v1782
    %v3769 = vpop.f32.mrb[0].mxu0
    %v3770 = vadd.f32 %v3657, %v3769
    %v3771 = vpop.f32.mrb[0].mxu0
    %v3772 = vadd.f32 %v3659, %v3771
    %v3773 = vpop.f32.mrb[0].mxu0
    %v3774 = vadd.f32 %v3661, %v3773
    %v3775 = vpop.f32.mrb[0].mxu0
    %v3776 = vadd.f32 %v3663, %v3775
    %3777 = vmatprep.mubr.bf16.mxu0 %v1787
    %3778 = vmatmul.mubr.bf16.gmra.mrb[0].mxu0 %v1786
    %v3779 = vpop.f32.mrb[0].mxu0
    %v3780 = vadd.f32 %v3667, %v3779
    %v3781 = vpop.f32.mrb[0].mxu0
    %v3782 = vadd.f32 %v3669, %v3781
    %v3783 = vpop.f32.mrb[0].mxu0
    %v3784 = vadd.f32 %v3671, %v3783
    %v3785 = vpop.f32.mrb[0].mxu0
    %v3786 = vadd.f32 %v3673, %v3785
    %3787 = vmatprep.mubr.bf16.mxu0 %v1791
    %3788 = vmatmul.mubr.bf16.gmra.mrb[0].mxu0 %v1790
    %v3789 = vpop.f32.mrb[0].mxu0
    %v3790 = vadd.f32 %v3677, %v3789
    %v3791 = vpop.f32.mrb[0].mxu0
    %v3792 = vadd.f32 %v3679, %v3791
    %v3793 = vpop.f32.mrb[0].mxu0
    %v3794 = vadd.f32 %v3681, %v3793
    %v3795 = vpop.f32.mrb[0].mxu0
    %v3796 = vadd.f32 %v3683, %v3795
    %3797 = vmatprep.mubr.bf16.mxu0 %v1795
    %3798 = vmatmul.mubr.bf16.gmra.mrb[0].mxu0 %v1794
    %v3799 = vpop.f32.mrb[0].mxu0
    %v3800 = vadd.f32 %v3687, %v3799
    %v3801 = vpop.f32.mrb[0].mxu0
    %v3802 = vadd.f32 %v3689, %v3801
    %v3803 = vpop.f32.mrb[0].mxu0
    %v3804 = vadd.f32 %v3691, %v3803
    %v3805 = vpop.f32.mrb[0].mxu0
    %v3806 = vadd.f32 %v3693, %v3805
    %3807 = vmatprep.mubr.bf16.mxu0 %v1799
    %3808 = vmatmul.mubr.bf16.gmra.mrb[0].mxu0 %v1798
    %v3809 = vpop.f32.mrb[0].mxu0
    %v3810 = vadd.f32 %v3697, %v3809
    %v3811 = vpop.f32.mrb[0].mxu0
    %v3812 = vadd.f32 %v3699, %v3811
    %v3813 = vpop.f32.mrb[0].mxu0
    %v3814 = vadd.f32 %v3701, %v3813
    %v3815 = vpop.f32.mrb[0].mxu0
    %v3816 = vadd.f32 %v3703, %v3815
    %3817 = vmatprep.mubr.bf16.mxu0 %v1803
    %3818 = vmatmul.mubr.bf16.gmra.mrb[0].mxu0 %v1802
    %v3819 = vpop.f32.mrb[0].mxu0
    %v3820 = vadd.f32 %v3707, %v3819
    %v3821 = vpop.f32.mrb[0].mxu0
    %v3822 = vadd.f32 %v3709, %v3821
    %v3823 = vpop.f32.mrb[0].mxu0
    %v3824 = vadd.f32 %v3711, %v3823
    %v3825 = vpop.f32.mrb[0].mxu0
    %v3826 = vadd.f32 %v3713, %v3825
    %3827 = vmatprep.mubr.bf16.mxu0 %v1807
    %3828 = vmatmul.mubr.bf16.gmra.mrb[0].mxu0 %v1806
    %v3829 = vpop.f32.mrb[0].mxu0
    %v3830 = vadd.f32 %v3717, %v3829
    %v3831 = vpop.f32.mrb[0].mxu0
    %v3832 = vadd.f32 %v3719, %v3831
    %v3833 = vpop.f32.mrb[0].mxu0
    %v3834 = vadd.f32 %v3721, %v3833
    %v3835 = vpop.f32.mrb[0].mxu0
    %v3836 = vadd.f32 %v3723, %v3835
    %3837 = vdwg.mxu0
    %3838 = vmatprep.subr.bf16.mxu0 %v2879
    %3839 = vmatpush1.bf16.msra.mxu0 %v2878
    %3840 = vmatprep.subr.bf16.mxu0 %v2887
    %3841 = vmatpush1.bf16.msra.mxu0 %v2886
    %3842 = vmatprep.subr.bf16.mxu0 %v2895
    %3843 = vmatpush1.bf16.msra.mxu0 %v2894
    %3844 = vmatprep.subr.bf16.mxu0 %v2903
    %3845 = vmatpush1.bf16.msra.mxu0 %v2902
    %3846 = vmatprep.subr.bf16.mxu0 %v2911
    %3847 = vmatpush1.bf16.msra.mxu0 %v2910
    %3848 = vmatprep.subr.bf16.mxu0 %v2919
    %3849 = vmatpush1.bf16.msra.mxu0 %v2918
    %3850 = vmatprep.subr.bf16.mxu0 %v2927
    %3851 = vmatpush1.bf16.msra.mxu0 %v2926
    %3852 = vmatprep.subr.bf16.mxu0 %v2935
    %3853 = vmatpush1.bf16.msra.mxu0 %v2934
    %3854 = vmatprep.subr.bf16.mxu0 %v2943
    %3855 = vmatpush1.bf16.msra.mxu0 %v2942
    %3856 = vmatprep.subr.bf16.mxu0 %v2951
    %3857 = vmatpush1.bf16.msra.mxu0 %v2950
    %3858 = vmatprep.subr.bf16.mxu0 %v2959
    %3859 = vmatpush1.bf16.msra.mxu0 %v2958
    %3860 = vmatprep.subr.bf16.mxu0 %v2967
    %3861 = vmatpush1.bf16.msra.mxu0 %v2966
    %3862 = vmatprep.subr.bf16.mxu0 %v2975
    %3863 = vmatpush1.bf16.msra.mxu0 %v2974
    %3864 = vmatprep.subr.bf16.mxu0 %v2983
    %3865 = vmatpush1.bf16.msra.mxu0 %v2982
    %3866 = vmatprep.subr.bf16.mxu0 %v2991
    %3867 = vmatpush1.bf16.msra.mxu0 %v2990
    %3868 = vmatprep.subr.bf16.mxu0 %v2999
    %3869 = vmatpush1.bf16.msra.mxu0 %v2998
    %3870 = vmatprep.mubr.bf16.mxu0 %v1777
    %3871 = vmatmul.mubr.bf16.gmra.mrb[0].mxu0 %v1776
    %v3872 = vpop.f32.mrb[0].mxu0
    %v3873 = vadd.f32 %v2085, %v3872
    %v3874 = vpop.f32.mrb[0].mxu0
    %v3875 = vadd.f32 %v2089, %v3874
    %v3876 = vpop.f32.mrb[0].mxu0
    %v3877 = vadd.f32 %v2085, %v3876
    %v3878 = vpop.f32.mrb[0].mxu0
    %v3879 = vadd.f32 %v2089, %v3878
    %3880 = vmatprep.mubr.bf16.mxu0 %v1781
    %3881 = vmatmul.mubr.bf16.gmra.mrb[0].mxu0 %v1780
    %v3882 = vpop.f32.mrb[0].mxu0
    %v3883 = vadd.f32 %v2085, %v3882
    %v3884 = vpop.f32.mrb[0].mxu0
    %v3885 = vadd.f32 %v2089, %v3884
    %v3886 = vpop.f32.mrb[0].mxu0
    %v3887 = vadd.f32 %v2085, %v3886
    %v3888 = vpop.f32.mrb[0].mxu0
    %v3889 = vadd.f32 %v2089, %v3888
    %3890 = vmatprep.mubr.bf16.mxu0 %v1785
    %3891 = vmatmul.mubr.bf16.gmra.mrb[0].mxu0 %v1784
    %v3892 = vpop.f32.mrb[0].mxu0
    %v3893 = vadd.f32 %v2085, %v3892
    %v3894 = vpop.f32.mrb[0].mxu0
    %v3895 = vadd.f32 %v2089, %v3894
    %v3896 = vpop.f32.mrb[0].mxu0
    %v3897 = vadd.f32 %v2085, %v3896
    %v3898 = vpop.f32.mrb[0].mxu0
    %v3899 = vadd.f32 %v2089, %v3898
    %3900 = vmatprep.mubr.bf16.mxu0 %v1789
    %3901 = vmatmul.mubr.bf16.gmra.mrb[0].mxu0 %v1788
    %v3902 = vpop.f32.mrb[0].mxu0
    %v3903 = vadd.f32 %v2085, %v3902
    %v3904 = vpop.f32.mrb[0].mxu0
    %v3905 = vadd.f32 %v2089, %v3904
    %v3906 = vpop.f32.mrb[0].mxu0
    %v3907 = vadd.f32 %v2085, %v3906
    %v3908 = vpop.f32.mrb[0].mxu0
    %v3909 = vadd.f32 %v2089, %v3908
    %3910 = vmatprep.mubr.bf16.mxu0 %v1793
    %3911 = vmatmul.mubr.bf16.gmra.mrb[0].mxu0 %v1792
    %v3912 = vpop.f32.mrb[0].mxu0
    %v3913 = vadd.f32 %v2085, %v3912
    %v3914 = vpop.f32.mrb[0].mxu0
    %v3915 = vadd.f32 %v2089, %v3914
    %v3916 = vpop.f32.mrb[0].mxu0
    %v3917 = vadd.f32 %v2085, %v3916
    %v3918 = vpop.f32.mrb[0].mxu0
    %v3919 = vadd.f32 %v2089, %v3918
    %3920 = vmatprep.mubr.bf16.mxu0 %v1797
    %3921 = vmatmul.mubr.bf16.gmra.mrb[0].mxu0 %v1796
    %v3922 = vpop.f32.mrb[0].mxu0
    %v3923 = vadd.f32 %v2085, %v3922
    %v3924 = vpop.f32.mrb[0].mxu0
    %v3925 = vadd.f32 %v2089, %v3924
    %v3926 = vpop.f32.mrb[0].mxu0
    %v3927 = vadd.f32 %v2085, %v3926
    %v3928 = vpop.f32.mrb[0].mxu0
    %v3929 = vadd.f32 %v2089, %v3928
    %3930 = vmatprep.mubr.bf16.mxu0 %v1801
    %3931 = vmatmul.mubr.bf16.gmra.mrb[0].mxu0 %v1800
    %v3932 = vpop.f32.mrb[0].mxu0
    %v3933 = vadd.f32 %v2085, %v3932
    %v3934 = vpop.f32.mrb[0].mxu0
    %v3935 = vadd.f32 %v2089, %v3934
    %v3936 = vpop.f32.mrb[0].mxu0
    %v3937 = vadd.f32 %v2085, %v3936
    %v3938 = vpop.f32.mrb[0].mxu0
    %v3939 = vadd.f32 %v2089, %v3938
    %3940 = vmatprep.mubr.bf16.mxu0 %v1805
    %3941 = vmatmul.mubr.bf16.gmra.mrb[0].mxu0 %v1804
    %v3942 = vpop.f32.mrb[0].mxu0
    %v3943 = vadd.f32 %v2085, %v3942
    %v3944 = vpop.f32.mrb[0].mxu0
    %v3945 = vadd.f32 %v2089, %v3944
    %v3946 = vpop.f32.mrb[0].mxu0
    %v3947 = vadd.f32 %v2085, %v3946
    %v3948 = vpop.f32.mrb[0].mxu0
    %v3949 = vadd.f32 %v2089, %v3948
    %3950 = vdwg.mxu0
    %3951 = vmatprep.subr.bf16.mxu0 %v3007
    %3952 = vmatpush1.bf16.msra.mxu0 %v3006
    %3953 = vmatprep.subr.bf16.mxu0 %v3015
    %3954 = vmatpush1.bf16.msra.mxu0 %v3014
    %3955 = vmatprep.subr.bf16.mxu0 %v3023
    %3956 = vmatpush1.bf16.msra.mxu0 %v3022
    %3957 = vmatprep.subr.bf16.mxu0 %v3031
    %3958 = vmatpush1.bf16.msra.mxu0 %v3030
    %3959 = vmatprep.subr.bf16.mxu0 %v3039
    %3960 = vmatpush1.bf16.msra.mxu0 %v3038
    %3961 = vmatprep.subr.bf16.mxu0 %v3047
    %3962 = vmatpush1.bf16.msra.mxu0 %v3046
    %3963 = vmatprep.subr.bf16.mxu0 %v3055
    %3964 = vmatpush1.bf16.msra.mxu0 %v3054
    %3965 = vmatprep.subr.bf16.mxu0 %v3063
    %3966 = vmatpush1.bf16.msra.mxu0 %v3062
    %3967 = vmatprep.subr.bf16.mxu0 %v3071
    %3968 = vmatpush1.bf16.msra.mxu0 %v3070
    %3969 = vmatprep.subr.bf16.mxu0 %v3079
    %3970 = vmatpush1.bf16.msra.mxu0 %v3078
    %3971 = vmatprep.subr.bf16.mxu0 %v3087
    %3972 = vmatpush1.bf16.msra.mxu0 %v3086
    %3973 = vmatprep.subr.bf16.mxu0 %v3095
    %3974 = vmatpush1.bf16.msra.mxu0 %v3094
    %3975 = vmatprep.subr.bf16.mxu0 %v3103
    %3976 = vmatpush1.bf16.msra.mxu0 %v3102
    %3977 = vmatprep.subr.bf16.mxu0 %v3111
    %3978 = vmatpush1.bf16.msra.mxu0 %v3110
    %3979 = vmatprep.subr.bf16.mxu0 %v3119
    %3980 = vmatpush1.bf16.msra.mxu0 %v3118
    %3981 = vmatprep.subr.bf16.mxu0 %v3127
    %3982 = vmatpush1.bf16.msra.mxu0 %v3126
    %3983 = vmatprep.mubr.bf16.mxu0 %v1779
    %3984 = vmatmul.mubr.bf16.gmra.mrb[0].mxu0 %v1778
    %v3985 = vpop.f32.mrb[0].mxu0
    %v3986 = vadd.f32 %v3873, %v3985
    %v3987 = vpop.f32.mrb[0].mxu0
    %v3988 = vadd.f32 %v3875, %v3987
    %v3989 = vpop.f32.mrb[0].mxu0
    %v3990 = vadd.f32 %v3877, %v3989
    %v3991 = vpop.f32.mrb[0].mxu0
    %v3992 = vadd.f32 %v3879, %v3991
    %3993 = vmatprep.mubr.bf16.mxu0 %v1783
    %3994 = vmatmul.mubr.bf16.gmra.mrb[0].mxu0 %v1782
    %v3995 = vpop.f32.mrb[0].mxu0
    %v3996 = vadd.f32 %v3883, %v3995
    %v3997 = vpop.f32.mrb[0].mxu0
    %v3998 = vadd.f32 %v3885, %v3997
    %v3999 = vpop.f32.mrb[0].mxu0
    %v4000 = vadd.f32 %v3887, %v3999
    %v4001 = vpop.f32.mrb[0].mxu0
    %v4002 = vadd.f32 %v3889, %v4001
    %4003 = vmatprep.mubr.bf16.mxu0 %v1787
    %4004 = vmatmul.mubr.bf16.gmra.mrb[0].mxu0 %v1786
    %v4005 = vpop.f32.mrb[0].mxu0
    %v4006 = vadd.f32 %v3893, %v4005
    %v4007 = vpop.f32.mrb[0].mxu0
    %v4008 = vadd.f32 %v3895, %v4007
    %v4009 = vpop.f32.mrb[0].mxu0
    %v4010 = vadd.f32 %v3897, %v4009
    %v4011 = vpop.f32.mrb[0].mxu0
    %v4012 = vadd.f32 %v3899, %v4011
    %4013 = vmatprep.mubr.bf16.mxu0 %v1791
    %4014 = vmatmul.mubr.bf16.gmra.mrb[0].mxu0 %v1790
    %v4015 = vpop.f32.mrb[0].mxu0
    %v4016 = vadd.f32 %v3903, %v4015
    %v4017 = vpop.f32.mrb[0].mxu0
    %v4018 = vadd.f32 %v3905, %v4017
    %v4019 = vpop.f32.mrb[0].mxu0
    %v4020 = vadd.f32 %v3907, %v4019
    %v4021 = vpop.f32.mrb[0].mxu0
    %v4022 = vadd.f32 %v3909, %v4021
    %4023 = vmatprep.mubr.bf16.mxu0 %v1795
    %4024 = vmatmul.mubr.bf16.gmra.mrb[0].mxu0 %v1794
    %v4025 = vpop.f32.mrb[0].mxu0
    %v4026 = vadd.f32 %v3913, %v4025
    %v4027 = vpop.f32.mrb[0].mxu0
    %v4028 = vadd.f32 %v3915, %v4027
    %v4029 = vpop.f32.mrb[0].mxu0
    %v4030 = vadd.f32 %v3917, %v4029
    %v4031 = vpop.f32.mrb[0].mxu0
    %v4032 = vadd.f32 %v3919, %v4031
    %4033 = vmatprep.mubr.bf16.mxu0 %v1799
    %4034 = vmatmul.mubr.bf16.gmra.mrb[0].mxu0 %v1798
    %v4035 = vpop.f32.mrb[0].mxu0
    %v4036 = vadd.f32 %v3923, %v4035
    %v4037 = vpop.f32.mrb[0].mxu0
    %v4038 = vadd.f32 %v3925, %v4037
    %v4039 = vpop.f32.mrb[0].mxu0
    %v4040 = vadd.f32 %v3927, %v4039
    %v4041 = vpop.f32.mrb[0].mxu0
    %v4042 = vadd.f32 %v3929, %v4041
    %4043 = vmatprep.mubr.bf16.mxu0 %v1803
    %4044 = vmatmul.mubr.bf16.gmra.mrb[0].mxu0 %v1802
    %v4045 = vpop.f32.mrb[0].mxu0
    %v4046 = vadd.f32 %v3933, %v4045
    %v4047 = vpop.f32.mrb[0].mxu0
    %v4048 = vadd.f32 %v3935, %v4047
    %v4049 = vpop.f32.mrb[0].mxu0
    %v4050 = vadd.f32 %v3937, %v4049
    %v4051 = vpop.f32.mrb[0].mxu0
    %v4052 = vadd.f32 %v3939, %v4051
    %4053 = vmatprep.mubr.bf16.mxu0 %v1807
    %4054 = vmatmul.mubr.bf16.gmra.mrb[0].mxu0 %v1806
    %v4055 = vpop.f32.mrb[0].mxu0
    %v4056 = vadd.f32 %v3943, %v4055
    %v4057 = vpop.f32.mrb[0].mxu0
    %v4058 = vadd.f32 %v3945, %v4057
    %v4059 = vpop.f32.mrb[0].mxu0
    %v4060 = vadd.f32 %v3947, %v4059
    %v4061 = vpop.f32.mrb[0].mxu0
    %v4062 = vadd.f32 %v3949, %v4061
    %4063 = vdwg.mxu0
    %4064 = vmatprep.subr.bf16.mxu0 %v2881
    %4065 = vmatpush1.bf16.msra.mxu0 %v2880
    %4066 = vmatprep.subr.bf16.mxu0 %v2889
    %4067 = vmatpush1.bf16.msra.mxu0 %v2888
    %4068 = vmatprep.subr.bf16.mxu0 %v2897
    %4069 = vmatpush1.bf16.msra.mxu0 %v2896
    %4070 = vmatprep.subr.bf16.mxu0 %v2905
    %4071 = vmatpush1.bf16.msra.mxu0 %v2904
    %4072 = vmatprep.subr.bf16.mxu0 %v2913
    %4073 = vmatpush1.bf16.msra.mxu0 %v2912
    %4074 = vmatprep.subr.bf16.mxu0 %v2921
    %4075 = vmatpush1.bf16.msra.mxu0 %v2920
    %4076 = vmatprep.subr.bf16.mxu0 %v2929
    %4077 = vmatpush1.bf16.msra.mxu0 %v2928
    %4078 = vmatprep.subr.bf16.mxu0 %v2937
    %4079 = vmatpush1.bf16.msra.mxu0 %v2936
    %4080 = vmatprep.subr.bf16.mxu0 %v2945
    %4081 = vmatpush1.bf16.msra.mxu0 %v2944
    %4082 = vmatprep.subr.bf16.mxu0 %v2953
    %4083 = vmatpush1.bf16.msra.mxu0 %v2952
    %4084 = vmatprep.subr.bf16.mxu0 %v2961
    %4085 = vmatpush1.bf16.msra.mxu0 %v2960
    %4086 = vmatprep.subr.bf16.mxu0 %v2969
    %4087 = vmatpush1.bf16.msra.mxu0 %v2968
    %4088 = vmatprep.subr.bf16.mxu0 %v2977
    %4089 = vmatpush1.bf16.msra.mxu0 %v2976
    %4090 = vmatprep.subr.bf16.mxu0 %v2985
    %4091 = vmatpush1.bf16.msra.mxu0 %v2984
    %4092 = vmatprep.subr.bf16.mxu0 %v2993
    %4093 = vmatpush1.bf16.msra.mxu0 %v2992
    %4094 = vmatprep.subr.bf16.mxu0 %v3001
    %4095 = vmatpush1.bf16.msra.mxu0 %v3000
    %4096 = vmatprep.mubr.bf16.mxu0 %v1777
    %4097 = vmatmul.mubr.bf16.gmra.mrb[0].mxu0 %v1776
    %v4098 = vpop.f32.mrb[0].mxu0
    %v4099 = vadd.f32 %v2093, %v4098
    %v4100 = vpop.f32.mrb[0].mxu0
    %v4101 = vadd.f32 %v2097, %v4100
    %v4102 = vpop.f32.mrb[0].mxu0
    %v4103 = vadd.f32 %v2093, %v4102
    %v4104 = vpop.f32.mrb[0].mxu0
    %v4105 = vadd.f32 %v2097, %v4104
    %4106 = vmatprep.mubr.bf16.mxu0 %v1781
    %4107 = vmatmul.mubr.bf16.gmra.mrb[0].mxu0 %v1780
    %v4108 = vpop.f32.mrb[0].mxu0
    %v4109 = vadd.f32 %v2093, %v4108
    %v4110 = vpop.f32.mrb[0].mxu0
    %v4111 = vadd.f32 %v2097, %v4110
    %v4112 = vpop.f32.mrb[0].mxu0
    %v4113 = vadd.f32 %v2093, %v4112
    %v4114 = vpop.f32.mrb[0].mxu0
    %v4115 = vadd.f32 %v2097, %v4114
    %4116 = vmatprep.mubr.bf16.mxu0 %v1785
    %4117 = vmatmul.mubr.bf16.gmra.mrb[0].mxu0 %v1784
    %v4118 = vpop.f32.mrb[0].mxu0
    %v4119 = vadd.f32 %v2093, %v4118
    %v4120 = vpop.f32.mrb[0].mxu0
    %v4121 = vadd.f32 %v2097, %v4120
    %v4122 = vpop.f32.mrb[0].mxu0
    %v4123 = vadd.f32 %v2093, %v4122
    %v4124 = vpop.f32.mrb[0].mxu0
    %v4125 = vadd.f32 %v2097, %v4124
    %4126 = vmatprep.mubr.bf16.mxu0 %v1789
    %4127 = vmatmul.mubr.bf16.gmra.mrb[0].mxu0 %v1788
    %v4128 = vpop.f32.mrb[0].mxu0
    %v4129 = vadd.f32 %v2093, %v4128
    %v4130 = vpop.f32.mrb[0].mxu0
    %v4131 = vadd.f32 %v2097, %v4130
    %v4132 = vpop.f32.mrb[0].mxu0
    %v4133 = vadd.f32 %v2093, %v4132
    %v4134 = vpop.f32.mrb[0].mxu0
    %v4135 = vadd.f32 %v2097, %v4134
    %4136 = vmatprep.mubr.bf16.mxu0 %v1793
    %4137 = vmatmul.mubr.bf16.gmra.mrb[0].mxu0 %v1792
    %v4138 = vpop.f32.mrb[0].mxu0
    %v4139 = vadd.f32 %v2093, %v4138
    %v4140 = vpop.f32.mrb[0].mxu0
    %v4141 = vadd.f32 %v2097, %v4140
    %v4142 = vpop.f32.mrb[0].mxu0
    %v4143 = vadd.f32 %v2093, %v4142
    %v4144 = vpop.f32.mrb[0].mxu0
    %v4145 = vadd.f32 %v2097, %v4144
    %4146 = vmatprep.mubr.bf16.mxu0 %v1797
    %4147 = vmatmul.mubr.bf16.gmra.mrb[0].mxu0 %v1796
    %v4148 = vpop.f32.mrb[0].mxu0
    %v4149 = vadd.f32 %v2093, %v4148
    %v4150 = vpop.f32.mrb[0].mxu0
    %v4151 = vadd.f32 %v2097, %v4150
    %v4152 = vpop.f32.mrb[0].mxu0
    %v4153 = vadd.f32 %v2093, %v4152
    %v4154 = vpop.f32.mrb[0].mxu0
    %v4155 = vadd.f32 %v2097, %v4154
    %4156 = vmatprep.mubr.bf16.mxu0 %v1801
    %4157 = vmatmul.mubr.bf16.gmra.mrb[0].mxu0 %v1800
    %v4158 = vpop.f32.mrb[0].mxu0
    %v4159 = vadd.f32 %v2093, %v4158
    %v4160 = vpop.f32.mrb[0].mxu0
    %v4161 = vadd.f32 %v2097, %v4160
    %v4162 = vpop.f32.mrb[0].mxu0
    %v4163 = vadd.f32 %v2093, %v4162
    %v4164 = vpop.f32.mrb[0].mxu0
    %v4165 = vadd.f32 %v2097, %v4164
    %4166 = vmatprep.mubr.bf16.mxu0 %v1805
    %4167 = vmatmul.mubr.bf16.gmra.mrb[0].mxu0 %v1804
    %v4168 = vpop.f32.mrb[0].mxu0
    %v4169 = vadd.f32 %v2093, %v4168
    %v4170 = vpop.f32.mrb[0].mxu0
    %v4171 = vadd.f32 %v2097, %v4170
    %v4172 = vpop.f32.mrb[0].mxu0
    %v4173 = vadd.f32 %v2093, %v4172
    %v4174 = vpop.f32.mrb[0].mxu0
    %v4175 = vadd.f32 %v2097, %v4174
    %4176 = vdwg.mxu0
    %4177 = vmatprep.subr.bf16.mxu0 %v3009
    %4178 = vmatpush1.bf16.msra.mxu0 %v3008
    %4179 = vmatprep.subr.bf16.mxu0 %v3017
    %4180 = vmatpush1.bf16.msra.mxu0 %v3016
    %4181 = vmatprep.subr.bf16.mxu0 %v3025
    %4182 = vmatpush1.bf16.msra.mxu0 %v3024
    %4183 = vmatprep.subr.bf16.mxu0 %v3033
    %4184 = vmatpush1.bf16.msra.mxu0 %v3032
    %4185 = vmatprep.subr.bf16.mxu0 %v3041
    %4186 = vmatpush1.bf16.msra.mxu0 %v3040
    %4187 = vmatprep.subr.bf16.mxu0 %v3049
    %4188 = vmatpush1.bf16.msra.mxu0 %v3048
    %4189 = vmatprep.subr.bf16.mxu0 %v3057
    %4190 = vmatpush1.bf16.msra.mxu0 %v3056
    %4191 = vmatprep.subr.bf16.mxu0 %v3065
    %4192 = vmatpush1.bf16.msra.mxu0 %v3064
    %4193 = vmatprep.subr.bf16.mxu0 %v3073
    %4194 = vmatpush1.bf16.msra.mxu0 %v3072
    %4195 = vmatprep.subr.bf16.mxu0 %v3081
    %4196 = vmatpush1.bf16.msra.mxu0 %v3080
    %4197 = vmatprep.subr.bf16.mxu0 %v3089
    %4198 = vmatpush1.bf16.msra.mxu0 %v3088
    %4199 = vmatprep.subr.bf16.mxu0 %v3097
    %4200 = vmatpush1.bf16.msra.mxu0 %v3096
    %4201 = vmatprep.subr.bf16.mxu0 %v3105
    %4202 = vmatpush1.bf16.msra.mxu0 %v3104
    %4203 = vmatprep.subr.bf16.mxu0 %v3113
    %4204 = vmatpush1.bf16.msra.mxu0 %v3112
    %4205 = vmatprep.subr.bf16.mxu0 %v3121
    %4206 = vmatpush1.bf16.msra.mxu0 %v3120
    %4207 = vmatprep.subr.bf16.mxu0 %v3129
    %4208 = vmatpush1.bf16.msra.mxu0 %v3128
    %4209 = vmatprep.mubr.bf16.mxu0 %v1779
    %4210 = vmatmul.mubr.bf16.gmra.mrb[0].mxu0 %v1778
    %v4211 = vpop.f32.mrb[0].mxu0
    %v4212 = vadd.f32 %v4099, %v4211
    %v4213 = vpop.f32.mrb[0].mxu0
    %v4214 = vadd.f32 %v4101, %v4213
    %v4215 = vpop.f32.mrb[0].mxu0
    %v4216 = vadd.f32 %v4103, %v4215
    %v4217 = vpop.f32.mrb[0].mxu0
    %v4218 = vadd.f32 %v4105, %v4217
    %4219 = vmatprep.mubr.bf16.mxu0 %v1783
    %4220 = vmatmul.mubr.bf16.gmra.mrb[0].mxu0 %v1782
    %v4221 = vpop.f32.mrb[0].mxu0
    %v4222 = vadd.f32 %v4109, %v4221
    %v4223 = vpop.f32.mrb[0].mxu0
    %v4224 = vadd.f32 %v4111, %v4223
    %v4225 = vpop.f32.mrb[0].mxu0
    %v4226 = vadd.f32 %v4113, %v4225
    %v4227 = vpop.f32.mrb[0].mxu0
    %v4228 = vadd.f32 %v4115, %v4227
    %4229 = vmatprep.mubr.bf16.mxu0 %v1787
    %4230 = vmatmul.mubr.bf16.gmra.mrb[0].mxu0 %v1786
    %v4231 = vpop.f32.mrb[0].mxu0
    %v4232 = vadd.f32 %v4119, %v4231
    %v4233 = vpop.f32.mrb[0].mxu0
    %v4234 = vadd.f32 %v4121, %v4233
    %v4235 = vpop.f32.mrb[0].mxu0
    %v4236 = vadd.f32 %v4123, %v4235
    %v4237 = vpop.f32.mrb[0].mxu0
    %v4238 = vadd.f32 %v4125, %v4237
    %4239 = vmatprep.mubr.bf16.mxu0 %v1791
    %4240 = vmatmul.mubr.bf16.gmra.mrb[0].mxu0 %v1790
    %v4241 = vpop.f32.mrb[0].mxu0
    %v4242 = vadd.f32 %v4129, %v4241
    %v4243 = vpop.f32.mrb[0].mxu0
    %v4244 = vadd.f32 %v4131, %v4243
    %v4245 = vpop.f32.mrb[0].mxu0
    %v4246 = vadd.f32 %v4133, %v4245
    %v4247 = vpop.f32.mrb[0].mxu0
    %v4248 = vadd.f32 %v4135, %v4247
    %4249 = vmatprep.mubr.bf16.mxu0 %v1795
    %4250 = vmatmul.mubr.bf16.gmra.mrb[0].mxu0 %v1794
    %v4251 = vpop.f32.mrb[0].mxu0
    %v4252 = vadd.f32 %v4139, %v4251
    %v4253 = vpop.f32.mrb[0].mxu0
    %v4254 = vadd.f32 %v4141, %v4253
    %v4255 = vpop.f32.mrb[0].mxu0
    %v4256 = vadd.f32 %v4143, %v4255
    %v4257 = vpop.f32.mrb[0].mxu0
    %v4258 = vadd.f32 %v4145, %v4257
    %4259 = vmatprep.mubr.bf16.mxu0 %v1799
    %4260 = vmatmul.mubr.bf16.gmra.mrb[0].mxu0 %v1798
    %v4261 = vpop.f32.mrb[0].mxu0
    %v4262 = vadd.f32 %v4149, %v4261
    %v4263 = vpop.f32.mrb[0].mxu0
    %v4264 = vadd.f32 %v4151, %v4263
    %v4265 = vpop.f32.mrb[0].mxu0
    %v4266 = vadd.f32 %v4153, %v4265
    %v4267 = vpop.f32.mrb[0].mxu0
    %v4268 = vadd.f32 %v4155, %v4267
    %4269 = vmatprep.mubr.bf16.mxu0 %v1803
    %4270 = vmatmul.mubr.bf16.gmra.mrb[0].mxu0 %v1802
    %v4271 = vpop.f32.mrb[0].mxu0
    %v4272 = vadd.f32 %v4159, %v4271
    %v4273 = vpop.f32.mrb[0].mxu0
    %v4274 = vadd.f32 %v4161, %v4273
    %v4275 = vpop.f32.mrb[0].mxu0
    %v4276 = vadd.f32 %v4163, %v4275
    %v4277 = vpop.f32.mrb[0].mxu0
    %v4278 = vadd.f32 %v4165, %v4277
    %4279 = vmatprep.mubr.bf16.mxu0 %v1807
    %4280 = vmatmul.mubr.bf16.gmra.mrb[0].mxu0 %v1806
    %v4281 = vpop.f32.mrb[0].mxu0
    %v4282 = vadd.f32 %v4169, %v4281
    %v4283 = vpop.f32.mrb[0].mxu0
    %v4284 = vadd.f32 %v4171, %v4283
    %v4285 = vpop.f32.mrb[0].mxu0
    %v4286 = vadd.f32 %v4173, %v4285
    %v4287 = vpop.f32.mrb[0].mxu0
    %v4288 = vadd.f32 %v4175, %v4287
    %4289 = vdwg.mxu0
    %v4290 = vrot.slane %v3534, 4
    %v4291 = vmax.f32 %v3534, %v4290
    %v4292 = vrot.slane %v4291, 2
    %v4293 = vmax.f32 %v4291, %v4292
    %v4294 = vrot.slane %v4293, 1
    %v4295 = vmax.f32 %v4293, %v4294
    %v4296 = vrot.slane %v3536, 4
    %v4297 = vmax.f32 %v3536, %v4296
    %v4298 = vrot.slane %v4297, 2
    %v4299 = vmax.f32 %v4297, %v4298
    %v4300 = vrot.slane %v4299, 1
    %v4301 = vmax.f32 %v4299, %v4300
    %v4302 = vrot.slane %v3760, 4
    %v4303 = vmax.f32 %v3760, %v4302
    %v4304 = vrot.slane %v4303, 2
    %v4305 = vmax.f32 %v4303, %v4304
    %v4306 = vrot.slane %v4305, 1
    %v4307 = vmax.f32 %v4305, %v4306
    %v4308 = vrot.slane %v3762, 4
    %v4309 = vmax.f32 %v3762, %v4308
    %v4310 = vrot.slane %v4309, 2
    %v4311 = vmax.f32 %v4309, %v4310
    %v4312 = vrot.slane %v4311, 1
    %v4313 = vmax.f32 %v4311, %v4312
    %v4314 = vrot.slane %v3986, 4
    %v4315 = vmax.f32 %v3986, %v4314
    %v4316 = vrot.slane %v4315, 2
    %v4317 = vmax.f32 %v4315, %v4316
    %v4318 = vrot.slane %v4317, 1
    %v4319 = vmax.f32 %v4317, %v4318
    %v4320 = vrot.slane %v3988, 4
    %v4321 = vmax.f32 %v3988, %v4320
    %v4322 = vrot.slane %v4321, 2
    %v4323 = vmax.f32 %v4321, %v4322
    %v4324 = vrot.slane %v4323, 1
    %v4325 = vmax.f32 %v4323, %v4324
    %v4326 = vrot.slane %v4212, 4
    %v4327 = vmax.f32 %v4212, %v4326
    %v4328 = vrot.slane %v4327, 2
    %v4329 = vmax.f32 %v4327, %v4328
    %v4330 = vrot.slane %v4329, 1
    %v4331 = vmax.f32 %v4329, %v4330
    %v4332 = vrot.slane %v4214, 4
    %v4333 = vmax.f32 %v4214, %v4332
    %v4334 = vrot.slane %v4333, 2
    %v4335 = vmax.f32 %v4333, %v4334
    %v4336 = vrot.slane %v4335, 1
    %v4337 = vmax.f32 %v4335, %v4336
    %v4338 = vrot.slane %v3538, 4
    %v4339 = vmax.f32 %v3538, %v4338
    %v4340 = vrot.slane %v4339, 2
    %v4341 = vmax.f32 %v4339, %v4340
    %v4342 = vrot.slane %v4341, 1
    %v4343 = vmax.f32 %v4341, %v4342
    %v4344 = vrot.slane %v3540, 4
    %v4345 = vmax.f32 %v3540, %v4344
    %v4346 = vrot.slane %v4345, 2
    %v4347 = vmax.f32 %v4345, %v4346
    %v4348 = vrot.slane %v4347, 1
    %v4349 = vmax.f32 %v4347, %v4348
    %v4350 = vrot.slane %v3764, 4
    %v4351 = vmax.f32 %v3764, %v4350
    %v4352 = vrot.slane %v4351, 2
    %v4353 = vmax.f32 %v4351, %v4352
    %v4354 = vrot.slane %v4353, 1
    %v4355 = vmax.f32 %v4353, %v4354
    %v4356 = vrot.slane %v3766, 4
    %v4357 = vmax.f32 %v3766, %v4356
    %v4358 = vrot.slane %v4357, 2
    %v4359 = vmax.f32 %v4357, %v4358
    %v4360 = vrot.slane %v4359, 1
    %v4361 = vmax.f32 %v4359, %v4360
    %v4362 = vrot.slane %v3990, 4
    %v4363 = vmax.f32 %v3990, %v4362
    %v4364 = vrot.slane %v4363, 2
    %v4365 = vmax.f32 %v4363, %v4364
    %v4366 = vrot.slane %v4365, 1
    %v4367 = vmax.f32 %v4365, %v4366
    %v4368 = vrot.slane %v3992, 4
    %v4369 = vmax.f32 %v3992, %v4368
    %v4370 = vrot.slane %v4369, 2
    %v4371 = vmax.f32 %v4369, %v4370
    %v4372 = vrot.slane %v4371, 1
    %v4373 = vmax.f32 %v4371, %v4372
    %v4374 = vrot.slane %v4216, 4
    %v4375 = vmax.f32 %v4216, %v4374
    %v4376 = vrot.slane %v4375, 2
    %v4377 = vmax.f32 %v4375, %v4376
    %v4378 = vrot.slane %v4377, 1
    %v4379 = vmax.f32 %v4377, %v4378
    %v4380 = vrot.slane %v4218, 4
    %v4381 = vmax.f32 %v4218, %v4380
    %v4382 = vrot.slane %v4381, 2
    %v4383 = vmax.f32 %v4381, %v4382
    %v4384 = vrot.slane %v4383, 1
    %v4385 = vmax.f32 %v4383, %v4384
    %v4386 = vrot.slane %v3544, 4
    %v4387 = vmax.f32 %v3544, %v4386
    %v4388 = vrot.slane %v4387, 2
    %v4389 = vmax.f32 %v4387, %v4388
    %v4390 = vrot.slane %v4389, 1
    %v4391 = vmax.f32 %v4389, %v4390
    %v4392 = vrot.slane %v3546, 4
    %v4393 = vmax.f32 %v3546, %v4392
    %v4394 = vrot.slane %v4393, 2
    %v4395 = vmax.f32 %v4393, %v4394
    %v4396 = vrot.slane %v4395, 1
    %v4397 = vmax.f32 %v4395, %v4396
    %v4398 = vrot.slane %v3770, 4
    %v4399 = vmax.f32 %v3770, %v4398
    %v4400 = vrot.slane %v4399, 2
    %v4401 = vmax.f32 %v4399, %v4400
    %v4402 = vrot.slane %v4401, 1
    %v4403 = vmax.f32 %v4401, %v4402
    %v4404 = vrot.slane %v3772, 4
    %v4405 = vmax.f32 %v3772, %v4404
    %v4406 = vrot.slane %v4405, 2
    %v4407 = vmax.f32 %v4405, %v4406
    %v4408 = vrot.slane %v4407, 1
    %v4409 = vmax.f32 %v4407, %v4408
    %v4410 = vrot.slane %v3996, 4
    %v4411 = vmax.f32 %v3996, %v4410
    %v4412 = vrot.slane %v4411, 2
    %v4413 = vmax.f32 %v4411, %v4412
    %v4414 = vrot.slane %v4413, 1
    %v4415 = vmax.f32 %v4413, %v4414
    %v4416 = vrot.slane %v3998, 4
    %v4417 = vmax.f32 %v3998, %v4416
    %v4418 = vrot.slane %v4417, 2
    %v4419 = vmax.f32 %v4417, %v4418
    %v4420 = vrot.slane %v4419, 1
    %v4421 = vmax.f32 %v4419, %v4420
    %v4422 = vrot.slane %v4222, 4
    %v4423 = vmax.f32 %v4222, %v4422
    %v4424 = vrot.slane %v4423, 2
    %v4425 = vmax.f32 %v4423, %v4424
    %v4426 = vrot.slane %v4425, 1
    %v4427 = vmax.f32 %v4425, %v4426
    %v4428 = vrot.slane %v4224, 4
    %v4429 = vmax.f32 %v4224, %v4428
    %v4430 = vrot.slane %v4429, 2
    %v4431 = vmax.f32 %v4429, %v4430
    %v4432 = vrot.slane %v4431, 1
    %v4433 = vmax.f32 %v4431, %v4432
    %v4434 = vrot.slane %v3548, 4
    %v4435 = vmax.f32 %v3548, %v4434
    %v4436 = vrot.slane %v4435, 2
    %v4437 = vmax.f32 %v4435, %v4436
    %v4438 = vrot.slane %v4437, 1
    %v4439 = vmax.f32 %v4437, %v4438
    %v4440 = vrot.slane %v3550, 4
    %v4441 = vmax.f32 %v3550, %v4440
    %v4442 = vrot.slane %v4441, 2
    %v4443 = vmax.f32 %v4441, %v4442
    %v4444 = vrot.slane %v4443, 1
    %v4445 = vmax.f32 %v4443, %v4444
    %v4446 = vrot.slane %v3774, 4
    %v4447 = vmax.f32 %v3774, %v4446
    %v4448 = vrot.slane %v4447, 2
    %v4449 = vmax.f32 %v4447, %v4448
    %v4450 = vrot.slane %v4449, 1
    %v4451 = vmax.f32 %v4449, %v4450
    %v4452 = vrot.slane %v3776, 4
    %v4453 = vmax.f32 %v3776, %v4452
    %v4454 = vrot.slane %v4453, 2
    %v4455 = vmax.f32 %v4453, %v4454
    %v4456 = vrot.slane %v4455, 1
    %v4457 = vmax.f32 %v4455, %v4456
    %v4458 = vrot.slane %v4000, 4
    %v4459 = vmax.f32 %v4000, %v4458
    %v4460 = vrot.slane %v4459, 2
    %v4461 = vmax.f32 %v4459, %v4460
    %v4462 = vrot.slane %v4461, 1
    %v4463 = vmax.f32 %v4461, %v4462
    %v4464 = vrot.slane %v4002, 4
    %v4465 = vmax.f32 %v4002, %v4464
    %v4466 = vrot.slane %v4465, 2
    %v4467 = vmax.f32 %v4465, %v4466
    %v4468 = vrot.slane %v4467, 1
    %v4469 = vmax.f32 %v4467, %v4468
    %v4470 = vrot.slane %v4226, 4
    %v4471 = vmax.f32 %v4226, %v4470
    %v4472 = vrot.slane %v4471, 2
    %v4473 = vmax.f32 %v4471, %v4472
    %v4474 = vrot.slane %v4473, 1
    %v4475 = vmax.f32 %v4473, %v4474
    %v4476 = vrot.slane %v4228, 4
    %v4477 = vmax.f32 %v4228, %v4476
    %v4478 = vrot.slane %v4477, 2
    %v4479 = vmax.f32 %v4477, %v4478
    %v4480 = vrot.slane %v4479, 1
    %v4481 = vmax.f32 %v4479, %v4480
    %v4482 = vrot.slane %v3554, 4
    %v4483 = vmax.f32 %v3554, %v4482
    %v4484 = vrot.slane %v4483, 2
    %v4485 = vmax.f32 %v4483, %v4484
    %v4486 = vrot.slane %v4485, 1
    %v4487 = vmax.f32 %v4485, %v4486
    %v4488 = vrot.slane %v3556, 4
    %v4489 = vmax.f32 %v3556, %v4488
    %v4490 = vrot.slane %v4489, 2
    %v4491 = vmax.f32 %v4489, %v4490
    %v4492 = vrot.slane %v4491, 1
    %v4493 = vmax.f32 %v4491, %v4492
    %v4494 = vrot.slane %v3780, 4
    %v4495 = vmax.f32 %v3780, %v4494
    %v4496 = vrot.slane %v4495, 2
    %v4497 = vmax.f32 %v4495, %v4496
    %v4498 = vrot.slane %v4497, 1
    %v4499 = vmax.f32 %v4497, %v4498
    %v4500 = vrot.slane %v3782, 4
    %v4501 = vmax.f32 %v3782, %v4500
    %v4502 = vrot.slane %v4501, 2
    %v4503 = vmax.f32 %v4501, %v4502
    %v4504 = vrot.slane %v4503, 1
    %v4505 = vmax.f32 %v4503, %v4504
    %v4506 = vrot.slane %v4006, 4
    %v4507 = vmax.f32 %v4006, %v4506
    %v4508 = vrot.slane %v4507, 2
    %v4509 = vmax.f32 %v4507, %v4508
    %v4510 = vrot.slane %v4509, 1
    %v4511 = vmax.f32 %v4509, %v4510
    %v4512 = vrot.slane %v4008, 4
    %v4513 = vmax.f32 %v4008, %v4512
    %v4514 = vrot.slane %v4513, 2
    %v4515 = vmax.f32 %v4513, %v4514
    %v4516 = vrot.slane %v4515, 1
    %v4517 = vmax.f32 %v4515, %v4516
    %v4518 = vrot.slane %v4232, 4
    %v4519 = vmax.f32 %v4232, %v4518
    %v4520 = vrot.slane %v4519, 2
    %v4521 = vmax.f32 %v4519, %v4520
    %v4522 = vrot.slane %v4521, 1
    %v4523 = vmax.f32 %v4521, %v4522
    %v4524 = vrot.slane %v4234, 4
    %v4525 = vmax.f32 %v4234, %v4524
    %v4526 = vrot.slane %v4525, 2
    %v4527 = vmax.f32 %v4525, %v4526
    %v4528 = vrot.slane %v4527, 1
    %v4529 = vmax.f32 %v4527, %v4528
    %v4530 = vrot.slane %v3558, 4
    %v4531 = vmax.f32 %v3558, %v4530
    %v4532 = vrot.slane %v4531, 2
    %v4533 = vmax.f32 %v4531, %v4532
    %v4534 = vrot.slane %v4533, 1
    %v4535 = vmax.f32 %v4533, %v4534
    %v4536 = vrot.slane %v3560, 4
    %v4537 = vmax.f32 %v3560, %v4536
    %v4538 = vrot.slane %v4537, 2
    %v4539 = vmax.f32 %v4537, %v4538
    %v4540 = vrot.slane %v4539, 1
    %v4541 = vmax.f32 %v4539, %v4540
    %v4542 = vrot.slane %v3784, 4
    %v4543 = vmax.f32 %v3784, %v4542
    %v4544 = vrot.slane %v4543, 2
    %v4545 = vmax.f32 %v4543, %v4544
    %v4546 = vrot.slane %v4545, 1
    %v4547 = vmax.f32 %v4545, %v4546
    %v4548 = vrot.slane %v3786, 4
    %v4549 = vmax.f32 %v3786, %v4548
    %v4550 = vrot.slane %v4549, 2
    %v4551 = vmax.f32 %v4549, %v4550
    %v4552 = vrot.slane %v4551, 1
    %v4553 = vmax.f32 %v4551, %v4552
    %v4554 = vrot.slane %v4010, 4
    %v4555 = vmax.f32 %v4010, %v4554
    %v4556 = vrot.slane %v4555, 2
    %v4557 = vmax.f32 %v4555, %v4556
    %v4558 = vrot.slane %v4557, 1
    %v4559 = vmax.f32 %v4557, %v4558
    %v4560 = vrot.slane %v4012, 4
    %v4561 = vmax.f32 %v4012, %v4560
    %v4562 = vrot.slane %v4561, 2
    %v4563 = vmax.f32 %v4561, %v4562
    %v4564 = vrot.slane %v4563, 1
    %v4565 = vmax.f32 %v4563, %v4564
    %v4566 = vrot.slane %v4236, 4
    %v4567 = vmax.f32 %v4236, %v4566
    %v4568 = vrot.slane %v4567, 2
    %v4569 = vmax.f32 %v4567, %v4568
    %v4570 = vrot.slane %v4569, 1
    %v4571 = vmax.f32 %v4569, %v4570
    %v4572 = vrot.slane %v4238, 4
    %v4573 = vmax.f32 %v4238, %v4572
    %v4574 = vrot.slane %v4573, 2
    %v4575 = vmax.f32 %v4573, %v4574
    %v4576 = vrot.slane %v4575, 1
    %v4577 = vmax.f32 %v4575, %v4576
    %v4578 = vrot.slane %v3564, 4
    %v4579 = vmax.f32 %v3564, %v4578
    %v4580 = vrot.slane %v4579, 2
    %v4581 = vmax.f32 %v4579, %v4580
    %v4582 = vrot.slane %v4581, 1
    %v4583 = vmax.f32 %v4581, %v4582
    %v4584 = vrot.slane %v3566, 4
    %v4585 = vmax.f32 %v3566, %v4584
    %v4586 = vrot.slane %v4585, 2
    %v4587 = vmax.f32 %v4585, %v4586
    %v4588 = vrot.slane %v4587, 1
    %v4589 = vmax.f32 %v4587, %v4588
    %v4590 = vrot.slane %v3790, 4
    %v4591 = vmax.f32 %v3790, %v4590
    %v4592 = vrot.slane %v4591, 2
    %v4593 = vmax.f32 %v4591, %v4592
    %v4594 = vrot.slane %v4593, 1
    %v4595 = vmax.f32 %v4593, %v4594
    %v4596 = vrot.slane %v3792, 4
    %v4597 = vmax.f32 %v3792, %v4596
    %v4598 = vrot.slane %v4597, 2
    %v4599 = vmax.f32 %v4597, %v4598
    %v4600 = vrot.slane %v4599, 1
    %v4601 = vmax.f32 %v4599, %v4600
    %v4602 = vrot.slane %v4016, 4
    %v4603 = vmax.f32 %v4016, %v4602
    %v4604 = vrot.slane %v4603, 2
    %v4605 = vmax.f32 %v4603, %v4604
    %v4606 = vrot.slane %v4605, 1
    %v4607 = vmax.f32 %v4605, %v4606
    %v4608 = vrot.slane %v4018, 4
    %v4609 = vmax.f32 %v4018, %v4608
    %v4610 = vrot.slane %v4609, 2
    %v4611 = vmax.f32 %v4609, %v4610
    %v4612 = vrot.slane %v4611, 1
    %v4613 = vmax.f32 %v4611, %v4612
    %v4614 = vrot.slane %v4242, 4
    %v4615 = vmax.f32 %v4242, %v4614
    %v4616 = vrot.slane %v4615, 2
    %v4617 = vmax.f32 %v4615, %v4616
    %v4618 = vrot.slane %v4617, 1
    %v4619 = vmax.f32 %v4617, %v4618
    %v4620 = vrot.slane %v4244, 4
    %v4621 = vmax.f32 %v4244, %v4620
    %v4622 = vrot.slane %v4621, 2
    %v4623 = vmax.f32 %v4621, %v4622
    %v4624 = vrot.slane %v4623, 1
    %v4625 = vmax.f32 %v4623, %v4624
    %v4626 = vrot.slane %v3568, 4
    %v4627 = vmax.f32 %v3568, %v4626
    %v4628 = vrot.slane %v4627, 2
    %v4629 = vmax.f32 %v4627, %v4628
    %v4630 = vrot.slane %v4629, 1
    %v4631 = vmax.f32 %v4629, %v4630
    %v4632 = vrot.slane %v3570, 4
    %v4633 = vmax.f32 %v3570, %v4632
    %v4634 = vrot.slane %v4633, 2
    %v4635 = vmax.f32 %v4633, %v4634
    %v4636 = vrot.slane %v4635, 1
    %v4637 = vmax.f32 %v4635, %v4636
    %v4638 = vrot.slane %v3794, 4
    %v4639 = vmax.f32 %v3794, %v4638
    %v4640 = vrot.slane %v4639, 2
    %v4641 = vmax.f32 %v4639, %v4640
    %v4642 = vrot.slane %v4641, 1
    %v4643 = vmax.f32 %v4641, %v4642
    %v4644 = vrot.slane %v3796, 4
    %v4645 = vmax.f32 %v3796, %v4644
    %v4646 = vrot.slane %v4645, 2
    %v4647 = vmax.f32 %v4645, %v4646
    %v4648 = vrot.slane %v4647, 1
    %v4649 = vmax.f32 %v4647, %v4648
    %v4650 = vrot.slane %v4020, 4
    %v4651 = vmax.f32 %v4020, %v4650
    %v4652 = vrot.slane %v4651, 2
    %v4653 = vmax.f32 %v4651, %v4652
    %v4654 = vrot.slane %v4653, 1
    %v4655 = vmax.f32 %v4653, %v4654
    %v4656 = vrot.slane %v4022, 4
    %v4657 = vmax.f32 %v4022, %v4656
    %v4658 = vrot.slane %v4657, 2
    %v4659 = vmax.f32 %v4657, %v4658
    %v4660 = vrot.slane %v4659, 1
    %v4661 = vmax.f32 %v4659, %v4660
    %v4662 = vrot.slane %v4246, 4
    %v4663 = vmax.f32 %v4246, %v4662
    %v4664 = vrot.slane %v4663, 2
    %v4665 = vmax.f32 %v4663, %v4664
    %v4666 = vrot.slane %v4665, 1
    %v4667 = vmax.f32 %v4665, %v4666
    %v4668 = vrot.slane %v4248, 4
    %v4669 = vmax.f32 %v4248, %v4668
    %v4670 = vrot.slane %v4669, 2
    %v4671 = vmax.f32 %v4669, %v4670
    %v4672 = vrot.slane %v4671, 1
    %v4673 = vmax.f32 %v4671, %v4672
    %v4674 = vrot.slane %v3574, 4
    %v4675 = vmax.f32 %v3574, %v4674
    %v4676 = vrot.slane %v4675, 2
    %v4677 = vmax.f32 %v4675, %v4676
    %v4678 = vrot.slane %v4677, 1
    %v4679 = vmax.f32 %v4677, %v4678
    %v4680 = vrot.slane %v3576, 4
    %v4681 = vmax.f32 %v3576, %v4680
    %v4682 = vrot.slane %v4681, 2
    %v4683 = vmax.f32 %v4681, %v4682
    %v4684 = vrot.slane %v4683, 1
    %v4685 = vmax.f32 %v4683, %v4684
    %v4686 = vrot.slane %v3800, 4
    %v4687 = vmax.f32 %v3800, %v4686
    %v4688 = vrot.slane %v4687, 2
    %v4689 = vmax.f32 %v4687, %v4688
    %v4690 = vrot.slane %v4689, 1
    %v4691 = vmax.f32 %v4689, %v4690
    %v4692 = vrot.slane %v3802, 4
    %v4693 = vmax.f32 %v3802, %v4692
    %v4694 = vrot.slane %v4693, 2
    %v4695 = vmax.f32 %v4693, %v4694
    %v4696 = vrot.slane %v4695, 1
    %v4697 = vmax.f32 %v4695, %v4696
    %v4698 = vrot.slane %v4026, 4
    %v4699 = vmax.f32 %v4026, %v4698
    %v4700 = vrot.slane %v4699, 2
    %v4701 = vmax.f32 %v4699, %v4700
    %v4702 = vrot.slane %v4701, 1
    %v4703 = vmax.f32 %v4701, %v4702
    %v4704 = vrot.slane %v4028, 4
    %v4705 = vmax.f32 %v4028, %v4704
    %v4706 = vrot.slane %v4705, 2
    %v4707 = vmax.f32 %v4705, %v4706
    %v4708 = vrot.slane %v4707, 1
    %v4709 = vmax.f32 %v4707, %v4708
    %v4710 = vrot.slane %v4252, 4
    %v4711 = vmax.f32 %v4252, %v4710
    %v4712 = vrot.slane %v4711, 2
    %v4713 = vmax.f32 %v4711, %v4712
    %v4714 = vrot.slane %v4713, 1
    %v4715 = vmax.f32 %v4713, %v4714
    %v4716 = vrot.slane %v4254, 4
    %v4717 = vmax.f32 %v4254, %v4716
    %v4718 = vrot.slane %v4717, 2
    %v4719 = vmax.f32 %v4717, %v4718
    %v4720 = vrot.slane %v4719, 1
    %v4721 = vmax.f32 %v4719, %v4720
    %v4722 = vrot.slane %v3578, 4
    %v4723 = vmax.f32 %v3578, %v4722
    %v4724 = vrot.slane %v4723, 2
    %v4725 = vmax.f32 %v4723, %v4724
    %v4726 = vrot.slane %v4725, 1
    %v4727 = vmax.f32 %v4725, %v4726
    %v4728 = vrot.slane %v3580, 4
    %v4729 = vmax.f32 %v3580, %v4728
    %v4730 = vrot.slane %v4729, 2
    %v4731 = vmax.f32 %v4729, %v4730
    %v4732 = vrot.slane %v4731, 1
    %v4733 = vmax.f32 %v4731, %v4732
    %v4734 = vrot.slane %v3804, 4
    %v4735 = vmax.f32 %v3804, %v4734
    %v4736 = vrot.slane %v4735, 2
    %v4737 = vmax.f32 %v4735, %v4736
    %v4738 = vrot.slane %v4737, 1
    %v4739 = vmax.f32 %v4737, %v4738
    %v4740 = vrot.slane %v3806, 4
    %v4741 = vmax.f32 %v3806, %v4740
    %v4742 = vrot.slane %v4741, 2
    %v4743 = vmax.f32 %v4741, %v4742
    %v4744 = vrot.slane %v4743, 1
    %v4745 = vmax.f32 %v4743, %v4744
    %v4746 = vrot.slane %v4030, 4
    %v4747 = vmax.f32 %v4030, %v4746
    %v4748 = vrot.slane %v4747, 2
    %v4749 = vmax.f32 %v4747, %v4748
    %v4750 = vrot.slane %v4749, 1
    %v4751 = vmax.f32 %v4749, %v4750
    %v4752 = vrot.slane %v4032, 4
    %v4753 = vmax.f32 %v4032, %v4752
    %v4754 = vrot.slane %v4753, 2
    %v4755 = vmax.f32 %v4753, %v4754
    %v4756 = vrot.slane %v4755, 1
    %v4757 = vmax.f32 %v4755, %v4756
    %v4758 = vrot.slane %v4256, 4
    %v4759 = vmax.f32 %v4256, %v4758
    %v4760 = vrot.slane %v4759, 2
    %v4761 = vmax.f32 %v4759, %v4760
    %v4762 = vrot.slane %v4761, 1
    %v4763 = vmax.f32 %v4761, %v4762
    %v4764 = vrot.slane %v4258, 4
    %v4765 = vmax.f32 %v4258, %v4764
    %v4766 = vrot.slane %v4765, 2
    %v4767 = vmax.f32 %v4765, %v4766
    %v4768 = vrot.slane %v4767, 1
    %v4769 = vmax.f32 %v4767, %v4768
    %v4770 = vrot.slane %v3584, 4
    %v4771 = vmax.f32 %v3584, %v4770
    %v4772 = vrot.slane %v4771, 2
    %v4773 = vmax.f32 %v4771, %v4772
    %v4774 = vrot.slane %v4773, 1
    %v4775 = vmax.f32 %v4773, %v4774
    %v4776 = vrot.slane %v3586, 4
    %v4777 = vmax.f32 %v3586, %v4776
    %v4778 = vrot.slane %v4777, 2
    %v4779 = vmax.f32 %v4777, %v4778
    %v4780 = vrot.slane %v4779, 1
    %v4781 = vmax.f32 %v4779, %v4780
    %v4782 = vrot.slane %v3810, 4
    %v4783 = vmax.f32 %v3810, %v4782
    %v4784 = vrot.slane %v4783, 2
    %v4785 = vmax.f32 %v4783, %v4784
    %v4786 = vrot.slane %v4785, 1
    %v4787 = vmax.f32 %v4785, %v4786
    %v4788 = vrot.slane %v3812, 4
    %v4789 = vmax.f32 %v3812, %v4788
    %v4790 = vrot.slane %v4789, 2
    %v4791 = vmax.f32 %v4789, %v4790
    %v4792 = vrot.slane %v4791, 1
    %v4793 = vmax.f32 %v4791, %v4792
    %v4794 = vrot.slane %v4036, 4
    %v4795 = vmax.f32 %v4036, %v4794
    %v4796 = vrot.slane %v4795, 2
    %v4797 = vmax.f32 %v4795, %v4796
    %v4798 = vrot.slane %v4797, 1
    %v4799 = vmax.f32 %v4797, %v4798
    %v4800 = vrot.slane %v4038, 4
    %v4801 = vmax.f32 %v4038, %v4800
    %v4802 = vrot.slane %v4801, 2
    %v4803 = vmax.f32 %v4801, %v4802
    %v4804 = vrot.slane %v4803, 1
    %v4805 = vmax.f32 %v4803, %v4804
    %v4806 = vrot.slane %v4262, 4
    %v4807 = vmax.f32 %v4262, %v4806
    %v4808 = vrot.slane %v4807, 2
    %v4809 = vmax.f32 %v4807, %v4808
    %v4810 = vrot.slane %v4809, 1
    %v4811 = vmax.f32 %v4809, %v4810
    %v4812 = vrot.slane %v4264, 4
    %v4813 = vmax.f32 %v4264, %v4812
    %v4814 = vrot.slane %v4813, 2
    %v4815 = vmax.f32 %v4813, %v4814
    %v4816 = vrot.slane %v4815, 1
    %v4817 = vmax.f32 %v4815, %v4816
    %v4818 = vrot.slane %v3588, 4
    %v4819 = vmax.f32 %v3588, %v4818
    %v4820 = vrot.slane %v4819, 2
    %v4821 = vmax.f32 %v4819, %v4820
    %v4822 = vrot.slane %v4821, 1
    %v4823 = vmax.f32 %v4821, %v4822
    %v4824 = vrot.slane %v3590, 4
    %v4825 = vmax.f32 %v3590, %v4824
    %v4826 = vrot.slane %v4825, 2
    %v4827 = vmax.f32 %v4825, %v4826
    %v4828 = vrot.slane %v4827, 1
    %v4829 = vmax.f32 %v4827, %v4828
    %v4830 = vrot.slane %v3814, 4
    %v4831 = vmax.f32 %v3814, %v4830
    %v4832 = vrot.slane %v4831, 2
    %v4833 = vmax.f32 %v4831, %v4832
    %v4834 = vrot.slane %v4833, 1
    %v4835 = vmax.f32 %v4833, %v4834
    %v4836 = vrot.slane %v3816, 4
    %v4837 = vmax.f32 %v3816, %v4836
    %v4838 = vrot.slane %v4837, 2
    %v4839 = vmax.f32 %v4837, %v4838
    %v4840 = vrot.slane %v4839, 1
    %v4841 = vmax.f32 %v4839, %v4840
    %v4842 = vrot.slane %v4040, 4
    %v4843 = vmax.f32 %v4040, %v4842
    %v4844 = vrot.slane %v4843, 2
    %v4845 = vmax.f32 %v4843, %v4844
    %v4846 = vrot.slane %v4845, 1
    %v4847 = vmax.f32 %v4845, %v4846
    %v4848 = vrot.slane %v4042, 4
    %v4849 = vmax.f32 %v4042, %v4848
    %v4850 = vrot.slane %v4849, 2
    %v4851 = vmax.f32 %v4849, %v4850
    %v4852 = vrot.slane %v4851, 1
    %v4853 = vmax.f32 %v4851, %v4852
    %v4854 = vrot.slane %v4266, 4
    %v4855 = vmax.f32 %v4266, %v4854
    %v4856 = vrot.slane %v4855, 2
    %v4857 = vmax.f32 %v4855, %v4856
    %v4858 = vrot.slane %v4857, 1
    %v4859 = vmax.f32 %v4857, %v4858
    %v4860 = vrot.slane %v4268, 4
    %v4861 = vmax.f32 %v4268, %v4860
    %v4862 = vrot.slane %v4861, 2
    %v4863 = vmax.f32 %v4861, %v4862
    %v4864 = vrot.slane %v4863, 1
    %v4865 = vmax.f32 %v4863, %v4864
    %v4866 = vrot.slane %v3594, 4
    %v4867 = vmax.f32 %v3594, %v4866
    %v4868 = vrot.slane %v4867, 2
    %v4869 = vmax.f32 %v4867, %v4868
    %v4870 = vrot.slane %v4869, 1
    %v4871 = vmax.f32 %v4869, %v4870
    %v4872 = vrot.slane %v3596, 4
    %v4873 = vmax.f32 %v3596, %v4872
    %v4874 = vrot.slane %v4873, 2
    %v4875 = vmax.f32 %v4873, %v4874
    %v4876 = vrot.slane %v4875, 1
    %v4877 = vmax.f32 %v4875, %v4876
    %v4878 = vrot.slane %v3820, 4
    %v4879 = vmax.f32 %v3820, %v4878
    %v4880 = vrot.slane %v4879, 2
    %v4881 = vmax.f32 %v4879, %v4880
    %v4882 = vrot.slane %v4881, 1
    %v4883 = vmax.f32 %v4881, %v4882
    %v4884 = vrot.slane %v3822, 4
    %v4885 = vmax.f32 %v3822, %v4884
    %v4886 = vrot.slane %v4885, 2
    %v4887 = vmax.f32 %v4885, %v4886
    %v4888 = vrot.slane %v4887, 1
    %v4889 = vmax.f32 %v4887, %v4888
    %v4890 = vrot.slane %v4046, 4
    %v4891 = vmax.f32 %v4046, %v4890
    %v4892 = vrot.slane %v4891, 2
    %v4893 = vmax.f32 %v4891, %v4892
    %v4894 = vrot.slane %v4893, 1
    %v4895 = vmax.f32 %v4893, %v4894
    %v4896 = vrot.slane %v4048, 4
    %v4897 = vmax.f32 %v4048, %v4896
    %v4898 = vrot.slane %v4897, 2
    %v4899 = vmax.f32 %v4897, %v4898
    %v4900 = vrot.slane %v4899, 1
    %v4901 = vmax.f32 %v4899, %v4900
    %v4902 = vrot.slane %v4272, 4
    %v4903 = vmax.f32 %v4272, %v4902
    %v4904 = vrot.slane %v4903, 2
    %v4905 = vmax.f32 %v4903, %v4904
    %v4906 = vrot.slane %v4905, 1
    %v4907 = vmax.f32 %v4905, %v4906
    %v4908 = vrot.slane %v4274, 4
    %v4909 = vmax.f32 %v4274, %v4908
    %v4910 = vrot.slane %v4909, 2
    %v4911 = vmax.f32 %v4909, %v4910
    %v4912 = vrot.slane %v4911, 1
    %v4913 = vmax.f32 %v4911, %v4912
    %v4914 = vrot.slane %v3598, 4
    %v4915 = vmax.f32 %v3598, %v4914
    %v4916 = vrot.slane %v4915, 2
    %v4917 = vmax.f32 %v4915, %v4916
    %v4918 = vrot.slane %v4917, 1
    %v4919 = vmax.f32 %v4917, %v4918
    %v4920 = vrot.slane %v3600, 4
    %v4921 = vmax.f32 %v3600, %v4920
    %v4922 = vrot.slane %v4921, 2
    %v4923 = vmax.f32 %v4921, %v4922
    %v4924 = vrot.slane %v4923, 1
    %v4925 = vmax.f32 %v4923, %v4924
    %v4926 = vrot.slane %v3824, 4
    %v4927 = vmax.f32 %v3824, %v4926
    %v4928 = vrot.slane %v4927, 2
    %v4929 = vmax.f32 %v4927, %v4928
    %v4930 = vrot.slane %v4929, 1
    %v4931 = vmax.f32 %v4929, %v4930
    %v4932 = vrot.slane %v3826, 4
    %v4933 = vmax.f32 %v3826, %v4932
    %v4934 = vrot.slane %v4933, 2
    %v4935 = vmax.f32 %v4933, %v4934
    %v4936 = vrot.slane %v4935, 1
    %v4937 = vmax.f32 %v4935, %v4936
    %v4938 = vrot.slane %v4050, 4
    %v4939 = vmax.f32 %v4050, %v4938
    %v4940 = vrot.slane %v4939, 2
    %v4941 = vmax.f32 %v4939, %v4940
    %v4942 = vrot.slane %v4941, 1
    %v4943 = vmax.f32 %v4941, %v4942
    %v4944 = vrot.slane %v4052, 4
    %v4945 = vmax.f32 %v4052, %v4944
    %v4946 = vrot.slane %v4945, 2
    %v4947 = vmax.f32 %v4945, %v4946
    %v4948 = vrot.slane %v4947, 1
    %v4949 = vmax.f32 %v4947, %v4948
    %v4950 = vrot.slane %v4276, 4
    %v4951 = vmax.f32 %v4276, %v4950
    %v4952 = vrot.slane %v4951, 2
    %v4953 = vmax.f32 %v4951, %v4952
    %v4954 = vrot.slane %v4953, 1
    %v4955 = vmax.f32 %v4953, %v4954
    %v4956 = vrot.slane %v4278, 4
    %v4957 = vmax.f32 %v4278, %v4956
    %v4958 = vrot.slane %v4957, 2
    %v4959 = vmax.f32 %v4957, %v4958
    %v4960 = vrot.slane %v4959, 1
    %v4961 = vmax.f32 %v4959, %v4960
    %v4962 = vrot.slane %v3604, 4
    %v4963 = vmax.f32 %v3604, %v4962
    %v4964 = vrot.slane %v4963, 2
    %v4965 = vmax.f32 %v4963, %v4964
    %v4966 = vrot.slane %v4965, 1
    %v4967 = vmax.f32 %v4965, %v4966
    %v4968 = vrot.slane %v3606, 4
    %v4969 = vmax.f32 %v3606, %v4968
    %v4970 = vrot.slane %v4969, 2
    %v4971 = vmax.f32 %v4969, %v4970
    %v4972 = vrot.slane %v4971, 1
    %v4973 = vmax.f32 %v4971, %v4972
    %v4974 = vrot.slane %v3830, 4
    %v4975 = vmax.f32 %v3830, %v4974
    %v4976 = vrot.slane %v4975, 2
    %v4977 = vmax.f32 %v4975, %v4976
    %v4978 = vrot.slane %v4977, 1
    %v4979 = vmax.f32 %v4977, %v4978
    %v4980 = vrot.slane %v3832, 4
    %v4981 = vmax.f32 %v3832, %v4980
    %v4982 = vrot.slane %v4981, 2
    %v4983 = vmax.f32 %v4981, %v4982
    %v4984 = vrot.slane %v4983, 1
    %v4985 = vmax.f32 %v4983, %v4984
    %v4986 = vrot.slane %v4056, 4
    %v4987 = vmax.f32 %v4056, %v4986
    %v4988 = vrot.slane %v4987, 2
    %v4989 = vmax.f32 %v4987, %v4988
    %v4990 = vrot.slane %v4989, 1
    %v4991 = vmax.f32 %v4989, %v4990
    %v4992 = vrot.slane %v4058, 4
    %v4993 = vmax.f32 %v4058, %v4992
    %v4994 = vrot.slane %v4993, 2
    %v4995 = vmax.f32 %v4993, %v4994
    %v4996 = vrot.slane %v4995, 1
    %v4997 = vmax.f32 %v4995, %v4996
    %v4998 = vrot.slane %v4282, 4
    %v4999 = vmax.f32 %v4282, %v4998
    %v5000 = vrot.slane %v4999, 2
    %v5001 = vmax.f32 %v4999, %v5000
    %v5002 = vrot.slane %v5001, 1
    %v5003 = vmax.f32 %v5001, %v5002
    %v5004 = vrot.slane %v4284, 4
    %v5005 = vmax.f32 %v4284, %v5004
    %v5006 = vrot.slane %v5005, 2
    %v5007 = vmax.f32 %v5005, %v5006
    %v5008 = vrot.slane %v5007, 1
    %v5009 = vmax.f32 %v5007, %v5008
    %v5010 = vrot.slane %v3608, 4
    %v5011 = vmax.f32 %v3608, %v5010
    %v5012 = vrot.slane %v5011, 2
    %v5013 = vmax.f32 %v5011, %v5012
    %v5014 = vrot.slane %v5013, 1
    %v5015 = vmax.f32 %v5013, %v5014
    %v5016 = vrot.slane %v3610, 4
    %v5017 = vmax.f32 %v3610, %v5016
    %v5018 = vrot.slane %v5017, 2
    %v5019 = vmax.f32 %v5017, %v5018
    %v5020 = vrot.slane %v5019, 1
    %v5021 = vmax.f32 %v5019, %v5020
    %v5022 = vrot.slane %v3834, 4
    %v5023 = vmax.f32 %v3834, %v5022
    %v5024 = vrot.slane %v5023, 2
    %v5025 = vmax.f32 %v5023, %v5024
    %v5026 = vrot.slane %v5025, 1
    %v5027 = vmax.f32 %v5025, %v5026
    %v5028 = vrot.slane %v3836, 4
    %v5029 = vmax.f32 %v3836, %v5028
    %v5030 = vrot.slane %v5029, 2
    %v5031 = vmax.f32 %v5029, %v5030
    %v5032 = vrot.slane %v5031, 1
    %v5033 = vmax.f32 %v5031, %v5032
    %v5034 = vrot.slane %v4060, 4
    %v5035 = vmax.f32 %v4060, %v5034
    %v5036 = vrot.slane %v5035, 2
    %v5037 = vmax.f32 %v5035, %v5036
    %v5038 = vrot.slane %v5037, 1
    %v5039 = vmax.f32 %v5037, %v5038
    %v5040 = vrot.slane %v4062, 4
    %v5041 = vmax.f32 %v4062, %v5040
    %v5042 = vrot.slane %v5041, 2
    %v5043 = vmax.f32 %v5041, %v5042
    %v5044 = vrot.slane %v5043, 1
    %v5045 = vmax.f32 %v5043, %v5044
    %v5046 = vrot.slane %v4286, 4
    %v5047 = vmax.f32 %v4286, %v5046
    %v5048 = vrot.slane %v5047, 2
    %v5049 = vmax.f32 %v5047, %v5048
    %v5050 = vrot.slane %v5049, 1
    %v5051 = vmax.f32 %v5049, %v5050
    %v5052 = vrot.slane %v4288, 4
    %v5053 = vmax.f32 %v4288, %v5052
    %v5054 = vrot.slane %v5053, 2
    %v5055 = vmax.f32 %v5053, %v5054
    %v5056 = vrot.slane %v5055, 1
    %v5057 = vmax.f32 %v5055, %v5056
    %v5058 = vpack.c.bf16 %v4295, %v4295
    %v5059 = vpack.c.bf16 %v4301, %v4301
    %v5060 = vpack.c.bf16 %v4307, %v4307
    %v5061 = vpack.c.bf16 %v4313, %v4313
    %v5062 = vpack.c.bf16 %v4319, %v4319
    %v5063 = vpack.c.bf16 %v4325, %v4325
    %v5064 = vpack.c.bf16 %v4331, %v4331
    %v5065 = vpack.c.bf16 %v4337, %v4337
    %v5066 = vpack.c.bf16 %v4343, %v4343
    %v5067 = vpack.c.bf16 %v4349, %v4349
    %v5068 = vpack.c.bf16 %v4355, %v4355
    %v5069 = vpack.c.bf16 %v4361, %v4361
    %v5070 = vpack.c.bf16 %v4367, %v4367
    %v5071 = vpack.c.bf16 %v4373, %v4373
    %v5072 = vpack.c.bf16 %v4379, %v4379
    %v5073 = vpack.c.bf16 %v4385, %v4385
    %v5074 = vpack.c.bf16 %v4391, %v4391
    %v5075 = vpack.c.bf16 %v4397, %v4397
    %v5076 = vpack.c.bf16 %v4403, %v4403
    %v5077 = vpack.c.bf16 %v4409, %v4409
    %v5078 = vpack.c.bf16 %v4415, %v4415
    %v5079 = vpack.c.bf16 %v4421, %v4421
    %v5080 = vpack.c.bf16 %v4427, %v4427
    %v5081 = vpack.c.bf16 %v4433, %v4433
    %v5082 = vpack.c.bf16 %v4439, %v4439
    %v5083 = vpack.c.bf16 %v4445, %v4445
    %v5084 = vpack.c.bf16 %v4451, %v4451
    %v5085 = vpack.c.bf16 %v4457, %v4457
    %v5086 = vpack.c.bf16 %v4463, %v4463
    %v5087 = vpack.c.bf16 %v4469, %v4469
    %v5088 = vpack.c.bf16 %v4475, %v4475
    %v5089 = vpack.c.bf16 %v4481, %v4481
    %v5090 = vpack.c.bf16 %v4487, %v4487
    %v5091 = vpack.c.bf16 %v4493, %v4493
    %v5092 = vpack.c.bf16 %v4499, %v4499
    %v5093 = vpack.c.bf16 %v4505, %v4505
    %v5094 = vpack.c.bf16 %v4511, %v4511
    %v5095 = vpack.c.bf16 %v4517, %v4517
    %v5096 = vpack.c.bf16 %v4523, %v4523
    %v5097 = vpack.c.bf16 %v4529, %v4529
    %v5098 = vpack.c.bf16 %v4535, %v4535
    %v5099 = vpack.c.bf16 %v4541, %v4541
    %v5100 = vpack.c.bf16 %v4547, %v4547
    %v5101 = vpack.c.bf16 %v4553, %v4553
    %v5102 = vpack.c.bf16 %v4559, %v4559
    %v5103 = vpack.c.bf16 %v4565, %v4565
    %v5104 = vpack.c.bf16 %v4571, %v4571
    %v5105 = vpack.c.bf16 %v4577, %v4577
    %v5106 = vpack.c.bf16 %v4583, %v4583
    %v5107 = vpack.c.bf16 %v4589, %v4589
    %v5108 = vpack.c.bf16 %v4595, %v4595
    %v5109 = vpack.c.bf16 %v4601, %v4601
    %v5110 = vpack.c.bf16 %v4607, %v4607
    %v5111 = vpack.c.bf16 %v4613, %v4613
    %v5112 = vpack.c.bf16 %v4619, %v4619
    %v5113 = vpack.c.bf16 %v4625, %v4625
    %v5114 = vpack.c.bf16 %v4631, %v4631
    %v5115 = vpack.c.bf16 %v4637, %v4637
    %v5116 = vpack.c.bf16 %v4643, %v4643
    %v5117 = vpack.c.bf16 %v4649, %v4649
    %v5118 = vpack.c.bf16 %v4655, %v4655
    %v5119 = vpack.c.bf16 %v4661, %v4661
    %v5120 = vpack.c.bf16 %v4667, %v4667
    %v5121 = vpack.c.bf16 %v4673, %v4673
    %v5122 = vpack.c.bf16 %v4679, %v4679
    %v5123 = vpack.c.bf16 %v4685, %v4685
    %v5124 = vpack.c.bf16 %v4691, %v4691
    %v5125 = vpack.c.bf16 %v4697, %v4697
    %v5126 = vpack.c.bf16 %v4703, %v4703
    %v5127 = vpack.c.bf16 %v4709, %v4709
    %v5128 = vpack.c.bf16 %v4715, %v4715
    %v5129 = vpack.c.bf16 %v4721, %v4721
    %v5130 = vpack.c.bf16 %v4727, %v4727
    %v5131 = vpack.c.bf16 %v4733, %v4733
    %v5132 = vpack.c.bf16 %v4739, %v4739
    %v5133 = vpack.c.bf16 %v4745, %v4745
    %v5134 = vpack.c.bf16 %v4751, %v4751
    %v5135 = vpack.c.bf16 %v4757, %v4757
    %v5136 = vpack.c.bf16 %v4763, %v4763
    %v5137 = vpack.c.bf16 %v4769, %v4769
    %v5138 = vpack.c.bf16 %v4775, %v4775
    %v5139 = vpack.c.bf16 %v4781, %v4781
    %v5140 = vpack.c.bf16 %v4787, %v4787
    %v5141 = vpack.c.bf16 %v4793, %v4793
    %v5142 = vpack.c.bf16 %v4799, %v4799
    %v5143 = vpack.c.bf16 %v4805, %v4805
    %v5144 = vpack.c.bf16 %v4811, %v4811
    %v5145 = vpack.c.bf16 %v4817, %v4817
    %v5146 = vpack.c.bf16 %v4823, %v4823
    %v5147 = vpack.c.bf16 %v4829, %v4829
    %v5148 = vpack.c.bf16 %v4835, %v4835
    %v5149 = vpack.c.bf16 %v4841, %v4841
    %v5150 = vpack.c.bf16 %v4847, %v4847
    %v5151 = vpack.c.bf16 %v4853, %v4853
    %v5152 = vpack.c.bf16 %v4859, %v4859
    %v5153 = vpack.c.bf16 %v4865, %v4865
    %v5154 = vpack.c.bf16 %v4871, %v4871
    %v5155 = vpack.c.bf16 %v4877, %v4877
    %v5156 = vpack.c.bf16 %v4883, %v4883
    %v5157 = vpack.c.bf16 %v4889, %v4889
    %v5158 = vpack.c.bf16 %v4895, %v4895
    %v5159 = vpack.c.bf16 %v4901, %v4901
    %v5160 = vpack.c.bf16 %v4907, %v4907
    %v5161 = vpack.c.bf16 %v4913, %v4913
    %v5162 = vpack.c.bf16 %v4919, %v4919
    %v5163 = vpack.c.bf16 %v4925, %v4925
    %v5164 = vpack.c.bf16 %v4931, %v4931
    %v5165 = vpack.c.bf16 %v4937, %v4937
    %v5166 = vpack.c.bf16 %v4943, %v4943
    %v5167 = vpack.c.bf16 %v4949, %v4949
    %v5168 = vpack.c.bf16 %v4955, %v4955
    %v5169 = vpack.c.bf16 %v4961, %v4961
    %v5170 = vpack.c.bf16 %v4967, %v4967
    %v5171 = vpack.c.bf16 %v4973, %v4973
    %v5172 = vpack.c.bf16 %v4979, %v4979
    %v5173 = vpack.c.bf16 %v4985, %v4985
    %v5174 = vpack.c.bf16 %v4991, %v4991
    %v5175 = vpack.c.bf16 %v4997, %v4997
    %v5176 = vpack.c.bf16 %v5003, %v5003
    %v5177 = vpack.c.bf16 %v5009, %v5009
    %v5178 = vpack.c.bf16 %v5015, %v5015
    %v5179 = vpack.c.bf16 %v5021, %v5021
    %v5180 = vpack.c.bf16 %v5027, %v5027
    %v5181 = vpack.c.bf16 %v5033, %v5033
    %v5182 = vpack.c.bf16 %v5039, %v5039
    %v5183 = vpack.c.bf16 %v5045, %v5045
    %v5184 = vpack.c.bf16 %v5051, %v5051
    %v5185 = vpack.c.bf16 %v5057, %v5057
    %v5314 = vunpack.c.l.b16 %v5058
    %v5315 = vunpack.c.l.b16 %v5059
    %v5316 = vunpack.c.l.b16 %v5060
    %v5317 = vunpack.c.l.b16 %v5061
    %v5318 = vunpack.c.l.b16 %v5062
    %v5319 = vunpack.c.l.b16 %v5063
    %v5320 = vunpack.c.l.b16 %v5064
    %v5321 = vunpack.c.l.b16 %v5065
    %v5322 = vunpack.c.l.b16 %v5066
    %v5323 = vunpack.c.l.b16 %v5067
    %v5324 = vunpack.c.l.b16 %v5068
    %v5325 = vunpack.c.l.b16 %v5069
    %v5326 = vunpack.c.l.b16 %v5070
    %v5327 = vunpack.c.l.b16 %v5071
    %v5328 = vunpack.c.l.b16 %v5072
    %v5329 = vunpack.c.l.b16 %v5073
    %v5330 = vunpack.c.l.b16 %v5074
    %v5331 = vunpack.c.l.b16 %v5075
    %v5332 = vunpack.c.l.b16 %v5076
    %v5333 = vunpack.c.l.b16 %v5077
    %v5334 = vunpack.c.l.b16 %v5078
    %v5335 = vunpack.c.l.b16 %v5079
    %v5336 = vunpack.c.l.b16 %v5080
    %v5337 = vunpack.c.l.b16 %v5081
    %v5338 = vunpack.c.l.b16 %v5082
    %v5339 = vunpack.c.l.b16 %v5083
    %v5340 = vunpack.c.l.b16 %v5084
    %v5341 = vunpack.c.l.b16 %v5085
    %v5342 = vunpack.c.l.b16 %v5086
    %v5343 = vunpack.c.l.b16 %v5087
    %v5344 = vunpack.c.l.b16 %v5088
    %v5345 = vunpack.c.l.b16 %v5089
    %v5346 = vunpack.c.l.b16 %v5090
    %v5347 = vunpack.c.l.b16 %v5091
    %v5348 = vunpack.c.l.b16 %v5092
    %v5349 = vunpack.c.l.b16 %v5093
    %v5350 = vunpack.c.l.b16 %v5094
    %v5351 = vunpack.c.l.b16 %v5095
    %v5352 = vunpack.c.l.b16 %v5096
    %v5353 = vunpack.c.l.b16 %v5097
    %v5354 = vunpack.c.l.b16 %v5098
    %v5355 = vunpack.c.l.b16 %v5099
    %v5356 = vunpack.c.l.b16 %v5100
    %v5357 = vunpack.c.l.b16 %v5101
    %v5358 = vunpack.c.l.b16 %v5102
    %v5359 = vunpack.c.l.b16 %v5103
    %v5360 = vunpack.c.l.b16 %v5104
    %v5361 = vunpack.c.l.b16 %v5105
    %v5362 = vunpack.c.l.b16 %v5106
    %v5363 = vunpack.c.l.b16 %v5107
    %v5364 = vunpack.c.l.b16 %v5108
    %v5365 = vunpack.c.l.b16 %v5109
    %v5366 = vunpack.c.l.b16 %v5110
    %v5367 = vunpack.c.l.b16 %v5111
    %v5368 = vunpack.c.l.b16 %v5112
    %v5369 = vunpack.c.l.b16 %v5113
    %v5370 = vunpack.c.l.b16 %v5114
    %v5371 = vunpack.c.l.b16 %v5115
    %v5372 = vunpack.c.l.b16 %v5116
    %v5373 = vunpack.c.l.b16 %v5117
    %v5374 = vunpack.c.l.b16 %v5118
    %v5375 = vunpack.c.l.b16 %v5119
    %v5376 = vunpack.c.l.b16 %v5120
    %v5377 = vunpack.c.l.b16 %v5121
    %v5378 = vunpack.c.l.b16 %v5122
    %v5379 = vunpack.c.l.b16 %v5123
    %v5380 = vunpack.c.l.b16 %v5124
    %v5381 = vunpack.c.l.b16 %v5125
    %v5382 = vunpack.c.l.b16 %v5126
    %v5383 = vunpack.c.l.b16 %v5127
    %v5384 = vunpack.c.l.b16 %v5128
    %v5385 = vunpack.c.l.b16 %v5129
    %v5386 = vunpack.c.l.b16 %v5130
    %v5387 = vunpack.c.l.b16 %v5131
    %v5388 = vunpack.c.l.b16 %v5132
    %v5389 = vunpack.c.l.b16 %v5133
    %v5390 = vunpack.c.l.b16 %v5134
    %v5391 = vunpack.c.l.b16 %v5135
    %v5392 = vunpack.c.l.b16 %v5136
    %v5393 = vunpack.c.l.b16 %v5137
    %v5394 = vunpack.c.l.b16 %v5138
    %v5395 = vunpack.c.l.b16 %v5139
    %v5396 = vunpack.c.l.b16 %v5140
    %v5397 = vunpack.c.l.b16 %v5141
    %v5398 = vunpack.c.l.b16 %v5142
    %v5399 = vunpack.c.l.b16 %v5143
    %v5400 = vunpack.c.l.b16 %v5144
    %v5401 = vunpack.c.l.b16 %v5145
    %v5402 = vunpack.c.l.b16 %v5146
    %v5403 = vunpack.c.l.b16 %v5147
    %v5404 = vunpack.c.l.b16 %v5148
    %v5405 = vunpack.c.l.b16 %v5149
    %v5406 = vunpack.c.l.b16 %v5150
    %v5407 = vunpack.c.l.b16 %v5151
    %v5408 = vunpack.c.l.b16 %v5152
    %v5409 = vunpack.c.l.b16 %v5153
    %v5410 = vunpack.c.l.b16 %v5154
    %v5411 = vunpack.c.l.b16 %v5155
    %v5412 = vunpack.c.l.b16 %v5156
    %v5413 = vunpack.c.l.b16 %v5157
    %v5414 = vunpack.c.l.b16 %v5158
    %v5415 = vunpack.c.l.b16 %v5159
    %v5416 = vunpack.c.l.b16 %v5160
    %v5417 = vunpack.c.l.b16 %v5161
    %v5418 = vunpack.c.l.b16 %v5162
    %v5419 = vunpack.c.l.b16 %v5163
    %v5420 = vunpack.c.l.b16 %v5164
    %v5421 = vunpack.c.l.b16 %v5165
    %v5422 = vunpack.c.l.b16 %v5166
    %v5423 = vunpack.c.l.b16 %v5167
    %v5424 = vunpack.c.l.b16 %v5168
    %v5425 = vunpack.c.l.b16 %v5169
    %v5426 = vunpack.c.l.b16 %v5170
    %v5427 = vunpack.c.l.b16 %v5171
    %v5428 = vunpack.c.l.b16 %v5172
    %v5429 = vunpack.c.l.b16 %v5173
    %v5430 = vunpack.c.l.b16 %v5174
    %v5431 = vunpack.c.l.b16 %v5175
    %v5432 = vunpack.c.l.b16 %v5176
    %v5433 = vunpack.c.l.b16 %v5177
    %v5434 = vunpack.c.l.b16 %v5178
    %v5435 = vunpack.c.l.b16 %v5179
    %v5436 = vunpack.c.l.b16 %v5180
    %v5437 = vunpack.c.l.b16 %v5181
    %v5438 = vunpack.c.l.b16 %v5182
    %v5439 = vunpack.c.l.b16 %v5183
    %v5440 = vunpack.c.l.b16 %v5184
    %v5441 = vunpack.c.l.b16 %v5185
    %v5442 = vpack.c.b16 %v5315, %v5314
    %v5443 = vpack.c.b16 %v5317, %v5316
    %v5444 = vpack.c.b16 %v5319, %v5318
    %v5445 = vpack.c.b16 %v5321, %v5320
    %v5446 = vpack.c.b16 %v5323, %v5322
    %v5447 = vpack.c.b16 %v5325, %v5324
    %v5448 = vpack.c.b16 %v5327, %v5326
    %v5449 = vpack.c.b16 %v5329, %v5328
    %v5450 = vpack.c.b16 %v5331, %v5330
    %v5451 = vpack.c.b16 %v5333, %v5332
    %v5452 = vpack.c.b16 %v5335, %v5334
    %v5453 = vpack.c.b16 %v5337, %v5336
    %v5454 = vpack.c.b16 %v5339, %v5338
    %v5455 = vpack.c.b16 %v5341, %v5340
    %v5456 = vpack.c.b16 %v5343, %v5342
    %v5457 = vpack.c.b16 %v5345, %v5344
    %v5458 = vpack.c.b16 %v5347, %v5346
    %v5459 = vpack.c.b16 %v5349, %v5348
    %v5460 = vpack.c.b16 %v5351, %v5350
    %v5461 = vpack.c.b16 %v5353, %v5352
    %v5462 = vpack.c.b16 %v5355, %v5354
    %v5463 = vpack.c.b16 %v5357, %v5356
    %v5464 = vpack.c.b16 %v5359, %v5358
    %v5465 = vpack.c.b16 %v5361, %v5360
    %v5466 = vpack.c.b16 %v5363, %v5362
    %v5467 = vpack.c.b16 %v5365, %v5364
    %v5468 = vpack.c.b16 %v5367, %v5366
    %v5469 = vpack.c.b16 %v5369, %v5368
    %v5470 = vpack.c.b16 %v5371, %v5370
    %v5471 = vpack.c.b16 %v5373, %v5372
    %v5472 = vpack.c.b16 %v5375, %v5374
    %v5473 = vpack.c.b16 %v5377, %v5376
    %v5474 = vpack.c.b16 %v5379, %v5378
    %v5475 = vpack.c.b16 %v5381, %v5380
    %v5476 = vpack.c.b16 %v5383, %v5382
    %v5477 = vpack.c.b16 %v5385, %v5384
    %v5478 = vpack.c.b16 %v5387, %v5386
    %v5479 = vpack.c.b16 %v5389, %v5388
    %v5480 = vpack.c.b16 %v5391, %v5390
    %v5481 = vpack.c.b16 %v5393, %v5392
    %v5482 = vpack.c.b16 %v5395, %v5394
    %v5483 = vpack.c.b16 %v5397, %v5396
    %v5484 = vpack.c.b16 %v5399, %v5398
    %v5485 = vpack.c.b16 %v5401, %v5400
    %v5486 = vpack.c.b16 %v5403, %v5402
    %v5487 = vpack.c.b16 %v5405, %v5404
    %v5488 = vpack.c.b16 %v5407, %v5406
    %v5489 = vpack.c.b16 %v5409, %v5408
    %v5490 = vpack.c.b16 %v5411, %v5410
    %v5491 = vpack.c.b16 %v5413, %v5412
    %v5492 = vpack.c.b16 %v5415, %v5414
    %v5493 = vpack.c.b16 %v5417, %v5416
    %v5494 = vpack.c.b16 %v5419, %v5418
    %v5495 = vpack.c.b16 %v5421, %v5420
    %v5496 = vpack.c.b16 %v5423, %v5422
    %v5497 = vpack.c.b16 %v5425, %v5424
    %v5498 = vpack.c.b16 %v5427, %v5426
    %v5499 = vpack.c.b16 %v5429, %v5428
    %v5500 = vpack.c.b16 %v5431, %v5430
    %v5501 = vpack.c.b16 %v5433, %v5432
    %v5502 = vpack.c.b16 %v5435, %v5434
    %v5503 = vpack.c.b16 %v5437, %v5436
    %v5504 = vpack.c.b16 %v5439, %v5438
    %v5505 = vpack.c.b16 %v5441, %v5440
    %v5506 = vunpack.c.l.b16 %v5442
    %v5507 = vunpack.c.h.b16 %v5442
    %v5508 = vunpack.c.l.b16 %v5443
    %v5509 = vunpack.c.h.b16 %v5443
    %v5510 = vunpack.c.l.b16 %v5444
    %v5511 = vunpack.c.h.b16 %v5444
    %v5512 = vunpack.c.l.b16 %v5445
    %v5513 = vunpack.c.h.b16 %v5445
    %v5514 = vunpack.c.l.b16 %v5446
    %v5515 = vunpack.c.h.b16 %v5446
    %v5516 = vunpack.c.l.b16 %v5447
    %v5517 = vunpack.c.h.b16 %v5447
    %v5518 = vunpack.c.l.b16 %v5448
    %v5519 = vunpack.c.h.b16 %v5448
    %v5520 = vunpack.c.l.b16 %v5449
    %v5521 = vunpack.c.h.b16 %v5449
    %v5522 = vunpack.c.l.b16 %v5450
    %v5523 = vunpack.c.h.b16 %v5450
    %v5524 = vunpack.c.l.b16 %v5451
    %v5525 = vunpack.c.h.b16 %v5451
    %v5526 = vunpack.c.l.b16 %v5452
    %v5527 = vunpack.c.h.b16 %v5452
    %v5528 = vunpack.c.l.b16 %v5453
    %v5529 = vunpack.c.h.b16 %v5453
    %v5530 = vunpack.c.l.b16 %v5454
    %v5531 = vunpack.c.h.b16 %v5454
    %v5532 = vunpack.c.l.b16 %v5455
    %v5533 = vunpack.c.h.b16 %v5455
    %v5534 = vunpack.c.l.b16 %v5456
    %v5535 = vunpack.c.h.b16 %v5456
    %v5536 = vunpack.c.l.b16 %v5457
    %v5537 = vunpack.c.h.b16 %v5457
    %v5538 = vunpack.c.l.b16 %v5458
    %v5539 = vunpack.c.h.b16 %v5458
    %v5540 = vunpack.c.l.b16 %v5459
    %v5541 = vunpack.c.h.b16 %v5459
    %v5542 = vunpack.c.l.b16 %v5460
    %v5543 = vunpack.c.h.b16 %v5460
    %v5544 = vunpack.c.l.b16 %v5461
    %v5545 = vunpack.c.h.b16 %v5461
    %v5546 = vunpack.c.l.b16 %v5462
    %v5547 = vunpack.c.h.b16 %v5462
    %v5548 = vunpack.c.l.b16 %v5463
    %v5549 = vunpack.c.h.b16 %v5463
    %v5550 = vunpack.c.l.b16 %v5464
    %v5551 = vunpack.c.h.b16 %v5464
    %v5552 = vunpack.c.l.b16 %v5465
    %v5553 = vunpack.c.h.b16 %v5465
    %v5554 = vunpack.c.l.b16 %v5466
    %v5555 = vunpack.c.h.b16 %v5466
    %v5556 = vunpack.c.l.b16 %v5467
    %v5557 = vunpack.c.h.b16 %v5467
    %v5558 = vunpack.c.l.b16 %v5468
    %v5559 = vunpack.c.h.b16 %v5468
    %v5560 = vunpack.c.l.b16 %v5469
    %v5561 = vunpack.c.h.b16 %v5469
    %v5562 = vunpack.c.l.b16 %v5470
    %v5563 = vunpack.c.h.b16 %v5470
    %v5564 = vunpack.c.l.b16 %v5471
    %v5565 = vunpack.c.h.b16 %v5471
    %v5566 = vunpack.c.l.b16 %v5472
    %v5567 = vunpack.c.h.b16 %v5472
    %v5568 = vunpack.c.l.b16 %v5473
    %v5569 = vunpack.c.h.b16 %v5473
    %v5570 = vunpack.c.l.b16 %v5474
    %v5571 = vunpack.c.h.b16 %v5474
    %v5572 = vunpack.c.l.b16 %v5475
    %v5573 = vunpack.c.h.b16 %v5475
    %v5574 = vunpack.c.l.b16 %v5476
    %v5575 = vunpack.c.h.b16 %v5476
    %v5576 = vunpack.c.l.b16 %v5477
    %v5577 = vunpack.c.h.b16 %v5477
    %v5578 = vunpack.c.l.b16 %v5478
    %v5579 = vunpack.c.h.b16 %v5478
    %v5580 = vunpack.c.l.b16 %v5479
    %v5581 = vunpack.c.h.b16 %v5479
    %v5582 = vunpack.c.l.b16 %v5480
    %v5583 = vunpack.c.h.b16 %v5480
    %v5584 = vunpack.c.l.b16 %v5481
    %v5585 = vunpack.c.h.b16 %v5481
    %v5586 = vunpack.c.l.b16 %v5482
    %v5587 = vunpack.c.h.b16 %v5482
    %v5588 = vunpack.c.l.b16 %v5483
    %v5589 = vunpack.c.h.b16 %v5483
    %v5590 = vunpack.c.l.b16 %v5484
    %v5591 = vunpack.c.h.b16 %v5484
    %v5592 = vunpack.c.l.b16 %v5485
    %v5593 = vunpack.c.h.b16 %v5485
    %v5594 = vunpack.c.l.b16 %v5486
    %v5595 = vunpack.c.h.b16 %v5486
    %v5596 = vunpack.c.l.b16 %v5487
    %v5597 = vunpack.c.h.b16 %v5487
    %v5598 = vunpack.c.l.b16 %v5488
    %v5599 = vunpack.c.h.b16 %v5488
    %v5600 = vunpack.c.l.b16 %v5489
    %v5601 = vunpack.c.h.b16 %v5489
    %v5602 = vunpack.c.l.b16 %v5490
    %v5603 = vunpack.c.h.b16 %v5490
    %v5604 = vunpack.c.l.b16 %v5491
    %v5605 = vunpack.c.h.b16 %v5491
    %v5606 = vunpack.c.l.b16 %v5492
    %v5607 = vunpack.c.h.b16 %v5492
    %v5608 = vunpack.c.l.b16 %v5493
    %v5609 = vunpack.c.h.b16 %v5493
    %v5610 = vunpack.c.l.b16 %v5494
    %v5611 = vunpack.c.h.b16 %v5494
    %v5612 = vunpack.c.l.b16 %v5495
    %v5613 = vunpack.c.h.b16 %v5495
    %v5614 = vunpack.c.l.b16 %v5496
    %v5615 = vunpack.c.h.b16 %v5496
    %v5616 = vunpack.c.l.b16 %v5497
    %v5617 = vunpack.c.h.b16 %v5497
    %v5618 = vunpack.c.l.b16 %v5498
    %v5619 = vunpack.c.h.b16 %v5498
    %v5620 = vunpack.c.l.b16 %v5499
    %v5621 = vunpack.c.h.b16 %v5499
    %v5622 = vunpack.c.l.b16 %v5500
    %v5623 = vunpack.c.h.b16 %v5500
    %v5624 = vunpack.c.l.b16 %v5501
    %v5625 = vunpack.c.h.b16 %v5501
    %v5626 = vunpack.c.l.b16 %v5502
    %v5627 = vunpack.c.h.b16 %v5502
    %v5628 = vunpack.c.l.b16 %v5503
    %v5629 = vunpack.c.h.b16 %v5503
    %v5630 = vunpack.c.l.b16 %v5504
    %v5631 = vunpack.c.h.b16 %v5504
    %v5632 = vunpack.c.l.b16 %v5505
    %v5633 = vunpack.c.h.b16 %v5505
    %vm5634 = vcmask 1041409
    %v5635 = vsel %vm5634, %v5514, %v5506
    %vm5636 = vcmask 1042434
    %v5637 = vsel %vm5636, %v5522, %v5635
    %vm5638 = vcmask 1043459
    %v5639 = vsel %vm5638, %v5530, %v5637
    %vm5640 = vcmask 1044484
    %v5641 = vsel %vm5640, %v5538, %v5639
    %vm5642 = vcmask 1045509
    %v5643 = vsel %vm5642, %v5546, %v5641
    %vm5644 = vcmask 1046534
    %v5645 = vsel %vm5644, %v5554, %v5643
    %vm5646 = vcmask 1047559
    %v5647 = vsel %vm5646, %v5562, %v5645
    %v5648 = vsel %vm5634, %v5515, %v5507
    %v5649 = vsel %vm5636, %v5523, %v5648
    %v5650 = vsel %vm5638, %v5531, %v5649
    %v5651 = vsel %vm5640, %v5539, %v5650
    %v5652 = vsel %vm5642, %v5547, %v5651
    %v5653 = vsel %vm5644, %v5555, %v5652
    %v5654 = vsel %vm5646, %v5563, %v5653
    %v5655 = vsel %vm5634, %v5516, %v5508
    %v5656 = vsel %vm5636, %v5524, %v5655
    %v5657 = vsel %vm5638, %v5532, %v5656
    %v5658 = vsel %vm5640, %v5540, %v5657
    %v5659 = vsel %vm5642, %v5548, %v5658
    %v5660 = vsel %vm5644, %v5556, %v5659
    %v5661 = vsel %vm5646, %v5564, %v5660
    %v5662 = vsel %vm5634, %v5517, %v5509
    %v5663 = vsel %vm5636, %v5525, %v5662
    %v5664 = vsel %vm5638, %v5533, %v5663
    %v5665 = vsel %vm5640, %v5541, %v5664
    %v5666 = vsel %vm5642, %v5549, %v5665
    %v5667 = vsel %vm5644, %v5557, %v5666
    %v5668 = vsel %vm5646, %v5565, %v5667
    %v5669 = vsel %vm5634, %v5518, %v5510
    %v5670 = vsel %vm5636, %v5526, %v5669
    %v5671 = vsel %vm5638, %v5534, %v5670
    %v5672 = vsel %vm5640, %v5542, %v5671
    %v5673 = vsel %vm5642, %v5550, %v5672
    %v5674 = vsel %vm5644, %v5558, %v5673
    %v5675 = vsel %vm5646, %v5566, %v5674
    %v5676 = vsel %vm5634, %v5519, %v5511
    %v5677 = vsel %vm5636, %v5527, %v5676
    %v5678 = vsel %vm5638, %v5535, %v5677
    %v5679 = vsel %vm5640, %v5543, %v5678
    %v5680 = vsel %vm5642, %v5551, %v5679
    %v5681 = vsel %vm5644, %v5559, %v5680
    %v5682 = vsel %vm5646, %v5567, %v5681
    %v5683 = vsel %vm5634, %v5520, %v5512
    %v5684 = vsel %vm5636, %v5528, %v5683
    %v5685 = vsel %vm5638, %v5536, %v5684
    %v5686 = vsel %vm5640, %v5544, %v5685
    %v5687 = vsel %vm5642, %v5552, %v5686
    %v5688 = vsel %vm5644, %v5560, %v5687
    %v5689 = vsel %vm5646, %v5568, %v5688
    %v5690 = vsel %vm5634, %v5521, %v5513
    %v5691 = vsel %vm5636, %v5529, %v5690
    %v5692 = vsel %vm5638, %v5537, %v5691
    %v5693 = vsel %vm5640, %v5545, %v5692
    %v5694 = vsel %vm5642, %v5553, %v5693
    %v5695 = vsel %vm5644, %v5561, %v5694
    %v5696 = vsel %vm5646, %v5569, %v5695
    %v5697 = vsel %vm5634, %v5578, %v5570
    %v5698 = vsel %vm5636, %v5586, %v5697
    %v5699 = vsel %vm5638, %v5594, %v5698
    %v5700 = vsel %vm5640, %v5602, %v5699
    %v5701 = vsel %vm5642, %v5610, %v5700
    %v5702 = vsel %vm5644, %v5618, %v5701
    %v5703 = vsel %vm5646, %v5626, %v5702
    %v5704 = vsel %vm5634, %v5579, %v5571
    %v5705 = vsel %vm5636, %v5587, %v5704
    %v5706 = vsel %vm5638, %v5595, %v5705
    %v5707 = vsel %vm5640, %v5603, %v5706
    %v5708 = vsel %vm5642, %v5611, %v5707
    %v5709 = vsel %vm5644, %v5619, %v5708
    %v5710 = vsel %vm5646, %v5627, %v5709
    %v5711 = vsel %vm5634, %v5580, %v5572
    %v5712 = vsel %vm5636, %v5588, %v5711
    %v5713 = vsel %vm5638, %v5596, %v5712
    %v5714 = vsel %vm5640, %v5604, %v5713
    %v5715 = vsel %vm5642, %v5612, %v5714
    %v5716 = vsel %vm5644, %v5620, %v5715
    %v5717 = vsel %vm5646, %v5628, %v5716
    %v5718 = vsel %vm5634, %v5581, %v5573
    %v5719 = vsel %vm5636, %v5589, %v5718
    %v5720 = vsel %vm5638, %v5597, %v5719
    %v5721 = vsel %vm5640, %v5605, %v5720
    %v5722 = vsel %vm5642, %v5613, %v5721
    %v5723 = vsel %vm5644, %v5621, %v5722
    %v5724 = vsel %vm5646, %v5629, %v5723
    %v5725 = vsel %vm5634, %v5582, %v5574
    %v5726 = vsel %vm5636, %v5590, %v5725
    %v5727 = vsel %vm5638, %v5598, %v5726
    %v5728 = vsel %vm5640, %v5606, %v5727
    %v5729 = vsel %vm5642, %v5614, %v5728
    %v5730 = vsel %vm5644, %v5622, %v5729
    %v5731 = vsel %vm5646, %v5630, %v5730
    %v5732 = vsel %vm5634, %v5583, %v5575
    %v5733 = vsel %vm5636, %v5591, %v5732
    %v5734 = vsel %vm5638, %v5599, %v5733
    %v5735 = vsel %vm5640, %v5607, %v5734
    %v5736 = vsel %vm5642, %v5615, %v5735
    %v5737 = vsel %vm5644, %v5623, %v5736
    %v5738 = vsel %vm5646, %v5631, %v5737
    %v5739 = vsel %vm5634, %v5584, %v5576
    %v5740 = vsel %vm5636, %v5592, %v5739
    %v5741 = vsel %vm5638, %v5600, %v5740
    %v5742 = vsel %vm5640, %v5608, %v5741
    %v5743 = vsel %vm5642, %v5616, %v5742
    %v5744 = vsel %vm5644, %v5624, %v5743
    %v5745 = vsel %vm5646, %v5632, %v5744
    %v5746 = vsel %vm5634, %v5585, %v5577
    %v5747 = vsel %vm5636, %v5593, %v5746
    %v5748 = vsel %vm5638, %v5601, %v5747
    %v5749 = vsel %vm5640, %v5609, %v5748
    %v5750 = vsel %vm5642, %v5617, %v5749
    %v5751 = vsel %vm5644, %v5625, %v5750
    %v5752 = vsel %vm5646, %v5633, %v5751
    %v5753 = vpack.c.b16 %v5654, %v5647
    %v5754 = vpack.c.b16 %v5668, %v5661
    %v5755 = vpack.c.b16 %v5682, %v5675
    %v5756 = vpack.c.b16 %v5696, %v5689
    %v5757 = vpack.c.b16 %v5710, %v5703
    %v5758 = vpack.c.b16 %v5724, %v5717
    %v5759 = vpack.c.b16 %v5738, %v5731
    %v5760 = vpack.c.b16 %v5752, %v5745
    %5769 = vst [vmem:[#allocation17] sm:$0xff] %v5753
    %5770 = vst [vmem:[#allocation17 + $0x8] sm:$0xff] %v5754
    %5771 = vst [vmem:[#allocation17 + $0x10] sm:$0xff] %v5755
    %5772 = vst [vmem:[#allocation17 + $0x18] sm:$0xff] %v5756
    %5773 = vst [vmem:[#allocation17 + $0x20] sm:$0xff] %v5757
    %5774 = vst [vmem:[#allocation17 + $0x28] sm:$0xff] %v5758
    %5775 = vst [vmem:[#allocation17 + $0x30] sm:$0xff] %v5759
    %5776 = vst [vmem:[#allocation17 + $0x38] sm:$0xff] %v5760
    // Predicated region
    $region74: #{a_call__.6} parent=1 // pred_check
      _
    $region75: #{a_call__.6} parent=1 // pred_check_branch
      %5778 = sbr.rel (0) target = $region77
    $region76: #{a_call__.6} parent=1 // pred_region
      %s5780 = ssub.s32 1024, 1024
      %5781 = vsyncadd [#allocation4], %s5780
      %s5782 = sshll.u32 [#allocation17], 4
      %s5783 = int_to_ptr.vmem [resolvable:$true] %s5782
      %5788 = dma.vmem_to_hbm [thread:$0]  %s5783, 1024, %s9, [#allocation4], 512, 512, 32
    $region77: #{a_call__.6} parent=1 // pred_fallthru
      _
    // Predicated region
    $region78: #{a_call__.6} parent=1 // pred_check
      _
    $region79: #{a_call__.6} parent=1 // pred_check_branch
      %5790 = sbr.rel (0) target = $region81
    $region80: #{a_call__.6} parent=1 // pred_region
      %5791 = dma.done [#allocation4], 1024
    $region81: #{a_call__.6} parent=1 // pred_fallthru
      _
    %5792 = vsyncpa [#allocation3], 1
    %5793 = vsyncpa [#allocation6], 1
    %5794 = vsyncpa [#allocation9], 1
    %5795 = vsyncpa [#allocation12], 1
    %5796 = vsyncpa [#allocation15], 1
    %5797 = vsyncpa [#allocation4], 1

</llo_original>
